<compile_context>
chip_gen: v5e
topology: v5e:2x2
jax: 0.10.0
libtpu: 0.0.40
codegen_flags: <defaults>
</compile_context>

<pallas_src>
import functools
import math

import jax
import jax.numpy as jnp
import numpy as np
from jax import lax
from jax.experimental import pallas as pl
from jax.experimental.pallas import tpu as pltpu


# ---------------------------------------------------------------------------
# helpers (glue, runs in XLA at trace time / on tiny (C,) vectors)
# ---------------------------------------------------------------------------

def _gelu_tanh(v):
    c = math.sqrt(2.0 / math.pi)
    return 0.5 * v * (1.0 + jnp.tanh(c * (v + 0.044715 * v * v * v)))


def _grouped_conv_to_dense(w_conv, groups):
    """(out_c, in_c//groups, 1) grouped 1x1 Conv1d weight -> dense (out_c, in_c)."""
    oc, dg, _ = w_conv.shape
    ocg = oc // groups
    blocks = w_conv[:, :, 0].reshape(groups, ocg, dg)
    dense = jnp.zeros((oc, groups * dg), dtype=w_conv.dtype)
    for g in range(groups):
        dense = dense.at[g * ocg:(g + 1) * ocg, g * dg:(g + 1) * dg].set(blocks[g])
    return dense


def _per_head_rows(w_dense, heads, dim_head):
    """dense (inner, C) with conv-channel row index o = d*heads + h  ->  (inner, C)
    with head-major row index h*dim_head + d (layout used inside the kernels)."""
    inner, C = w_dense.shape
    return w_dense.reshape(dim_head, heads, C).transpose(1, 0, 2).reshape(inner, C)


# ---------------------------------------------------------------------------
# kernel 1: fused FCBNReLU1DRes block
#   out = gelu(BN2(W2 @ gelu(BN1(W1 @ x))) + x), training-mode BN stats in-kernel,
#   plus per-channel mean/var of the block output (feeds the attention BatchNorm).
# ---------------------------------------------------------------------------

def _res_block_kernel(x_ref, w1_ref, w2_ref, g1_ref, b1_ref, g2_ref, b2_ref,
                      o_ref, mean_ref, var_ref, z1_scr, z2_scr, *, batch, eps):
    C = x_ref.shape[1]
    N = x_ref.shape[2]
    inv_cnt = 1.0 / float(batch * N)

    # pass 1: z1 = W1 @ x   (bf16 MXU operands, f32 accumulation), packed as (C, B*N)
    for b in range(batch):
        z1_scr[:, b * N:(b + 1) * N] = lax.dot_general(
            w1_ref[...], x_ref[b].astype(jnp.bfloat16),
            (((1,), (0,)), ((), ())), preferred_element_type=jnp.float32)

    z1 = z1_scr[...]
    mean1 = jnp.sum(z1, axis=1, keepdims=True) * inv_cnt
    var1 = jnp.sum(z1 * z1, axis=1, keepdims=True) * inv_cnt - mean1 * mean1
    s1 = g1_ref[...] * lax.rsqrt(var1 + eps)
    t1 = b1_ref[...] - mean1 * s1

    # pass 2: z2 = W2 @ gelu(BN1(z1))
    for b in range(batch):
        h = _gelu_tanh(z1_scr[:, b * N:(b + 1) * N] * s1 + t1)
        z2_scr[:, b * N:(b + 1) * N] = lax.dot_general(
            w2_ref[...], h.astype(jnp.bfloat16),
            (((1,), (0,)), ((), ())), preferred_element_type=jnp.float32)

    z2 = z2_scr[...]
    mean2 = jnp.sum(z2, axis=1, keepdims=True) * inv_cnt
    var2 = jnp.sum(z2 * z2, axis=1, keepdims=True) * inv_cnt - mean2 * mean2
    s2 = g2_ref[...] * lax.rsqrt(var2 + eps)
    t2 = b2_ref[...] - mean2 * s2

    # pass 3: residual GELU + per-channel stats of the block output.
    osum = jnp.zeros((C, 1), jnp.float32)
    osq = jnp.zeros((C, 1), jnp.float32)
    for b in range(batch):
        ob = _gelu_tanh(z2_scr[:, b * N:(b + 1) * N] * s2 + t2 + x_ref[b])
        o_ref[b] = ob.astype(o_ref.dtype)
        osum = osum + jnp.sum(ob, axis=1, keepdims=True)
        osq = osq + jnp.sum(ob * ob, axis=1, keepdims=True)
    mean_o = osum * inv_cnt
    mean_ref[...] = mean_o
    var_ref[...] = osq * inv_cnt - mean_o * mean_o


def _res_block(y, p, *, eps):
    B, C, N = y.shape
    # Whole block in one call: all batches resident (needed anyway for cross-batch BN
    # statistics). At PosExtraction point-cloud sizes this is a few hundred KiB.
    # TODO(synk): for very large B*C*N an N-tiled two-pass variant (or the previous
    #             per-batch kernels + glue reductions) would be needed.
    kernel = functools.partial(_res_block_kernel, batch=B, eps=eps)
    out, mean, var = pl.pallas_call(
        kernel,
        out_shape=(jax.ShapeDtypeStruct((B, C, N), y.dtype),
                   jax.ShapeDtypeStruct((C, 1), jnp.float32),
                   jax.ShapeDtypeStruct((C, 1), jnp.float32)),
        grid_spec=pltpu.PrefetchScalarGridSpec(
            num_scalar_prefetch=0,
            grid=(1,),
            in_specs=[
                pl.BlockSpec((B, C, N), lambda i: (0, 0, 0)),
                pl.BlockSpec((C, C), lambda i: (0, 0)),
                pl.BlockSpec((C, C), lambda i: (0, 0)),
                pl.BlockSpec((C, 1), lambda i: (0, 0)),
                pl.BlockSpec((C, 1), lambda i: (0, 0)),
                pl.BlockSpec((C, 1), lambda i: (0, 0)),
                pl.BlockSpec((C, 1), lambda i: (0, 0)),
            ],
            out_specs=(
                pl.BlockSpec((B, C, N), lambda i: (0, 0, 0)),
                pl.BlockSpec((C, 1), lambda i: (0, 0)),
                pl.BlockSpec((C, 1), lambda i: (0, 0)),
            ),
            scratch_shapes=[pltpu.VMEM((C, B * N), jnp.float32),
                            pltpu.VMEM((C, B * N), jnp.float32)],
        ),
        compiler_params=pltpu.CompilerParams(dimension_semantics=("arbitrary",)),
    )(y,
      p["w1"][:, :, 0].astype(jnp.bfloat16),
      p["w2"][:, :, 0].astype(jnp.bfloat16),
      p["bn1_gamma"].reshape(C, 1), p["bn1_beta"].reshape(C, 1),
      p["bn2_gamma"].reshape(C, 1), p["bn2_beta"].reshape(C, 1))
    return out, mean, var


# ---------------------------------------------------------------------------
# kernel 2: attention core
#   BN folded into QKV weights, head-major QKV scratch, q-tiled, bf16 MXU operands,
#   fused output projection + bias + residual, and BN-stat accumulators for the FFN.
# ---------------------------------------------------------------------------

def _attention_kernel(x_ref, wqkv_ref, bqkv_ref, wo_ref, bo_ref,
                      o_ref, sum_ref, sq_ref, qkv_scr, proj_scr,
                      *, heads, dim_head, tq):
    iq = pl.program_id(1)
    inner = heads * dim_head

    # Once per batch (q-tile 0): project the whole sequence to Q|K|V with a single
    # head-major bf16 matmul. BN affine + softmax scale + PyTorch q/k swap are folded
    # into wqkv/bqkv by the glue, so no normalization work happens here. Head-major
    # (3*inner, N) layout: no (C,N) transpose, per-head slices are sublane-aligned.
    @pl.when(iq == 0)
    def _():
        qkv = lax.dot_general(wqkv_ref[...], x_ref[...].astype(jnp.bfloat16),
                              (((1,), (0,)), ((), ())),
                              preferred_element_type=jnp.float32)     # (3*inner, N)
        qkv_scr[...] = (qkv + bqkv_ref[...]).astype(jnp.bfloat16)

    q0 = pl.multiple_of(iq * tq, tq)

    for h in range(heads):
        q = qkv_scr[h * dim_head:(h + 1) * dim_head, pl.ds(q0, tq)]            # (Dh, tq)
        k = qkv_scr[inner + h * dim_head: inner + (h + 1) * dim_head, :]       # (Dh, N)
        v = qkv_scr[2 * inner + h * dim_head: 2 * inner + (h + 1) * dim_head, :]
        dots = lax.dot_general(q, k, (((0,), (0,)), ((), ())),
                               preferred_element_type=jnp.float32)             # (tq, N)
        m = jnp.max(dots, axis=-1, keepdims=True)
        p = jnp.exp(dots - m)                                                  # unnormalized
        denom = jnp.sum(p, axis=-1, keepdims=True)                             # (tq, 1)
        o_h = lax.dot_general(p.astype(jnp.bfloat16), v, (((1,), (1,)), ((), ())),
                              preferred_element_type=jnp.float32)              # (tq, Dh)
        # deferred softmax normalization: one approx reciprocal on (tq, Dh) elements
        o_h = o_h * pl.reciprocal(denom, approx=True)
        contrib = lax.dot_general(wo_ref[h], o_h.astype(jnp.bfloat16),
                                  (((1,), (1,)), ((), ())),
                                  preferred_element_type=jnp.float32)          # (C, tq)
        if h == 0:
            proj_scr[...] = contrib
        else:
            proj_scr[...] += contrib

    # Output 1x1 conv bias + residual, written directly in the native (C, N) layout.
    out = proj_scr[...] + bo_ref[...] + x_ref[:, pl.ds(q0, tq)]                # (C, tq)
    o_ref[...] = out.astype(o_ref.dtype)

    # Per-channel sum / sum-of-squares of the attention output (accumulated over
    # q-tiles) -> FFN BatchNorm statistics finished in glue, no HBM re-read of `att`.
    @pl.when(iq == 0)
    def _():
        sum_ref[...] = jnp.zeros_like(sum_ref)
        sq_ref[...] = jnp.zeros_like(sq_ref)
    sum_ref[...] += jnp.sum(out, axis=1, keepdims=True)
    sq_ref[...] += jnp.sum(out * out, axis=1, keepdims=True)


def _attention(y, y_mean, y_var, ap, *, heads, dim_head, eps):
    B, C, N = y.shape
    inner = heads * dim_head

    # Training-mode BatchNorm affine (stats provided by the previous kernel).
    s = ap["bn_gamma"] * lax.rsqrt(y_var + eps)
    t = ap["bn_beta"] - y_mean * s

    wk_d = _grouped_conv_to_dense(ap["w_k"], heads)                  # (inner, C)
    wq_d = _grouped_conv_to_dense(ap["w_q"], heads)
    wv_d = _grouped_conv_to_dense(ap["w_v"], heads)
    # PyTorch forward: attention-q <- to_k(x), attention-k <- to_q(x) (intentional swap);
    # softmax scale folded into the q rows (exact power of two, no rounding loss).
    scale = float(dim_head) ** -0.5
    wq_rows = _per_head_rows(wk_d, heads, dim_head) * scale          # (inner, C)
    wk_rows = _per_head_rows(wq_d, heads, dim_head)
    wv_rows = _per_head_rows(wv_d, heads, dim_head)
    w_rows = jnp.concatenate([wq_rows, wk_rows, wv_rows], axis=0)    # (3*inner, C)
    b_qkv = (w_rows @ t).reshape(3 * inner, 1)                       # BN shift folded
    w_qkv = (w_rows * s[None, :]).astype(jnp.bfloat16)               # BN scale folded
    # to_out weight reshaped to (heads, C, dim_head): head h, column d = channel h*Dh+d.
    w_out = (ap["w_out"][:, :, 0].reshape(C, heads, dim_head)
             .transpose(1, 0, 2).astype(jnp.bfloat16))
    b_out = ap["b_out"].reshape(C, 1)

    # q-tile size: largest lane-dense multiple of 128 dividing N (256 preferred over 512
    # to keep the (tq, N) score buffer small on v7x's 64 MiB VMEM).
    tq = N
    for cand in (256, 128):
        if N % cand == 0:
            tq = cand
            break
    # TODO(synk): if N is not a multiple of 128 the fallback tq=N produces masked
    #             partial stores; pad N glue-side for best store throughput.
    nq = N // tq

    # VMEM budget derived from hardware (64 MiB/core on v7x, 128 MiB on v5e/v6e).
    # TODO(synk): for very long sequences (N >~ 8-16K on v7x) the resident (C,N) x block
    #             and (3*inner, N) QKV scratch should additionally be K/V-tiled.
    est = (2 * (C * N * 4 + C * tq * 4 + 2 * C * 4)          # x / out / stat blocks (dbl-buf)
           + 3 * inner * N * 2 + C * tq * 4                  # QKV + proj scratches
           + 2 * ((3 * inner * C + heads * C * dim_head) * 2
                  + (3 * inner + C) * 4)                     # weights / biases
           + 2 * tq * N * 4 + 2 * tq * dim_head * 4)         # dots/p + o_h temporaries
    try:
        cap = int(pltpu.get_tpu_info().vmem_capacity_bytes)
    except Exception:
        cap = 64 * 2 ** 20                                   # conservative (v7x per-core)
    vmem_limit = int(min(cap - 12 * 2 ** 20, max(32 * 2 ** 20, 2 * est)))

    kernel = functools.partial(_attention_kernel, heads=heads, dim_head=dim_head, tq=tq)
    att, asum, asq = pl.pallas_call(
        kernel,
        out_shape=(jax.ShapeDtypeStruct((B, C, N), y.dtype),
                   jax.ShapeDtypeStruct((B, C, 1), jnp.float32),
                   jax.ShapeDtypeStruct((B, C, 1), jnp.float32)),
        grid_spec=pltpu.PrefetchScalarGridSpec(
            num_scalar_prefetch=0,
            grid=(B, nq),
            in_specs=[
                pl.BlockSpec((None, C, N), lambda b, i: (b, 0, 0)),   # x, resident over q-tiles
                pl.BlockSpec((3 * inner, C), lambda b, i: (0, 0)),
                pl.BlockSpec((3 * inner, 1), lambda b, i: (0, 0)),
                pl.BlockSpec((heads, C, dim_head), lambda b, i: (0, 0, 0)),
                pl.BlockSpec((C, 1), lambda b, i: (0, 0)),
            ],
            out_specs=(
                pl.BlockSpec((None, C, tq), lambda b, i: (b, 0, i)),
                pl.BlockSpec((None, C, 1), lambda b, i: (b, 0, 0)),
                pl.BlockSpec((None, C, 1), lambda b, i: (b, 0, 0)),
            ),
            scratch_shapes=[pltpu.VMEM((3 * inner, N), jnp.bfloat16),
                            pltpu.VMEM((C, tq), jnp.float32)],
        ),
        compiler_params=pltpu.CompilerParams(
            dimension_semantics=("parallel", "arbitrary"),
            vmem_limit_bytes=vmem_limit),
    )(y, w_qkv, b_qkv, w_out, b_out)
    return att, asum, asq


# ---------------------------------------------------------------------------
# kernel 3: FFN  o = x + W2 @ relu(W1' @ x + b1)   (BN folded into W1'/b1)
# ---------------------------------------------------------------------------

def _ffn_kernel(x_ref, w1_ref, b1_ref, w2_ref, o_ref):
    h = lax.dot_general(w1_ref[...], x_ref[...].astype(jnp.bfloat16),
                        (((1,), (0,)), ((), ())),
                        preferred_element_type=jnp.float32) + b1_ref[...]
    h = jnp.maximum(h, 0.0)
    y = lax.dot_general(w2_ref[...], h.astype(jnp.bfloat16),
                        (((1,), (0,)), ((), ())),
                        preferred_element_type=jnp.float32)
    o_ref[...] = (x_ref[...] + y).astype(o_ref.dtype)


def _ffn(att, a_mean, a_var, fp, *, heads, eps):
    B, C, N = att.shape
    inner = fp["w1"].shape[0]
    s = fp["bn_gamma"] * lax.rsqrt(a_var + eps)
    t = fp["bn_beta"] - a_mean * s
    w1_dense = _grouped_conv_to_dense(fp["w1"], heads)               # (inner, C)
    w1_eff = (w1_dense * s[None, :]).astype(jnp.bfloat16)            # BN scale folded
    b1 = (w1_dense @ t).reshape(inner, 1)                            # BN shift folded
    w2 = fp["w2"][:, :, 0].astype(jnp.bfloat16)                      # (C, inner)
    return pl.pallas_call(
        _ffn_kernel,
        out_shape=jax.ShapeDtypeStruct((B, C, N), att.dtype),
        grid_spec=pltpu.PrefetchScalarGridSpec(
            num_scalar_prefetch=0,
            grid=(B,),
            in_specs=[
                pl.BlockSpec((None, C, N), lambda b: (b, 0, 0)),
                pl.BlockSpec((inner, C), lambda b: (0, 0)),
                pl.BlockSpec((inner, 1), lambda b: (0, 0)),
                pl.BlockSpec((C, inner), lambda b: (0, 0)),
            ],
            out_specs=pl.BlockSpec((None, C, N), lambda b: (b, 0, 0)),
        ),
        compiler_params=pltpu.CompilerParams(dimension_semantics=("parallel",)),
    )(att, w1_eff, b1, w2)


# ---------------------------------------------------------------------------
# full PosExtraction forward
# ---------------------------------------------------------------------------

def pos_extraction_pallas(x, params, *, heads, dim_head, eps=1e-5):
    B, C, N = x.shape
    assert C % heads == 0

    y = x
    y_mean = y_var = None
    for p in params["blocks"]:
        y, y_mean, y_var = _res_block(y, p, eps=eps)

    if y_mean is None:       # blocks == 0: stats of the raw input, computed in glue
        y_mean = jnp.mean(y, axis=(0, 2))
        y_var = jnp.var(y, axis=(0, 2))
    else:
        y_mean = y_mean[:, 0]
        y_var = y_var[:, 0]

    # TransformerBlock: attention (+ residual fused in-kernel), then FFN (+ residual).
    att, asum, asq = _attention(y, y_mean, y_var, params["attn"],
                                heads=heads, dim_head=dim_head, eps=eps)
    cnt = float(B * N)
    a_mean = jnp.sum(asum[:, :, 0], axis=0) / cnt                    # (C,)
    a_var = jnp.sum(asq[:, :, 0], axis=0) / cnt - a_mean * a_mean    # biased variance
    out = _ffn(att, a_mean, a_var, params["ffn"], heads=heads, eps=eps)
    return out


# ---------------------------------------------------------------------------
# parameters + pure-JAX reference (PyTorch semantics, exact erf-GELU)
# ---------------------------------------------------------------------------

def init_params(key, channels, heads, dim_head, blocks):
    inner = heads * dim_head
    dg = channels // heads
    keys = iter(jax.random.split(key, 2 * blocks + 7))

    def conv_w(shape, fan_in):
        bound = 1.0 / np.sqrt(fan_in)
        return jax.random.uniform(next(keys), shape, jnp.float32, -bound, bound)

    blocks_p = []
    for _ in range(blocks):
        blocks_p.append({
            "w1": conv_w((channels, channels, 1), channels),
            "bn1_gamma": jnp.ones((channels,), jnp.float32),
            "bn1_beta": jnp.zeros((channels,), jnp.float32),
            "w2": conv_w((channels, channels, 1), channels),
            "bn2_gamma": jnp.ones((channels,), jnp.float32),
            "bn2_beta": jnp.zeros((channels,), jnp.float32),
        })
    attn = {
        "bn_gamma": jnp.ones((channels,), jnp.float32),
        "bn_beta": jnp.zeros((channels,), jnp.float32),
        "w_k": conv_w((inner, dg, 1), dg),
        "w_q": conv_w((inner, dg, 1), dg),
        "w_v": conv_w((inner, dg, 1), dg),
        "w_out": conv_w((channels, inner, 1), inner),
        "b_out": conv_w((channels,), inner),
    }
    ffn = {
        "bn_gamma": jnp.ones((channels,), jnp.float32),
        "bn_beta": jnp.zeros((channels,), jnp.float32),
        "w1": conv_w((inner, dg, 1), dg),
        "w2": conv_w((channels, inner, 1), inner),
    }
    return {"blocks": blocks_p, "attn": attn, "ffn": ffn}


def pos_extraction_reference(x, params, *, heads, dim_head, eps=1e-5):
    def bn(z, gamma, beta):
        mean = jnp.mean(z, axis=(0, 2), keepdims=True)
        var = jnp.var(z, axis=(0, 2), keepdims=True)
        return ((z - mean) / jnp.sqrt(var + eps)) * gamma[None, :, None] + beta[None, :, None]

    def conv1x1(z, w):
        return jnp.einsum('oc,bcn->bon', w[:, :, 0], z)

    def gconv1x1(z, w, groups):
        B, C, N = z.shape
        O = w.shape[0]
        wg = w[:, :, 0].reshape(groups, O // groups, C // groups)
        zg = z.reshape(B, groups, C // groups, N)
        return jnp.einsum('goc,bgcn->bgon', wg, zg).reshape(B, O, N)

    gelu = lambda v: jax.nn.gelu(v, approximate=False)

    y = x
    for p in params["blocks"]:
        z1 = conv1x1(y, p["w1"])
        h = gelu(bn(z1, p["bn1_gamma"], p["bn1_beta"]))
        z2 = conv1x1(h, p["w2"])
        y = gelu(bn(z2, p["bn2_gamma"], p["bn2_beta"]) + y)

    a = params["attn"]
    B, C, N = y.shape
    xn = bn(y, a["bn_gamma"], a["bn_beta"])
    kc = gconv1x1(xn, a["w_k"], heads)
    qc = gconv1x1(xn, a["w_q"], heads)
    vc = gconv1x1(xn, a["w_v"], heads)

    def rearr(t):  # 'b (d h) n -> b h n d'
        return t.reshape(B, dim_head, heads, N).transpose(0, 2, 3, 1)

    q, k, v = rearr(kc), rearr(qc), rearr(vc)        # same q/k swap as PyTorch forward
    dots = jnp.einsum('bhid,bhjd->bhij', q, k) * (float(dim_head) ** -0.5)
    attn = jax.nn.softmax(dots, axis=-1)
    out = jnp.einsum('bhij,bhjd->bhid', attn, v)
    out = out.transpose(0, 1, 3, 2).reshape(B, heads * dim_head, N)  # 'b h n d -> b (h d) n'
    att = jnp.einsum('oc,bcn->bon', a["w_out"][:, :, 0], out) + a["b_out"][None, :, None]
    att = att + y

    f = params["ffn"]
    fin = bn(att, f["bn_gamma"], f["bn_beta"])
    h1 = jnp.maximum(gconv1x1(fin, f["w1"], heads), 0.0)
    h2 = conv1x1(h1, f["w2"])
    return att + h2


if __name__ == "__main__":
    # PosExtraction(channels): heads=4 fixed, TransformerBlock default dim_head=64.
    B, C, N = 2, 128, 128
    heads, dim_head, blocks = 4, 64, 1

    key = jax.random.PRNGKey(0)
    kx, kp = jax.random.split(key)
    x = jax.random.normal(kx, (B, C, N), jnp.float32)
    params = init_params(kp, C, heads, dim_head, blocks)

    fwd = jax.jit(functools.partial(pos_extraction_pallas, heads=heads, dim_head=dim_head))
    out = jax.block_until_ready(fwd(x, params))

    ref = pos_extraction_reference(x, params, heads=heads, dim_head=dim_head)
    np.testing.assert_allclose(np.asarray(out), np.asarray(ref), rtol=2e-2, atol=2e-2)
    print("KERNEL_OK")
</pallas_src>

<mosaic_0001>
module attributes {stable_mosaic.version = 11 : i64} {
  func.func @_res_block_kernel(%arg0: i32, %arg1: memref<2x128x128xf32, #tpu.memory_space<vmem>>, %arg2: memref<128x128xbf16, #tpu.memory_space<vmem>>, %arg3: memref<128x128xbf16, #tpu.memory_space<vmem>>, %arg4: memref<128x1xf32, #tpu.memory_space<vmem>>, %arg5: memref<128x1xf32, #tpu.memory_space<vmem>>, %arg6: memref<128x1xf32, #tpu.memory_space<vmem>>, %arg7: memref<128x1xf32, #tpu.memory_space<vmem>>, %arg8: memref<2x128x128xf32, #tpu.memory_space<vmem>>, %arg9: memref<128x1xf32, #tpu.memory_space<vmem>>, %arg10: memref<128x1xf32, #tpu.memory_space<vmem>>, %arg11: memref<128x256xf32, #tpu.memory_space<vmem>>, %arg12: memref<128x256xf32, #tpu.memory_space<vmem>>) attributes {dimension_semantics = [#tpu.dimension_semantics<arbitrary>], iteration_bounds = array<i64: 1>, scalar_prefetch = 0 : i64, scratch_operands = 2 : i64, tpu.core_type = #tpu.core_type<tc>, window_params = [{pipeline_mode = #tpu.pipeline_mode<synchronous>, transform_indices = @transform_0, window_bounds = array<i64: 2, 128, 128>}, {pipeline_mode = #tpu.pipeline_mode<synchronous>, transform_indices = @transform_1, window_bounds = array<i64: 128, 128>}, {pipeline_mode = #tpu.pipeline_mode<synchronous>, transform_indices = @transform_2, window_bounds = array<i64: 128, 128>}, {pipeline_mode = #tpu.pipeline_mode<synchronous>, transform_indices = @transform_3, window_bounds = array<i64: 128, 1>}, {pipeline_mode = #tpu.pipeline_mode<synchronous>, transform_indices = @transform_4, window_bounds = array<i64: 128, 1>}, {pipeline_mode = #tpu.pipeline_mode<synchronous>, transform_indices = @transform_5, window_bounds = array<i64: 128, 1>}, {pipeline_mode = #tpu.pipeline_mode<synchronous>, transform_indices = @transform_6, window_bounds = array<i64: 128, 1>}, {pipeline_mode = #tpu.pipeline_mode<synchronous>, transform_indices = @transform_7, window_bounds = array<i64: 2, 128, 128>}, {pipeline_mode = #tpu.pipeline_mode<synchronous>, transform_indices = @transform_8, window_bounds = array<i64: 128, 1>}, {pipeline_mode = #tpu.pipeline_mode<synchronous>, transform_indices = @transform_9, window_bounds = array<i64: 128, 1>}]} {
    %c0 = arith.constant 0 : index
    %c0_0 = arith.constant 0 : index
    %0 = vector.load %arg2[%c0, %c0_0] : memref<128x128xbf16, #tpu.memory_space<vmem>>, vector<128x128xbf16>
    %c0_1 = arith.constant 0 : index
    %c0_2 = arith.constant 0 : index
    %c0_3 = arith.constant 0 : index
    %1 = vector.load %arg1[%c0_1, %c0_2, %c0_3] : memref<2x128x128xf32, #tpu.memory_space<vmem>>, vector<1x128x128xf32>
    %2 = vector.shape_cast %1 : vector<1x128x128xf32> to vector<128x128xf32>
    %3 = arith.truncf %2 : vector<128x128xf32> to vector<128x128xbf16>
    %cst = arith.constant dense<0.000000e+00> : vector<128x128xf32>
    %4 = tpu.matmul %0, %3, %cst {dimension_numbers = #tpu.dot_dimension_numbers<[1], [0], [0], [1], [0, 0, 1, 1], [], []>} : vector<128x128xbf16>, vector<128x128xbf16>, vector<128x128xf32> -> vector<128x128xf32>
    %c0_4 = arith.constant 0 : index
    %c0_5 = arith.constant 0 : index
    %5 = vector.load %arg11[%c0_4, %c0_5] : memref<128x256xf32, #tpu.memory_space<vmem>>, vector<128x128xf32>
    tpu.vector_store %arg11[%c0_4, %c0_5], %4 {strides = array<i32>} : memref<128x256xf32, #tpu.memory_space<vmem>>, vector<128x128xf32>,
    %c0_6 = arith.constant 0 : index
    %c0_7 = arith.constant 0 : index
    %6 = vector.load %arg2[%c0_6, %c0_7] : memref<128x128xbf16, #tpu.memory_space<vmem>>, vector<128x128xbf16>
    %c1 = arith.constant 1 : index
    %c0_8 = arith.constant 0 : index
    %c0_9 = arith.constant 0 : index
    %7 = vector.load %arg1[%c1, %c0_8, %c0_9] : memref<2x128x128xf32, #tpu.memory_space<vmem>>, vector<1x128x128xf32>
    %8 = vector.shape_cast %7 : vector<1x128x128xf32> to vector<128x128xf32>
    %9 = arith.truncf %8 : vector<128x128xf32> to vector<128x128xbf16>
    %cst_10 = arith.constant dense<0.000000e+00> : vector<128x128xf32>
    %10 = tpu.matmul %6, %9, %cst_10 {dimension_numbers = #tpu.dot_dimension_numbers<[1], [0], [0], [1], [0, 0, 1, 1], [], []>} : vector<128x128xbf16>, vector<128x128xbf16>, vector<128x128xf32> -> vector<128x128xf32>
    %c0_11 = arith.constant 0 : index
    %c128 = arith.constant 128 : index
    %11 = vector.load %arg11[%c0_11, %c128] : memref<128x256xf32, #tpu.memory_space<vmem>>, vector<128x128xf32>
    tpu.vector_store %arg11[%c0_11, %c128], %10 {strides = array<i32>} : memref<128x256xf32, #tpu.memory_space<vmem>>, vector<128x128xf32>,
    %c0_12 = arith.constant 0 : index
    %c0_13 = arith.constant 0 : index
    %12 = vector.load %arg11[%c0_12, %c0_13] : memref<128x256xf32, #tpu.memory_space<vmem>>, vector<128x256xf32>
    %cst_14 = arith.constant dense<0.000000e+00> : vector<128xf32>
    %13 = vector.multi_reduction <add>, %12, %cst_14 [1] : vector<128x256xf32> to vector<128xf32>
    %14 = vector.shape_cast %13 : vector<128xf32> to vector<128x1xf32>
    %cst_15 = arith.constant 3.906250e-03 : f32
    %15 = vector.broadcast %cst_15 : f32 to vector<128x1xf32>
    %16 = arith.mulf %14, %15 : vector<128x1xf32>
    %17 = arith.mulf %12, %12 : vector<128x256xf32>
    %cst_16 = arith.constant dense<0.000000e+00> : vector<128xf32>
    %18 = vector.multi_reduction <add>, %17, %cst_16 [1] : vector<128x256xf32> to vector<128xf32>
    %19 = vector.shape_cast %18 : vector<128xf32> to vector<128x1xf32>
    %cst_17 = arith.constant 3.906250e-03 : f32
    %20 = vector.broadcast %cst_17 : f32 to vector<128x1xf32>
    %21 = arith.mulf %19, %20 : vector<128x1xf32>
    %22 = arith.mulf %16, %16 : vector<128x1xf32>
    %23 = arith.subf %21, %22 : vector<128x1xf32>
    %c0_18 = arith.constant 0 : index
    %c0_19 = arith.constant 0 : index
    %24 = vector.load %arg4[%c0_18, %c0_19] : memref<128x1xf32, #tpu.memory_space<vmem>>, vector<128x1xf32>
    %cst_20 = arith.constant 9.99999974E-6 : f32
    %25 = vector.broadcast %cst_20 : f32 to vector<128x1xf32>
    %26 = arith.addf %23, %25 : vector<128x1xf32>
    %27 = math.rsqrt %26 : vector<128x1xf32>
    %28 = arith.mulf %24, %27 : vector<128x1xf32>
    %c0_21 = arith.constant 0 : index
    %c0_22 = arith.constant 0 : index
    %29 = vector.load %arg5[%c0_21, %c0_22] : memref<128x1xf32, #tpu.memory_space<vmem>>, vector<128x1xf32>
    %30 = arith.mulf %16, %28 : vector<128x1xf32>
    %31 = arith.subf %29, %30 : vector<128x1xf32>
    %c0_23 = arith.constant 0 : index
    %c0_24 = arith.constant 0 : index
    %32 = vector.load %arg11[%c0_23, %c0_24] : memref<128x256xf32, #tpu.memory_space<vmem>>, vector<128x128xf32>
    %33 = vector.broadcast %28 : vector<128x1xf32> to vector<128x128xf32>
    %34 = arith.mulf %32, %33 : vector<128x128xf32>
    %35 = vector.broadcast %31 : vector<128x1xf32> to vector<128x128xf32>
    %36 = arith.addf %34, %35 : vector<128x128xf32>
    %cst_25 = arith.constant 5.000000e-01 : f32
    %37 = vector.broadcast %cst_25 : f32 to vector<128x128xf32>
    %38 = arith.mulf %37, %36 : vector<128x128xf32>
    %cst_26 = arith.constant 4.471500e-02 : f32
    %39 = vector.broadcast %cst_26 : f32 to vector<128x128xf32>
    %40 = arith.mulf %39, %36 : vector<128x128xf32>
    %41 = arith.mulf %40, %36 : vector<128x128xf32>
    %42 = arith.mulf %41, %36 : vector<128x128xf32>
    %43 = arith.addf %36, %42 : vector<128x128xf32>
    %cst_27 = arith.constant 0.797884583 : f32
    %44 = vector.broadcast %cst_27 : f32 to vector<128x128xf32>
    %45 = arith.mulf %44, %43 : vector<128x128xf32>
    %46 = math.tanh %45 : vector<128x128xf32>
    %cst_28 = arith.constant 1.000000e+00 : f32
    %47 = vector.broadcast %cst_28 : f32 to vector<128x128xf32>
    %48 = arith.addf %47, %46 : vector<128x128xf32>
    %49 = arith.mulf %38, %48 : vector<128x128xf32>
    %c0_29 = arith.constant 0 : index
    %c0_30 = arith.constant 0 : index
    %50 = vector.load %arg3[%c0_29, %c0_30] : memref<128x128xbf16, #tpu.memory_space<vmem>>, vector<128x128xbf16>
    %51 = arith.truncf %49 : vector<128x128xf32> to vector<128x128xbf16>
    %cst_31 = arith.constant dense<0.000000e+00> : vector<128x128xf32>
    %52 = tpu.matmul %50, %51, %cst_31 {dimension_numbers = #tpu.dot_dimension_numbers<[1], [0], [0], [1], [0, 0, 1, 1], [], []>} : vector<128x128xbf16>, vector<128x128xbf16>, vector<128x128xf32> -> vector<128x128xf32>
    %c0_32 = arith.constant 0 : index
    %c0_33 = arith.constant 0 : index
    %53 = vector.load %arg12[%c0_32, %c0_33] : memref<128x256xf32, #tpu.memory_space<vmem>>, vector<128x128xf32>
    tpu.vector_store %arg12[%c0_32, %c0_33], %52 {strides = array<i32>} : memref<128x256xf32, #tpu.memory_space<vmem>>, vector<128x128xf32>,
    %c0_34 = arith.constant 0 : index
    %c128_35 = arith.constant 128 : index
    %54 = vector.load %arg11[%c0_34, %c128_35] : memref<128x256xf32, #tpu.memory_space<vmem>>, vector<128x128xf32>
    %55 = vector.broadcast %28 : vector<128x1xf32> to vector<128x128xf32>
    %56 = arith.mulf %54, %55 : vector<128x128xf32>
    %57 = vector.broadcast %31 : vector<128x1xf32> to vector<128x128xf32>
    %58 = arith.addf %56, %57 : vector<128x128xf32>
    %cst_36 = arith.constant 5.000000e-01 : f32
    %59 = vector.broadcast %cst_36 : f32 to vector<128x128xf32>
    %60 = arith.mulf %59, %58 : vector<128x128xf32>
    %cst_37 = arith.constant 4.471500e-02 : f32
    %61 = vector.broadcast %cst_37 : f32 to vector<128x128xf32>
    %62 = arith.mulf %61, %58 : vector<128x128xf32>
    %63 = arith.mulf %62, %58 : vector<128x128xf32>
    %64 = arith.mulf %63, %58 : vector<128x128xf32>
    %65 = arith.addf %58, %64 : vector<128x128xf32>
    %cst_38 = arith.constant 0.797884583 : f32
    %66 = vector.broadcast %cst_38 : f32 to vector<128x128xf32>
    %67 = arith.mulf %66, %65 : vector<128x128xf32>
    %68 = math.tanh %67 : vector<128x128xf32>
    %cst_39 = arith.constant 1.000000e+00 : f32
    %69 = vector.broadcast %cst_39 : f32 to vector<128x128xf32>
    %70 = arith.addf %69, %68 : vector<128x128xf32>
    %71 = arith.mulf %60, %70 : vector<128x128xf32>
    %c0_40 = arith.constant 0 : index
    %c0_41 = arith.constant 0 : index
    %72 = vector.load %arg3[%c0_40, %c0_41] : memref<128x128xbf16, #tpu.memory_space<vmem>>, vector<128x128xbf16>
    %73 = arith.truncf %71 : vector<128x128xf32> to vector<128x128xbf16>
    %cst_42 = arith.constant dense<0.000000e+00> : vector<128x128xf32>
    %74 = tpu.matmul %72, %73, %cst_42 {dimension_numbers = #tpu.dot_dimension_numbers<[1], [0], [0], [1], [0, 0, 1, 1], [], []>} : vector<128x128xbf16>, vector<128x128xbf16>, vector<128x128xf32> -> vector<128x128xf32>
    %c0_43 = arith.constant 0 : index
    %c128_44 = arith.constant 128 : index
    %75 = vector.load %arg12[%c0_43, %c128_44] : memref<128x256xf32, #tpu.memory_space<vmem>>, vector<128x128xf32>
    tpu.vector_store %arg12[%c0_43, %c128_44], %74 {strides = array<i32>} : memref<128x256xf32, #tpu.memory_space<vmem>>, vector<128x128xf32>,
    %c0_45 = arith.constant 0 : index
    %c0_46 = arith.constant 0 : index
    %76 = vector.load %arg12[%c0_45, %c0_46] : memref<128x256xf32, #tpu.memory_space<vmem>>, vector<128x256xf32>
    %cst_47 = arith.constant dense<0.000000e+00> : vector<128xf32>
    %77 = vector.multi_reduction <add>, %76, %cst_47 [1] : vector<128x256xf32> to vector<128xf32>
    %78 = vector.shape_cast %77 : vector<128xf32> to vector<128x1xf32>
    %cst_48 = arith.constant 3.906250e-03 : f32
    %79 = vector.broadcast %cst_48 : f32 to vector<128x1xf32>
    %80 = arith.mulf %78, %79 : vector<128x1xf32>
    %81 = arith.mulf %76, %76 : vector<128x256xf32>
    %cst_49 = arith.constant dense<0.000000e+00> : vector<128xf32>
    %82 = vector.multi_reduction <add>, %81, %cst_49 [1] : vector<128x256xf32> to vector<128xf32>
    %83 = vector.shape_cast %82 : vector<128xf32> to vector<128x1xf32>
    %cst_50 = arith.constant 3.906250e-03 : f32
    %84 = vector.broadcast %cst_50 : f32 to vector<128x1xf32>
    %85 = arith.mulf %83, %84 : vector<128x1xf32>
    %86 = arith.mulf %80, %80 : vector<128x1xf32>
    %87 = arith.subf %85, %86 : vector<128x1xf32>
    %c0_51 = arith.constant 0 : index
    %c0_52 = arith.constant 0 : index
    %88 = vector.load %arg6[%c0_51, %c0_52] : memref<128x1xf32, #tpu.memory_space<vmem>>, vector<128x1xf32>
    %cst_53 = arith.constant 9.99999974E-6 : f32
    %89 = vector.broadcast %cst_53 : f32 to vector<128x1xf32>
    %90 = arith.addf %87, %89 : vector<128x1xf32>
    %91 = math.rsqrt %90 : vector<128x1xf32>
    %92 = arith.mulf %88, %91 : vector<128x1xf32>
    %c0_54 = arith.constant 0 : index
    %c0_55 = arith.constant 0 : index
    %93 = vector.load %arg7[%c0_54, %c0_55] : memref<128x1xf32, #tpu.memory_space<vmem>>, vector<128x1xf32>
    %94 = arith.mulf %80, %92 : vector<128x1xf32>
    %95 = arith.subf %93, %94 : vector<128x1xf32>
    %cst_56 = arith.constant 0.000000e+00 : f32
    %96 = vector.broadcast %cst_56 : f32 to vector<128x1xf32>
    %cst_57 = arith.constant 0.000000e+00 : f32
    %97 = vector.broadcast %cst_57 : f32 to vector<128x1xf32>
    %c0_58 = arith.constant 0 : index
    %c0_59 = arith.constant 0 : index
    %98 = vector.load %arg12[%c0_58, %c0_59] : memref<128x256xf32, #tpu.memory_space<vmem>>, vector<128x128xf32>
    %99 = vector.broadcast %92 : vector<128x1xf32> to vector<128x128xf32>
    %100 = arith.mulf %98, %99 : vector<128x128xf32>
    %101 = vector.broadcast %95 : vector<128x1xf32> to vector<128x128xf32>
    %102 = arith.addf %100, %101 : vector<128x128xf32>
    %c0_60 = arith.constant 0 : index
    %c0_61 = arith.constant 0 : index
    %c0_62 = arith.constant 0 : index
    %103 = vector.load %arg1[%c0_60, %c0_61, %c0_62] : memref<2x128x128xf32, #tpu.memory_space<vmem>>, vector<1x128x128xf32>
    %104 = vector.shape_cast %103 : vector<1x128x128xf32> to vector<128x128xf32>
    %105 = arith.addf %102, %104 : vector<128x128xf32>
    %cst_63 = arith.constant 5.000000e-01 : f32
    %106 = vector.broadcast %cst_63 : f32 to vector<128x128xf32>
    %107 = arith.mulf %106, %105 : vector<128x128xf32>
    %cst_64 = arith.constant 4.471500e-02 : f32
    %108 = vector.broadcast %cst_64 : f32 to vector<128x128xf32>
    %109 = arith.mulf %108, %105 : vector<128x128xf32>
    %110 = arith.mulf %109, %105 : vector<128x128xf32>
    %111 = arith.mulf %110, %105 : vector<128x128xf32>
    %112 = arith.addf %105, %111 : vector<128x128xf32>
    %cst_65 = arith.constant 0.797884583 : f32
    %113 = vector.broadcast %cst_65 : f32 to vector<128x128xf32>
    %114 = arith.mulf %113, %112 : vector<128x128xf32>
    %115 = math.tanh %114 : vector<128x128xf32>
    %cst_66 = arith.constant 1.000000e+00 : f32
    %116 = vector.broadcast %cst_66 : f32 to vector<128x128xf32>
    %117 = arith.addf %116, %115 : vector<128x128xf32>
    %118 = arith.mulf %107, %117 : vector<128x128xf32>
    %c0_67 = arith.constant 0 : index
    %c0_68 = arith.constant 0 : index
    %c0_69 = arith.constant 0 : index
    %119 = vector.load %arg8[%c0_67, %c0_68, %c0_69] : memref<2x128x128xf32, #tpu.memory_space<vmem>>, vector<1x128x128xf32>
    %120 = vector.shape_cast %119 : vector<1x128x128xf32> to vector<128x128xf32>
    %121 = vector.shape_cast %118 : vector<128x128xf32> to vector<1x128x128xf32>
    tpu.vector_store %arg8[%c0_67, %c0_68, %c0_69], %121 {strides = array<i32>} : memref<2x128x128xf32, #tpu.memory_space<vmem>>, vector<1x128x128xf32>,
    %cst_70 = arith.constant dense<0.000000e+00> : vector<128xf32>
    %122 = vector.multi_reduction <add>, %118, %cst_70 [1] : vector<128x128xf32> to vector<128xf32>
    %123 = vector.shape_cast %122 : vector<128xf32> to vector<128x1xf32>
    %124 = arith.addf %96, %123 : vector<128x1xf32>
    %125 = arith.mulf %118, %118 : vector<128x128xf32>
    %cst_71 = arith.constant dense<0.000000e+00> : vector<128xf32>
    %126 = vector.multi_reduction <add>, %125, %cst_71 [1] : vector<128x128xf32> to vector<128xf32>
    %127 = vector.shape_cast %126 : vector<128xf32> to vector<128x1xf32>
    %128 = arith.addf %97, %127 : vector<128x1xf32>
    %c0_72 = arith.constant 0 : index
    %c128_73 = arith.constant 128 : index
    %129 = vector.load %arg12[%c0_72, %c128_73] : memref<128x256xf32, #tpu.memory_space<vmem>>, vector<128x128xf32>
    %130 = vector.broadcast %92 : vector<128x1xf32> to vector<128x128xf32>
    %131 = arith.mulf %129, %130 : vector<128x128xf32>
    %132 = vector.broadcast %95 : vector<128x1xf32> to vector<128x128xf32>
    %133 = arith.addf %131, %132 : vector<128x128xf32>
    %c1_74 = arith.constant 1 : index
    %c0_75 = arith.constant 0 : index
    %c0_76 = arith.constant 0 : index
    %134 = vector.load %arg1[%c1_74, %c0_75, %c0_76] : memref<2x128x128xf32, #tpu.memory_space<vmem>>, vector<1x128x128xf32>
    %135 = vector.shape_cast %134 : vector<1x128x128xf32> to vector<128x128xf32>
    %136 = arith.addf %133, %135 : vector<128x128xf32>
    %cst_77 = arith.constant 5.000000e-01 : f32
    %137 = vector.broadcast %cst_77 : f32 to vector<128x128xf32>
    %138 = arith.mulf %137, %136 : vector<128x128xf32>
    %cst_78 = arith.constant 4.471500e-02 : f32
    %139 = vector.broadcast %cst_78 : f32 to vector<128x128xf32>
    %140 = arith.mulf %139, %136 : vector<128x128xf32>
    %141 = arith.mulf %140, %136 : vector<128x128xf32>
    %142 = arith.mulf %141, %136 : vector<128x128xf32>
    %143 = arith.addf %136, %142 : vector<128x128xf32>
    %cst_79 = arith.constant 0.797884583 : f32
    %144 = vector.broadcast %cst_79 : f32 to vector<128x128xf32>
    %145 = arith.mulf %144, %143 : vector<128x128xf32>
    %146 = math.tanh %145 : vector<128x128xf32>
    %cst_80 = arith.constant 1.000000e+00 : f32
    %147 = vector.broadcast %cst_80 : f32 to vector<128x128xf32>
    %148 = arith.addf %147, %146 : vector<128x128xf32>
    %149 = arith.mulf %138, %148 : vector<128x128xf32>
    %c1_81 = arith.constant 1 : index
    %c0_82 = arith.constant 0 : index
    %c0_83 = arith.constant 0 : index
    %150 = vector.load %arg8[%c1_81, %c0_82, %c0_83] : memref<2x128x128xf32, #tpu.memory_space<vmem>>, vector<1x128x128xf32>
    %151 = vector.shape_cast %150 : vector<1x128x128xf32> to vector<128x128xf32>
    %152 = vector.shape_cast %149 : vector<128x128xf32> to vector<1x128x128xf32>
    tpu.vector_store %arg8[%c1_81, %c0_82, %c0_83], %152 {strides = array<i32>} : memref<2x128x128xf32, #tpu.memory_space<vmem>>, vector<1x128x128xf32>,
    %cst_84 = arith.constant dense<0.000000e+00> : vector<128xf32>
    %153 = vector.multi_reduction <add>, %149, %cst_84 [1] : vector<128x128xf32> to vector<128xf32>
    %154 = vector.shape_cast %153 : vector<128xf32> to vector<128x1xf32>
    %155 = arith.addf %124, %154 : vector<128x1xf32>
    %156 = arith.mulf %149, %149 : vector<128x128xf32>
    %cst_85 = arith.constant dense<0.000000e+00> : vector<128xf32>
    %157 = vector.multi_reduction <add>, %156, %cst_85 [1] : vector<128x128xf32> to vector<128xf32>
    %158 = vector.shape_cast %157 : vector<128xf32> to vector<128x1xf32>
    %159 = arith.addf %128, %158 : vector<128x1xf32>
    %cst_86 = arith.constant 3.906250e-03 : f32
    %160 = vector.broadcast %cst_86 : f32 to vector<128x1xf32>
    %161 = arith.mulf %155, %160 : vector<128x1xf32>
    %c0_87 = arith.constant 0 : index
    %c0_88 = arith.constant 0 : index
    %162 = vector.load %arg9[%c0_87, %c0_88] : memref<128x1xf32, #tpu.memory_space<vmem>>, vector<128x1xf32>
    tpu.vector_store %arg9[%c0_87, %c0_88], %161 {strides = array<i32>} : memref<128x1xf32, #tpu.memory_space<vmem>>, vector<128x1xf32>,
    %cst_89 = arith.constant 3.906250e-03 : f32
    %163 = vector.broadcast %cst_89 : f32 to vector<128x1xf32>
    %164 = arith.mulf %159, %163 : vector<128x1xf32>
    %165 = arith.mulf %161, %161 : vector<128x1xf32>
    %166 = arith.subf %164, %165 : vector<128x1xf32>
    %c0_90 = arith.constant 0 : index
    %c0_91 = arith.constant 0 : index
    %167 = vector.load %arg10[%c0_90, %c0_91] : memref<128x1xf32, #tpu.memory_space<vmem>>, vector<128x1xf32>
    tpu.vector_store %arg10[%c0_90, %c0_91], %166 {strides = array<i32>} : memref<128x1xf32, #tpu.memory_space<vmem>>, vector<128x1xf32>,
    return
  }
  func.func @transform_0(%arg0: i32) -> (i32, i32, i32) {
    %c0_i32 = arith.constant 0 : i32
    %c0_i32_0 = arith.constant 0 : i32
    %c0_i32_1 = arith.constant 0 : i32
    %c0_i32_2 = arith.constant 0 : i32
    return %c0_i32, %c0_i32_0, %c0_i32_1 : i32, i32, i32
  }
  func.func @transform_1(%arg0: i32) -> (i32, i32) {
    %c0_i32 = arith.constant 0 : i32
    %c0_i32_0 = arith.constant 0 : i32
    %c0_i32_1 = arith.constant 0 : i32
    return %c0_i32, %c0_i32_0 : i32, i32
  }
  func.func @transform_2(%arg0: i32) -> (i32, i32) {
    %c0_i32 = arith.constant 0 : i32
    %c0_i32_0 = arith.constant 0 : i32
    %c0_i32_1 = arith.constant 0 : i32
    return %c0_i32, %c0_i32_0 : i32, i32
  }
  func.func @transform_3(%arg0: i32) -> (i32, i32) {
    %c0_i32 = arith.constant 0 : i32
    %c0_i32_0 = arith.constant 0 : i32
    %c0_i32_1 = arith.constant 0 : i32
    return %c0_i32, %c0_i32_0 : i32, i32
  }
  func.func @transform_4(%arg0: i32) -> (i32, i32) {
    %c0_i32 = arith.constant 0 : i32
    %c0_i32_0 = arith.constant 0 : i32
    %c0_i32_1 = arith.constant 0 : i32
    return %c0_i32, %c0_i32_0 : i32, i32
  }
  func.func @transform_5(%arg0: i32) -> (i32, i32) {
    %c0_i32 = arith.constant 0 : i32
    %c0_i32_0 = arith.constant 0 : i32
    %c0_i32_1 = arith.constant 0 : i32
    return %c0_i32, %c0_i32_0 : i32, i32
  }
  func.func @transform_6(%arg0: i32) -> (i32, i32) {
    %c0_i32 = arith.constant 0 : i32
    %c0_i32_0 = arith.constant 0 : i32
    %c0_i32_1 = arith.constant 0 : i32
    return %c0_i32, %c0_i32_0 : i32, i32
  }
  func.func @transform_7(%arg0: i32) -> (i32, i32, i32) {
    %c0_i32 = arith.constant 0 : i32
    %c0_i32_0 = arith.constant 0 : i32
    %c0_i32_1 = arith.constant 0 : i32
    %c0_i32_2 = arith.constant 0 : i32
    return %c0_i32, %c0_i32_0, %c0_i32_1 : i32, i32, i32
  }
  func.func @transform_8(%arg0: i32) -> (i32, i32) {
    %c0_i32 = arith.constant 0 : i32
    %c0_i32_0 = arith.constant 0 : i32
    %c0_i32_1 = arith.constant 0 : i32
    return %c0_i32, %c0_i32_0 : i32, i32
  }
  func.func @transform_9(%arg0: i32) -> (i32, i32) {
    %c0_i32 = arith.constant 0 : i32
    %c0_i32_0 = arith.constant 0 : i32
    %c0_i32_1 = arith.constant 0 : i32
    return %c0_i32, %c0_i32_0 : i32, i32
  }
}

module attributes {stable_mosaic.version = 11 : i64} {
  func.func @_attention_kernel(%arg0: i32, %arg1: i32, %arg2: memref<1x128x128xf32, #tpu.memory_space<vmem>>, %arg3: memref<768x128xbf16, #tpu.memory_space<vmem>>, %arg4: memref<768x1xf32, #tpu.memory_space<vmem>>, %arg5: memref<4x128x64xbf16, #tpu.memory_space<vmem>>, %arg6: memref<128x1xf32, #tpu.memory_space<vmem>>, %arg7: memref<1x128x128xf32, #tpu.memory_space<vmem>>, %arg8: memref<1x128x1xf32, #tpu.memory_space<vmem>>, %arg9: memref<1x128x1xf32, #tpu.memory_space<vmem>>, %arg10: memref<768x128xbf16, #tpu.memory_space<vmem>>, %arg11: memref<128x128xf32, #tpu.memory_space<vmem>>) attributes {dimension_semantics = [#tpu.dimension_semantics<parallel>, #tpu.dimension_semantics<arbitrary>], iteration_bounds = array<i64: 2, 1>, scalar_prefetch = 0 : i64, scratch_operands = 2 : i64, tpu.core_type = #tpu.core_type<tc>, window_params = [{transform_indices = @transform_0, window_bounds = array<i64: 1, 128, 128>}, {pipeline_mode = #tpu.pipeline_mode<synchronous>, transform_indices = @transform_1, window_bounds = array<i64: 768, 128>}, {pipeline_mode = #tpu.pipeline_mode<synchronous>, transform_indices = @transform_2, window_bounds = array<i64: 768, 1>}, {pipeline_mode = #tpu.pipeline_mode<synchronous>, transform_indices = @transform_3, window_bounds = array<i64: 4, 128, 64>}, {pipeline_mode = #tpu.pipeline_mode<synchronous>, transform_indices = @transform_4, window_bounds = array<i64: 128, 1>}, {transform_indices = @transform_5, window_bounds = array<i64: 1, 128, 128>}, {transform_indices = @transform_6, window_bounds = array<i64: 1, 128, 1>}, {transform_indices = @transform_7, window_bounds = array<i64: 1, 128, 1>}]} {
    %c0_i32 = arith.constant 0 : i32
    %0 = arith.cmpi eq, %arg1, %c0_i32 : i32
    %1 = arith.extui %0 : i1 to i32
    %c0_i32_0 = arith.constant 0 : i32
    %2 = arith.cmpi ne, %1, %c0_i32_0 : i32
    scf.if %2 {
      %c0_76 = arith.constant 0 : index
      %c0_77 = arith.constant 0 : index
      %130 = vector.load %arg3[%c0_76, %c0_77] : memref<768x128xbf16, #tpu.memory_space<vmem>>, vector<768x128xbf16>
      %c0_78 = arith.constant 0 : index
      %c0_79 = arith.constant 0 : index
      %c0_80 = arith.constant 0 : index
      %131 = vector.load %arg2[%c0_78, %c0_79, %c0_80] : memref<1x128x128xf32, #tpu.memory_space<vmem>>, vector<1x128x128xf32>
      %132 = vector.shape_cast %131 : vector<1x128x128xf32> to vector<128x128xf32>
      %133 = arith.truncf %132 : vector<128x128xf32> to vector<128x128xbf16>
      %cst_81 = arith.constant dense<0.000000e+00> : vector<768x128xf32>
      %134 = tpu.matmul %130, %133, %cst_81 {dimension_numbers = #tpu.dot_dimension_numbers<[1], [0], [0], [1], [0, 0, 1, 1], [], []>} : vector<768x128xbf16>, vector<128x128xbf16>, vector<768x128xf32> -> vector<768x128xf32>
      %c0_82 = arith.constant 0 : index
      %c0_83 = arith.constant 0 : index
      %135 = vector.load %arg4[%c0_82, %c0_83] : memref<768x1xf32, #tpu.memory_space<vmem>>, vector<768x1xf32>
      %136 = vector.broadcast %135 : vector<768x1xf32> to vector<768x128xf32>
      %137 = arith.addf %134, %136 : vector<768x128xf32>
      %138 = arith.truncf %137 : vector<768x128xf32> to vector<768x128xbf16>
      %c0_84 = arith.constant 0 : index
      %c0_85 = arith.constant 0 : index
      %139 = vector.load %arg10[%c0_84, %c0_85] : memref<768x128xbf16, #tpu.memory_space<vmem>>, vector<768x128xbf16>
      tpu.vector_store %arg10[%c0_84, %c0_85], %138 {strides = array<i32>} : memref<768x128xbf16, #tpu.memory_space<vmem>>, vector<768x128xbf16>,
    } else {
    }
    %c128_i32 = arith.constant 128 : i32
    %3 = arith.muli %arg1, %c128_i32 : i32
    %4 = tpu.assume_multiple %3, 128 : i32
    %c0 = arith.constant 0 : index
    %5 = arith.index_cast %4 : i32 to index
    %6 = vector.load %arg10[%c0, %5] : memref<768x128xbf16, #tpu.memory_space<vmem>>, vector<64x128xbf16>
    %c256 = arith.constant 256 : index
    %c0_1 = arith.constant 0 : index
    %7 = vector.load %arg10[%c256, %c0_1] : memref<768x128xbf16, #tpu.memory_space<vmem>>, vector<64x128xbf16>
    %c512 = arith.constant 512 : index
    %c0_2 = arith.constant 0 : index
    %8 = vector.load %arg10[%c512, %c0_2] : memref<768x128xbf16, #tpu.memory_space<vmem>>, vector<64x128xbf16>
    %cst = arith.constant dense<0.000000e+00> : vector<128x128xf32>
    %9 = tpu.matmul %6, %7, %cst {dimension_numbers = #tpu.dot_dimension_numbers<[0], [0], [1], [1], [0, 1, 1, 1], [], []>} : vector<64x128xbf16>, vector<64x128xbf16>, vector<128x128xf32> -> vector<128x128xf32>
    %cst_3 = arith.constant dense<0xFF800000> : vector<128xf32>
    %10 = vector.multi_reduction <maximumf>, %9, %cst_3 [1] : vector<128x128xf32> to vector<128xf32>
    %11 = vector.shape_cast %10 : vector<128xf32> to vector<128x1xf32>
    %12 = vector.broadcast %11 : vector<128x1xf32> to vector<128x128xf32>
    %13 = arith.subf %9, %12 : vector<128x128xf32>
    %14 = math.exp %13 : vector<128x128xf32>
    %cst_4 = arith.constant dense<0.000000e+00> : vector<128xf32>
    %15 = vector.multi_reduction <add>, %14, %cst_4 [1] : vector<128x128xf32> to vector<128xf32>
    %16 = vector.shape_cast %15 : vector<128xf32> to vector<128x1xf32>
    %17 = arith.truncf %14 : vector<128x128xf32> to vector<128x128xbf16>
    %cst_5 = arith.constant dense<0.000000e+00> : vector<128x64xf32>
    %18 = tpu.matmul %17, %8, %cst_5 {dimension_numbers = #tpu.dot_dimension_numbers<[1], [1], [0], [0], [0, 0, 1, 0], [], []>} : vector<128x128xbf16>, vector<64x128xbf16>, vector<128x64xf32> -> vector<128x64xf32>
    %19 = tpu.reciprocal %16 {approx = true} : vector<128x1xf32> -> vector<128x1xf32>
    %20 = vector.broadcast %19 : vector<128x1xf32> to vector<128x64xf32>
    %21 = arith.mulf %18, %20 : vector<128x64xf32>
    %c0_6 = arith.constant 0 : index
    %c0_7 = arith.constant 0 : index
    %c0_8 = arith.constant 0 : index
    %22 = vector.load %arg5[%c0_6, %c0_7, %c0_8] : memref<4x128x64xbf16, #tpu.memory_space<vmem>>, vector<1x128x64xbf16>
    %23 = vector.shape_cast %22 : vector<1x128x64xbf16> to vector<128x64xbf16>
    %24 = arith.truncf %21 : vector<128x64xf32> to vector<128x64xbf16>
    %cst_9 = arith.constant dense<0.000000e+00> : vector<128x128xf32>
    %25 = tpu.matmul %23, %24, %cst_9 {dimension_numbers = #tpu.dot_dimension_numbers<[1], [1], [0], [0], [0, 0, 1, 0], [], []>} : vector<128x64xbf16>, vector<128x64xbf16>, vector<128x128xf32> -> vector<128x128xf32>
    %c0_10 = arith.constant 0 : index
    %c0_11 = arith.constant 0 : index
    %26 = vector.load %arg11[%c0_10, %c0_11] : memref<128x128xf32, #tpu.memory_space<vmem>>, vector<128x128xf32>
    tpu.vector_store %arg11[%c0_10, %c0_11], %25 {strides = array<i32>} : memref<128x128xf32, #tpu.memory_space<vmem>>, vector<128x128xf32>,
    %c64 = arith.constant 64 : index
    %27 = arith.index_cast %4 : i32 to index
    %28 = vector.load %arg10[%c64, %27] : memref<768x128xbf16, #tpu.memory_space<vmem>>, vector<64x128xbf16>
    %c320 = arith.constant 320 : index
    %c0_12 = arith.constant 0 : index
    %29 = vector.load %arg10[%c320, %c0_12] : memref<768x128xbf16, #tpu.memory_space<vmem>>, vector<64x128xbf16>
    %c576 = arith.constant 576 : index
    %c0_13 = arith.constant 0 : index
    %30 = vector.load %arg10[%c576, %c0_13] : memref<768x128xbf16, #tpu.memory_space<vmem>>, vector<64x128xbf16>
    %cst_14 = arith.constant dense<0.000000e+00> : vector<128x128xf32>
    %31 = tpu.matmul %28, %29, %cst_14 {dimension_numbers = #tpu.dot_dimension_numbers<[0], [0], [1], [1], [0, 1, 1, 1], [], []>} : vector<64x128xbf16>, vector<64x128xbf16>, vector<128x128xf32> -> vector<128x128xf32>
    %cst_15 = arith.constant dense<0xFF800000> : vector<128xf32>
    %32 = vector.multi_reduction <maximumf>, %31, %cst_15 [1] : vector<128x128xf32> to vector<128xf32>
    %33 = vector.shape_cast %32 : vector<128xf32> to vector<128x1xf32>
    %34 = vector.broadcast %33 : vector<128x1xf32> to vector<128x128xf32>
    %35 = arith.subf %31, %34 : vector<128x128xf32>
    %36 = math.exp %35 : vector<128x128xf32>
    %cst_16 = arith.constant dense<0.000000e+00> : vector<128xf32>
    %37 = vector.multi_reduction <add>, %36, %cst_16 [1] : vector<128x128xf32> to vector<128xf32>
    %38 = vector.shape_cast %37 : vector<128xf32> to vector<128x1xf32>
    %39 = arith.truncf %36 : vector<128x128xf32> to vector<128x128xbf16>
    %cst_17 = arith.constant dense<0.000000e+00> : vector<128x64xf32>
    %40 = tpu.matmul %39, %30, %cst_17 {dimension_numbers = #tpu.dot_dimension_numbers<[1], [1], [0], [0], [0, 0, 1, 0], [], []>} : vector<128x128xbf16>, vector<64x128xbf16>, vector<128x64xf32> -> vector<128x64xf32>
    %41 = tpu.reciprocal %38 {approx = true} : vector<128x1xf32> -> vector<128x1xf32>
    %42 = vector.broadcast %41 : vector<128x1xf32> to vector<128x64xf32>
    %43 = arith.mulf %40, %42 : vector<128x64xf32>
    %c1 = arith.constant 1 : index
    %c0_18 = arith.constant 0 : index
    %c0_19 = arith.constant 0 : index
    %44 = vector.load %arg5[%c1, %c0_18, %c0_19] : memref<4x128x64xbf16, #tpu.memory_space<vmem>>, vector<1x128x64xbf16>
    %45 = vector.shape_cast %44 : vector<1x128x64xbf16> to vector<128x64xbf16>
    %46 = arith.truncf %43 : vector<128x64xf32> to vector<128x64xbf16>
    %cst_20 = arith.constant dense<0.000000e+00> : vector<128x128xf32>
    %47 = tpu.matmul %45, %46, %cst_20 {dimension_numbers = #tpu.dot_dimension_numbers<[1], [1], [0], [0], [0, 0, 1, 0], [], []>} : vector<128x64xbf16>, vector<128x64xbf16>, vector<128x128xf32> -> vector<128x128xf32>
    %c0_21 = arith.constant 0 : index
    %c0_22 = arith.constant 0 : index
    %48 = vector.load %arg11[%c0_21, %c0_22] : memref<128x128xf32, #tpu.memory_space<vmem>>, vector<128x128xf32>
    %49 = arith.addf %48, %47 : vector<128x128xf32>
    %c0_23 = arith.constant 0 : index
    %c0_24 = arith.constant 0 : index
    %50 = vector.load %arg11[%c0_23, %c0_24] : memref<128x128xf32, #tpu.memory_space<vmem>>, vector<128x128xf32>
    tpu.vector_store %arg11[%c0_23, %c0_24], %49 {strides = array<i32>} : memref<128x128xf32, #tpu.memory_space<vmem>>, vector<128x128xf32>,
    %c128 = arith.constant 128 : index
    %51 = arith.index_cast %4 : i32 to index
    %52 = vector.load %arg10[%c128, %51] : memref<768x128xbf16, #tpu.memory_space<vmem>>, vector<64x128xbf16>
    %c384 = arith.constant 384 : index
    %c0_25 = arith.constant 0 : index
    %53 = vector.load %arg10[%c384, %c0_25] : memref<768x128xbf16, #tpu.memory_space<vmem>>, vector<64x128xbf16>
    %c640 = arith.constant 640 : index
    %c0_26 = arith.constant 0 : index
    %54 = vector.load %arg10[%c640, %c0_26] : memref<768x128xbf16, #tpu.memory_space<vmem>>, vector<64x128xbf16>
    %cst_27 = arith.constant dense<0.000000e+00> : vector<128x128xf32>
    %55 = tpu.matmul %52, %53, %cst_27 {dimension_numbers = #tpu.dot_dimension_numbers<[0], [0], [1], [1], [0, 1, 1, 1], [], []>} : vector<64x128xbf16>, vector<64x128xbf16>, vector<128x128xf32> -> vector<128x128xf32>
    %cst_28 = arith.constant dense<0xFF800000> : vector<128xf32>
    %56 = vector.multi_reduction <maximumf>, %55, %cst_28 [1] : vector<128x128xf32> to vector<128xf32>
    %57 = vector.shape_cast %56 : vector<128xf32> to vector<128x1xf32>
    %58 = vector.broadcast %57 : vector<128x1xf32> to vector<128x128xf32>
    %59 = arith.subf %55, %58 : vector<128x128xf32>
    %60 = math.exp %59 : vector<128x128xf32>
    %cst_29 = arith.constant dense<0.000000e+00> : vector<128xf32>
    %61 = vector.multi_reduction <add>, %60, %cst_29 [1] : vector<128x128xf32> to vector<128xf32>
    %62 = vector.shape_cast %61 : vector<128xf32> to vector<128x1xf32>
    %63 = arith.truncf %60 : vector<128x128xf32> to vector<128x128xbf16>
    %cst_30 = arith.constant dense<0.000000e+00> : vector<128x64xf32>
    %64 = tpu.matmul %63, %54, %cst_30 {dimension_numbers = #tpu.dot_dimension_numbers<[1], [1], [0], [0], [0, 0, 1, 0], [], []>} : vector<128x128xbf16>, vector<64x128xbf16>, vector<128x64xf32> -> vector<128x64xf32>
    %65 = tpu.reciprocal %62 {approx = true} : vector<128x1xf32> -> vector<128x1xf32>
    %66 = vector.broadcast %65 : vector<128x1xf32> to vector<128x64xf32>
    %67 = arith.mulf %64, %66 : vector<128x64xf32>
    %c2 = arith.constant 2 : index
    %c0_31 = arith.constant 0 : index
    %c0_32 = arith.constant 0 : index
    %68 = vector.load %arg5[%c2, %c0_31, %c0_32] : memref<4x128x64xbf16, #tpu.memory_space<vmem>>, vector<1x128x64xbf16>
    %69 = vector.shape_cast %68 : vector<1x128x64xbf16> to vector<128x64xbf16>
    %70 = arith.truncf %67 : vector<128x64xf32> to vector<128x64xbf16>
    %cst_33 = arith.constant dense<0.000000e+00> : vector<128x128xf32>
    %71 = tpu.matmul %69, %70, %cst_33 {dimension_numbers = #tpu.dot_dimension_numbers<[1], [1], [0], [0], [0, 0, 1, 0], [], []>} : vector<128x64xbf16>, vector<128x64xbf16>, vector<128x128xf32> -> vector<128x128xf32>
    %c0_34 = arith.constant 0 : index
    %c0_35 = arith.constant 0 : index
    %72 = vector.load %arg11[%c0_34, %c0_35] : memref<128x128xf32, #tpu.memory_space<vmem>>, vector<128x128xf32>
    %73 = arith.addf %72, %71 : vector<128x128xf32>
    %c0_36 = arith.constant 0 : index
    %c0_37 = arith.constant 0 : index
    %74 = vector.load %arg11[%c0_36, %c0_37] : memref<128x128xf32, #tpu.memory_space<vmem>>, vector<128x128xf32>
    tpu.vector_store %arg11[%c0_36, %c0_37], %73 {strides = array<i32>} : memref<128x128xf32, #tpu.memory_space<vmem>>, vector<128x128xf32>,
    %c192 = arith.constant 192 : index
    %75 = arith.index_cast %4 : i32 to index
    %76 = vector.load %arg10[%c192, %75] : memref<768x128xbf16, #tpu.memory_space<vmem>>, vector<64x128xbf16>
    %c448 = arith.constant 448 : index
    %c0_38 = arith.constant 0 : index
    %77 = vector.load %arg10[%c448, %c0_38] : memref<768x128xbf16, #tpu.memory_space<vmem>>, vector<64x128xbf16>
    %c704 = arith.constant 704 : index
    %c0_39 = arith.constant 0 : index
    %78 = vector.load %arg10[%c704, %c0_39] : memref<768x128xbf16, #tpu.memory_space<vmem>>, vector<64x128xbf16>
    %cst_40 = arith.constant dense<0.000000e+00> : vector<128x128xf32>
    %79 = tpu.matmul %76, %77, %cst_40 {dimension_numbers = #tpu.dot_dimension_numbers<[0], [0], [1], [1], [0, 1, 1, 1], [], []>} : vector<64x128xbf16>, vector<64x128xbf16>, vector<128x128xf32> -> vector<128x128xf32>
    %cst_41 = arith.constant dense<0xFF800000> : vector<128xf32>
    %80 = vector.multi_reduction <maximumf>, %79, %cst_41 [1] : vector<128x128xf32> to vector<128xf32>
    %81 = vector.shape_cast %80 : vector<128xf32> to vector<128x1xf32>
    %82 = vector.broadcast %81 : vector<128x1xf32> to vector<128x128xf32>
    %83 = arith.subf %79, %82 : vector<128x128xf32>
    %84 = math.exp %83 : vector<128x128xf32>
    %cst_42 = arith.constant dense<0.000000e+00> : vector<128xf32>
    %85 = vector.multi_reduction <add>, %84, %cst_42 [1] : vector<128x128xf32> to vector<128xf32>
    %86 = vector.shape_cast %85 : vector<128xf32> to vector<128x1xf32>
    %87 = arith.truncf %84 : vector<128x128xf32> to vector<128x128xbf16>
    %cst_43 = arith.constant dense<0.000000e+00> : vector<128x64xf32>
    %88 = tpu.matmul %87, %78, %cst_43 {dimension_numbers = #tpu.dot_dimension_numbers<[1], [1], [0], [0], [0, 0, 1, 0], [], []>} : vector<128x128xbf16>, vector<64x128xbf16>, vector<128x64xf32> -> vector<128x64xf32>
    %89 = tpu.reciprocal %86 {approx = true} : vector<128x1xf32> -> vector<128x1xf32>
    %90 = vector.broadcast %89 : vector<128x1xf32> to vector<128x64xf32>
    %91 = arith.mulf %88, %90 : vector<128x64xf32>
    %c3 = arith.constant 3 : index
    %c0_44 = arith.constant 0 : index
    %c0_45 = arith.constant 0 : index
    %92 = vector.load %arg5[%c3, %c0_44, %c0_45] : memref<4x128x64xbf16, #tpu.memory_space<vmem>>, vector<1x128x64xbf16>
    %93 = vector.shape_cast %92 : vector<1x128x64xbf16> to vector<128x64xbf16>
    %94 = arith.truncf %91 : vector<128x64xf32> to vector<128x64xbf16>
    %cst_46 = arith.constant dense<0.000000e+00> : vector<128x128xf32>
    %95 = tpu.matmul %93, %94, %cst_46 {dimension_numbers = #tpu.dot_dimension_numbers<[1], [1], [0], [0], [0, 0, 1, 0], [], []>} : vector<128x64xbf16>, vector<128x64xbf16>, vector<128x128xf32> -> vector<128x128xf32>
    %c0_47 = arith.constant 0 : index
    %c0_48 = arith.constant 0 : index
    %96 = vector.load %arg11[%c0_47, %c0_48] : memref<128x128xf32, #tpu.memory_space<vmem>>, vector<128x128xf32>
    %97 = arith.addf %96, %95 : vector<128x128xf32>
    %c0_49 = arith.constant 0 : index
    %c0_50 = arith.constant 0 : index
    %98 = vector.load %arg11[%c0_49, %c0_50] : memref<128x128xf32, #tpu.memory_space<vmem>>, vector<128x128xf32>
    tpu.vector_store %arg11[%c0_49, %c0_50], %97 {strides = array<i32>} : memref<128x128xf32, #tpu.memory_space<vmem>>, vector<128x128xf32>,
    %c0_51 = arith.constant 0 : index
    %c0_52 = arith.constant 0 : index
    %99 = vector.load %arg11[%c0_51, %c0_52] : memref<128x128xf32, #tpu.memory_space<vmem>>, vector<128x128xf32>
    %c0_53 = arith.constant 0 : index
    %c0_54 = arith.constant 0 : index
    %100 = vector.load %arg6[%c0_53, %c0_54] : memref<128x1xf32, #tpu.memory_space<vmem>>, vector<128x1xf32>
    %101 = vector.broadcast %100 : vector<128x1xf32> to vector<128x128xf32>
    %102 = arith.addf %99, %101 : vector<128x128xf32>
    %c0_55 = arith.constant 0 : index
    %c0_56 = arith.constant 0 : index
    %103 = arith.index_cast %4 : i32 to index
    %104 = vector.load %arg2[%c0_55, %c0_56, %103] : memref<1x128x128xf32, #tpu.memory_space<vmem>>, vector<1x128x128xf32>
    %105 = vector.shape_cast %104 : vector<1x128x128xf32> to vector<128x128xf32>
    %106 = arith.addf %102, %105 : vector<128x128xf32>
    %c0_57 = arith.constant 0 : index
    %c0_58 = arith.constant 0 : index
    %c0_59 = arith.constant 0 : index
    %107 = vector.load %arg7[%c0_57, %c0_58, %c0_59] : memref<1x128x128xf32, #tpu.memory_space<vmem>>, vector<1x128x128xf32>
    %108 = vector.shape_cast %107 : vector<1x128x128xf32> to vector<128x128xf32>
    %109 = vector.shape_cast %106 : vector<128x128xf32> to vector<1x128x128xf32>
    tpu.vector_store %arg7[%c0_57, %c0_58, %c0_59], %109 {strides = array<i32>} : memref<1x128x128xf32, #tpu.memory_space<vmem>>, vector<1x128x128xf32>,
    %c0_i32_60 = arith.constant 0 : i32
    %110 = arith.cmpi eq, %arg1, %c0_i32_60 : i32
    %111 = arith.extui %110 : i1 to i32
    %c0_i32_61 = arith.constant 0 : i32
    %112 = arith.cmpi ne, %111, %c0_i32_61 : i32
    scf.if %112 {
      %cst_76 = arith.constant 0.000000e+00 : f32
      %130 = vector.broadcast %cst_76 : f32 to vector<128x1xf32>
      %c0_77 = arith.constant 0 : index
      %c0_78 = arith.constant 0 : index
      %c0_79 = arith.constant 0 : index
      %131 = vector.load %arg8[%c0_77, %c0_78, %c0_79] : memref<1x128x1xf32, #tpu.memory_space<vmem>>, vector<1x128x1xf32>
      %132 = vector.shape_cast %131 : vector<1x128x1xf32> to vector<128x1xf32>
      %133 = vector.shape_cast %130 : vector<128x1xf32> to vector<1x128x1xf32>
      tpu.vector_store %arg8[%c0_77, %c0_78, %c0_79], %133 {strides = array<i32>} : memref<1x128x1xf32, #tpu.memory_space<vmem>>, vector<1x128x1xf32>,
      %cst_80 = arith.constant 0.000000e+00 : f32
      %134 = vector.broadcast %cst_80 : f32 to vector<128x1xf32>
      %c0_81 = arith.constant 0 : index
      %c0_82 = arith.constant 0 : index
      %c0_83 = arith.constant 0 : index
      %135 = vector.load %arg9[%c0_81, %c0_82, %c0_83] : memref<1x128x1xf32, #tpu.memory_space<vmem>>, vector<1x128x1xf32>
      %136 = vector.shape_cast %135 : vector<1x128x1xf32> to vector<128x1xf32>
      %137 = vector.shape_cast %134 : vector<128x1xf32> to vector<1x128x1xf32>
      tpu.vector_store %arg9[%c0_81, %c0_82, %c0_83], %137 {strides = array<i32>} : memref<1x128x1xf32, #tpu.memory_space<vmem>>, vector<1x128x1xf32>,
    } else {
    }
    %c0_62 = arith.constant 0 : index
    %c0_63 = arith.constant 0 : index
    %c0_64 = arith.constant 0 : index
    %113 = vector.load %arg8[%c0_62, %c0_63, %c0_64] : memref<1x128x1xf32, #tpu.memory_space<vmem>>, vector<1x128x1xf32>
    %114 = vector.shape_cast %113 : vector<1x128x1xf32> to vector<128x1xf32>
    %cst_65 = arith.constant dense<0.000000e+00> : vector<128xf32>
    %115 = vector.multi_reduction <add>, %106, %cst_65 [1] : vector<128x128xf32> to vector<128xf32>
    %116 = vector.shape_cast %115 : vector<128xf32> to vector<128x1xf32>
    %117 = arith.addf %114, %116 : vector<128x1xf32>
    %c0_66 = arith.constant 0 : index
    %c0_67 = arith.constant 0 : index
    %c0_68 = arith.constant 0 : index
    %118 = vector.load %arg8[%c0_66, %c0_67, %c0_68] : memref<1x128x1xf32, #tpu.memory_space<vmem>>, vector<1x128x1xf32>
    %119 = vector.shape_cast %118 : vector<1x128x1xf32> to vector<128x1xf32>
    %120 = vector.shape_cast %117 : vector<128x1xf32> to vector<1x128x1xf32>
    tpu.vector_store %arg8[%c0_66, %c0_67, %c0_68], %120 {strides = array<i32>} : memref<1x128x1xf32, #tpu.memory_space<vmem>>, vector<1x128x1xf32>,
    %c0_69 = arith.constant 0 : index
    %c0_70 = arith.constant 0 : index
    %c0_71 = arith.constant 0 : index
    %121 = vector.load %arg9[%c0_69, %c0_70, %c0_71] : memref<1x128x1xf32, #tpu.memory_space<vmem>>, vector<1x128x1xf32>
    %122 = vector.shape_cast %121 : vector<1x128x1xf32> to vector<128x1xf32>
    %123 = arith.mulf %106, %106 : vector<128x128xf32>
    %cst_72 = arith.constant dense<0.000000e+00> : vector<128xf32>
    %124 = vector.multi_reduction <add>, %123, %cst_72 [1] : vector<128x128xf32> to vector<128xf32>
    %125 = vector.shape_cast %124 : vector<128xf32> to vector<128x1xf32>
    %126 = arith.addf %122, %125 : vector<128x1xf32>
    %c0_73 = arith.constant 0 : index
    %c0_74 = arith.constant 0 : index
    %c0_75 = arith.constant 0 : index
    %127 = vector.load %arg9[%c0_73, %c0_74, %c0_75] : memref<1x128x1xf32, #tpu.memory_space<vmem>>, vector<1x128x1xf32>
    %128 = vector.shape_cast %127 : vector<1x128x1xf32> to vector<128x1xf32>
    %129 = vector.shape_cast %126 : vector<128x1xf32> to vector<1x128x1xf32>
    tpu.vector_store %arg9[%c0_73, %c0_74, %c0_75], %129 {strides = array<i32>} : memref<1x128x1xf32, #tpu.memory_space<vmem>>, vector<1x128x1xf32>,
    return
  }
  func.func @transform_0(%arg0: i32, %arg1: i32) -> (i32, i32, i32) {
    %c0_i32 = arith.constant 0 : i32
    %c0_i32_0 = arith.constant 0 : i32
    %c0_i32_1 = arith.constant 0 : i32
    return %arg0, %c0_i32, %c0_i32_0 : i32, i32, i32
  }
  func.func @transform_1(%arg0: i32, %arg1: i32) -> (i32, i32) {
    %c0_i32 = arith.constant 0 : i32
    %c0_i32_0 = arith.constant 0 : i32
    %c0_i32_1 = arith.constant 0 : i32
    return %c0_i32, %c0_i32_0 : i32, i32
  }
  func.func @transform_2(%arg0: i32, %arg1: i32) -> (i32, i32) {
    %c0_i32 = arith.constant 0 : i32
    %c0_i32_0 = arith.constant 0 : i32
    %c0_i32_1 = arith.constant 0 : i32
    return %c0_i32, %c0_i32_0 : i32, i32
  }
  func.func @transform_3(%arg0: i32, %arg1: i32) -> (i32, i32, i32) {
    %c0_i32 = arith.constant 0 : i32
    %c0_i32_0 = arith.constant 0 : i32
    %c0_i32_1 = arith.constant 0 : i32
    %c0_i32_2 = arith.constant 0 : i32
    return %c0_i32, %c0_i32_0, %c0_i32_1 : i32, i32, i32
  }
  func.func @transform_4(%arg0: i32, %arg1: i32) -> (i32, i32) {
    %c0_i32 = arith.constant 0 : i32
    %c0_i32_0 = arith.constant 0 : i32
    %c0_i32_1 = arith.constant 0 : i32
    return %c0_i32, %c0_i32_0 : i32, i32
  }
  func.func @transform_5(%arg0: i32, %arg1: i32) -> (i32, i32, i32) {
    %c0_i32 = arith.constant 0 : i32
    %c0_i32_0 = arith.constant 0 : i32
    return %arg0, %c0_i32, %arg1 : i32, i32, i32
  }
  func.func @transform_6(%arg0: i32, %arg1: i32) -> (i32, i32, i32) {
    %c0_i32 = arith.constant 0 : i32
    %c0_i32_0 = arith.constant 0 : i32
    %c0_i32_1 = arith.constant 0 : i32
    return %arg0, %c0_i32, %c0_i32_0 : i32, i32, i32
  }
  func.func @transform_7(%arg0: i32, %arg1: i32) -> (i32, i32, i32) {
    %c0_i32 = arith.constant 0 : i32
    %c0_i32_0 = arith.constant 0 : i32
    %c0_i32_1 = arith.constant 0 : i32
    return %arg0, %c0_i32, %c0_i32_0 : i32, i32, i32
  }
}

module attributes {stable_mosaic.version = 11 : i64} {
  func.func @_ffn_kernel(%arg0: i32, %arg1: memref<1x128x128xf32, #tpu.memory_space<vmem>>, %arg2: memref<256x128xbf16, #tpu.memory_space<vmem>>, %arg3: memref<256x1xf32, #tpu.memory_space<vmem>>, %arg4: memref<128x256xbf16, #tpu.memory_space<vmem>>, %arg5: memref<1x128x128xf32, #tpu.memory_space<vmem>>) attributes {dimension_semantics = [#tpu.dimension_semantics<parallel>], iteration_bounds = array<i64: 2>, scalar_prefetch = 0 : i64, scratch_operands = 0 : i64, tpu.core_type = #tpu.core_type<tc>, window_params = [{transform_indices = @transform_0, window_bounds = array<i64: 1, 128, 128>}, {pipeline_mode = #tpu.pipeline_mode<synchronous>, transform_indices = @transform_1, window_bounds = array<i64: 256, 128>}, {pipeline_mode = #tpu.pipeline_mode<synchronous>, transform_indices = @transform_2, window_bounds = array<i64: 256, 1>}, {pipeline_mode = #tpu.pipeline_mode<synchronous>, transform_indices = @transform_3, window_bounds = array<i64: 128, 256>}, {transform_indices = @transform_4, window_bounds = array<i64: 1, 128, 128>}]} {
    %c0 = arith.constant 0 : index
    %c0_0 = arith.constant 0 : index
    %0 = vector.load %arg2[%c0, %c0_0] : memref<256x128xbf16, #tpu.memory_space<vmem>>, vector<256x128xbf16>
    %c0_1 = arith.constant 0 : index
    %c0_2 = arith.constant 0 : index
    %c0_3 = arith.constant 0 : index
    %1 = vector.load %arg1[%c0_1, %c0_2, %c0_3] : memref<1x128x128xf32, #tpu.memory_space<vmem>>, vector<1x128x128xf32>
    %2 = vector.shape_cast %1 : vector<1x128x128xf32> to vector<128x128xf32>
    %3 = arith.truncf %2 : vector<128x128xf32> to vector<128x128xbf16>
    %cst = arith.constant dense<0.000000e+00> : vector<256x128xf32>
    %4 = tpu.matmul %0, %3, %cst {dimension_numbers = #tpu.dot_dimension_numbers<[1], [0], [0], [1], [0, 0, 1, 1], [], []>} : vector<256x128xbf16>, vector<128x128xbf16>, vector<256x128xf32> -> vector<256x128xf32>
    %c0_4 = arith.constant 0 : index
    %c0_5 = arith.constant 0 : index
    %5 = vector.load %arg3[%c0_4, %c0_5] : memref<256x1xf32, #tpu.memory_space<vmem>>, vector<256x1xf32>
    %6 = vector.broadcast %5 : vector<256x1xf32> to vector<256x128xf32>
    %7 = arith.addf %4, %6 : vector<256x128xf32>
    %cst_6 = arith.constant 0.000000e+00 : f32
    %8 = vector.broadcast %cst_6 : f32 to vector<256x128xf32>
    %9 = arith.maximumf %7, %8 : vector<256x128xf32>
    %c0_7 = arith.constant 0 : index
    %c0_8 = arith.constant 0 : index
    %10 = vector.load %arg4[%c0_7, %c0_8] : memref<128x256xbf16, #tpu.memory_space<vmem>>, vector<128x256xbf16>
    %11 = arith.truncf %9 : vector<256x128xf32> to vector<256x128xbf16>
    %cst_9 = arith.constant dense<0.000000e+00> : vector<128x128xf32>
    %12 = tpu.matmul %10, %11, %cst_9 {dimension_numbers = #tpu.dot_dimension_numbers<[1], [0], [0], [1], [0, 0, 1, 1], [], []>} : vector<128x256xbf16>, vector<256x128xbf16>, vector<128x128xf32> -> vector<128x128xf32>
    %c0_10 = arith.constant 0 : index
    %c0_11 = arith.constant 0 : index
    %c0_12 = arith.constant 0 : index
    %13 = vector.load %arg1[%c0_10, %c0_11, %c0_12] : memref<1x128x128xf32, #tpu.memory_space<vmem>>, vector<1x128x128xf32>
    %14 = vector.shape_cast %13 : vector<1x128x128xf32> to vector<128x128xf32>
    %15 = arith.addf %14, %12 : vector<128x128xf32>
    %c0_13 = arith.constant 0 : index
    %c0_14 = arith.constant 0 : index
    %c0_15 = arith.constant 0 : index
    %16 = vector.load %arg5[%c0_13, %c0_14, %c0_15] : memref<1x128x128xf32, #tpu.memory_space<vmem>>, vector<1x128x128xf32>
    %17 = vector.shape_cast %16 : vector<1x128x128xf32> to vector<128x128xf32>
    %18 = vector.shape_cast %15 : vector<128x128xf32> to vector<1x128x128xf32>
    tpu.vector_store %arg5[%c0_13, %c0_14, %c0_15], %18 {strides = array<i32>} : memref<1x128x128xf32, #tpu.memory_space<vmem>>, vector<1x128x128xf32>,
    return
  }
  func.func @transform_0(%arg0: i32) -> (i32, i32, i32) {
    %c0_i32 = arith.constant 0 : i32
    %c0_i32_0 = arith.constant 0 : i32
    %c0_i32_1 = arith.constant 0 : i32
    return %arg0, %c0_i32, %c0_i32_0 : i32, i32, i32
  }
  func.func @transform_1(%arg0: i32) -> (i32, i32) {
    %c0_i32 = arith.constant 0 : i32
    %c0_i32_0 = arith.constant 0 : i32
    %c0_i32_1 = arith.constant 0 : i32
    return %c0_i32, %c0_i32_0 : i32, i32
  }
  func.func @transform_2(%arg0: i32) -> (i32, i32) {
    %c0_i32 = arith.constant 0 : i32
    %c0_i32_0 = arith.constant 0 : i32
    %c0_i32_1 = arith.constant 0 : i32
    return %c0_i32, %c0_i32_0 : i32, i32
  }
  func.func @transform_3(%arg0: i32) -> (i32, i32) {
    %c0_i32 = arith.constant 0 : i32
    %c0_i32_0 = arith.constant 0 : i32
    %c0_i32_1 = arith.constant 0 : i32
    return %c0_i32, %c0_i32_0 : i32, i32
  }
  func.func @transform_4(%arg0: i32) -> (i32, i32, i32) {
    %c0_i32 = arith.constant 0 : i32
    %c0_i32_0 = arith.constant 0 : i32
    %c0_i32_1 = arith.constant 0 : i32
    return %arg0, %c0_i32, %c0_i32_0 : i32, i32, i32
  }
}

</mosaic_0001>

<llo_original>
// kernel: squeeze.32
$region0: #{squeeze.32}
  %s0 = inlined_call_operand.vmem [shape: f32[256,32], index: 0, kind: input, shape index: {}]
  %s1 = inlined_call_operand.vmem [shape: f32[4,64,32], index: 1, kind: output, shape index: {}]
  $region1: #{squeeze.32} parent=0
    #allocation0 [shape = 'u8[131072]{0}', space=vmem, size = 0x20000, scoped, tag = 'scoped mem for output reshape']
    %v2 = vld [vmem:[%s0] sm:$0xff]
    %vm3 = vcmask 523264
    %4 = vst.msk [vmem:[#allocation0] ss:$8 sm:$0xf] %vm3, %v2
    %5 = vst.msk [vmem:[#allocation0] ss:$8 sm:$0xf0] %vm3, %v2
    %s6 = scalar_lea.vmem %s0, 8
    %v7 = vld [vmem:[%s6] sm:$0xff]
    %vm8 = vcmask 523264
    %s9 = scalar_lea.vmem [#allocation0], 2
    %10 = vst.msk [vmem:[%s9] ss:$8 sm:$0xf] %vm8, %v7
    %s11 = scalar_lea.vmem [#allocation0], 2
    %12 = vst.msk [vmem:[%s11] ss:$8 sm:$0xf0] %vm8, %v7
    %s13 = scalar_lea.vmem %s0, 16
    %v14 = vld [vmem:[%s13] sm:$0xff]
    %vm15 = vcmask 523264
    %s16 = scalar_lea.vmem [#allocation0], 64
    %17 = vst.msk [vmem:[%s16] ss:$8 sm:$0xf] %vm15, %v14
    %s18 = scalar_lea.vmem [#allocation0], 64
    %19 = vst.msk [vmem:[%s18] ss:$8 sm:$0xf0] %vm15, %v14
    %s20 = scalar_lea.vmem %s0, 24
    %v21 = vld [vmem:[%s20] sm:$0xff]
    %vm22 = vcmask 523264
    %s23 = scalar_lea.vmem [#allocation0], 66
    %24 = vst.msk [vmem:[%s23] ss:$8 sm:$0xf] %vm22, %v21
    %s25 = scalar_lea.vmem [#allocation0], 66
    %26 = vst.msk [vmem:[%s25] ss:$8 sm:$0xf0] %vm22, %v21
    %s27 = scalar_lea.vmem %s0, 32
    %v28 = vld [vmem:[%s27] sm:$0xff]
    %vm29 = vcmask 523264
    %s30 = scalar_lea.vmem [#allocation0], 128
    %31 = vst.msk [vmem:[%s30] ss:$8 sm:$0xf] %vm29, %v28
    %s32 = scalar_lea.vmem [#allocation0], 128
    %33 = vst.msk [vmem:[%s32] ss:$8 sm:$0xf0] %vm29, %v28
    %s34 = scalar_lea.vmem %s0, 40
    %v35 = vld [vmem:[%s34] sm:$0xff]
    %vm36 = vcmask 523264
    %s37 = scalar_lea.vmem [#allocation0], 130
    %38 = vst.msk [vmem:[%s37] ss:$8 sm:$0xf] %vm36, %v35
    %s39 = scalar_lea.vmem [#allocation0], 130
    %40 = vst.msk [vmem:[%s39] ss:$8 sm:$0xf0] %vm36, %v35
    %s41 = scalar_lea.vmem %s0, 48
    %v42 = vld [vmem:[%s41] sm:$0xff]
    %vm43 = vcmask 523264
    %s44 = scalar_lea.vmem [#allocation0], 192
    %45 = vst.msk [vmem:[%s44] ss:$8 sm:$0xf] %vm43, %v42
    %s46 = scalar_lea.vmem [#allocation0], 192
    %47 = vst.msk [vmem:[%s46] ss:$8 sm:$0xf0] %vm43, %v42
    %s48 = scalar_lea.vmem %s0, 56
    %v49 = vld [vmem:[%s48] sm:$0xff]
    %vm50 = vcmask 523264
    %s51 = scalar_lea.vmem [#allocation0], 194
    %52 = vst.msk [vmem:[%s51] ss:$8 sm:$0xf] %vm50, %v49
    %s53 = scalar_lea.vmem [#allocation0], 194
    %54 = vst.msk [vmem:[%s53] ss:$8 sm:$0xf0] %vm50, %v49
    %v55 = vld.sshfl [vmem:[%s0] sm:$0xff pattern:$0xb3a29180]
    %56 = vrot.lane.b32.xlu0 %v55, 64
    %v57 = vpop.permute.xlu0 %56
    %vm58 = vcmask 523264
    %s59 = scalar_lea.vmem [#allocation0], 1
    %60 = vst.msk [vmem:[%s59] ss:$2 sm:$0x3] %vm58, %v57
    %s61 = scalar_lea.vmem [#allocation0], 5
    %62 = vst.msk [vmem:[%s61] ss:$2 sm:$0xc] %vm58, %v57
    %s63 = scalar_lea.vmem [#allocation0], 9
    %64 = vst.msk [vmem:[%s63] ss:$2 sm:$0x30] %vm58, %v57
    %s65 = scalar_lea.vmem [#allocation0], 13
    %66 = vst.msk [vmem:[%s65] ss:$2 sm:$0xc0] %vm58, %v57
    %s67 = scalar_lea.vmem %s0, 4
    %v68 = vld.sshfl [vmem:[%s67] sm:$0xff pattern:$0xb3a29180]
    %69 = vrot.lane.b32.xlu0 %v68, 64
    %v70 = vpop.permute.xlu0 %69
    %vm71 = vcmask 523264
    %s72 = scalar_lea.vmem [#allocation0], 33
    %73 = vst.msk [vmem:[%s72] ss:$2 sm:$0x3] %vm71, %v70
    %s74 = scalar_lea.vmem [#allocation0], 37
    %75 = vst.msk [vmem:[%s74] ss:$2 sm:$0xc] %vm71, %v70
    %s76 = scalar_lea.vmem [#allocation0], 41
    %77 = vst.msk [vmem:[%s76] ss:$2 sm:$0x30] %vm71, %v70
    %s78 = scalar_lea.vmem [#allocation0], 45
    %79 = vst.msk [vmem:[%s78] ss:$2 sm:$0xc0] %vm71, %v70
    %s80 = scalar_lea.vmem %s0, 16
    %v81 = vld.sshfl [vmem:[%s80] sm:$0xff pattern:$0xb3a29180]
    %82 = vrot.lane.b32.xlu0 %v81, 64
    %v83 = vpop.permute.xlu0 %82
    %vm84 = vcmask 523264
    %s85 = scalar_lea.vmem [#allocation0], 65
    %86 = vst.msk [vmem:[%s85] ss:$2 sm:$0x3] %vm84, %v83
    %s87 = scalar_lea.vmem [#allocation0], 69
    %88 = vst.msk [vmem:[%s87] ss:$2 sm:$0xc] %vm84, %v83
    %s89 = scalar_lea.vmem [#allocation0], 73
    %90 = vst.msk [vmem:[%s89] ss:$2 sm:$0x30] %vm84, %v83
    %s91 = scalar_lea.vmem [#allocation0], 77
    %92 = vst.msk [vmem:[%s91] ss:$2 sm:$0xc0] %vm84, %v83
    %s93 = scalar_lea.vmem %s0, 20
    %v94 = vld.sshfl [vmem:[%s93] sm:$0xff pattern:$0xb3a29180]
    %95 = vrot.lane.b32.xlu0 %v94, 64
    %v96 = vpop.permute.xlu0 %95
    %vm97 = vcmask 523264
    %s98 = scalar_lea.vmem [#allocation0], 97
    %99 = vst.msk [vmem:[%s98] ss:$2 sm:$0x3] %vm97, %v96
    %s100 = scalar_lea.vmem [#allocation0], 101
    %101 = vst.msk [vmem:[%s100] ss:$2 sm:$0xc] %vm97, %v96
    %s102 = scalar_lea.vmem [#allocation0], 105
    %103 = vst.msk [vmem:[%s102] ss:$2 sm:$0x30] %vm97, %v96
    %s104 = scalar_lea.vmem [#allocation0], 109
    %105 = vst.msk [vmem:[%s104] ss:$2 sm:$0xc0] %vm97, %v96
    %s106 = scalar_lea.vmem %s0, 32
    %v107 = vld.sshfl [vmem:[%s106] sm:$0xff pattern:$0xb3a29180]
    %108 = vrot.lane.b32.xlu0 %v107, 64
    %v109 = vpop.permute.xlu0 %108
    %vm110 = vcmask 523264
    %s111 = scalar_lea.vmem [#allocation0], 129
    %112 = vst.msk [vmem:[%s111] ss:$2 sm:$0x3] %vm110, %v109
    %s113 = scalar_lea.vmem [#allocation0], 133
    %114 = vst.msk [vmem:[%s113] ss:$2 sm:$0xc] %vm110, %v109
    %s115 = scalar_lea.vmem [#allocation0], 137
    %116 = vst.msk [vmem:[%s115] ss:$2 sm:$0x30] %vm110, %v109
    %s117 = scalar_lea.vmem [#allocation0], 141
    %118 = vst.msk [vmem:[%s117] ss:$2 sm:$0xc0] %vm110, %v109
    %s119 = scalar_lea.vmem %s0, 36
    %v120 = vld.sshfl [vmem:[%s119] sm:$0xff pattern:$0xb3a29180]
    %121 = vrot.lane.b32.xlu0 %v120, 64
    %v122 = vpop.permute.xlu0 %121
    %vm123 = vcmask 523264
    %s124 = scalar_lea.vmem [#allocation0], 161
    %125 = vst.msk [vmem:[%s124] ss:$2 sm:$0x3] %vm123, %v122
    %s126 = scalar_lea.vmem [#allocation0], 165
    %127 = vst.msk [vmem:[%s126] ss:$2 sm:$0xc] %vm123, %v122
    %s128 = scalar_lea.vmem [#allocation0], 169
    %129 = vst.msk [vmem:[%s128] ss:$2 sm:$0x30] %vm123, %v122
    %s130 = scalar_lea.vmem [#allocation0], 173
    %131 = vst.msk [vmem:[%s130] ss:$2 sm:$0xc0] %vm123, %v122
    %s132 = scalar_lea.vmem %s0, 48
    %v133 = vld.sshfl [vmem:[%s132] sm:$0xff pattern:$0xb3a29180]
    %134 = vrot.lane.b32.xlu0 %v133, 64
    %v135 = vpop.permute.xlu0 %134
    %vm136 = vcmask 523264
    %s137 = scalar_lea.vmem [#allocation0], 193
    %138 = vst.msk [vmem:[%s137] ss:$2 sm:$0x3] %vm136, %v135
    %s139 = scalar_lea.vmem [#allocation0], 197
    %140 = vst.msk [vmem:[%s139] ss:$2 sm:$0xc] %vm136, %v135
    %s141 = scalar_lea.vmem [#allocation0], 201
    %142 = vst.msk [vmem:[%s141] ss:$2 sm:$0x30] %vm136, %v135
    %s143 = scalar_lea.vmem [#allocation0], 205
    %144 = vst.msk [vmem:[%s143] ss:$2 sm:$0xc0] %vm136, %v135
    %s145 = scalar_lea.vmem %s0, 52
    %v146 = vld.sshfl [vmem:[%s145] sm:$0xff pattern:$0xb3a29180]
    %147 = vrot.lane.b32.xlu0 %v146, 64
    %v148 = vpop.permute.xlu0 %147
    %vm149 = vcmask 523264
    %s150 = scalar_lea.vmem [#allocation0], 225
    %151 = vst.msk [vmem:[%s150] ss:$2 sm:$0x3] %vm149, %v148
    %s152 = scalar_lea.vmem [#allocation0], 229
    %153 = vst.msk [vmem:[%s152] ss:$2 sm:$0xc] %vm149, %v148
    %s154 = scalar_lea.vmem [#allocation0], 233
    %155 = vst.msk [vmem:[%s154] ss:$2 sm:$0x30] %vm149, %v148
    %s156 = scalar_lea.vmem [#allocation0], 237
    %157 = vst.msk [vmem:[%s156] ss:$2 sm:$0xc0] %vm149, %v148
    %s159 = ssub.s32 16, 1
    %v160 = vld [vmem:[#allocation0] sm:%s159]
    %s162 = ssub.s32 16, 1
    %163 = vst [vmem:[%s1] sm:%s162] %v160
    %s164 = scalar_lea.vmem [#allocation0], 8
    %v165 = vld [vmem:[%s164] sm:%s159]
    %s167 = ssub.s32 16, 1
    %s168 = scalar_lea.vmem %s1, 4
    %169 = vst [vmem:[%s168] sm:%s167] %v165
    %s170 = scalar_lea.vmem [#allocation0], 16
    %v171 = vld [vmem:[%s170] sm:%s159]
    %s173 = ssub.s32 16, 1
    %s174 = scalar_lea.vmem %s1, 8
    %175 = vst [vmem:[%s174] sm:%s173] %v171
    %s176 = scalar_lea.vmem [#allocation0], 24
    %v177 = vld [vmem:[%s176] sm:%s159]
    %s179 = ssub.s32 16, 1
    %s180 = scalar_lea.vmem %s1, 12
    %181 = vst [vmem:[%s180] sm:%s179] %v177
    %s182 = scalar_lea.vmem [#allocation0], 32
    %v183 = vld [vmem:[%s182] sm:%s159]
    %s185 = ssub.s32 16, 1
    %s186 = scalar_lea.vmem %s1, 16
    %187 = vst [vmem:[%s186] sm:%s185] %v183
    %s188 = scalar_lea.vmem [#allocation0], 40
    %v189 = vld [vmem:[%s188] sm:%s159]
    %s191 = ssub.s32 16, 1
    %s192 = scalar_lea.vmem %s1, 20
    %193 = vst [vmem:[%s192] sm:%s191] %v189
    %s194 = scalar_lea.vmem [#allocation0], 48
    %v195 = vld [vmem:[%s194] sm:%s159]
    %s197 = ssub.s32 16, 1
    %s198 = scalar_lea.vmem %s1, 24
    %199 = vst [vmem:[%s198] sm:%s197] %v195
    %s200 = scalar_lea.vmem [#allocation0], 56
    %v201 = vld [vmem:[%s200] sm:%s159]
    %s203 = ssub.s32 16, 1
    %s204 = scalar_lea.vmem %s1, 28
    %205 = vst [vmem:[%s204] sm:%s203] %v201
    %s206 = scalar_lea.vmem [#allocation0], 64
    %v207 = vld [vmem:[%s206] sm:%s159]
    %s209 = ssub.s32 16, 1
    %s210 = scalar_lea.vmem %s1, 32
    %211 = vst [vmem:[%s210] sm:%s209] %v207
    %s212 = scalar_lea.vmem [#allocation0], 72
    %v213 = vld [vmem:[%s212] sm:%s159]
    %s215 = ssub.s32 16, 1
    %s216 = scalar_lea.vmem %s1, 36
    %217 = vst [vmem:[%s216] sm:%s215] %v213
    %s218 = scalar_lea.vmem [#allocation0], 80
    %v219 = vld [vmem:[%s218] sm:%s159]
    %s221 = ssub.s32 16, 1
    %s222 = scalar_lea.vmem %s1, 40
    %223 = vst [vmem:[%s222] sm:%s221] %v219
    %s224 = scalar_lea.vmem [#allocation0], 88
    %v225 = vld [vmem:[%s224] sm:%s159]
    %s227 = ssub.s32 16, 1
    %s228 = scalar_lea.vmem %s1, 44
    %229 = vst [vmem:[%s228] sm:%s227] %v225
    %s230 = scalar_lea.vmem [#allocation0], 96
    %v231 = vld [vmem:[%s230] sm:%s159]
    %s233 = ssub.s32 16, 1
    %s234 = scalar_lea.vmem %s1, 48
    %235 = vst [vmem:[%s234] sm:%s233] %v231
    %s236 = scalar_lea.vmem [#allocation0], 104
    %v237 = vld [vmem:[%s236] sm:%s159]
    %s239 = ssub.s32 16, 1
    %s240 = scalar_lea.vmem %s1, 52
    %241 = vst [vmem:[%s240] sm:%s239] %v237
    %s242 = scalar_lea.vmem [#allocation0], 112
    %v243 = vld [vmem:[%s242] sm:%s159]
    %s245 = ssub.s32 16, 1
    %s246 = scalar_lea.vmem %s1, 56
    %247 = vst [vmem:[%s246] sm:%s245] %v243
    %s248 = scalar_lea.vmem [#allocation0], 120
    %v249 = vld [vmem:[%s248] sm:%s159]
    %s251 = ssub.s32 16, 1
    %s252 = scalar_lea.vmem %s1, 60
    %253 = vst [vmem:[%s252] sm:%s251] %v249
    %s254 = scalar_lea.vmem [#allocation0], 128
    %v255 = vld [vmem:[%s254] sm:%s159]
    %s257 = ssub.s32 16, 1
    %s258 = scalar_lea.vmem %s1, 64
    %259 = vst [vmem:[%s258] sm:%s257] %v255
    %s260 = scalar_lea.vmem [#allocation0], 136
    %v261 = vld [vmem:[%s260] sm:%s159]
    %s263 = ssub.s32 16, 1
    %s264 = scalar_lea.vmem %s1, 68
    %265 = vst [vmem:[%s264] sm:%s263] %v261
    %s266 = scalar_lea.vmem [#allocation0], 144
    %v267 = vld [vmem:[%s266] sm:%s159]
    %s269 = ssub.s32 16, 1
    %s270 = scalar_lea.vmem %s1, 72
    %271 = vst [vmem:[%s270] sm:%s269] %v267
    %s272 = scalar_lea.vmem [#allocation0], 152
    %v273 = vld [vmem:[%s272] sm:%s159]
    %s275 = ssub.s32 16, 1
    %s276 = scalar_lea.vmem %s1, 76
    %277 = vst [vmem:[%s276] sm:%s275] %v273
    %s278 = scalar_lea.vmem [#allocation0], 160
    %v279 = vld [vmem:[%s278] sm:%s159]
    %s281 = ssub.s32 16, 1
    %s282 = scalar_lea.vmem %s1, 80
    %283 = vst [vmem:[%s282] sm:%s281] %v279
    %s284 = scalar_lea.vmem [#allocation0], 168
    %v285 = vld [vmem:[%s284] sm:%s159]
    %s287 = ssub.s32 16, 1
    %s288 = scalar_lea.vmem %s1, 84
    %289 = vst [vmem:[%s288] sm:%s287] %v285
    %s290 = scalar_lea.vmem [#allocation0], 176
    %v291 = vld [vmem:[%s290] sm:%s159]
    %s293 = ssub.s32 16, 1
    %s294 = scalar_lea.vmem %s1, 88
    %295 = vst [vmem:[%s294] sm:%s293] %v291
    %s296 = scalar_lea.vmem [#allocation0], 184
    %v297 = vld [vmem:[%s296] sm:%s159]
    %s299 = ssub.s32 16, 1
    %s300 = scalar_lea.vmem %s1, 92
    %301 = vst [vmem:[%s300] sm:%s299] %v297
    %s302 = scalar_lea.vmem [#allocation0], 192
    %v303 = vld [vmem:[%s302] sm:%s159]
    %s305 = ssub.s32 16, 1
    %s306 = scalar_lea.vmem %s1, 96
    %307 = vst [vmem:[%s306] sm:%s305] %v303
    %s308 = scalar_lea.vmem [#allocation0], 200
    %v309 = vld [vmem:[%s308] sm:%s159]
    %s311 = ssub.s32 16, 1
    %s312 = scalar_lea.vmem %s1, 100
    %313 = vst [vmem:[%s312] sm:%s311] %v309
    %s314 = scalar_lea.vmem [#allocation0], 208
    %v315 = vld [vmem:[%s314] sm:%s159]
    %s317 = ssub.s32 16, 1
    %s318 = scalar_lea.vmem %s1, 104
    %319 = vst [vmem:[%s318] sm:%s317] %v315
    %s320 = scalar_lea.vmem [#allocation0], 216
    %v321 = vld [vmem:[%s320] sm:%s159]
    %s323 = ssub.s32 16, 1
    %s324 = scalar_lea.vmem %s1, 108
    %325 = vst [vmem:[%s324] sm:%s323] %v321
    %s326 = scalar_lea.vmem [#allocation0], 224
    %v327 = vld [vmem:[%s326] sm:%s159]
    %s329 = ssub.s32 16, 1
    %s330 = scalar_lea.vmem %s1, 112
    %331 = vst [vmem:[%s330] sm:%s329] %v327
    %s332 = scalar_lea.vmem [#allocation0], 232
    %v333 = vld [vmem:[%s332] sm:%s159]
    %s335 = ssub.s32 16, 1
    %s336 = scalar_lea.vmem %s1, 116
    %337 = vst [vmem:[%s336] sm:%s335] %v333
    %s338 = scalar_lea.vmem [#allocation0], 240
    %v339 = vld [vmem:[%s338] sm:%s159]
    %s341 = ssub.s32 16, 1
    %s342 = scalar_lea.vmem %s1, 120
    %343 = vst [vmem:[%s342] sm:%s341] %v339
    %s344 = scalar_lea.vmem [#allocation0], 248
    %v345 = vld [vmem:[%s344] sm:%s159]
    %s347 = ssub.s32 16, 1
    %s348 = scalar_lea.vmem %s1, 124
    %349 = vst [vmem:[%s348] sm:%s347] %v345

// kernel: pos_extraction_pallas.5
$region0: #{pos_extraction_pallas.5}
  #allocation0 [shape = 'u32[]', space=smem, size = 0x4, offset = 0x4, fixed_abs, tag = 'smem constant byte address 0x4 - core index']
  #allocation1 [shape = 'u32[72,128]{1,0:T(1,128)}', space=vmem, size = 0x9000, scoped, tag = 'internal scratch']
  %s0 = inlined_call_operand.vmem [shape: f32[2,128,128], index: 0, kind: input, shape index: {}]
  %s1 = inlined_call_operand.vmem [shape: bf16[256,128], index: 1, kind: input, shape index: {}]
  %s2 = inlined_call_operand.vmem [shape: f32[256,1], index: 2, kind: input, shape index: {}]
  %s3 = inlined_call_operand.vmem [shape: bf16[128,256], index: 3, kind: input, shape index: {}]
  %s4 = inlined_call_operand.hbm [shape: f32[2,128,128], index: 4, kind: output, shape index: {}]
  %s5 = sld [smem:[#allocation0]]
  $region49: #{pos_extraction_pallas.5} parent=0
    _
  %s7 = ssub.s32 1, %s5
  %s8 = scalar_select 0, %s7, %s5
  $region1: #{pos_extraction_pallas.5} parent=0
    #allocation2 [shape = 'u8[131072]{0}', space=vmem, size = 0x20000, scoped, tag = 'output window, operand 0']
    #allocation3 [shape = 's32[2]{0}', space=sflag, size = 0x8, scoped, tag = 'scoped memory for pos_extraction_pallas.5']
    %9 = vsyncpa [#allocation3], 0
    %s10 = scalar_lea.sflag [#allocation3], 1
    %11 = vsyncpa %s10, 0
    loop: start=0, step=1, limit=4
    $region2: #{pos_extraction_pallas.5} parent=1 // loop_pre_header
      _
    $region3: #{pos_extraction_pallas.5} parent=1 // loop_header
      %s13 = sphi 0, %s17
      %p14 = scmp.ge.s32.totalorder %s13, 4
      %s23 = sphi 0, %s25
      %s26 = sphi 0, %s23
      %s27 = sphi 0, %s26
      %s43 = sphi 0, %s27
      %s47 = sphi 0, %s47
      %s49 = sphi 0, %s47
      %s50 = sphi 0, %s49
      %s64 = sphi 0, %s50
      %s68 = sphi 0, %s68
      %s70 = sphi 0, %s68
      %s71 = sphi 0, %s70
      %s85 = sphi 0, %s71
      %s89 = sphi 0, %s89
      %s91 = sphi 0, %s89
      %s92 = sphi 0, %s91
      %s106 = sphi 0, %s92
      %s112 = sphi 0, %s114
      %s115 = sphi 0, %s112
      %s116 = sphi 0, %s115
      %s132 = sphi 0, %s116
    $region4: #{pos_extraction_pallas.5} parent=1 // loop_header_branch
      %16 = sbr.rel (%p14) target = $region8
    $region5: #{pos_extraction_pallas.5} parent=1 // loop_body
      %s18 = ssub.s32 %s13, 1
      %s19 = ssub.s32 %s13, 2
      %s20 = sadd.s32 %s13, 1
      %s21 = ssub.s32 %s13, %s20
      %p22 = scmp.eq.s32.totalorder %s21, 0
      %s24 = sadd.s32 %s23, 1
      %s25 = scalar_select %p22, %s23, %s24
      %p28 = pneg %p22
      %p29 = scmp.eq.s32.totalorder %s13, 1
      %p30 = por %p28, %p29
      %p31 = scmp.ne.s32.totalorder %s23, %s26
      %p32 = scmp.eq.s32.totalorder %s13, 0
      %p33 = por %p31, %p32
      %p34 = scmp.ne.s32.totalorder %s23, %s26
      %p35 = scmp.eq.s32.totalorder %s18, 1
      %p36 = por %p34, %p35
      %p37 = scmp.ne.s32.totalorder %s26, %s27
      %p38 = scmp.eq.s32.totalorder %s18, 0
      %p39 = por %p37, %p38
      %p40 = scmp.ne.s32.totalorder %s26, %s27
      %p41 = scmp.eq.s32.totalorder %s19, 1
      %p42 = por %p40, %p41
      %p44 = scmp.ne.s32.totalorder %s27, %s43
      %p45 = scmp.eq.s32.totalorder %s19, 0
      %p46 = por %p44, %p45
      %s48 = sadd.s32 %s47, 1
      %p51 = scmp.eq.s32.totalorder %s13, 1
      %p52 = scmp.ne.s32.totalorder %s47, %s49
      %p53 = scmp.eq.s32.totalorder %s13, 0
      %p54 = por %p52, %p53
      %p55 = scmp.ne.s32.totalorder %s47, %s49
      %p56 = scmp.eq.s32.totalorder %s18, 1
      %p57 = por %p55, %p56
      %p58 = scmp.ne.s32.totalorder %s49, %s50
      %p59 = scmp.eq.s32.totalorder %s18, 0
      %p60 = por %p58, %p59
      %p61 = scmp.ne.s32.totalorder %s49, %s50
      %p62 = scmp.eq.s32.totalorder %s19, 1
      %p63 = por %p61, %p62
      %p65 = scmp.ne.s32.totalorder %s50, %s64
      %p66 = scmp.eq.s32.totalorder %s19, 0
      %p67 = por %p65, %p66
      %s69 = sadd.s32 %s68, 1
      %p72 = scmp.eq.s32.totalorder %s13, 1
      %p73 = scmp.ne.s32.totalorder %s68, %s70
      %p74 = scmp.eq.s32.totalorder %s13, 0
      %p75 = por %p73, %p74
      %p76 = scmp.ne.s32.totalorder %s68, %s70
      %p77 = scmp.eq.s32.totalorder %s18, 1
      %p78 = por %p76, %p77
      %p79 = scmp.ne.s32.totalorder %s70, %s71
      %p80 = scmp.eq.s32.totalorder %s18, 0
      %p81 = por %p79, %p80
      %p82 = scmp.ne.s32.totalorder %s70, %s71
      %p83 = scmp.eq.s32.totalorder %s19, 1
      %p84 = por %p82, %p83
      %p86 = scmp.ne.s32.totalorder %s71, %s85
      %p87 = scmp.eq.s32.totalorder %s19, 0
      %p88 = por %p86, %p87
      %s90 = sadd.s32 %s89, 1
      %p93 = scmp.eq.s32.totalorder %s13, 1
      %p94 = scmp.ne.s32.totalorder %s89, %s91
      %p95 = scmp.eq.s32.totalorder %s13, 0
      %p96 = por %p94, %p95
      %p97 = scmp.ne.s32.totalorder %s89, %s91
      %p98 = scmp.eq.s32.totalorder %s18, 1
      %p99 = por %p97, %p98
      %p100 = scmp.ne.s32.totalorder %s91, %s92
      %p101 = scmp.eq.s32.totalorder %s18, 0
      %p102 = por %p100, %p101
      %p103 = scmp.ne.s32.totalorder %s91, %s92
      %p104 = scmp.eq.s32.totalorder %s19, 1
      %p105 = por %p103, %p104
      %p107 = scmp.ne.s32.totalorder %s92, %s106
      %p108 = scmp.eq.s32.totalorder %s19, 0
      %p109 = por %p107, %p108
      %s110 = ssub.s32 %s13, %s20
      %p111 = scmp.eq.s32.totalorder %s110, 0
      %s113 = sadd.s32 %s112, 1
      %s114 = scalar_select %p111, %s112, %s113
      %p117 = pneg %p111
      %p118 = scmp.eq.s32.totalorder %s13, 1
      %p119 = por %p117, %p118
      %p120 = scmp.ne.s32.totalorder %s112, %s115
      %p121 = scmp.eq.s32.totalorder %s13, 0
      %p122 = por %p120, %p121
      %p123 = scmp.ne.s32.totalorder %s112, %s115
      %p124 = scmp.eq.s32.totalorder %s18, 1
      %p125 = por %p123, %p124
      %p126 = scmp.ne.s32.totalorder %s115, %s116
      %p127 = scmp.eq.s32.totalorder %s18, 0
      %p128 = por %p126, %p127
      %p129 = scmp.ne.s32.totalorder %s115, %s116
      %p130 = scmp.eq.s32.totalorder %s19, 1
      %p131 = por %p129, %p130
      %p133 = scmp.ne.s32.totalorder %s116, %s132
      %p134 = scmp.eq.s32.totalorder %s19, 0
      %p135 = por %p133, %p134
      %p136 = scmp.le.s32.totalorder 1, %s13
      %p137 = scmp.lt.s32.totalorder %s13, 3
      %p138 = pnand %p136, %p137
      %p139 = pneg %p138
      // Predicated region
      $region9: #{pos_extraction_pallas.5} parent=5 // pred_check
        _
      $region10: #{pos_extraction_pallas.5} parent=5 // pred_check_branch
        %141 = sbr.rel (%p138) target = $region12
      $region11: #{pos_extraction_pallas.5} parent=5 // pred_region
        %s142 = ssub.s32 %s13, 1
        // Predicated region
        $region13: #{pos_extraction_pallas.5} parent=11 // pred_check
          %p143 = pneg %p60
        $region14: #{pos_extraction_pallas.5} parent=11 // pred_check_branch
          %145 = sbr.rel (%p143) target = $region16
        $region15: #{pos_extraction_pallas.5} parent=11 // pred_region
          _
        $region16: #{pos_extraction_pallas.5} parent=11 // pred_fallthru
          _
        // Predicated region
        $region17: #{pos_extraction_pallas.5} parent=11 // pred_check
          %p146 = pneg %p81
        $region18: #{pos_extraction_pallas.5} parent=11 // pred_check_branch
          %148 = sbr.rel (%p146) target = $region20
        $region19: #{pos_extraction_pallas.5} parent=11 // pred_region
          _
        $region20: #{pos_extraction_pallas.5} parent=11 // pred_fallthru
          _
        // Predicated region
        $region21: #{pos_extraction_pallas.5} parent=11 // pred_check
          %p149 = pneg %p102
        $region22: #{pos_extraction_pallas.5} parent=11 // pred_check_branch
          %151 = sbr.rel (%p149) target = $region24
        $region23: #{pos_extraction_pallas.5} parent=11 // pred_region
          _
        $region24: #{pos_extraction_pallas.5} parent=11 // pred_fallthru
          _
      $region12: #{pos_extraction_pallas.5} parent=5 // pred_fallthru
        _
      %p152 = scmp.lt.s32.totalorder %s13, 2
      // Predicated region
      $region25: #{pos_extraction_pallas.5} parent=5 // pred_check
        %p153 = pneg %p152
      $region26: #{pos_extraction_pallas.5} parent=5 // pred_check_branch
        %155 = sbr.rel (%p153) target = $region28
      $region27: #{pos_extraction_pallas.5} parent=5 // pred_region
        // Predicated region
        $region29: #{pos_extraction_pallas.5} parent=27 // pred_check
          %p156 = pneg %p33
        $region30: #{pos_extraction_pallas.5} parent=27 // pred_check_branch
          %158 = sbr.rel (%p156) target = $region32
        $region31: #{pos_extraction_pallas.5} parent=27 // pred_region
          %p159 = scmp.lt.s32.totalorder %s13, 1
          %s160 = scalar_select %p159, %s13, 1
          %s161 = smul.addr %s160, 16
          %s162 = smul.addr %s161, 8
          %s163 = scalar_lea.vmem %s0, %s162
        $region32: #{pos_extraction_pallas.5} parent=27 // pred_fallthru
          _
      $region28: #{pos_extraction_pallas.5} parent=5 // pred_fallthru
        _
      %p164 = scmp.le.s32.totalorder 1, %s13
      %p165 = scmp.lt.s32.totalorder %s13, 3
      %p166 = pnand %p164, %p165
      %p167 = pneg %p166
      // Predicated region
      $region33: #{pos_extraction_pallas.5} parent=5 // pred_check
        _
      $region34: #{pos_extraction_pallas.5} parent=5 // pred_check_branch
        %169 = sbr.rel (%p166) target = $region36
      $region35: #{pos_extraction_pallas.5} parent=5 // pred_region
        %s170 = ssub.s32 %s13, 1
        %p171 = scmp.lt.s32.totalorder %s18, 1
        %s172 = scalar_select %p171, %s18, 1
        %s173 = smul.addr %s172, 16
        %s174 = smul.addr %s173, 8
        %s175 = scalar_lea.vmem %s0, %s174
        %p176 = pneg %p39
        %p177 = pneg %p36
        %p178 = pneg %p60
        %p179 = pneg %p57
        %p180 = pneg %p81
        %p181 = pneg %p78
        %p182 = pneg %p102
        %p183 = pneg %p99
        %p184 = pneg %p128
        %p185 = pneg %p125
        %s186 = sand.u32 %s115, 1
        %s187 = scalar_lea.sflag [#allocation3], %s186
        %s188 = sand.u32 %s115, 1
        %s189 = smul.addr %s188, 128
        %s190 = scalar_lea.vmem [#allocation2], %s189
        %p191 = scmp.lt.s32.totalorder %s18, 1
        %s192 = scalar_select %p191, %s18, 1
        %s193 = smul.addr %s192, 16
        %s194 = smul.addr %s193, 8
        %s195 = scalar_lea.vmem %s0, %s194
        %v196 = vld [vmem:[%s1] sm:$0xf]
        %v197 = vld [vmem:[%s1 + $0x4] sm:$0xf]
        %v198 = vld [vmem:[%s1 + $0x8] sm:$0xf]
        %v199 = vld [vmem:[%s1 + $0xc] sm:$0xf]
        %v200 = vld [vmem:[%s1 + $0x10] sm:$0xf]
        %v201 = vld [vmem:[%s1 + $0x14] sm:$0xf]
        %v202 = vld [vmem:[%s1 + $0x18] sm:$0xf]
        %v203 = vld [vmem:[%s1 + $0x1c] sm:$0xf]
        %v204 = vld [vmem:[%s1 + $0x20] sm:$0xf]
        %v205 = vld [vmem:[%s1 + $0x24] sm:$0xf]
        %v206 = vld [vmem:[%s1 + $0x28] sm:$0xf]
        %v207 = vld [vmem:[%s1 + $0x2c] sm:$0xf]
        %v208 = vld [vmem:[%s1 + $0x30] sm:$0xf]
        %v209 = vld [vmem:[%s1 + $0x34] sm:$0xf]
        %v210 = vld [vmem:[%s1 + $0x38] sm:$0xf]
        %v211 = vld [vmem:[%s1 + $0x3c] sm:$0xf]
        %v212 = vld [vmem:[%s1 + $0x40] sm:$0xf]
        %v213 = vld [vmem:[%s1 + $0x44] sm:$0xf]
        %v214 = vld [vmem:[%s1 + $0x48] sm:$0xf]
        %v215 = vld [vmem:[%s1 + $0x4c] sm:$0xf]
        %v216 = vld [vmem:[%s1 + $0x50] sm:$0xf]
        %v217 = vld [vmem:[%s1 + $0x54] sm:$0xf]
        %v218 = vld [vmem:[%s1 + $0x58] sm:$0xf]
        %v219 = vld [vmem:[%s1 + $0x5c] sm:$0xf]
        %v220 = vld [vmem:[%s1 + $0x60] sm:$0xf]
        %v221 = vld [vmem:[%s1 + $0x64] sm:$0xf]
        %v222 = vld [vmem:[%s1 + $0x68] sm:$0xf]
        %v223 = vld [vmem:[%s1 + $0x6c] sm:$0xf]
        %v224 = vld [vmem:[%s1 + $0x70] sm:$0xf]
        %v225 = vld [vmem:[%s1 + $0x74] sm:$0xf]
        %v226 = vld [vmem:[%s1 + $0x78] sm:$0xf]
        %v227 = vld [vmem:[%s1 + $0x7c] sm:$0xf]
        %v228 = vld [vmem:[%s195] sm:$0xff]
        %v229 = vld [vmem:[%s195 + $0x8] sm:$0xff]
        %v230 = vld [vmem:[%s195 + $0x10] sm:$0xff]
        %v231 = vld [vmem:[%s195 + $0x18] sm:$0xff]
        %v232 = vld [vmem:[%s195 + $0x20] sm:$0xff]
        %v233 = vld [vmem:[%s195 + $0x28] sm:$0xff]
        %v234 = vld [vmem:[%s195 + $0x30] sm:$0xff]
        %v235 = vld [vmem:[%s195 + $0x38] sm:$0xff]
        %v236 = vld [vmem:[%s195 + $0x40] sm:$0xff]
        %v237 = vld [vmem:[%s195 + $0x48] sm:$0xff]
        %v238 = vld [vmem:[%s195 + $0x50] sm:$0xff]
        %v239 = vld [vmem:[%s195 + $0x58] sm:$0xff]
        %v240 = vld [vmem:[%s195 + $0x60] sm:$0xff]
        %v241 = vld [vmem:[%s195 + $0x68] sm:$0xff]
        %v242 = vld [vmem:[%s195 + $0x70] sm:$0xff]
        %v243 = vld [vmem:[%s195 + $0x78] sm:$0xff]
        %v244 = vpack.c.bf16 %v229, %v228
        %v245 = vpack.c.bf16 %v231, %v230
        %v246 = vpack.c.bf16 %v233, %v232
        %v247 = vpack.c.bf16 %v235, %v234
        %v248 = vpack.c.bf16 %v237, %v236
        %v249 = vpack.c.bf16 %v239, %v238
        %v250 = vpack.c.bf16 %v241, %v240
        %v251 = vpack.c.bf16 %v243, %v242
        %v252 = vld [vmem:[%s2] sm:$0xff]
        %v253 = vld [vmem:[%s2 + $0x8] sm:$0xff]
        %v254 = vld [vmem:[%s2 + $0x10] sm:$0xff]
        %v255 = vld [vmem:[%s2 + $0x18] sm:$0xff]
        %v256 = vld [vmem:[%s2 + $0x20] sm:$0xff]
        %v257 = vld [vmem:[%s2 + $0x28] sm:$0xff]
        %v258 = vld [vmem:[%s2 + $0x30] sm:$0xff]
        %v259 = vld [vmem:[%s2 + $0x38] sm:$0xff]
        %v260 = vld [vmem:[%s2 + $0x40] sm:$0xff]
        %v261 = vld [vmem:[%s2 + $0x48] sm:$0xff]
        %v262 = vld [vmem:[%s2 + $0x50] sm:$0xff]
        %v263 = vld [vmem:[%s2 + $0x58] sm:$0xff]
        %v264 = vld [vmem:[%s2 + $0x60] sm:$0xff]
        %v265 = vld [vmem:[%s2 + $0x68] sm:$0xff]
        %v266 = vld [vmem:[%s2 + $0x70] sm:$0xff]
        %v267 = vld [vmem:[%s2 + $0x78] sm:$0xff]
        %v268 = vld [vmem:[%s2 + $0x80] sm:$0xff]
        %v269 = vld [vmem:[%s2 + $0x88] sm:$0xff]
        %v270 = vld [vmem:[%s2 + $0x90] sm:$0xff]
        %v271 = vld [vmem:[%s2 + $0x98] sm:$0xff]
        %v272 = vld [vmem:[%s2 + $0xa0] sm:$0xff]
        %v273 = vld [vmem:[%s2 + $0xa8] sm:$0xff]
        %v274 = vld [vmem:[%s2 + $0xb0] sm:$0xff]
        %v275 = vld [vmem:[%s2 + $0xb8] sm:$0xff]
        %v276 = vld [vmem:[%s2 + $0xc0] sm:$0xff]
        %v277 = vld [vmem:[%s2 + $0xc8] sm:$0xff]
        %v278 = vld [vmem:[%s2 + $0xd0] sm:$0xff]
        %v279 = vld [vmem:[%s2 + $0xd8] sm:$0xff]
        %v280 = vld [vmem:[%s2 + $0xe0] sm:$0xff]
        %v281 = vld [vmem:[%s2 + $0xe8] sm:$0xff]
        %v282 = vld [vmem:[%s2 + $0xf0] sm:$0xff]
        %v283 = vld [vmem:[%s2 + $0xf8] sm:$0xff]
        %285 = vset.pattern.permute.xlu0 0
        %286 = vperm.xlu0 %285, %v252
        %v287 = vpop.permute.xlu0 %286
        %290 = vset.pattern.permute.xlu0 0
        %291 = vperm.xlu0 %290, %v253
        %v292 = vpop.permute.xlu0 %291
        %295 = vset.pattern.permute.xlu0 0
        %296 = vperm.xlu0 %295, %v254
        %v297 = vpop.permute.xlu0 %296
        %300 = vset.pattern.permute.xlu0 0
        %301 = vperm.xlu0 %300, %v255
        %v302 = vpop.permute.xlu0 %301
        %305 = vset.pattern.permute.xlu0 0
        %306 = vperm.xlu0 %305, %v256
        %v307 = vpop.permute.xlu0 %306
        %310 = vset.pattern.permute.xlu0 0
        %311 = vperm.xlu0 %310, %v257
        %v312 = vpop.permute.xlu0 %311
        %315 = vset.pattern.permute.xlu0 0
        %316 = vperm.xlu0 %315, %v258
        %v317 = vpop.permute.xlu0 %316
        %320 = vset.pattern.permute.xlu0 0
        %321 = vperm.xlu0 %320, %v259
        %v322 = vpop.permute.xlu0 %321
        %325 = vset.pattern.permute.xlu0 0
        %326 = vperm.xlu0 %325, %v260
        %v327 = vpop.permute.xlu0 %326
        %330 = vset.pattern.permute.xlu0 0
        %331 = vperm.xlu0 %330, %v261
        %v332 = vpop.permute.xlu0 %331
        %335 = vset.pattern.permute.xlu0 0
        %336 = vperm.xlu0 %335, %v262
        %v337 = vpop.permute.xlu0 %336
        %340 = vset.pattern.permute.xlu0 0
        %341 = vperm.xlu0 %340, %v263
        %v342 = vpop.permute.xlu0 %341
        %345 = vset.pattern.permute.xlu0 0
        %346 = vperm.xlu0 %345, %v264
        %v347 = vpop.permute.xlu0 %346
        %350 = vset.pattern.permute.xlu0 0
        %351 = vperm.xlu0 %350, %v265
        %v352 = vpop.permute.xlu0 %351
        %355 = vset.pattern.permute.xlu0 0
        %356 = vperm.xlu0 %355, %v266
        %v357 = vpop.permute.xlu0 %356
        %360 = vset.pattern.permute.xlu0 0
        %361 = vperm.xlu0 %360, %v267
        %v362 = vpop.permute.xlu0 %361
        %365 = vset.pattern.permute.xlu0 0
        %366 = vperm.xlu0 %365, %v268
        %v367 = vpop.permute.xlu0 %366
        %370 = vset.pattern.permute.xlu0 0
        %371 = vperm.xlu0 %370, %v269
        %v372 = vpop.permute.xlu0 %371
        %375 = vset.pattern.permute.xlu0 0
        %376 = vperm.xlu0 %375, %v270
        %v377 = vpop.permute.xlu0 %376
        %380 = vset.pattern.permute.xlu0 0
        %381 = vperm.xlu0 %380, %v271
        %v382 = vpop.permute.xlu0 %381
        %385 = vset.pattern.permute.xlu0 0
        %386 = vperm.xlu0 %385, %v272
        %v387 = vpop.permute.xlu0 %386
        %390 = vset.pattern.permute.xlu0 0
        %391 = vperm.xlu0 %390, %v273
        %v392 = vpop.permute.xlu0 %391
        %395 = vset.pattern.permute.xlu0 0
        %396 = vperm.xlu0 %395, %v274
        %v397 = vpop.permute.xlu0 %396
        %400 = vset.pattern.permute.xlu0 0
        %401 = vperm.xlu0 %400, %v275
        %v402 = vpop.permute.xlu0 %401
        %405 = vset.pattern.permute.xlu0 0
        %406 = vperm.xlu0 %405, %v276
        %v407 = vpop.permute.xlu0 %406
        %410 = vset.pattern.permute.xlu0 0
        %411 = vperm.xlu0 %410, %v277
        %v412 = vpop.permute.xlu0 %411
        %415 = vset.pattern.permute.xlu0 0
        %416 = vperm.xlu0 %415, %v278
        %v417 = vpop.permute.xlu0 %416
        %420 = vset.pattern.permute.xlu0 0
        %421 = vperm.xlu0 %420, %v279
        %v422 = vpop.permute.xlu0 %421
        %425 = vset.pattern.permute.xlu0 0
        %426 = vperm.xlu0 %425, %v280
        %v427 = vpop.permute.xlu0 %426
        %430 = vset.pattern.permute.xlu0 0
        %431 = vperm.xlu0 %430, %v281
        %v432 = vpop.permute.xlu0 %431
        %435 = vset.pattern.permute.xlu0 0
        %436 = vperm.xlu0 %435, %v282
        %v437 = vpop.permute.xlu0 %436
        %440 = vset.pattern.permute.xlu0 0
        %441 = vperm.xlu0 %440, %v283
        %v442 = vpop.permute.xlu0 %441
        %v476 = vunpack.c.l.b16 %v196
        %v477 = vunpack.c.l.b16 %v197
        %v478 = vunpack.c.l.b16 %v198
        %v479 = vunpack.c.l.b16 %v199
        %v480 = vunpack.c.l.b16 %v200
        %v481 = vunpack.c.l.b16 %v201
        %v482 = vunpack.c.l.b16 %v202
        %v483 = vunpack.c.l.b16 %v203
        %v484 = vunpack.c.l.b16 %v204
        %v485 = vunpack.c.l.b16 %v205
        %v486 = vunpack.c.l.b16 %v206
        %v487 = vunpack.c.l.b16 %v207
        %v488 = vunpack.c.l.b16 %v208
        %v489 = vunpack.c.l.b16 %v209
        %v490 = vunpack.c.l.b16 %v210
        %v491 = vunpack.c.l.b16 %v211
        %v492 = vunpack.c.l.b16 %v212
        %v493 = vunpack.c.l.b16 %v213
        %v494 = vunpack.c.l.b16 %v214
        %v495 = vunpack.c.l.b16 %v215
        %v496 = vunpack.c.l.b16 %v216
        %v497 = vunpack.c.l.b16 %v217
        %v498 = vunpack.c.l.b16 %v218
        %v499 = vunpack.c.l.b16 %v219
        %v500 = vunpack.c.l.b16 %v220
        %v501 = vunpack.c.l.b16 %v221
        %v502 = vunpack.c.l.b16 %v222
        %v503 = vunpack.c.l.b16 %v223
        %v504 = vunpack.c.l.b16 %v224
        %v505 = vunpack.c.l.b16 %v225
        %v506 = vunpack.c.l.b16 %v226
        %v507 = vunpack.c.l.b16 %v227
        %v508 = vpack.c.b16 %v477, %v476
        %v509 = vpack.c.b16 %v479, %v478
        %v510 = vpack.c.b16 %v481, %v480
        %v511 = vpack.c.b16 %v483, %v482
        %v512 = vpack.c.b16 %v485, %v484
        %v513 = vpack.c.b16 %v487, %v486
        %v514 = vpack.c.b16 %v489, %v488
        %v515 = vpack.c.b16 %v491, %v490
        %v516 = vpack.c.b16 %v493, %v492
        %v517 = vpack.c.b16 %v495, %v494
        %v518 = vpack.c.b16 %v497, %v496
        %v519 = vpack.c.b16 %v499, %v498
        %v520 = vpack.c.b16 %v501, %v500
        %v521 = vpack.c.b16 %v503, %v502
        %v522 = vpack.c.b16 %v505, %v504
        %v523 = vpack.c.b16 %v507, %v506
        %540 = vmatpush.bf16.msra.mxu0 %v251
        %541 = vmatpush.bf16.msra.mxu0 %v250
        %542 = vmatpush.bf16.msra.mxu0 %v249
        %543 = vmatpush.bf16.msra.mxu0 %v248
        %544 = vmatpush.bf16.msra.mxu0 %v247
        %545 = vmatpush.bf16.msra.mxu0 %v246
        %546 = vmatpush.bf16.msra.mxu0 %v245
        %547 = vmatpush.bf16.msra.mxu0 %v244
        %548 = vmatmul.bf16.gmra.mxu0 %v508
        %v549 = vpop.f32.mrf.mxu0
        %v550 = vadd.f32 %v287, %v549
        %v551 = vpop.f32.mrf.mxu0
        %v552 = vadd.f32 %v292, %v551
        %553 = vmatmul.bf16.gmra.mxu0 %v509
        %v554 = vpop.f32.mrf.mxu0
        %v555 = vadd.f32 %v297, %v554
        %v556 = vpop.f32.mrf.mxu0
        %v557 = vadd.f32 %v302, %v556
        %558 = vmatmul.bf16.gmra.mxu0 %v510
        %v559 = vpop.f32.mrf.mxu0
        %v560 = vadd.f32 %v307, %v559
        %v561 = vpop.f32.mrf.mxu0
        %v562 = vadd.f32 %v312, %v561
        %563 = vmatmul.bf16.gmra.mxu0 %v511
        %v564 = vpop.f32.mrf.mxu0
        %v565 = vadd.f32 %v317, %v564
        %v566 = vpop.f32.mrf.mxu0
        %v567 = vadd.f32 %v322, %v566
        %568 = vmatmul.bf16.gmra.mxu0 %v512
        %v569 = vpop.f32.mrf.mxu0
        %v570 = vadd.f32 %v327, %v569
        %v571 = vpop.f32.mrf.mxu0
        %v572 = vadd.f32 %v332, %v571
        %573 = vmatmul.bf16.gmra.mxu0 %v513
        %v574 = vpop.f32.mrf.mxu0
        %v575 = vadd.f32 %v337, %v574
        %v576 = vpop.f32.mrf.mxu0
        %v577 = vadd.f32 %v342, %v576
        %578 = vmatmul.bf16.gmra.mxu0 %v514
        %v579 = vpop.f32.mrf.mxu0
        %v580 = vadd.f32 %v347, %v579
        %v581 = vpop.f32.mrf.mxu0
        %v582 = vadd.f32 %v352, %v581
        %583 = vmatmul.bf16.gmra.mxu0 %v515
        %v584 = vpop.f32.mrf.mxu0
        %v585 = vadd.f32 %v357, %v584
        %v586 = vpop.f32.mrf.mxu0
        %v587 = vadd.f32 %v362, %v586
        %588 = vmatmul.bf16.gmra.mxu0 %v516
        %v589 = vpop.f32.mrf.mxu0
        %v590 = vadd.f32 %v367, %v589
        %v591 = vpop.f32.mrf.mxu0
        %v592 = vadd.f32 %v372, %v591
        %593 = vmatmul.bf16.gmra.mxu0 %v517
        %v594 = vpop.f32.mrf.mxu0
        %v595 = vadd.f32 %v377, %v594
        %v596 = vpop.f32.mrf.mxu0
        %v597 = vadd.f32 %v382, %v596
        %598 = vmatmul.bf16.gmra.mxu0 %v518
        %v599 = vpop.f32.mrf.mxu0
        %v600 = vadd.f32 %v387, %v599
        %v601 = vpop.f32.mrf.mxu0
        %v602 = vadd.f32 %v392, %v601
        %603 = vmatmul.bf16.gmra.mxu0 %v519
        %v604 = vpop.f32.mrf.mxu0
        %v605 = vadd.f32 %v397, %v604
        %v606 = vpop.f32.mrf.mxu0
        %v607 = vadd.f32 %v402, %v606
        %608 = vmatmul.bf16.gmra.mxu0 %v520
        %v609 = vpop.f32.mrf.mxu0
        %v610 = vadd.f32 %v407, %v609
        %v611 = vpop.f32.mrf.mxu0
        %v612 = vadd.f32 %v412, %v611
        %613 = vmatmul.bf16.gmra.mxu0 %v521
        %v614 = vpop.f32.mrf.mxu0
        %v615 = vadd.f32 %v417, %v614
        %v616 = vpop.f32.mrf.mxu0
        %v617 = vadd.f32 %v422, %v616
        %618 = vmatmul.bf16.gmra.mxu0 %v522
        %v619 = vpop.f32.mrf.mxu0
        %v620 = vadd.f32 %v427, %v619
        %v621 = vpop.f32.mrf.mxu0
        %v622 = vadd.f32 %v432, %v621
        %623 = vmatmul.bf16.gmra.mxu0 %v523
        %v624 = vpop.f32.mrf.mxu0
        %v625 = vadd.f32 %v437, %v624
        %v626 = vpop.f32.mrf.mxu0
        %v627 = vadd.f32 %v442, %v626
        %628 = vdwg.mxu0
        %v629 = vmax.f32 %v550, 0.0
        %v630 = vmax.f32 %v552, 0.0
        %v631 = vmax.f32 %v555, 0.0
        %v632 = vmax.f32 %v557, 0.0
        %v633 = vmax.f32 %v560, 0.0
        %v634 = vmax.f32 %v562, 0.0
        %v635 = vmax.f32 %v565, 0.0
        %v636 = vmax.f32 %v567, 0.0
        %v637 = vmax.f32 %v570, 0.0
        %v638 = vmax.f32 %v572, 0.0
        %v639 = vmax.f32 %v575, 0.0
        %v640 = vmax.f32 %v577, 0.0
        %v641 = vmax.f32 %v580, 0.0
        %v642 = vmax.f32 %v582, 0.0
        %v643 = vmax.f32 %v585, 0.0
        %v644 = vmax.f32 %v587, 0.0
        %v645 = vmax.f32 %v590, 0.0
        %v646 = vmax.f32 %v592, 0.0
        %v647 = vmax.f32 %v595, 0.0
        %v648 = vmax.f32 %v597, 0.0
        %v649 = vmax.f32 %v600, 0.0
        %v650 = vmax.f32 %v602, 0.0
        %v651 = vmax.f32 %v605, 0.0
        %v652 = vmax.f32 %v607, 0.0
        %v653 = vmax.f32 %v610, 0.0
        %v654 = vmax.f32 %v612, 0.0
        %v655 = vmax.f32 %v615, 0.0
        %v656 = vmax.f32 %v617, 0.0
        %v657 = vmax.f32 %v620, 0.0
        %v658 = vmax.f32 %v622, 0.0
        %v659 = vmax.f32 %v625, 0.0
        %v660 = vmax.f32 %v627, 0.0
        %v661 = vld [vmem:[%s3] sm:$0xff]
        %v662 = vld [vmem:[%s3 + $0x8] sm:$0xff]
        %v663 = vld [vmem:[%s3 + $0x10] sm:$0xff]
        %v664 = vld [vmem:[%s3 + $0x18] sm:$0xff]
        %v665 = vld [vmem:[%s3 + $0x20] sm:$0xff]
        %v666 = vld [vmem:[%s3 + $0x28] sm:$0xff]
        %v667 = vld [vmem:[%s3 + $0x30] sm:$0xff]
        %v668 = vld [vmem:[%s3 + $0x38] sm:$0xff]
        %v669 = vld [vmem:[%s3 + $0x40] sm:$0xff]
        %v670 = vld [vmem:[%s3 + $0x48] sm:$0xff]
        %v671 = vld [vmem:[%s3 + $0x50] sm:$0xff]
        %v672 = vld [vmem:[%s3 + $0x58] sm:$0xff]
        %v673 = vld [vmem:[%s3 + $0x60] sm:$0xff]
        %v674 = vld [vmem:[%s3 + $0x68] sm:$0xff]
        %v675 = vld [vmem:[%s3 + $0x70] sm:$0xff]
        %v676 = vld [vmem:[%s3 + $0x78] sm:$0xff]
        %v677 = vpack.c.bf16 %v630, %v629
        %v678 = vpack.c.bf16 %v632, %v631
        %v679 = vpack.c.bf16 %v634, %v633
        %v680 = vpack.c.bf16 %v636, %v635
        %v681 = vpack.c.bf16 %v638, %v637
        %v682 = vpack.c.bf16 %v640, %v639
        %v683 = vpack.c.bf16 %v642, %v641
        %v684 = vpack.c.bf16 %v644, %v643
        %v685 = vpack.c.bf16 %v646, %v645
        %v686 = vpack.c.bf16 %v648, %v647
        %v687 = vpack.c.bf16 %v650, %v649
        %v688 = vpack.c.bf16 %v652, %v651
        %v689 = vpack.c.bf16 %v654, %v653
        %v690 = vpack.c.bf16 %v656, %v655
        %v691 = vpack.c.bf16 %v658, %v657
        %v692 = vpack.c.bf16 %v660, %v659
        %v709 = vunpack.c.l.b16 %v661
        %v710 = vunpack.c.h.b16 %v661
        %v711 = vunpack.c.l.b16 %v662
        %v712 = vunpack.c.h.b16 %v662
        %v713 = vunpack.c.l.b16 %v663
        %v714 = vunpack.c.h.b16 %v663
        %v715 = vunpack.c.l.b16 %v664
        %v716 = vunpack.c.h.b16 %v664
        %v717 = vunpack.c.l.b16 %v665
        %v718 = vunpack.c.h.b16 %v665
        %v719 = vunpack.c.l.b16 %v666
        %v720 = vunpack.c.h.b16 %v666
        %v721 = vunpack.c.l.b16 %v667
        %v722 = vunpack.c.h.b16 %v667
        %v723 = vunpack.c.l.b16 %v668
        %v724 = vunpack.c.h.b16 %v668
        %v725 = vunpack.c.l.b16 %v669
        %v726 = vunpack.c.h.b16 %v669
        %v727 = vunpack.c.l.b16 %v670
        %v728 = vunpack.c.h.b16 %v670
        %v729 = vunpack.c.l.b16 %v671
        %v730 = vunpack.c.h.b16 %v671
        %v731 = vunpack.c.l.b16 %v672
        %v732 = vunpack.c.h.b16 %v672
        %v733 = vunpack.c.l.b16 %v673
        %v734 = vunpack.c.h.b16 %v673
        %v735 = vunpack.c.l.b16 %v674
        %v736 = vunpack.c.h.b16 %v674
        %v737 = vunpack.c.l.b16 %v675
        %v738 = vunpack.c.h.b16 %v675
        %v739 = vunpack.c.l.b16 %v676
        %v740 = vunpack.c.h.b16 %v676
        %v741 = vpack.c.b16 %v711, %v709
        %v742 = vpack.c.b16 %v712, %v710
        %v743 = vpack.c.b16 %v715, %v713
        %v744 = vpack.c.b16 %v716, %v714
        %v745 = vpack.c.b16 %v719, %v717
        %v746 = vpack.c.b16 %v720, %v718
        %v747 = vpack.c.b16 %v723, %v721
        %v748 = vpack.c.b16 %v724, %v722
        %v749 = vpack.c.b16 %v727, %v725
        %v750 = vpack.c.b16 %v728, %v726
        %v751 = vpack.c.b16 %v731, %v729
        %v752 = vpack.c.b16 %v732, %v730
        %v753 = vpack.c.b16 %v735, %v733
        %v754 = vpack.c.b16 %v736, %v734
        %v755 = vpack.c.b16 %v739, %v737
        %v756 = vpack.c.b16 %v740, %v738
        %773 = vmatpush.bf16.msra.mxu0 %v684
        %774 = vmatpush.bf16.msra.mxu0 %v683
        %775 = vmatpush.bf16.msra.mxu0 %v682
        %776 = vmatpush.bf16.msra.mxu0 %v681
        %777 = vmatpush.bf16.msra.mxu0 %v680
        %778 = vmatpush.bf16.msra.mxu0 %v679
        %779 = vmatpush.bf16.msra.mxu0 %v678
        %780 = vmatpush.bf16.msra.mxu0 %v677
        %781 = vmatmul.bf16.gmra.mxu0 %v741
        %v782 = vpop.f32.mrf.mxu0
        %v783 = vadd.f32 0.0, %v782
        %v784 = vpop.f32.mrf.mxu0
        %v785 = vadd.f32 0.0, %v784
        %786 = vmatmul.bf16.gmra.mxu0 %v743
        %v787 = vpop.f32.mrf.mxu0
        %v788 = vadd.f32 0.0, %v787
        %v789 = vpop.f32.mrf.mxu0
        %v790 = vadd.f32 0.0, %v789
        %791 = vmatmul.bf16.gmra.mxu0 %v745
        %v792 = vpop.f32.mrf.mxu0
        %v793 = vadd.f32 0.0, %v792
        %v794 = vpop.f32.mrf.mxu0
        %v795 = vadd.f32 0.0, %v794
        %796 = vmatmul.bf16.gmra.mxu0 %v747
        %v797 = vpop.f32.mrf.mxu0
        %v798 = vadd.f32 0.0, %v797
        %v799 = vpop.f32.mrf.mxu0
        %v800 = vadd.f32 0.0, %v799
        %801 = vmatmul.bf16.gmra.mxu0 %v749
        %v802 = vpop.f32.mrf.mxu0
        %v803 = vadd.f32 0.0, %v802
        %v804 = vpop.f32.mrf.mxu0
        %v805 = vadd.f32 0.0, %v804
        %806 = vmatmul.bf16.gmra.mxu0 %v751
        %v807 = vpop.f32.mrf.mxu0
        %v808 = vadd.f32 0.0, %v807
        %v809 = vpop.f32.mrf.mxu0
        %v810 = vadd.f32 0.0, %v809
        %811 = vmatmul.bf16.gmra.mxu0 %v753
        %v812 = vpop.f32.mrf.mxu0
        %v813 = vadd.f32 0.0, %v812
        %v814 = vpop.f32.mrf.mxu0
        %v815 = vadd.f32 0.0, %v814
        %816 = vmatmul.bf16.gmra.mxu0 %v755
        %v817 = vpop.f32.mrf.mxu0
        %v818 = vadd.f32 0.0, %v817
        %v819 = vpop.f32.mrf.mxu0
        %v820 = vadd.f32 0.0, %v819
        %821 = vdwg.mxu0
        %822 = vmatpush.bf16.msra.mxu0 %v692
        %823 = vmatpush.bf16.msra.mxu0 %v691
        %824 = vmatpush.bf16.msra.mxu0 %v690
        %825 = vmatpush.bf16.msra.mxu0 %v689
        %826 = vmatpush.bf16.msra.mxu0 %v688
        %827 = vmatpush.bf16.msra.mxu0 %v687
        %828 = vmatpush.bf16.msra.mxu0 %v686
        %829 = vmatpush.bf16.msra.mxu0 %v685
        %830 = vmatmul.bf16.gmra.mxu0 %v742
        %v831 = vpop.f32.mrf.mxu0
        %v832 = vadd.f32 %v783, %v831
        %v833 = vpop.f32.mrf.mxu0
        %v834 = vadd.f32 %v785, %v833
        %835 = vmatmul.bf16.gmra.mxu0 %v744
        %v836 = vpop.f32.mrf.mxu0
        %v837 = vadd.f32 %v788, %v836
        %v838 = vpop.f32.mrf.mxu0
        %v839 = vadd.f32 %v790, %v838
        %840 = vmatmul.bf16.gmra.mxu0 %v746
        %v841 = vpop.f32.mrf.mxu0
        %v842 = vadd.f32 %v793, %v841
        %v843 = vpop.f32.mrf.mxu0
        %v844 = vadd.f32 %v795, %v843
        %845 = vmatmul.bf16.gmra.mxu0 %v748
        %v846 = vpop.f32.mrf.mxu0
        %v847 = vadd.f32 %v798, %v846
        %v848 = vpop.f32.mrf.mxu0
        %v849 = vadd.f32 %v800, %v848
        %850 = vmatmul.bf16.gmra.mxu0 %v750
        %v851 = vpop.f32.mrf.mxu0
        %v852 = vadd.f32 %v803, %v851
        %v853 = vpop.f32.mrf.mxu0
        %v854 = vadd.f32 %v805, %v853
        %855 = vmatmul.bf16.gmra.mxu0 %v752
        %v856 = vpop.f32.mrf.mxu0
        %v857 = vadd.f32 %v808, %v856
        %v858 = vpop.f32.mrf.mxu0
        %v859 = vadd.f32 %v810, %v858
        %860 = vmatmul.bf16.gmra.mxu0 %v754
        %v861 = vpop.f32.mrf.mxu0
        %v862 = vadd.f32 %v813, %v861
        %v863 = vpop.f32.mrf.mxu0
        %v864 = vadd.f32 %v815, %v863
        %865 = vmatmul.bf16.gmra.mxu0 %v756
        %v866 = vpop.f32.mrf.mxu0
        %v867 = vadd.f32 %v818, %v866
        %v868 = vpop.f32.mrf.mxu0
        %v869 = vadd.f32 %v820, %v868
        %870 = vdwg.mxu0
        %v871 = vadd.f32 %v228, %v832
        %v872 = vadd.f32 %v229, %v834
        %v873 = vadd.f32 %v230, %v837
        %v874 = vadd.f32 %v231, %v839
        %v875 = vadd.f32 %v232, %v842
        %v876 = vadd.f32 %v233, %v844
        %v877 = vadd.f32 %v234, %v847
        %v878 = vadd.f32 %v235, %v849
        %v879 = vadd.f32 %v236, %v852
        %v880 = vadd.f32 %v237, %v854
        %v881 = vadd.f32 %v238, %v857
        %v882 = vadd.f32 %v239, %v859
        %v883 = vadd.f32 %v240, %v862
        %v884 = vadd.f32 %v241, %v864
        %v885 = vadd.f32 %v242, %v867
        %v886 = vadd.f32 %v243, %v869
        %887 = vst [vmem:[%s190] sm:$0xff] %v871
        %888 = vst [vmem:[%s190 + $0x8] sm:$0xff] %v872
        %889 = vst [vmem:[%s190 + $0x10] sm:$0xff] %v873
        %890 = vst [vmem:[%s190 + $0x18] sm:$0xff] %v874
        %891 = vst [vmem:[%s190 + $0x20] sm:$0xff] %v875
        %892 = vst [vmem:[%s190 + $0x28] sm:$0xff] %v876
        %893 = vst [vmem:[%s190 + $0x30] sm:$0xff] %v877
        %894 = vst [vmem:[%s190 + $0x38] sm:$0xff] %v878
        %895 = vst [vmem:[%s190 + $0x40] sm:$0xff] %v879
        %896 = vst [vmem:[%s190 + $0x48] sm:$0xff] %v880
        %897 = vst [vmem:[%s190 + $0x50] sm:$0xff] %v881
        %898 = vst [vmem:[%s190 + $0x58] sm:$0xff] %v882
        %899 = vst [vmem:[%s190 + $0x60] sm:$0xff] %v883
        %900 = vst [vmem:[%s190 + $0x68] sm:$0xff] %v884
        %901 = vst [vmem:[%s190 + $0x70] sm:$0xff] %v885
        %902 = vst [vmem:[%s190 + $0x78] sm:$0xff] %v886
        %s903 = sand.u32 %s115, 1
        %s904 = scalar_lea.sflag [#allocation3], %s903
        %s905 = sand.u32 %s115, 1
        %s906 = smul.addr %s905, 128
        %s907 = scalar_lea.vmem [#allocation2], %s906
        // Predicated region
        $region37: #{pos_extraction_pallas.5} parent=35 // pred_check
          %p908 = pneg %p125
        $region38: #{pos_extraction_pallas.5} parent=35 // pred_check_branch
          %910 = sbr.rel (%p908) target = $region40
        $region39: #{pos_extraction_pallas.5} parent=35 // pred_region
          %912 = vsyncadd %s904, 0
          %s913 = smul.addr %s18, 16
          %s914 = smul.addr %s913, 8
          %s915 = scalar_lea.hbm %s4, %s914
          %s916 = sshll.u32 %s907, 4
          %s917 = int_to_ptr.vmem [resolvable:$true] %s916
          %s918 = sshll.u32 %s915, 4
          %s919 = int_to_ptr.hbm [resolvable:$true] %s918
          %924 = dma.vmem_to_hbm [thread:$0]  %s917, 2048, %s919, %s904, 128, 128, 8
        $region40: #{pos_extraction_pallas.5} parent=35 // pred_fallthru
          _
      $region36: #{pos_extraction_pallas.5} parent=5 // pred_fallthru
        _
      %p925 = scmp.le.s32.totalorder 2, %s13
      // Predicated region
      $region41: #{pos_extraction_pallas.5} parent=5 // pred_check
        %p926 = pneg %p925
      $region42: #{pos_extraction_pallas.5} parent=5 // pred_check_branch
        %928 = sbr.rel (%p926) target = $region44
      $region43: #{pos_extraction_pallas.5} parent=5 // pred_region
        %s929 = ssub.s32 %s13, 2
        // Predicated region
        $region45: #{pos_extraction_pallas.5} parent=43 // pred_check
          %p930 = pneg %p131
        $region46: #{pos_extraction_pallas.5} parent=43 // pred_check_branch
          %932 = sbr.rel (%p930) target = $region48
        $region47: #{pos_extraction_pallas.5} parent=43 // pred_region
          %s933 = sand.u32 %s116, 1
          %s934 = scalar_lea.sflag [#allocation3], %s933
          %s935 = sand.u32 %s116, 1
          %s936 = smul.addr %s935, 128
          %s937 = scalar_lea.vmem [#allocation2], %s936
          %939 = dma.done %s934, 2048
        $region48: #{pos_extraction_pallas.5} parent=43 // pred_fallthru
          _
      $region44: #{pos_extraction_pallas.5} parent=5 // pred_fallthru
        _
    $region6: #{pos_extraction_pallas.5} parent=1 // loop_footer
      %s17 = sadd.s32 1, %s13
    $region7: #{pos_extraction_pallas.5} parent=1 // loop_footer_branch
      %12 = sbr.rel target = $region3
    $region8: #{pos_extraction_pallas.5} parent=1 // loop_exit
      _
    %940 = vsyncpa [#allocation3], 1
    %s941 = scalar_lea.sflag [#allocation3], 1
    %942 = vsyncpa %s941, 1

// kernel: pos_extraction_pallas.3
$region0: #{pos_extraction_pallas.3}
  #allocation0 [shape = 'u32[]', space=smem, size = 0x4, offset = 0x4, fixed_abs, tag = 'smem constant byte address 0x4 - core index']
  #allocation1 [shape = 'u32[72,128]{1,0:T(1,128)}', space=vmem, size = 0x9000, scoped, tag = 'internal scratch']
  #allocation2 [shape = 'f32[128,256]{1,0:T(8,128)}', space=vmem, size = 0x20000, scoped, tag = 'scratch operand']
  #allocation3 [shape = 'f32[128,256]{1,0:T(8,128)}', space=vmem, size = 0x20000, scoped, tag = 'scratch operand']
  %s0 = inlined_call_operand.vmem [shape: f32[2,128,128], index: 0, kind: input, shape index: {}]
  %s1 = inlined_call_operand.vmem [shape: bf16[128,128], index: 1, kind: input, shape index: {}]
  %s2 = inlined_call_operand.vmem [shape: bf16[128,128], index: 2, kind: input, shape index: {}]
  %s3 = inlined_call_operand.vmem [shape: f32[128,1], index: 3, kind: input, shape index: {}]
  %s4 = inlined_call_operand.vmem [shape: f32[128,1], index: 4, kind: input, shape index: {}]
  %s5 = inlined_call_operand.vmem [shape: f32[128,1], index: 5, kind: input, shape index: {}]
  %s6 = inlined_call_operand.vmem [shape: f32[128,1], index: 6, kind: input, shape index: {}]
  %s7 = inlined_call_operand.vmem [shape: f32[2,128,128], index: 7, kind: output, shape index: {0}]
  %s8 = inlined_call_operand.vmem [shape: f32[128,1], index: 8, kind: output, shape index: {1}]
  %s9 = inlined_call_operand.vmem [shape: f32[128,1], index: 9, kind: output, shape index: {2}]
  %10 = xla_tuple %s7, %s8, %s9
  %s11 = sld [smem:[#allocation0]]
  $region54: #{pos_extraction_pallas.3} parent=0
    _
  %s13 = ssub.s32 1, %s11
  %s14 = scalar_select 0, %s13, %s11
  // Predicated region
  $region2: #{pos_extraction_pallas.3} parent=0 // pred_check
    _
  $region3: #{pos_extraction_pallas.3} parent=0 // pred_check_branch
    %16 = sbr.rel (0) target = $region5
  $region4: #{pos_extraction_pallas.3} parent=0 // pred_region
    _
  $region5: #{pos_extraction_pallas.3} parent=0 // pred_fallthru
    _
  // Predicated region
  $region6: #{pos_extraction_pallas.3} parent=0 // pred_check
    _
  $region7: #{pos_extraction_pallas.3} parent=0 // pred_check_branch
    %18 = sbr.rel (0) target = $region9
  $region8: #{pos_extraction_pallas.3} parent=0 // pred_region
    _
  $region9: #{pos_extraction_pallas.3} parent=0 // pred_fallthru
    _
  // Predicated region
  $region10: #{pos_extraction_pallas.3} parent=0 // pred_check
    _
  $region11: #{pos_extraction_pallas.3} parent=0 // pred_check_branch
    %20 = sbr.rel (0) target = $region13
  $region12: #{pos_extraction_pallas.3} parent=0 // pred_region
    _
  $region13: #{pos_extraction_pallas.3} parent=0 // pred_fallthru
    _
  // Predicated region
  $region14: #{pos_extraction_pallas.3} parent=0 // pred_check
    _
  $region15: #{pos_extraction_pallas.3} parent=0 // pred_check_branch
    %22 = sbr.rel (0) target = $region17
  $region16: #{pos_extraction_pallas.3} parent=0 // pred_region
    _
  $region17: #{pos_extraction_pallas.3} parent=0 // pred_fallthru
    _
  // Predicated region
  $region18: #{pos_extraction_pallas.3} parent=0 // pred_check
    _
  $region19: #{pos_extraction_pallas.3} parent=0 // pred_check_branch
    %24 = sbr.rel (0) target = $region21
  $region20: #{pos_extraction_pallas.3} parent=0 // pred_region
    _
  $region21: #{pos_extraction_pallas.3} parent=0 // pred_fallthru
    _
  // Predicated region
  $region22: #{pos_extraction_pallas.3} parent=0 // pred_check
    _
  $region23: #{pos_extraction_pallas.3} parent=0 // pred_check_branch
    %26 = sbr.rel (0) target = $region25
  $region24: #{pos_extraction_pallas.3} parent=0 // pred_region
    _
  $region25: #{pos_extraction_pallas.3} parent=0 // pred_fallthru
    _
  // Predicated region
  $region26: #{pos_extraction_pallas.3} parent=0 // pred_check
    _
  $region27: #{pos_extraction_pallas.3} parent=0 // pred_check_branch
    %28 = sbr.rel (0) target = $region29
  $region28: #{pos_extraction_pallas.3} parent=0 // pred_region
    _
  $region29: #{pos_extraction_pallas.3} parent=0 // pred_fallthru
    _
  %v29 = vld [vmem:[%s1] sm:$0xf]
  %v30 = vld [vmem:[%s1 + $0x4] sm:$0xf]
  %v31 = vld [vmem:[%s1 + $0x8] sm:$0xf]
  %v32 = vld [vmem:[%s1 + $0xc] sm:$0xf]
  %v33 = vld [vmem:[%s1 + $0x10] sm:$0xf]
  %v34 = vld [vmem:[%s1 + $0x14] sm:$0xf]
  %v35 = vld [vmem:[%s1 + $0x18] sm:$0xf]
  %v36 = vld [vmem:[%s1 + $0x1c] sm:$0xf]
  %v37 = vld [vmem:[%s1 + $0x20] sm:$0xf]
  %v38 = vld [vmem:[%s1 + $0x24] sm:$0xf]
  %v39 = vld [vmem:[%s1 + $0x28] sm:$0xf]
  %v40 = vld [vmem:[%s1 + $0x2c] sm:$0xf]
  %v41 = vld [vmem:[%s1 + $0x30] sm:$0xf]
  %v42 = vld [vmem:[%s1 + $0x34] sm:$0xf]
  %v43 = vld [vmem:[%s1 + $0x38] sm:$0xf]
  %v44 = vld [vmem:[%s1 + $0x3c] sm:$0xf]
  %v45 = vld [vmem:[%s0] sm:$0xff]
  %v46 = vld [vmem:[%s0 + $0x8] sm:$0xff]
  %v47 = vld [vmem:[%s0 + $0x10] sm:$0xff]
  %v48 = vld [vmem:[%s0 + $0x18] sm:$0xff]
  %v49 = vld [vmem:[%s0 + $0x20] sm:$0xff]
  %v50 = vld [vmem:[%s0 + $0x28] sm:$0xff]
  %v51 = vld [vmem:[%s0 + $0x30] sm:$0xff]
  %v52 = vld [vmem:[%s0 + $0x38] sm:$0xff]
  %v53 = vld [vmem:[%s0 + $0x40] sm:$0xff]
  %v54 = vld [vmem:[%s0 + $0x48] sm:$0xff]
  %v55 = vld [vmem:[%s0 + $0x50] sm:$0xff]
  %v56 = vld [vmem:[%s0 + $0x58] sm:$0xff]
  %v57 = vld [vmem:[%s0 + $0x60] sm:$0xff]
  %v58 = vld [vmem:[%s0 + $0x68] sm:$0xff]
  %v59 = vld [vmem:[%s0 + $0x70] sm:$0xff]
  %v60 = vld [vmem:[%s0 + $0x78] sm:$0xff]
  %v61 = vpack.c.bf16 %v46, %v45
  %v62 = vpack.c.bf16 %v48, %v47
  %v63 = vpack.c.bf16 %v50, %v49
  %v64 = vpack.c.bf16 %v52, %v51
  %v65 = vpack.c.bf16 %v54, %v53
  %v66 = vpack.c.bf16 %v56, %v55
  %v67 = vpack.c.bf16 %v58, %v57
  %v68 = vpack.c.bf16 %v60, %v59
  %v85 = vunpack.c.l.b16 %v29
  %v86 = vunpack.c.l.b16 %v30
  %v87 = vunpack.c.l.b16 %v31
  %v88 = vunpack.c.l.b16 %v32
  %v89 = vunpack.c.l.b16 %v33
  %v90 = vunpack.c.l.b16 %v34
  %v91 = vunpack.c.l.b16 %v35
  %v92 = vunpack.c.l.b16 %v36
  %v93 = vunpack.c.l.b16 %v37
  %v94 = vunpack.c.l.b16 %v38
  %v95 = vunpack.c.l.b16 %v39
  %v96 = vunpack.c.l.b16 %v40
  %v97 = vunpack.c.l.b16 %v41
  %v98 = vunpack.c.l.b16 %v42
  %v99 = vunpack.c.l.b16 %v43
  %v100 = vunpack.c.l.b16 %v44
  %v101 = vpack.c.b16 %v86, %v85
  %v102 = vpack.c.b16 %v88, %v87
  %v103 = vpack.c.b16 %v90, %v89
  %v104 = vpack.c.b16 %v92, %v91
  %v105 = vpack.c.b16 %v94, %v93
  %v106 = vpack.c.b16 %v96, %v95
  %v107 = vpack.c.b16 %v98, %v97
  %v108 = vpack.c.b16 %v100, %v99
  %117 = vmatpush.bf16.msra.mxu0 %v68
  %118 = vmatpush.bf16.msra.mxu0 %v67
  %119 = vmatpush.bf16.msra.mxu0 %v66
  %120 = vmatpush.bf16.msra.mxu0 %v65
  %121 = vmatpush.bf16.msra.mxu0 %v64
  %122 = vmatpush.bf16.msra.mxu0 %v63
  %123 = vmatpush.bf16.msra.mxu0 %v62
  %124 = vmatpush.bf16.msra.mxu0 %v61
  %125 = vmatmul.bf16.gmra.mxu0 %v101
  %v126 = vpop.f32.mrf.mxu0
  %v127 = vadd.f32 0.0, %v126
  %v128 = vpop.f32.mrf.mxu0
  %v129 = vadd.f32 0.0, %v128
  %130 = vmatmul.bf16.gmra.mxu0 %v102
  %v131 = vpop.f32.mrf.mxu0
  %v132 = vadd.f32 0.0, %v131
  %v133 = vpop.f32.mrf.mxu0
  %v134 = vadd.f32 0.0, %v133
  %135 = vmatmul.bf16.gmra.mxu0 %v103
  %v136 = vpop.f32.mrf.mxu0
  %v137 = vadd.f32 0.0, %v136
  %v138 = vpop.f32.mrf.mxu0
  %v139 = vadd.f32 0.0, %v138
  %140 = vmatmul.bf16.gmra.mxu0 %v104
  %v141 = vpop.f32.mrf.mxu0
  %v142 = vadd.f32 0.0, %v141
  %v143 = vpop.f32.mrf.mxu0
  %v144 = vadd.f32 0.0, %v143
  %145 = vmatmul.bf16.gmra.mxu0 %v105
  %v146 = vpop.f32.mrf.mxu0
  %v147 = vadd.f32 0.0, %v146
  %v148 = vpop.f32.mrf.mxu0
  %v149 = vadd.f32 0.0, %v148
  %150 = vmatmul.bf16.gmra.mxu0 %v106
  %v151 = vpop.f32.mrf.mxu0
  %v152 = vadd.f32 0.0, %v151
  %v153 = vpop.f32.mrf.mxu0
  %v154 = vadd.f32 0.0, %v153
  %155 = vmatmul.bf16.gmra.mxu0 %v107
  %v156 = vpop.f32.mrf.mxu0
  %v157 = vadd.f32 0.0, %v156
  %v158 = vpop.f32.mrf.mxu0
  %v159 = vadd.f32 0.0, %v158
  %160 = vmatmul.bf16.gmra.mxu0 %v108
  %v161 = vpop.f32.mrf.mxu0
  %v162 = vadd.f32 0.0, %v161
  %v163 = vpop.f32.mrf.mxu0
  %v164 = vadd.f32 0.0, %v163
  %165 = vdwg.mxu0
  %166 = vst [vmem:[#allocation2] sm:$0xff] %v127
  %167 = vst [vmem:[#allocation2 + $0x10] sm:$0xff] %v129
  %168 = vst [vmem:[#allocation2 + $0x20] sm:$0xff] %v132
  %169 = vst [vmem:[#allocation2 + $0x30] sm:$0xff] %v134
  %170 = vst [vmem:[#allocation2 + $0x40] sm:$0xff] %v137
  %171 = vst [vmem:[#allocation2 + $0x50] sm:$0xff] %v139
  %172 = vst [vmem:[#allocation2 + $0x60] sm:$0xff] %v142
  %173 = vst [vmem:[#allocation2 + $0x70] sm:$0xff] %v144
  %174 = vst [vmem:[#allocation2 + $0x80] sm:$0xff] %v147
  %175 = vst [vmem:[#allocation2 + $0x90] sm:$0xff] %v149
  %176 = vst [vmem:[#allocation2 + $0xa0] sm:$0xff] %v152
  %177 = vst [vmem:[#allocation2 + $0xb0] sm:$0xff] %v154
  %178 = vst [vmem:[#allocation2 + $0xc0] sm:$0xff] %v157
  %179 = vst [vmem:[#allocation2 + $0xd0] sm:$0xff] %v159
  %180 = vst [vmem:[#allocation2 + $0xe0] sm:$0xff] %v162
  %181 = vst [vmem:[#allocation2 + $0xf0] sm:$0xff] %v164
  %v182 = vld [vmem:[%s1] sm:$0xf]
  %v183 = vld [vmem:[%s1 + $0x4] sm:$0xf]
  %v184 = vld [vmem:[%s1 + $0x8] sm:$0xf]
  %v185 = vld [vmem:[%s1 + $0xc] sm:$0xf]
  %v186 = vld [vmem:[%s1 + $0x10] sm:$0xf]
  %v187 = vld [vmem:[%s1 + $0x14] sm:$0xf]
  %v188 = vld [vmem:[%s1 + $0x18] sm:$0xf]
  %v189 = vld [vmem:[%s1 + $0x1c] sm:$0xf]
  %v190 = vld [vmem:[%s1 + $0x20] sm:$0xf]
  %v191 = vld [vmem:[%s1 + $0x24] sm:$0xf]
  %v192 = vld [vmem:[%s1 + $0x28] sm:$0xf]
  %v193 = vld [vmem:[%s1 + $0x2c] sm:$0xf]
  %v194 = vld [vmem:[%s1 + $0x30] sm:$0xf]
  %v195 = vld [vmem:[%s1 + $0x34] sm:$0xf]
  %v196 = vld [vmem:[%s1 + $0x38] sm:$0xf]
  %v197 = vld [vmem:[%s1 + $0x3c] sm:$0xf]
  %s198 = scalar_lea.vmem %s0, 128
  %v199 = vld [vmem:[%s198] sm:$0xff]
  %v200 = vld [vmem:[%s198 + $0x8] sm:$0xff]
  %v201 = vld [vmem:[%s198 + $0x10] sm:$0xff]
  %v202 = vld [vmem:[%s198 + $0x18] sm:$0xff]
  %v203 = vld [vmem:[%s198 + $0x20] sm:$0xff]
  %v204 = vld [vmem:[%s198 + $0x28] sm:$0xff]
  %v205 = vld [vmem:[%s198 + $0x30] sm:$0xff]
  %v206 = vld [vmem:[%s198 + $0x38] sm:$0xff]
  %v207 = vld [vmem:[%s198 + $0x40] sm:$0xff]
  %v208 = vld [vmem:[%s198 + $0x48] sm:$0xff]
  %v209 = vld [vmem:[%s198 + $0x50] sm:$0xff]
  %v210 = vld [vmem:[%s198 + $0x58] sm:$0xff]
  %v211 = vld [vmem:[%s198 + $0x60] sm:$0xff]
  %v212 = vld [vmem:[%s198 + $0x68] sm:$0xff]
  %v213 = vld [vmem:[%s198 + $0x70] sm:$0xff]
  %v214 = vld [vmem:[%s198 + $0x78] sm:$0xff]
  %v215 = vpack.c.bf16 %v200, %v199
  %v216 = vpack.c.bf16 %v202, %v201
  %v217 = vpack.c.bf16 %v204, %v203
  %v218 = vpack.c.bf16 %v206, %v205
  %v219 = vpack.c.bf16 %v208, %v207
  %v220 = vpack.c.bf16 %v210, %v209
  %v221 = vpack.c.bf16 %v212, %v211
  %v222 = vpack.c.bf16 %v214, %v213
  %v239 = vunpack.c.l.b16 %v182
  %v240 = vunpack.c.l.b16 %v183
  %v241 = vunpack.c.l.b16 %v184
  %v242 = vunpack.c.l.b16 %v185
  %v243 = vunpack.c.l.b16 %v186
  %v244 = vunpack.c.l.b16 %v187
  %v245 = vunpack.c.l.b16 %v188
  %v246 = vunpack.c.l.b16 %v189
  %v247 = vunpack.c.l.b16 %v190
  %v248 = vunpack.c.l.b16 %v191
  %v249 = vunpack.c.l.b16 %v192
  %v250 = vunpack.c.l.b16 %v193
  %v251 = vunpack.c.l.b16 %v194
  %v252 = vunpack.c.l.b16 %v195
  %v253 = vunpack.c.l.b16 %v196
  %v254 = vunpack.c.l.b16 %v197
  %v255 = vpack.c.b16 %v240, %v239
  %v256 = vpack.c.b16 %v242, %v241
  %v257 = vpack.c.b16 %v244, %v243
  %v258 = vpack.c.b16 %v246, %v245
  %v259 = vpack.c.b16 %v248, %v247
  %v260 = vpack.c.b16 %v250, %v249
  %v261 = vpack.c.b16 %v252, %v251
  %v262 = vpack.c.b16 %v254, %v253
  %271 = vmatpush.bf16.msra.mxu0 %v222
  %272 = vmatpush.bf16.msra.mxu0 %v221
  %273 = vmatpush.bf16.msra.mxu0 %v220
  %274 = vmatpush.bf16.msra.mxu0 %v219
  %275 = vmatpush.bf16.msra.mxu0 %v218
  %276 = vmatpush.bf16.msra.mxu0 %v217
  %277 = vmatpush.bf16.msra.mxu0 %v216
  %278 = vmatpush.bf16.msra.mxu0 %v215
  %279 = vmatmul.bf16.gmra.mxu0 %v255
  %v280 = vpop.f32.mrf.mxu0
  %v281 = vadd.f32 0.0, %v280
  %v282 = vpop.f32.mrf.mxu0
  %v283 = vadd.f32 0.0, %v282
  %284 = vmatmul.bf16.gmra.mxu0 %v256
  %v285 = vpop.f32.mrf.mxu0
  %v286 = vadd.f32 0.0, %v285
  %v287 = vpop.f32.mrf.mxu0
  %v288 = vadd.f32 0.0, %v287
  %289 = vmatmul.bf16.gmra.mxu0 %v257
  %v290 = vpop.f32.mrf.mxu0
  %v291 = vadd.f32 0.0, %v290
  %v292 = vpop.f32.mrf.mxu0
  %v293 = vadd.f32 0.0, %v292
  %294 = vmatmul.bf16.gmra.mxu0 %v258
  %v295 = vpop.f32.mrf.mxu0
  %v296 = vadd.f32 0.0, %v295
  %v297 = vpop.f32.mrf.mxu0
  %v298 = vadd.f32 0.0, %v297
  %299 = vmatmul.bf16.gmra.mxu0 %v259
  %v300 = vpop.f32.mrf.mxu0
  %v301 = vadd.f32 0.0, %v300
  %v302 = vpop.f32.mrf.mxu0
  %v303 = vadd.f32 0.0, %v302
  %304 = vmatmul.bf16.gmra.mxu0 %v260
  %v305 = vpop.f32.mrf.mxu0
  %v306 = vadd.f32 0.0, %v305
  %v307 = vpop.f32.mrf.mxu0
  %v308 = vadd.f32 0.0, %v307
  %309 = vmatmul.bf16.gmra.mxu0 %v261
  %v310 = vpop.f32.mrf.mxu0
  %v311 = vadd.f32 0.0, %v310
  %v312 = vpop.f32.mrf.mxu0
  %v313 = vadd.f32 0.0, %v312
  %314 = vmatmul.bf16.gmra.mxu0 %v262
  %v315 = vpop.f32.mrf.mxu0
  %v316 = vadd.f32 0.0, %v315
  %v317 = vpop.f32.mrf.mxu0
  %v318 = vadd.f32 0.0, %v317
  %319 = vdwg.mxu0
  %320 = vst [vmem:[#allocation2 + $0x8] sm:$0xff] %v281
  %321 = vst [vmem:[#allocation2 + $0x18] sm:$0xff] %v283
  %322 = vst [vmem:[#allocation2 + $0x28] sm:$0xff] %v286
  %323 = vst [vmem:[#allocation2 + $0x38] sm:$0xff] %v288
  %324 = vst [vmem:[#allocation2 + $0x48] sm:$0xff] %v291
  %325 = vst [vmem:[#allocation2 + $0x58] sm:$0xff] %v293
  %326 = vst [vmem:[#allocation2 + $0x68] sm:$0xff] %v296
  %327 = vst [vmem:[#allocation2 + $0x78] sm:$0xff] %v298
  %328 = vst [vmem:[#allocation2 + $0x88] sm:$0xff] %v301
  %329 = vst [vmem:[#allocation2 + $0x98] sm:$0xff] %v303
  %330 = vst [vmem:[#allocation2 + $0xa8] sm:$0xff] %v306
  %331 = vst [vmem:[#allocation2 + $0xb8] sm:$0xff] %v308
  %332 = vst [vmem:[#allocation2 + $0xc8] sm:$0xff] %v311
  %333 = vst [vmem:[#allocation2 + $0xd8] sm:$0xff] %v313
  %334 = vst [vmem:[#allocation2 + $0xe8] sm:$0xff] %v316
  %335 = vst [vmem:[#allocation2 + $0xf8] sm:$0xff] %v318
  %v336 = vld [vmem:[#allocation2] sm:$0xff]
  %v337 = vld [vmem:[#allocation2 + $0x8] sm:$0xff]
  %v338 = vld [vmem:[#allocation2 + $0x10] sm:$0xff]
  %v339 = vld [vmem:[#allocation2 + $0x18] sm:$0xff]
  %v340 = vld [vmem:[#allocation2 + $0x20] sm:$0xff]
  %v341 = vld [vmem:[#allocation2 + $0x28] sm:$0xff]
  %v342 = vld [vmem:[#allocation2 + $0x30] sm:$0xff]
  %v343 = vld [vmem:[#allocation2 + $0x38] sm:$0xff]
  %v344 = vld [vmem:[#allocation2 + $0x40] sm:$0xff]
  %v345 = vld [vmem:[#allocation2 + $0x48] sm:$0xff]
  %v346 = vld [vmem:[#allocation2 + $0x50] sm:$0xff]
  %v347 = vld [vmem:[#allocation2 + $0x58] sm:$0xff]
  %v348 = vld [vmem:[#allocation2 + $0x60] sm:$0xff]
  %v349 = vld [vmem:[#allocation2 + $0x68] sm:$0xff]
  %v350 = vld [vmem:[#allocation2 + $0x70] sm:$0xff]
  %v351 = vld [vmem:[#allocation2 + $0x78] sm:$0xff]
  %v352 = vld [vmem:[#allocation2 + $0x80] sm:$0xff]
  %v353 = vld [vmem:[#allocation2 + $0x88] sm:$0xff]
  %v354 = vld [vmem:[#allocation2 + $0x90] sm:$0xff]
  %v355 = vld [vmem:[#allocation2 + $0x98] sm:$0xff]
  %v356 = vld [vmem:[#allocation2 + $0xa0] sm:$0xff]
  %v357 = vld [vmem:[#allocation2 + $0xa8] sm:$0xff]
  %v358 = vld [vmem:[#allocation2 + $0xb0] sm:$0xff]
  %v359 = vld [vmem:[#allocation2 + $0xb8] sm:$0xff]
  %v360 = vld [vmem:[#allocation2 + $0xc0] sm:$0xff]
  %v361 = vld [vmem:[#allocation2 + $0xc8] sm:$0xff]
  %v362 = vld [vmem:[#allocation2 + $0xd0] sm:$0xff]
  %v363 = vld [vmem:[#allocation2 + $0xd8] sm:$0xff]
  %v364 = vld [vmem:[#allocation2 + $0xe0] sm:$0xff]
  %v365 = vld [vmem:[#allocation2 + $0xe8] sm:$0xff]
  %v366 = vld [vmem:[#allocation2 + $0xf0] sm:$0xff]
  %v367 = vld [vmem:[#allocation2 + $0xf8] sm:$0xff]
  %v368 = vadd.f32 %v336, %v337
  %369 = vadd.xlane.f32.xlu0 %v368
  %v370 = vpop.xlane.xlu0 %369
  %v371 = vadd.f32 %v338, %v339
  %372 = vadd.xlane.f32.xlu0 %v371
  %v373 = vpop.xlane.xlu0 %372
  %v374 = vadd.f32 %v340, %v341
  %375 = vadd.xlane.f32.xlu0 %v374
  %v376 = vpop.xlane.xlu0 %375
  %v377 = vadd.f32 %v342, %v343
  %378 = vadd.xlane.f32.xlu0 %v377
  %v379 = vpop.xlane.xlu0 %378
  %v380 = vadd.f32 %v344, %v345
  %381 = vadd.xlane.f32.xlu0 %v380
  %v382 = vpop.xlane.xlu0 %381
  %v383 = vadd.f32 %v346, %v347
  %384 = vadd.xlane.f32.xlu0 %v383
  %v385 = vpop.xlane.xlu0 %384
  %v386 = vadd.f32 %v348, %v349
  %387 = vadd.xlane.f32.xlu0 %v386
  %v388 = vpop.xlane.xlu0 %387
  %v389 = vadd.f32 %v350, %v351
  %390 = vadd.xlane.f32.xlu0 %v389
  %v391 = vpop.xlane.xlu0 %390
  %v392 = vadd.f32 %v352, %v353
  %393 = vadd.xlane.f32.xlu0 %v392
  %v394 = vpop.xlane.xlu0 %393
  %v395 = vadd.f32 %v354, %v355
  %396 = vadd.xlane.f32.xlu0 %v395
  %v397 = vpop.xlane.xlu0 %396
  %v398 = vadd.f32 %v356, %v357
  %399 = vadd.xlane.f32.xlu0 %v398
  %v400 = vpop.xlane.xlu0 %399
  %v401 = vadd.f32 %v358, %v359
  %402 = vadd.xlane.f32.xlu0 %v401
  %v403 = vpop.xlane.xlu0 %402
  %v404 = vadd.f32 %v360, %v361
  %405 = vadd.xlane.f32.xlu0 %v404
  %v406 = vpop.xlane.xlu0 %405
  %v407 = vadd.f32 %v362, %v363
  %408 = vadd.xlane.f32.xlu0 %v407
  %v409 = vpop.xlane.xlu0 %408
  %v410 = vadd.f32 %v364, %v365
  %411 = vadd.xlane.f32.xlu0 %v410
  %v412 = vpop.xlane.xlu0 %411
  %v413 = vadd.f32 %v366, %v367
  %414 = vadd.xlane.f32.xlu0 %v413
  %v415 = vpop.xlane.xlu0 %414
  %v416 = vmul.f32 %v370, 0.00390625
  %v417 = vmul.f32 %v373, 0.00390625
  %v418 = vmul.f32 %v376, 0.00390625
  %v419 = vmul.f32 %v379, 0.00390625
  %v420 = vmul.f32 %v382, 0.00390625
  %v421 = vmul.f32 %v385, 0.00390625
  %v422 = vmul.f32 %v388, 0.00390625
  %v423 = vmul.f32 %v391, 0.00390625
  %v424 = vmul.f32 %v394, 0.00390625
  %v425 = vmul.f32 %v397, 0.00390625
  %v426 = vmul.f32 %v400, 0.00390625
  %v427 = vmul.f32 %v403, 0.00390625
  %v428 = vmul.f32 %v406, 0.00390625
  %v429 = vmul.f32 %v409, 0.00390625
  %v430 = vmul.f32 %v412, 0.00390625
  %v431 = vmul.f32 %v415, 0.00390625
  %v432 = vmul.f32 %v336, %v336
  %v433 = vmul.f32 %v337, %v337
  %v434 = vmul.f32 %v338, %v338
  %v435 = vmul.f32 %v339, %v339
  %v436 = vmul.f32 %v340, %v340
  %v437 = vmul.f32 %v341, %v341
  %v438 = vmul.f32 %v342, %v342
  %v439 = vmul.f32 %v343, %v343
  %v440 = vmul.f32 %v344, %v344
  %v441 = vmul.f32 %v345, %v345
  %v442 = vmul.f32 %v346, %v346
  %v443 = vmul.f32 %v347, %v347
  %v444 = vmul.f32 %v348, %v348
  %v445 = vmul.f32 %v349, %v349
  %v446 = vmul.f32 %v350, %v350
  %v447 = vmul.f32 %v351, %v351
  %v448 = vmul.f32 %v352, %v352
  %v449 = vmul.f32 %v353, %v353
  %v450 = vmul.f32 %v354, %v354
  %v451 = vmul.f32 %v355, %v355
  %v452 = vmul.f32 %v356, %v356
  %v453 = vmul.f32 %v357, %v357
  %v454 = vmul.f32 %v358, %v358
  %v455 = vmul.f32 %v359, %v359
  %v456 = vmul.f32 %v360, %v360
  %v457 = vmul.f32 %v361, %v361
  %v458 = vmul.f32 %v362, %v362
  %v459 = vmul.f32 %v363, %v363
  %v460 = vmul.f32 %v364, %v364
  %v461 = vmul.f32 %v365, %v365
  %v462 = vmul.f32 %v366, %v366
  %v463 = vmul.f32 %v367, %v367
  %v464 = vadd.f32 %v432, %v433
  %465 = vadd.xlane.f32.xlu0 %v464
  %v466 = vpop.xlane.xlu0 %465
  %v467 = vadd.f32 %v434, %v435
  %468 = vadd.xlane.f32.xlu0 %v467
  %v469 = vpop.xlane.xlu0 %468
  %v470 = vadd.f32 %v436, %v437
  %471 = vadd.xlane.f32.xlu0 %v470
  %v472 = vpop.xlane.xlu0 %471
  %v473 = vadd.f32 %v438, %v439
  %474 = vadd.xlane.f32.xlu0 %v473
  %v475 = vpop.xlane.xlu0 %474
  %v476 = vadd.f32 %v440, %v441
  %477 = vadd.xlane.f32.xlu0 %v476
  %v478 = vpop.xlane.xlu0 %477
  %v479 = vadd.f32 %v442, %v443
  %480 = vadd.xlane.f32.xlu0 %v479
  %v481 = vpop.xlane.xlu0 %480
  %v482 = vadd.f32 %v444, %v445
  %483 = vadd.xlane.f32.xlu0 %v482
  %v484 = vpop.xlane.xlu0 %483
  %v485 = vadd.f32 %v446, %v447
  %486 = vadd.xlane.f32.xlu0 %v485
  %v487 = vpop.xlane.xlu0 %486
  %v488 = vadd.f32 %v448, %v449
  %489 = vadd.xlane.f32.xlu0 %v488
  %v490 = vpop.xlane.xlu0 %489
  %v491 = vadd.f32 %v450, %v451
  %492 = vadd.xlane.f32.xlu0 %v491
  %v493 = vpop.xlane.xlu0 %492
  %v494 = vadd.f32 %v452, %v453
  %495 = vadd.xlane.f32.xlu0 %v494
  %v496 = vpop.xlane.xlu0 %495
  %v497 = vadd.f32 %v454, %v455
  %498 = vadd.xlane.f32.xlu0 %v497
  %v499 = vpop.xlane.xlu0 %498
  %v500 = vadd.f32 %v456, %v457
  %501 = vadd.xlane.f32.xlu0 %v500
  %v502 = vpop.xlane.xlu0 %501
  %v503 = vadd.f32 %v458, %v459
  %504 = vadd.xlane.f32.xlu0 %v503
  %v505 = vpop.xlane.xlu0 %504
  %v506 = vadd.f32 %v460, %v461
  %507 = vadd.xlane.f32.xlu0 %v506
  %v508 = vpop.xlane.xlu0 %507
  %v509 = vadd.f32 %v462, %v463
  %510 = vadd.xlane.f32.xlu0 %v509
  %v511 = vpop.xlane.xlu0 %510
  %v512 = vmul.f32 %v466, 0.00390625
  %v513 = vmul.f32 %v469, 0.00390625
  %v514 = vmul.f32 %v472, 0.00390625
  %v515 = vmul.f32 %v475, 0.00390625
  %v516 = vmul.f32 %v478, 0.00390625
  %v517 = vmul.f32 %v481, 0.00390625
  %v518 = vmul.f32 %v484, 0.00390625
  %v519 = vmul.f32 %v487, 0.00390625
  %v520 = vmul.f32 %v490, 0.00390625
  %v521 = vmul.f32 %v493, 0.00390625
  %v522 = vmul.f32 %v496, 0.00390625
  %v523 = vmul.f32 %v499, 0.00390625
  %v524 = vmul.f32 %v502, 0.00390625
  %v525 = vmul.f32 %v505, 0.00390625
  %v526 = vmul.f32 %v508, 0.00390625
  %v527 = vmul.f32 %v511, 0.00390625
  %v528 = vmul.f32 %v416, %v416
  %v529 = vmul.f32 %v417, %v417
  %v530 = vmul.f32 %v418, %v418
  %v531 = vmul.f32 %v419, %v419
  %v532 = vmul.f32 %v420, %v420
  %v533 = vmul.f32 %v421, %v421
  %v534 = vmul.f32 %v422, %v422
  %v535 = vmul.f32 %v423, %v423
  %v536 = vmul.f32 %v424, %v424
  %v537 = vmul.f32 %v425, %v425
  %v538 = vmul.f32 %v426, %v426
  %v539 = vmul.f32 %v427, %v427
  %v540 = vmul.f32 %v428, %v428
  %v541 = vmul.f32 %v429, %v429
  %v542 = vmul.f32 %v430, %v430
  %v543 = vmul.f32 %v431, %v431
  %v544 = vsub.f32 %v512, %v528
  %v545 = vsub.f32 %v513, %v529
  %v546 = vsub.f32 %v514, %v530
  %v547 = vsub.f32 %v515, %v531
  %v548 = vsub.f32 %v516, %v532
  %v549 = vsub.f32 %v517, %v533
  %v550 = vsub.f32 %v518, %v534
  %v551 = vsub.f32 %v519, %v535
  %v552 = vsub.f32 %v520, %v536
  %v553 = vsub.f32 %v521, %v537
  %v554 = vsub.f32 %v522, %v538
  %v555 = vsub.f32 %v523, %v539
  %v556 = vsub.f32 %v524, %v540
  %v557 = vsub.f32 %v525, %v541
  %v558 = vsub.f32 %v526, %v542
  %v559 = vsub.f32 %v527, %v543
  %v560 = vld [vmem:[%s3] sm:$0xff]
  %v561 = vld [vmem:[%s3 + $0x8] sm:$0xff]
  %v562 = vld [vmem:[%s3 + $0x10] sm:$0xff]
  %v563 = vld [vmem:[%s3 + $0x18] sm:$0xff]
  %v564 = vld [vmem:[%s3 + $0x20] sm:$0xff]
  %v565 = vld [vmem:[%s3 + $0x28] sm:$0xff]
  %v566 = vld [vmem:[%s3 + $0x30] sm:$0xff]
  %v567 = vld [vmem:[%s3 + $0x38] sm:$0xff]
  %v568 = vld [vmem:[%s3 + $0x40] sm:$0xff]
  %v569 = vld [vmem:[%s3 + $0x48] sm:$0xff]
  %v570 = vld [vmem:[%s3 + $0x50] sm:$0xff]
  %v571 = vld [vmem:[%s3 + $0x58] sm:$0xff]
  %v572 = vld [vmem:[%s3 + $0x60] sm:$0xff]
  %v573 = vld [vmem:[%s3 + $0x68] sm:$0xff]
  %v574 = vld [vmem:[%s3 + $0x70] sm:$0xff]
  %v575 = vld [vmem:[%s3 + $0x78] sm:$0xff]
  %v576 = vadd.f32 %v544, 1e-05
  %v577 = vadd.f32 %v545, 1e-05
  %v578 = vadd.f32 %v546, 1e-05
  %v579 = vadd.f32 %v547, 1e-05
  %v580 = vadd.f32 %v548, 1e-05
  %v581 = vadd.f32 %v549, 1e-05
  %v582 = vadd.f32 %v550, 1e-05
  %v583 = vadd.f32 %v551, 1e-05
  %v584 = vadd.f32 %v552, 1e-05
  %v585 = vadd.f32 %v553, 1e-05
  %v586 = vadd.f32 %v554, 1e-05
  %v587 = vadd.f32 %v555, 1e-05
  %v588 = vadd.f32 %v556, 1e-05
  %v589 = vadd.f32 %v557, 1e-05
  %v590 = vadd.f32 %v558, 1e-05
  %v591 = vadd.f32 %v559, 1e-05
  %v592 = vrsqrt.pop %v576
  %v593 = vmul.f32 %v592, %v576
  %v594 = vmul.f32 %v593, %v592
  %v595 = vmul.f32 0.5, %v594
  %v596 = vsub.f32 1.5, %v595
  %v597 = vmul.f32 %v592, %v596
  %vm598 = vweird.f32 %v576
  %vm599 = vweird.f32 %v592
  %vm600 = vmor %vm598, %vm599
  %v601 = vsel %vm600, %v592, %v597
  %v602 = vrsqrt.pop %v577
  %v603 = vmul.f32 %v602, %v577
  %v604 = vmul.f32 %v603, %v602
  %v605 = vmul.f32 0.5, %v604
  %v606 = vsub.f32 1.5, %v605
  %v607 = vmul.f32 %v602, %v606
  %vm608 = vweird.f32 %v577
  %vm609 = vweird.f32 %v602
  %vm610 = vmor %vm608, %vm609
  %v611 = vsel %vm610, %v602, %v607
  %v612 = vrsqrt.pop %v578
  %v613 = vmul.f32 %v612, %v578
  %v614 = vmul.f32 %v613, %v612
  %v615 = vmul.f32 0.5, %v614
  %v616 = vsub.f32 1.5, %v615
  %v617 = vmul.f32 %v612, %v616
  %vm618 = vweird.f32 %v578
  %vm619 = vweird.f32 %v612
  %vm620 = vmor %vm618, %vm619
  %v621 = vsel %vm620, %v612, %v617
  %v622 = vrsqrt.pop %v579
  %v623 = vmul.f32 %v622, %v579
  %v624 = vmul.f32 %v623, %v622
  %v625 = vmul.f32 0.5, %v624
  %v626 = vsub.f32 1.5, %v625
  %v627 = vmul.f32 %v622, %v626
  %vm628 = vweird.f32 %v579
  %vm629 = vweird.f32 %v622
  %vm630 = vmor %vm628, %vm629
  %v631 = vsel %vm630, %v622, %v627
  %v632 = vrsqrt.pop %v580
  %v633 = vmul.f32 %v632, %v580
  %v634 = vmul.f32 %v633, %v632
  %v635 = vmul.f32 0.5, %v634
  %v636 = vsub.f32 1.5, %v635
  %v637 = vmul.f32 %v632, %v636
  %vm638 = vweird.f32 %v580
  %vm639 = vweird.f32 %v632
  %vm640 = vmor %vm638, %vm639
  %v641 = vsel %vm640, %v632, %v637
  %v642 = vrsqrt.pop %v581
  %v643 = vmul.f32 %v642, %v581
  %v644 = vmul.f32 %v643, %v642
  %v645 = vmul.f32 0.5, %v644
  %v646 = vsub.f32 1.5, %v645
  %v647 = vmul.f32 %v642, %v646
  %vm648 = vweird.f32 %v581
  %vm649 = vweird.f32 %v642
  %vm650 = vmor %vm648, %vm649
  %v651 = vsel %vm650, %v642, %v647
  %v652 = vrsqrt.pop %v582
  %v653 = vmul.f32 %v652, %v582
  %v654 = vmul.f32 %v653, %v652
  %v655 = vmul.f32 0.5, %v654
  %v656 = vsub.f32 1.5, %v655
  %v657 = vmul.f32 %v652, %v656
  %vm658 = vweird.f32 %v582
  %vm659 = vweird.f32 %v652
  %vm660 = vmor %vm658, %vm659
  %v661 = vsel %vm660, %v652, %v657
  %v662 = vrsqrt.pop %v583
  %v663 = vmul.f32 %v662, %v583
  %v664 = vmul.f32 %v663, %v662
  %v665 = vmul.f32 0.5, %v664
  %v666 = vsub.f32 1.5, %v665
  %v667 = vmul.f32 %v662, %v666
  %vm668 = vweird.f32 %v583
  %vm669 = vweird.f32 %v662
  %vm670 = vmor %vm668, %vm669
  %v671 = vsel %vm670, %v662, %v667
  %v672 = vrsqrt.pop %v584
  %v673 = vmul.f32 %v672, %v584
  %v674 = vmul.f32 %v673, %v672
  %v675 = vmul.f32 0.5, %v674
  %v676 = vsub.f32 1.5, %v675
  %v677 = vmul.f32 %v672, %v676
  %vm678 = vweird.f32 %v584
  %vm679 = vweird.f32 %v672
  %vm680 = vmor %vm678, %vm679
  %v681 = vsel %vm680, %v672, %v677
  %v682 = vrsqrt.pop %v585
  %v683 = vmul.f32 %v682, %v585
  %v684 = vmul.f32 %v683, %v682
  %v685 = vmul.f32 0.5, %v684
  %v686 = vsub.f32 1.5, %v685
  %v687 = vmul.f32 %v682, %v686
  %vm688 = vweird.f32 %v585
  %vm689 = vweird.f32 %v682
  %vm690 = vmor %vm688, %vm689
  %v691 = vsel %vm690, %v682, %v687
  %v692 = vrsqrt.pop %v586
  %v693 = vmul.f32 %v692, %v586
  %v694 = vmul.f32 %v693, %v692
  %v695 = vmul.f32 0.5, %v694
  %v696 = vsub.f32 1.5, %v695
  %v697 = vmul.f32 %v692, %v696
  %vm698 = vweird.f32 %v586
  %vm699 = vweird.f32 %v692
  %vm700 = vmor %vm698, %vm699
  %v701 = vsel %vm700, %v692, %v697
  %v702 = vrsqrt.pop %v587
  %v703 = vmul.f32 %v702, %v587
  %v704 = vmul.f32 %v703, %v702
  %v705 = vmul.f32 0.5, %v704
  %v706 = vsub.f32 1.5, %v705
  %v707 = vmul.f32 %v702, %v706
  %vm708 = vweird.f32 %v587
  %vm709 = vweird.f32 %v702
  %vm710 = vmor %vm708, %vm709
  %v711 = vsel %vm710, %v702, %v707
  %v712 = vrsqrt.pop %v588
  %v713 = vmul.f32 %v712, %v588
  %v714 = vmul.f32 %v713, %v712
  %v715 = vmul.f32 0.5, %v714
  %v716 = vsub.f32 1.5, %v715
  %v717 = vmul.f32 %v712, %v716
  %vm718 = vweird.f32 %v588
  %vm719 = vweird.f32 %v712
  %vm720 = vmor %vm718, %vm719
  %v721 = vsel %vm720, %v712, %v717
  %v722 = vrsqrt.pop %v589
  %v723 = vmul.f32 %v722, %v589
  %v724 = vmul.f32 %v723, %v722
  %v725 = vmul.f32 0.5, %v724
  %v726 = vsub.f32 1.5, %v725
  %v727 = vmul.f32 %v722, %v726
  %vm728 = vweird.f32 %v589
  %vm729 = vweird.f32 %v722
  %vm730 = vmor %vm728, %vm729
  %v731 = vsel %vm730, %v722, %v727
  %v732 = vrsqrt.pop %v590
  %v733 = vmul.f32 %v732, %v590
  %v734 = vmul.f32 %v733, %v732
  %v735 = vmul.f32 0.5, %v734
  %v736 = vsub.f32 1.5, %v735
  %v737 = vmul.f32 %v732, %v736
  %vm738 = vweird.f32 %v590
  %vm739 = vweird.f32 %v732
  %vm740 = vmor %vm738, %vm739
  %v741 = vsel %vm740, %v732, %v737
  %v742 = vrsqrt.pop %v591
  %v743 = vmul.f32 %v742, %v591
  %v744 = vmul.f32 %v743, %v742
  %v745 = vmul.f32 0.5, %v744
  %v746 = vsub.f32 1.5, %v745
  %v747 = vmul.f32 %v742, %v746
  %vm748 = vweird.f32 %v591
  %vm749 = vweird.f32 %v742
  %vm750 = vmor %vm748, %vm749
  %v751 = vsel %vm750, %v742, %v747
  %v752 = vmul.f32 %v560, %v601
  %v753 = vmul.f32 %v561, %v611
  %v754 = vmul.f32 %v562, %v621
  %v755 = vmul.f32 %v563, %v631
  %v756 = vmul.f32 %v564, %v641
  %v757 = vmul.f32 %v565, %v651
  %v758 = vmul.f32 %v566, %v661
  %v759 = vmul.f32 %v567, %v671
  %v760 = vmul.f32 %v568, %v681
  %v761 = vmul.f32 %v569, %v691
  %v762 = vmul.f32 %v570, %v701
  %v763 = vmul.f32 %v571, %v711
  %v764 = vmul.f32 %v572, %v721
  %v765 = vmul.f32 %v573, %v731
  %v766 = vmul.f32 %v574, %v741
  %v767 = vmul.f32 %v575, %v751
  %v768 = vld [vmem:[%s4] sm:$0xff]
  %v769 = vld [vmem:[%s4 + $0x8] sm:$0xff]
  %v770 = vld [vmem:[%s4 + $0x10] sm:$0xff]
  %v771 = vld [vmem:[%s4 + $0x18] sm:$0xff]
  %v772 = vld [vmem:[%s4 + $0x20] sm:$0xff]
  %v773 = vld [vmem:[%s4 + $0x28] sm:$0xff]
  %v774 = vld [vmem:[%s4 + $0x30] sm:$0xff]
  %v775 = vld [vmem:[%s4 + $0x38] sm:$0xff]
  %v776 = vld [vmem:[%s4 + $0x40] sm:$0xff]
  %v777 = vld [vmem:[%s4 + $0x48] sm:$0xff]
  %v778 = vld [vmem:[%s4 + $0x50] sm:$0xff]
  %v779 = vld [vmem:[%s4 + $0x58] sm:$0xff]
  %v780 = vld [vmem:[%s4 + $0x60] sm:$0xff]
  %v781 = vld [vmem:[%s4 + $0x68] sm:$0xff]
  %v782 = vld [vmem:[%s4 + $0x70] sm:$0xff]
  %v783 = vld [vmem:[%s4 + $0x78] sm:$0xff]
  %v784 = vmul.f32 %v416, %v752
  %v785 = vmul.f32 %v417, %v753
  %v786 = vmul.f32 %v418, %v754
  %v787 = vmul.f32 %v419, %v755
  %v788 = vmul.f32 %v420, %v756
  %v789 = vmul.f32 %v421, %v757
  %v790 = vmul.f32 %v422, %v758
  %v791 = vmul.f32 %v423, %v759
  %v792 = vmul.f32 %v424, %v760
  %v793 = vmul.f32 %v425, %v761
  %v794 = vmul.f32 %v426, %v762
  %v795 = vmul.f32 %v427, %v763
  %v796 = vmul.f32 %v428, %v764
  %v797 = vmul.f32 %v429, %v765
  %v798 = vmul.f32 %v430, %v766
  %v799 = vmul.f32 %v431, %v767
  %v800 = vsub.f32 %v768, %v784
  %v801 = vsub.f32 %v769, %v785
  %v802 = vsub.f32 %v770, %v786
  %v803 = vsub.f32 %v771, %v787
  %v804 = vsub.f32 %v772, %v788
  %v805 = vsub.f32 %v773, %v789
  %v806 = vsub.f32 %v774, %v790
  %v807 = vsub.f32 %v775, %v791
  %v808 = vsub.f32 %v776, %v792
  %v809 = vsub.f32 %v777, %v793
  %v810 = vsub.f32 %v778, %v794
  %v811 = vsub.f32 %v779, %v795
  %v812 = vsub.f32 %v780, %v796
  %v813 = vsub.f32 %v781, %v797
  %v814 = vsub.f32 %v782, %v798
  %v815 = vsub.f32 %v783, %v799
  %v816 = vld [vmem:[#allocation2] sm:$0xff]
  %v817 = vld [vmem:[#allocation2 + $0x10] sm:$0xff]
  %v818 = vld [vmem:[#allocation2 + $0x20] sm:$0xff]
  %v819 = vld [vmem:[#allocation2 + $0x30] sm:$0xff]
  %v820 = vld [vmem:[#allocation2 + $0x40] sm:$0xff]
  %v821 = vld [vmem:[#allocation2 + $0x50] sm:$0xff]
  %v822 = vld [vmem:[#allocation2 + $0x60] sm:$0xff]
  %v823 = vld [vmem:[#allocation2 + $0x70] sm:$0xff]
  %v824 = vld [vmem:[#allocation2 + $0x80] sm:$0xff]
  %v825 = vld [vmem:[#allocation2 + $0x90] sm:$0xff]
  %v826 = vld [vmem:[#allocation2 + $0xa0] sm:$0xff]
  %v827 = vld [vmem:[#allocation2 + $0xb0] sm:$0xff]
  %v828 = vld [vmem:[#allocation2 + $0xc0] sm:$0xff]
  %v829 = vld [vmem:[#allocation2 + $0xd0] sm:$0xff]
  %v830 = vld [vmem:[#allocation2 + $0xe0] sm:$0xff]
  %v831 = vld [vmem:[#allocation2 + $0xf0] sm:$0xff]
  %833 = vset.pattern.permute.xlu0 0
  %834 = vperm.xlu0 %833, %v752
  %v835 = vpop.permute.xlu0 %834
  %838 = vset.pattern.permute.xlu0 0
  %839 = vperm.xlu0 %838, %v753
  %v840 = vpop.permute.xlu0 %839
  %843 = vset.pattern.permute.xlu0 0
  %844 = vperm.xlu0 %843, %v754
  %v845 = vpop.permute.xlu0 %844
  %848 = vset.pattern.permute.xlu0 0
  %849 = vperm.xlu0 %848, %v755
  %v850 = vpop.permute.xlu0 %849
  %853 = vset.pattern.permute.xlu0 0
  %854 = vperm.xlu0 %853, %v756
  %v855 = vpop.permute.xlu0 %854
  %858 = vset.pattern.permute.xlu0 0
  %859 = vperm.xlu0 %858, %v757
  %v860 = vpop.permute.xlu0 %859
  %863 = vset.pattern.permute.xlu0 0
  %864 = vperm.xlu0 %863, %v758
  %v865 = vpop.permute.xlu0 %864
  %868 = vset.pattern.permute.xlu0 0
  %869 = vperm.xlu0 %868, %v759
  %v870 = vpop.permute.xlu0 %869
  %873 = vset.pattern.permute.xlu0 0
  %874 = vperm.xlu0 %873, %v760
  %v875 = vpop.permute.xlu0 %874
  %878 = vset.pattern.permute.xlu0 0
  %879 = vperm.xlu0 %878, %v761
  %v880 = vpop.permute.xlu0 %879
  %883 = vset.pattern.permute.xlu0 0
  %884 = vperm.xlu0 %883, %v762
  %v885 = vpop.permute.xlu0 %884
  %888 = vset.pattern.permute.xlu0 0
  %889 = vperm.xlu0 %888, %v763
  %v890 = vpop.permute.xlu0 %889
  %893 = vset.pattern.permute.xlu0 0
  %894 = vperm.xlu0 %893, %v764
  %v895 = vpop.permute.xlu0 %894
  %898 = vset.pattern.permute.xlu0 0
  %899 = vperm.xlu0 %898, %v765
  %v900 = vpop.permute.xlu0 %899
  %903 = vset.pattern.permute.xlu0 0
  %904 = vperm.xlu0 %903, %v766
  %v905 = vpop.permute.xlu0 %904
  %908 = vset.pattern.permute.xlu0 0
  %909 = vperm.xlu0 %908, %v767
  %v910 = vpop.permute.xlu0 %909
  %v912 = vmul.f32 %v816, %v835
  %v913 = vmul.f32 %v817, %v840
  %v914 = vmul.f32 %v818, %v845
  %v915 = vmul.f32 %v819, %v850
  %v916 = vmul.f32 %v820, %v855
  %v917 = vmul.f32 %v821, %v860
  %v918 = vmul.f32 %v822, %v865
  %v919 = vmul.f32 %v823, %v870
  %v920 = vmul.f32 %v824, %v875
  %v921 = vmul.f32 %v825, %v880
  %v922 = vmul.f32 %v826, %v885
  %v923 = vmul.f32 %v827, %v890
  %v924 = vmul.f32 %v828, %v895
  %v925 = vmul.f32 %v829, %v900
  %v926 = vmul.f32 %v830, %v905
  %v927 = vmul.f32 %v831, %v910
  %929 = vset.pattern.permute.xlu0 0
  %930 = vperm.xlu0 %929, %v800
  %v931 = vpop.permute.xlu0 %930
  %934 = vset.pattern.permute.xlu0 0
  %935 = vperm.xlu0 %934, %v801
  %v936 = vpop.permute.xlu0 %935
  %939 = vset.pattern.permute.xlu0 0
  %940 = vperm.xlu0 %939, %v802
  %v941 = vpop.permute.xlu0 %940
  %944 = vset.pattern.permute.xlu0 0
  %945 = vperm.xlu0 %944, %v803
  %v946 = vpop.permute.xlu0 %945
  %949 = vset.pattern.permute.xlu0 0
  %950 = vperm.xlu0 %949, %v804
  %v951 = vpop.permute.xlu0 %950
  %954 = vset.pattern.permute.xlu0 0
  %955 = vperm.xlu0 %954, %v805
  %v956 = vpop.permute.xlu0 %955
  %959 = vset.pattern.permute.xlu0 0
  %960 = vperm.xlu0 %959, %v806
  %v961 = vpop.permute.xlu0 %960
  %964 = vset.pattern.permute.xlu0 0
  %965 = vperm.xlu0 %964, %v807
  %v966 = vpop.permute.xlu0 %965
  %969 = vset.pattern.permute.xlu0 0
  %970 = vperm.xlu0 %969, %v808
  %v971 = vpop.permute.xlu0 %970
  %974 = vset.pattern.permute.xlu0 0
  %975 = vperm.xlu0 %974, %v809
  %v976 = vpop.permute.xlu0 %975
  %979 = vset.pattern.permute.xlu0 0
  %980 = vperm.xlu0 %979, %v810
  %v981 = vpop.permute.xlu0 %980
  %984 = vset.pattern.permute.xlu0 0
  %985 = vperm.xlu0 %984, %v811
  %v986 = vpop.permute.xlu0 %985
  %989 = vset.pattern.permute.xlu0 0
  %990 = vperm.xlu0 %989, %v812
  %v991 = vpop.permute.xlu0 %990
  %994 = vset.pattern.permute.xlu0 0
  %995 = vperm.xlu0 %994, %v813
  %v996 = vpop.permute.xlu0 %995
  %999 = vset.pattern.permute.xlu0 0
  %1000 = vperm.xlu0 %999, %v814
  %v1001 = vpop.permute.xlu0 %1000
  %1004 = vset.pattern.permute.xlu0 0
  %1005 = vperm.xlu0 %1004, %v815
  %v1006 = vpop.permute.xlu0 %1005
  %v1008 = vadd.f32 %v912, %v931
  %v1009 = vadd.f32 %v913, %v936
  %v1010 = vadd.f32 %v914, %v941
  %v1011 = vadd.f32 %v915, %v946
  %v1012 = vadd.f32 %v916, %v951
  %v1013 = vadd.f32 %v917, %v956
  %v1014 = vadd.f32 %v918, %v961
  %v1015 = vadd.f32 %v919, %v966
  %v1016 = vadd.f32 %v920, %v971
  %v1017 = vadd.f32 %v921, %v976
  %v1018 = vadd.f32 %v922, %v981
  %v1019 = vadd.f32 %v923, %v986
  %v1020 = vadd.f32 %v924, %v991
  %v1021 = vadd.f32 %v925, %v996
  %v1022 = vadd.f32 %v926, %v1001
  %v1023 = vadd.f32 %v927, %v1006
  %v1024 = vmul.f32 %v1008, 0.5
  %v1025 = vmul.f32 %v1009, 0.5
  %v1026 = vmul.f32 %v1010, 0.5
  %v1027 = vmul.f32 %v1011, 0.5
  %v1028 = vmul.f32 %v1012, 0.5
  %v1029 = vmul.f32 %v1013, 0.5
  %v1030 = vmul.f32 %v1014, 0.5
  %v1031 = vmul.f32 %v1015, 0.5
  %v1032 = vmul.f32 %v1016, 0.5
  %v1033 = vmul.f32 %v1017, 0.5
  %v1034 = vmul.f32 %v1018, 0.5
  %v1035 = vmul.f32 %v1019, 0.5
  %v1036 = vmul.f32 %v1020, 0.5
  %v1037 = vmul.f32 %v1021, 0.5
  %v1038 = vmul.f32 %v1022, 0.5
  %v1039 = vmul.f32 %v1023, 0.5
  %v1040 = vmul.f32 %v1008, 0.044715
  %v1041 = vmul.f32 %v1009, 0.044715
  %v1042 = vmul.f32 %v1010, 0.044715
  %v1043 = vmul.f32 %v1011, 0.044715
  %v1044 = vmul.f32 %v1012, 0.044715
  %v1045 = vmul.f32 %v1013, 0.044715
  %v1046 = vmul.f32 %v1014, 0.044715
  %v1047 = vmul.f32 %v1015, 0.044715
  %v1048 = vmul.f32 %v1016, 0.044715
  %v1049 = vmul.f32 %v1017, 0.044715
  %v1050 = vmul.f32 %v1018, 0.044715
  %v1051 = vmul.f32 %v1019, 0.044715
  %v1052 = vmul.f32 %v1020, 0.044715
  %v1053 = vmul.f32 %v1021, 0.044715
  %v1054 = vmul.f32 %v1022, 0.044715
  %v1055 = vmul.f32 %v1023, 0.044715
  %v1056 = vmul.f32 %v1040, %v1008
  %v1057 = vmul.f32 %v1041, %v1009
  %v1058 = vmul.f32 %v1042, %v1010
  %v1059 = vmul.f32 %v1043, %v1011
  %v1060 = vmul.f32 %v1044, %v1012
  %v1061 = vmul.f32 %v1045, %v1013
  %v1062 = vmul.f32 %v1046, %v1014
  %v1063 = vmul.f32 %v1047, %v1015
  %v1064 = vmul.f32 %v1048, %v1016
  %v1065 = vmul.f32 %v1049, %v1017
  %v1066 = vmul.f32 %v1050, %v1018
  %v1067 = vmul.f32 %v1051, %v1019
  %v1068 = vmul.f32 %v1052, %v1020
  %v1069 = vmul.f32 %v1053, %v1021
  %v1070 = vmul.f32 %v1054, %v1022
  %v1071 = vmul.f32 %v1055, %v1023
  %v1072 = vmul.f32 %v1056, %v1008
  %v1073 = vmul.f32 %v1057, %v1009
  %v1074 = vmul.f32 %v1058, %v1010
  %v1075 = vmul.f32 %v1059, %v1011
  %v1076 = vmul.f32 %v1060, %v1012
  %v1077 = vmul.f32 %v1061, %v1013
  %v1078 = vmul.f32 %v1062, %v1014
  %v1079 = vmul.f32 %v1063, %v1015
  %v1080 = vmul.f32 %v1064, %v1016
  %v1081 = vmul.f32 %v1065, %v1017
  %v1082 = vmul.f32 %v1066, %v1018
  %v1083 = vmul.f32 %v1067, %v1019
  %v1084 = vmul.f32 %v1068, %v1020
  %v1085 = vmul.f32 %v1069, %v1021
  %v1086 = vmul.f32 %v1070, %v1022
  %v1087 = vmul.f32 %v1071, %v1023
  %v1088 = vadd.f32 %v1008, %v1072
  %v1089 = vadd.f32 %v1009, %v1073
  %v1090 = vadd.f32 %v1010, %v1074
  %v1091 = vadd.f32 %v1011, %v1075
  %v1092 = vadd.f32 %v1012, %v1076
  %v1093 = vadd.f32 %v1013, %v1077
  %v1094 = vadd.f32 %v1014, %v1078
  %v1095 = vadd.f32 %v1015, %v1079
  %v1096 = vadd.f32 %v1016, %v1080
  %v1097 = vadd.f32 %v1017, %v1081
  %v1098 = vadd.f32 %v1018, %v1082
  %v1099 = vadd.f32 %v1019, %v1083
  %v1100 = vadd.f32 %v1020, %v1084
  %v1101 = vadd.f32 %v1021, %v1085
  %v1102 = vadd.f32 %v1022, %v1086
  %v1103 = vadd.f32 %v1023, %v1087
  %v1104 = vmul.f32 %v1088, 0.7978846
  %v1105 = vmul.f32 %v1089, 0.7978846
  %v1106 = vmul.f32 %v1090, 0.7978846
  %v1107 = vmul.f32 %v1091, 0.7978846
  %v1108 = vmul.f32 %v1092, 0.7978846
  %v1109 = vmul.f32 %v1093, 0.7978846
  %v1110 = vmul.f32 %v1094, 0.7978846
  %v1111 = vmul.f32 %v1095, 0.7978846
  %v1112 = vmul.f32 %v1096, 0.7978846
  %v1113 = vmul.f32 %v1097, 0.7978846
  %v1114 = vmul.f32 %v1098, 0.7978846
  %v1115 = vmul.f32 %v1099, 0.7978846
  %v1116 = vmul.f32 %v1100, 0.7978846
  %v1117 = vmul.f32 %v1101, 0.7978846
  %v1118 = vmul.f32 %v1102, 0.7978846
  %v1119 = vmul.f32 %v1103, 0.7978846
  %v1120 = vtanh.pop %v1104
  %v1121 = vtanh.pop %v1105
  %v1122 = vtanh.pop %v1106
  %v1123 = vtanh.pop %v1107
  %v1124 = vtanh.pop %v1108
  %v1125 = vtanh.pop %v1109
  %v1126 = vtanh.pop %v1110
  %v1127 = vtanh.pop %v1111
  %v1128 = vtanh.pop %v1112
  %v1129 = vtanh.pop %v1113
  %v1130 = vtanh.pop %v1114
  %v1131 = vtanh.pop %v1115
  %v1132 = vtanh.pop %v1116
  %v1133 = vtanh.pop %v1117
  %v1134 = vtanh.pop %v1118
  %v1135 = vtanh.pop %v1119
  %v1136 = vadd.f32 %v1120, 1.0
  %v1137 = vadd.f32 %v1121, 1.0
  %v1138 = vadd.f32 %v1122, 1.0
  %v1139 = vadd.f32 %v1123, 1.0
  %v1140 = vadd.f32 %v1124, 1.0
  %v1141 = vadd.f32 %v1125, 1.0
  %v1142 = vadd.f32 %v1126, 1.0
  %v1143 = vadd.f32 %v1127, 1.0
  %v1144 = vadd.f32 %v1128, 1.0
  %v1145 = vadd.f32 %v1129, 1.0
  %v1146 = vadd.f32 %v1130, 1.0
  %v1147 = vadd.f32 %v1131, 1.0
  %v1148 = vadd.f32 %v1132, 1.0
  %v1149 = vadd.f32 %v1133, 1.0
  %v1150 = vadd.f32 %v1134, 1.0
  %v1151 = vadd.f32 %v1135, 1.0
  %v1152 = vmul.f32 %v1024, %v1136
  %v1153 = vmul.f32 %v1025, %v1137
  %v1154 = vmul.f32 %v1026, %v1138
  %v1155 = vmul.f32 %v1027, %v1139
  %v1156 = vmul.f32 %v1028, %v1140
  %v1157 = vmul.f32 %v1029, %v1141
  %v1158 = vmul.f32 %v1030, %v1142
  %v1159 = vmul.f32 %v1031, %v1143
  %v1160 = vmul.f32 %v1032, %v1144
  %v1161 = vmul.f32 %v1033, %v1145
  %v1162 = vmul.f32 %v1034, %v1146
  %v1163 = vmul.f32 %v1035, %v1147
  %v1164 = vmul.f32 %v1036, %v1148
  %v1165 = vmul.f32 %v1037, %v1149
  %v1166 = vmul.f32 %v1038, %v1150
  %v1167 = vmul.f32 %v1039, %v1151
  %v1168 = vld [vmem:[%s2] sm:$0xf]
  %v1169 = vld [vmem:[%s2 + $0x4] sm:$0xf]
  %v1170 = vld [vmem:[%s2 + $0x8] sm:$0xf]
  %v1171 = vld [vmem:[%s2 + $0xc] sm:$0xf]
  %v1172 = vld [vmem:[%s2 + $0x10] sm:$0xf]
  %v1173 = vld [vmem:[%s2 + $0x14] sm:$0xf]
  %v1174 = vld [vmem:[%s2 + $0x18] sm:$0xf]
  %v1175 = vld [vmem:[%s2 + $0x1c] sm:$0xf]
  %v1176 = vld [vmem:[%s2 + $0x20] sm:$0xf]
  %v1177 = vld [vmem:[%s2 + $0x24] sm:$0xf]
  %v1178 = vld [vmem:[%s2 + $0x28] sm:$0xf]
  %v1179 = vld [vmem:[%s2 + $0x2c] sm:$0xf]
  %v1180 = vld [vmem:[%s2 + $0x30] sm:$0xf]
  %v1181 = vld [vmem:[%s2 + $0x34] sm:$0xf]
  %v1182 = vld [vmem:[%s2 + $0x38] sm:$0xf]
  %v1183 = vld [vmem:[%s2 + $0x3c] sm:$0xf]
  %v1184 = vpack.c.bf16 %v1153, %v1152
  %v1185 = vpack.c.bf16 %v1155, %v1154
  %v1186 = vpack.c.bf16 %v1157, %v1156
  %v1187 = vpack.c.bf16 %v1159, %v1158
  %v1188 = vpack.c.bf16 %v1161, %v1160
  %v1189 = vpack.c.bf16 %v1163, %v1162
  %v1190 = vpack.c.bf16 %v1165, %v1164
  %v1191 = vpack.c.bf16 %v1167, %v1166
  %v1208 = vunpack.c.l.b16 %v1168
  %v1209 = vunpack.c.l.b16 %v1169
  %v1210 = vunpack.c.l.b16 %v1170
  %v1211 = vunpack.c.l.b16 %v1171
  %v1212 = vunpack.c.l.b16 %v1172
  %v1213 = vunpack.c.l.b16 %v1173
  %v1214 = vunpack.c.l.b16 %v1174
  %v1215 = vunpack.c.l.b16 %v1175
  %v1216 = vunpack.c.l.b16 %v1176
  %v1217 = vunpack.c.l.b16 %v1177
  %v1218 = vunpack.c.l.b16 %v1178
  %v1219 = vunpack.c.l.b16 %v1179
  %v1220 = vunpack.c.l.b16 %v1180
  %v1221 = vunpack.c.l.b16 %v1181
  %v1222 = vunpack.c.l.b16 %v1182
  %v1223 = vunpack.c.l.b16 %v1183
  %v1224 = vpack.c.b16 %v1209, %v1208
  %v1225 = vpack.c.b16 %v1211, %v1210
  %v1226 = vpack.c.b16 %v1213, %v1212
  %v1227 = vpack.c.b16 %v1215, %v1214
  %v1228 = vpack.c.b16 %v1217, %v1216
  %v1229 = vpack.c.b16 %v1219, %v1218
  %v1230 = vpack.c.b16 %v1221, %v1220
  %v1231 = vpack.c.b16 %v1223, %v1222
  %1240 = vmatpush.bf16.msra.mxu0 %v1191
  %1241 = vmatpush.bf16.msra.mxu0 %v1190
  %1242 = vmatpush.bf16.msra.mxu0 %v1189
  %1243 = vmatpush.bf16.msra.mxu0 %v1188
  %1244 = vmatpush.bf16.msra.mxu0 %v1187
  %1245 = vmatpush.bf16.msra.mxu0 %v1186
  %1246 = vmatpush.bf16.msra.mxu0 %v1185
  %1247 = vmatpush.bf16.msra.mxu0 %v1184
  %1248 = vmatmul.bf16.gmra.mxu0 %v1224
  %v1249 = vpop.f32.mrf.mxu0
  %v1250 = vadd.f32 0.0, %v1249
  %v1251 = vpop.f32.mrf.mxu0
  %v1252 = vadd.f32 0.0, %v1251
  %1253 = vmatmul.bf16.gmra.mxu0 %v1225
  %v1254 = vpop.f32.mrf.mxu0
  %v1255 = vadd.f32 0.0, %v1254
  %v1256 = vpop.f32.mrf.mxu0
  %v1257 = vadd.f32 0.0, %v1256
  %1258 = vmatmul.bf16.gmra.mxu0 %v1226
  %v1259 = vpop.f32.mrf.mxu0
  %v1260 = vadd.f32 0.0, %v1259
  %v1261 = vpop.f32.mrf.mxu0
  %v1262 = vadd.f32 0.0, %v1261
  %1263 = vmatmul.bf16.gmra.mxu0 %v1227
  %v1264 = vpop.f32.mrf.mxu0
  %v1265 = vadd.f32 0.0, %v1264
  %v1266 = vpop.f32.mrf.mxu0
  %v1267 = vadd.f32 0.0, %v1266
  %1268 = vmatmul.bf16.gmra.mxu0 %v1228
  %v1269 = vpop.f32.mrf.mxu0
  %v1270 = vadd.f32 0.0, %v1269
  %v1271 = vpop.f32.mrf.mxu0
  %v1272 = vadd.f32 0.0, %v1271
  %1273 = vmatmul.bf16.gmra.mxu0 %v1229
  %v1274 = vpop.f32.mrf.mxu0
  %v1275 = vadd.f32 0.0, %v1274
  %v1276 = vpop.f32.mrf.mxu0
  %v1277 = vadd.f32 0.0, %v1276
  %1278 = vmatmul.bf16.gmra.mxu0 %v1230
  %v1279 = vpop.f32.mrf.mxu0
  %v1280 = vadd.f32 0.0, %v1279
  %v1281 = vpop.f32.mrf.mxu0
  %v1282 = vadd.f32 0.0, %v1281
  %1283 = vmatmul.bf16.gmra.mxu0 %v1231
  %v1284 = vpop.f32.mrf.mxu0
  %v1285 = vadd.f32 0.0, %v1284
  %v1286 = vpop.f32.mrf.mxu0
  %v1287 = vadd.f32 0.0, %v1286
  %1288 = vdwg.mxu0
  %1289 = vst [vmem:[#allocation3] sm:$0xff] %v1250
  %1290 = vst [vmem:[#allocation3 + $0x10] sm:$0xff] %v1252
  %1291 = vst [vmem:[#allocation3 + $0x20] sm:$0xff] %v1255
  %1292 = vst [vmem:[#allocation3 + $0x30] sm:$0xff] %v1257
  %1293 = vst [vmem:[#allocation3 + $0x40] sm:$0xff] %v1260
  %1294 = vst [vmem:[#allocation3 + $0x50] sm:$0xff] %v1262
  %1295 = vst [vmem:[#allocation3 + $0x60] sm:$0xff] %v1265
  %1296 = vst [vmem:[#allocation3 + $0x70] sm:$0xff] %v1267
  %1297 = vst [vmem:[#allocation3 + $0x80] sm:$0xff] %v1270
  %1298 = vst [vmem:[#allocation3 + $0x90] sm:$0xff] %v1272
  %1299 = vst [vmem:[#allocation3 + $0xa0] sm:$0xff] %v1275
  %1300 = vst [vmem:[#allocation3 + $0xb0] sm:$0xff] %v1277
  %1301 = vst [vmem:[#allocation3 + $0xc0] sm:$0xff] %v1280
  %1302 = vst [vmem:[#allocation3 + $0xd0] sm:$0xff] %v1282
  %1303 = vst [vmem:[#allocation3 + $0xe0] sm:$0xff] %v1285
  %1304 = vst [vmem:[#allocation3 + $0xf0] sm:$0xff] %v1287
  %v1305 = vld [vmem:[#allocation2 + $0x8] sm:$0xff]
  %v1306 = vld [vmem:[#allocation2 + $0x18] sm:$0xff]
  %v1307 = vld [vmem:[#allocation2 + $0x28] sm:$0xff]
  %v1308 = vld [vmem:[#allocation2 + $0x38] sm:$0xff]
  %v1309 = vld [vmem:[#allocation2 + $0x48] sm:$0xff]
  %v1310 = vld [vmem:[#allocation2 + $0x58] sm:$0xff]
  %v1311 = vld [vmem:[#allocation2 + $0x68] sm:$0xff]
  %v1312 = vld [vmem:[#allocation2 + $0x78] sm:$0xff]
  %v1313 = vld [vmem:[#allocation2 + $0x88] sm:$0xff]
  %v1314 = vld [vmem:[#allocation2 + $0x98] sm:$0xff]
  %v1315 = vld [vmem:[#allocation2 + $0xa8] sm:$0xff]
  %v1316 = vld [vmem:[#allocation2 + $0xb8] sm:$0xff]
  %v1317 = vld [vmem:[#allocation2 + $0xc8] sm:$0xff]
  %v1318 = vld [vmem:[#allocation2 + $0xd8] sm:$0xff]
  %v1319 = vld [vmem:[#allocation2 + $0xe8] sm:$0xff]
  %v1320 = vld [vmem:[#allocation2 + $0xf8] sm:$0xff]
  %v1321 = vmul.f32 %v1305, %v835
  %v1322 = vmul.f32 %v1306, %v840
  %v1323 = vmul.f32 %v1307, %v845
  %v1324 = vmul.f32 %v1308, %v850
  %v1325 = vmul.f32 %v1309, %v855
  %v1326 = vmul.f32 %v1310, %v860
  %v1327 = vmul.f32 %v1311, %v865
  %v1328 = vmul.f32 %v1312, %v870
  %v1329 = vmul.f32 %v1313, %v875
  %v1330 = vmul.f32 %v1314, %v880
  %v1331 = vmul.f32 %v1315, %v885
  %v1332 = vmul.f32 %v1316, %v890
  %v1333 = vmul.f32 %v1317, %v895
  %v1334 = vmul.f32 %v1318, %v900
  %v1335 = vmul.f32 %v1319, %v905
  %v1336 = vmul.f32 %v1320, %v910
  %v1337 = vadd.f32 %v1321, %v931
  %v1338 = vadd.f32 %v1322, %v936
  %v1339 = vadd.f32 %v1323, %v941
  %v1340 = vadd.f32 %v1324, %v946
  %v1341 = vadd.f32 %v1325, %v951
  %v1342 = vadd.f32 %v1326, %v956
  %v1343 = vadd.f32 %v1327, %v961
  %v1344 = vadd.f32 %v1328, %v966
  %v1345 = vadd.f32 %v1329, %v971
  %v1346 = vadd.f32 %v1330, %v976
  %v1347 = vadd.f32 %v1331, %v981
  %v1348 = vadd.f32 %v1332, %v986
  %v1349 = vadd.f32 %v1333, %v991
  %v1350 = vadd.f32 %v1334, %v996
  %v1351 = vadd.f32 %v1335, %v1001
  %v1352 = vadd.f32 %v1336, %v1006
  %v1353 = vmul.f32 %v1337, 0.5
  %v1354 = vmul.f32 %v1338, 0.5
  %v1355 = vmul.f32 %v1339, 0.5
  %v1356 = vmul.f32 %v1340, 0.5
  %v1357 = vmul.f32 %v1341, 0.5
  %v1358 = vmul.f32 %v1342, 0.5
  %v1359 = vmul.f32 %v1343, 0.5
  %v1360 = vmul.f32 %v1344, 0.5
  %v1361 = vmul.f32 %v1345, 0.5
  %v1362 = vmul.f32 %v1346, 0.5
  %v1363 = vmul.f32 %v1347, 0.5
  %v1364 = vmul.f32 %v1348, 0.5
  %v1365 = vmul.f32 %v1349, 0.5
  %v1366 = vmul.f32 %v1350, 0.5
  %v1367 = vmul.f32 %v1351, 0.5
  %v1368 = vmul.f32 %v1352, 0.5
  %v1369 = vmul.f32 %v1337, 0.044715
  %v1370 = vmul.f32 %v1338, 0.044715
  %v1371 = vmul.f32 %v1339, 0.044715
  %v1372 = vmul.f32 %v1340, 0.044715
  %v1373 = vmul.f32 %v1341, 0.044715
  %v1374 = vmul.f32 %v1342, 0.044715
  %v1375 = vmul.f32 %v1343, 0.044715
  %v1376 = vmul.f32 %v1344, 0.044715
  %v1377 = vmul.f32 %v1345, 0.044715
  %v1378 = vmul.f32 %v1346, 0.044715
  %v1379 = vmul.f32 %v1347, 0.044715
  %v1380 = vmul.f32 %v1348, 0.044715
  %v1381 = vmul.f32 %v1349, 0.044715
  %v1382 = vmul.f32 %v1350, 0.044715
  %v1383 = vmul.f32 %v1351, 0.044715
  %v1384 = vmul.f32 %v1352, 0.044715
  %v1385 = vmul.f32 %v1369, %v1337
  %v1386 = vmul.f32 %v1370, %v1338
  %v1387 = vmul.f32 %v1371, %v1339
  %v1388 = vmul.f32 %v1372, %v1340
  %v1389 = vmul.f32 %v1373, %v1341
  %v1390 = vmul.f32 %v1374, %v1342
  %v1391 = vmul.f32 %v1375, %v1343
  %v1392 = vmul.f32 %v1376, %v1344
  %v1393 = vmul.f32 %v1377, %v1345
  %v1394 = vmul.f32 %v1378, %v1346
  %v1395 = vmul.f32 %v1379, %v1347
  %v1396 = vmul.f32 %v1380, %v1348
  %v1397 = vmul.f32 %v1381, %v1349
  %v1398 = vmul.f32 %v1382, %v1350
  %v1399 = vmul.f32 %v1383, %v1351
  %v1400 = vmul.f32 %v1384, %v1352
  %v1401 = vmul.f32 %v1385, %v1337
  %v1402 = vmul.f32 %v1386, %v1338
  %v1403 = vmul.f32 %v1387, %v1339
  %v1404 = vmul.f32 %v1388, %v1340
  %v1405 = vmul.f32 %v1389, %v1341
  %v1406 = vmul.f32 %v1390, %v1342
  %v1407 = vmul.f32 %v1391, %v1343
  %v1408 = vmul.f32 %v1392, %v1344
  %v1409 = vmul.f32 %v1393, %v1345
  %v1410 = vmul.f32 %v1394, %v1346
  %v1411 = vmul.f32 %v1395, %v1347
  %v1412 = vmul.f32 %v1396, %v1348
  %v1413 = vmul.f32 %v1397, %v1349
  %v1414 = vmul.f32 %v1398, %v1350
  %v1415 = vmul.f32 %v1399, %v1351
  %v1416 = vmul.f32 %v1400, %v1352
  %v1417 = vadd.f32 %v1337, %v1401
  %v1418 = vadd.f32 %v1338, %v1402
  %v1419 = vadd.f32 %v1339, %v1403
  %v1420 = vadd.f32 %v1340, %v1404
  %v1421 = vadd.f32 %v1341, %v1405
  %v1422 = vadd.f32 %v1342, %v1406
  %v1423 = vadd.f32 %v1343, %v1407
  %v1424 = vadd.f32 %v1344, %v1408
  %v1425 = vadd.f32 %v1345, %v1409
  %v1426 = vadd.f32 %v1346, %v1410
  %v1427 = vadd.f32 %v1347, %v1411
  %v1428 = vadd.f32 %v1348, %v1412
  %v1429 = vadd.f32 %v1349, %v1413
  %v1430 = vadd.f32 %v1350, %v1414
  %v1431 = vadd.f32 %v1351, %v1415
  %v1432 = vadd.f32 %v1352, %v1416
  %v1433 = vmul.f32 %v1417, 0.7978846
  %v1434 = vmul.f32 %v1418, 0.7978846
  %v1435 = vmul.f32 %v1419, 0.7978846
  %v1436 = vmul.f32 %v1420, 0.7978846
  %v1437 = vmul.f32 %v1421, 0.7978846
  %v1438 = vmul.f32 %v1422, 0.7978846
  %v1439 = vmul.f32 %v1423, 0.7978846
  %v1440 = vmul.f32 %v1424, 0.7978846
  %v1441 = vmul.f32 %v1425, 0.7978846
  %v1442 = vmul.f32 %v1426, 0.7978846
  %v1443 = vmul.f32 %v1427, 0.7978846
  %v1444 = vmul.f32 %v1428, 0.7978846
  %v1445 = vmul.f32 %v1429, 0.7978846
  %v1446 = vmul.f32 %v1430, 0.7978846
  %v1447 = vmul.f32 %v1431, 0.7978846
  %v1448 = vmul.f32 %v1432, 0.7978846
  %v1449 = vtanh.pop %v1433
  %v1450 = vtanh.pop %v1434
  %v1451 = vtanh.pop %v1435
  %v1452 = vtanh.pop %v1436
  %v1453 = vtanh.pop %v1437
  %v1454 = vtanh.pop %v1438
  %v1455 = vtanh.pop %v1439
  %v1456 = vtanh.pop %v1440
  %v1457 = vtanh.pop %v1441
  %v1458 = vtanh.pop %v1442
  %v1459 = vtanh.pop %v1443
  %v1460 = vtanh.pop %v1444
  %v1461 = vtanh.pop %v1445
  %v1462 = vtanh.pop %v1446
  %v1463 = vtanh.pop %v1447
  %v1464 = vtanh.pop %v1448
  %v1465 = vadd.f32 %v1449, 1.0
  %v1466 = vadd.f32 %v1450, 1.0
  %v1467 = vadd.f32 %v1451, 1.0
  %v1468 = vadd.f32 %v1452, 1.0
  %v1469 = vadd.f32 %v1453, 1.0
  %v1470 = vadd.f32 %v1454, 1.0
  %v1471 = vadd.f32 %v1455, 1.0
  %v1472 = vadd.f32 %v1456, 1.0
  %v1473 = vadd.f32 %v1457, 1.0
  %v1474 = vadd.f32 %v1458, 1.0
  %v1475 = vadd.f32 %v1459, 1.0
  %v1476 = vadd.f32 %v1460, 1.0
  %v1477 = vadd.f32 %v1461, 1.0
  %v1478 = vadd.f32 %v1462, 1.0
  %v1479 = vadd.f32 %v1463, 1.0
  %v1480 = vadd.f32 %v1464, 1.0
  %v1481 = vmul.f32 %v1353, %v1465
  %v1482 = vmul.f32 %v1354, %v1466
  %v1483 = vmul.f32 %v1355, %v1467
  %v1484 = vmul.f32 %v1356, %v1468
  %v1485 = vmul.f32 %v1357, %v1469
  %v1486 = vmul.f32 %v1358, %v1470
  %v1487 = vmul.f32 %v1359, %v1471
  %v1488 = vmul.f32 %v1360, %v1472
  %v1489 = vmul.f32 %v1361, %v1473
  %v1490 = vmul.f32 %v1362, %v1474
  %v1491 = vmul.f32 %v1363, %v1475
  %v1492 = vmul.f32 %v1364, %v1476
  %v1493 = vmul.f32 %v1365, %v1477
  %v1494 = vmul.f32 %v1366, %v1478
  %v1495 = vmul.f32 %v1367, %v1479
  %v1496 = vmul.f32 %v1368, %v1480
  %v1497 = vld [vmem:[%s2] sm:$0xf]
  %v1498 = vld [vmem:[%s2 + $0x4] sm:$0xf]
  %v1499 = vld [vmem:[%s2 + $0x8] sm:$0xf]
  %v1500 = vld [vmem:[%s2 + $0xc] sm:$0xf]
  %v1501 = vld [vmem:[%s2 + $0x10] sm:$0xf]
  %v1502 = vld [vmem:[%s2 + $0x14] sm:$0xf]
  %v1503 = vld [vmem:[%s2 + $0x18] sm:$0xf]
  %v1504 = vld [vmem:[%s2 + $0x1c] sm:$0xf]
  %v1505 = vld [vmem:[%s2 + $0x20] sm:$0xf]
  %v1506 = vld [vmem:[%s2 + $0x24] sm:$0xf]
  %v1507 = vld [vmem:[%s2 + $0x28] sm:$0xf]
  %v1508 = vld [vmem:[%s2 + $0x2c] sm:$0xf]
  %v1509 = vld [vmem:[%s2 + $0x30] sm:$0xf]
  %v1510 = vld [vmem:[%s2 + $0x34] sm:$0xf]
  %v1511 = vld [vmem:[%s2 + $0x38] sm:$0xf]
  %v1512 = vld [vmem:[%s2 + $0x3c] sm:$0xf]
  %v1513 = vpack.c.bf16 %v1482, %v1481
  %v1514 = vpack.c.bf16 %v1484, %v1483
  %v1515 = vpack.c.bf16 %v1486, %v1485
  %v1516 = vpack.c.bf16 %v1488, %v1487
  %v1517 = vpack.c.bf16 %v1490, %v1489
  %v1518 = vpack.c.bf16 %v1492, %v1491
  %v1519 = vpack.c.bf16 %v1494, %v1493
  %v1520 = vpack.c.bf16 %v1496, %v1495
  %v1537 = vunpack.c.l.b16 %v1497
  %v1538 = vunpack.c.l.b16 %v1498
  %v1539 = vunpack.c.l.b16 %v1499
  %v1540 = vunpack.c.l.b16 %v1500
  %v1541 = vunpack.c.l.b16 %v1501
  %v1542 = vunpack.c.l.b16 %v1502
  %v1543 = vunpack.c.l.b16 %v1503
  %v1544 = vunpack.c.l.b16 %v1504
  %v1545 = vunpack.c.l.b16 %v1505
  %v1546 = vunpack.c.l.b16 %v1506
  %v1547 = vunpack.c.l.b16 %v1507
  %v1548 = vunpack.c.l.b16 %v1508
  %v1549 = vunpack.c.l.b16 %v1509
  %v1550 = vunpack.c.l.b16 %v1510
  %v1551 = vunpack.c.l.b16 %v1511
  %v1552 = vunpack.c.l.b16 %v1512
  %v1553 = vpack.c.b16 %v1538, %v1537
  %v1554 = vpack.c.b16 %v1540, %v1539
  %v1555 = vpack.c.b16 %v1542, %v1541
  %v1556 = vpack.c.b16 %v1544, %v1543
  %v1557 = vpack.c.b16 %v1546, %v1545
  %v1558 = vpack.c.b16 %v1548, %v1547
  %v1559 = vpack.c.b16 %v1550, %v1549
  %v1560 = vpack.c.b16 %v1552, %v1551
  %1569 = vmatpush.bf16.msra.mxu0 %v1520
  %1570 = vmatpush.bf16.msra.mxu0 %v1519
  %1571 = vmatpush.bf16.msra.mxu0 %v1518
  %1572 = vmatpush.bf16.msra.mxu0 %v1517
  %1573 = vmatpush.bf16.msra.mxu0 %v1516
  %1574 = vmatpush.bf16.msra.mxu0 %v1515
  %1575 = vmatpush.bf16.msra.mxu0 %v1514
  %1576 = vmatpush.bf16.msra.mxu0 %v1513
  %1577 = vmatmul.bf16.gmra.mxu0 %v1553
  %v1578 = vpop.f32.mrf.mxu0
  %v1579 = vadd.f32 0.0, %v1578
  %v1580 = vpop.f32.mrf.mxu0
  %v1581 = vadd.f32 0.0, %v1580
  %1582 = vmatmul.bf16.gmra.mxu0 %v1554
  %v1583 = vpop.f32.mrf.mxu0
  %v1584 = vadd.f32 0.0, %v1583
  %v1585 = vpop.f32.mrf.mxu0
  %v1586 = vadd.f32 0.0, %v1585
  %1587 = vmatmul.bf16.gmra.mxu0 %v1555
  %v1588 = vpop.f32.mrf.mxu0
  %v1589 = vadd.f32 0.0, %v1588
  %v1590 = vpop.f32.mrf.mxu0
  %v1591 = vadd.f32 0.0, %v1590
  %1592 = vmatmul.bf16.gmra.mxu0 %v1556
  %v1593 = vpop.f32.mrf.mxu0
  %v1594 = vadd.f32 0.0, %v1593
  %v1595 = vpop.f32.mrf.mxu0
  %v1596 = vadd.f32 0.0, %v1595
  %1597 = vmatmul.bf16.gmra.mxu0 %v1557
  %v1598 = vpop.f32.mrf.mxu0
  %v1599 = vadd.f32 0.0, %v1598
  %v1600 = vpop.f32.mrf.mxu0
  %v1601 = vadd.f32 0.0, %v1600
  %1602 = vmatmul.bf16.gmra.mxu0 %v1558
  %v1603 = vpop.f32.mrf.mxu0
  %v1604 = vadd.f32 0.0, %v1603
  %v1605 = vpop.f32.mrf.mxu0
  %v1606 = vadd.f32 0.0, %v1605
  %1607 = vmatmul.bf16.gmra.mxu0 %v1559
  %v1608 = vpop.f32.mrf.mxu0
  %v1609 = vadd.f32 0.0, %v1608
  %v1610 = vpop.f32.mrf.mxu0
  %v1611 = vadd.f32 0.0, %v1610
  %1612 = vmatmul.bf16.gmra.mxu0 %v1560
  %v1613 = vpop.f32.mrf.mxu0
  %v1614 = vadd.f32 0.0, %v1613
  %v1615 = vpop.f32.mrf.mxu0
  %v1616 = vadd.f32 0.0, %v1615
  %1617 = vdwg.mxu0
  %1618 = vst [vmem:[#allocation3 + $0x8] sm:$0xff] %v1579
  %1619 = vst [vmem:[#allocation3 + $0x18] sm:$0xff] %v1581
  %1620 = vst [vmem:[#allocation3 + $0x28] sm:$0xff] %v1584
  %1621 = vst [vmem:[#allocation3 + $0x38] sm:$0xff] %v1586
  %1622 = vst [vmem:[#allocation3 + $0x48] sm:$0xff] %v1589
  %1623 = vst [vmem:[#allocation3 + $0x58] sm:$0xff] %v1591
  %1624 = vst [vmem:[#allocation3 + $0x68] sm:$0xff] %v1594
  %1625 = vst [vmem:[#allocation3 + $0x78] sm:$0xff] %v1596
  %1626 = vst [vmem:[#allocation3 + $0x88] sm:$0xff] %v1599
  %1627 = vst [vmem:[#allocation3 + $0x98] sm:$0xff] %v1601
  %1628 = vst [vmem:[#allocation3 + $0xa8] sm:$0xff] %v1604
  %1629 = vst [vmem:[#allocation3 + $0xb8] sm:$0xff] %v1606
  %1630 = vst [vmem:[#allocation3 + $0xc8] sm:$0xff] %v1609
  %1631 = vst [vmem:[#allocation3 + $0xd8] sm:$0xff] %v1611
  %1632 = vst [vmem:[#allocation3 + $0xe8] sm:$0xff] %v1614
  %1633 = vst [vmem:[#allocation3 + $0xf8] sm:$0xff] %v1616
  %v1634 = vld [vmem:[#allocation3] sm:$0xff]
  %v1635 = vld [vmem:[#allocation3 + $0x8] sm:$0xff]
  %v1636 = vld [vmem:[#allocation3 + $0x10] sm:$0xff]
  %v1637 = vld [vmem:[#allocation3 + $0x18] sm:$0xff]
  %v1638 = vld [vmem:[#allocation3 + $0x20] sm:$0xff]
  %v1639 = vld [vmem:[#allocation3 + $0x28] sm:$0xff]
  %v1640 = vld [vmem:[#allocation3 + $0x30] sm:$0xff]
  %v1641 = vld [vmem:[#allocation3 + $0x38] sm:$0xff]
  %v1642 = vld [vmem:[#allocation3 + $0x40] sm:$0xff]
  %v1643 = vld [vmem:[#allocation3 + $0x48] sm:$0xff]
  %v1644 = vld [vmem:[#allocation3 + $0x50] sm:$0xff]
  %v1645 = vld [vmem:[#allocation3 + $0x58] sm:$0xff]
  %v1646 = vld [vmem:[#allocation3 + $0x60] sm:$0xff]
  %v1647 = vld [vmem:[#allocation3 + $0x68] sm:$0xff]
  %v1648 = vld [vmem:[#allocation3 + $0x70] sm:$0xff]
  %v1649 = vld [vmem:[#allocation3 + $0x78] sm:$0xff]
  %v1650 = vld [vmem:[#allocation3 + $0x80] sm:$0xff]
  %v1651 = vld [vmem:[#allocation3 + $0x88] sm:$0xff]
  %v1652 = vld [vmem:[#allocation3 + $0x90] sm:$0xff]
  %v1653 = vld [vmem:[#allocation3 + $0x98] sm:$0xff]
  %v1654 = vld [vmem:[#allocation3 + $0xa0] sm:$0xff]
  %v1655 = vld [vmem:[#allocation3 + $0xa8] sm:$0xff]
  %v1656 = vld [vmem:[#allocation3 + $0xb0] sm:$0xff]
  %v1657 = vld [vmem:[#allocation3 + $0xb8] sm:$0xff]
  %v1658 = vld [vmem:[#allocation3 + $0xc0] sm:$0xff]
  %v1659 = vld [vmem:[#allocation3 + $0xc8] sm:$0xff]
  %v1660 = vld [vmem:[#allocation3 + $0xd0] sm:$0xff]
  %v1661 = vld [vmem:[#allocation3 + $0xd8] sm:$0xff]
  %v1662 = vld [vmem:[#allocation3 + $0xe0] sm:$0xff]
  %v1663 = vld [vmem:[#allocation3 + $0xe8] sm:$0xff]
  %v1664 = vld [vmem:[#allocation3 + $0xf0] sm:$0xff]
  %v1665 = vld [vmem:[#allocation3 + $0xf8] sm:$0xff]
  %v1666 = vadd.f32 %v1634, %v1635
  %1667 = vadd.xlane.f32.xlu0 %v1666
  %v1668 = vpop.xlane.xlu0 %1667
  %v1669 = vadd.f32 %v1636, %v1637
  %1670 = vadd.xlane.f32.xlu0 %v1669
  %v1671 = vpop.xlane.xlu0 %1670
  %v1672 = vadd.f32 %v1638, %v1639
  %1673 = vadd.xlane.f32.xlu0 %v1672
  %v1674 = vpop.xlane.xlu0 %1673
  %v1675 = vadd.f32 %v1640, %v1641
  %1676 = vadd.xlane.f32.xlu0 %v1675
  %v1677 = vpop.xlane.xlu0 %1676
  %v1678 = vadd.f32 %v1642, %v1643
  %1679 = vadd.xlane.f32.xlu0 %v1678
  %v1680 = vpop.xlane.xlu0 %1679
  %v1681 = vadd.f32 %v1644, %v1645
  %1682 = vadd.xlane.f32.xlu0 %v1681
  %v1683 = vpop.xlane.xlu0 %1682
  %v1684 = vadd.f32 %v1646, %v1647
  %1685 = vadd.xlane.f32.xlu0 %v1684
  %v1686 = vpop.xlane.xlu0 %1685
  %v1687 = vadd.f32 %v1648, %v1649
  %1688 = vadd.xlane.f32.xlu0 %v1687
  %v1689 = vpop.xlane.xlu0 %1688
  %v1690 = vadd.f32 %v1650, %v1651
  %1691 = vadd.xlane.f32.xlu0 %v1690
  %v1692 = vpop.xlane.xlu0 %1691
  %v1693 = vadd.f32 %v1652, %v1653
  %1694 = vadd.xlane.f32.xlu0 %v1693
  %v1695 = vpop.xlane.xlu0 %1694
  %v1696 = vadd.f32 %v1654, %v1655
  %1697 = vadd.xlane.f32.xlu0 %v1696
  %v1698 = vpop.xlane.xlu0 %1697
  %v1699 = vadd.f32 %v1656, %v1657
  %1700 = vadd.xlane.f32.xlu0 %v1699
  %v1701 = vpop.xlane.xlu0 %1700
  %v1702 = vadd.f32 %v1658, %v1659
  %1703 = vadd.xlane.f32.xlu0 %v1702
  %v1704 = vpop.xlane.xlu0 %1703
  %v1705 = vadd.f32 %v1660, %v1661
  %1706 = vadd.xlane.f32.xlu0 %v1705
  %v1707 = vpop.xlane.xlu0 %1706
  %v1708 = vadd.f32 %v1662, %v1663
  %1709 = vadd.xlane.f32.xlu0 %v1708
  %v1710 = vpop.xlane.xlu0 %1709
  %v1711 = vadd.f32 %v1664, %v1665
  %1712 = vadd.xlane.f32.xlu0 %v1711
  %v1713 = vpop.xlane.xlu0 %1712
  %v1714 = vmul.f32 %v1668, 0.00390625
  %v1715 = vmul.f32 %v1671, 0.00390625
  %v1716 = vmul.f32 %v1674, 0.00390625
  %v1717 = vmul.f32 %v1677, 0.00390625
  %v1718 = vmul.f32 %v1680, 0.00390625
  %v1719 = vmul.f32 %v1683, 0.00390625
  %v1720 = vmul.f32 %v1686, 0.00390625
  %v1721 = vmul.f32 %v1689, 0.00390625
  %v1722 = vmul.f32 %v1692, 0.00390625
  %v1723 = vmul.f32 %v1695, 0.00390625
  %v1724 = vmul.f32 %v1698, 0.00390625
  %v1725 = vmul.f32 %v1701, 0.00390625
  %v1726 = vmul.f32 %v1704, 0.00390625
  %v1727 = vmul.f32 %v1707, 0.00390625
  %v1728 = vmul.f32 %v1710, 0.00390625
  %v1729 = vmul.f32 %v1713, 0.00390625
  %v1730 = vmul.f32 %v1634, %v1634
  %v1731 = vmul.f32 %v1635, %v1635
  %v1732 = vmul.f32 %v1636, %v1636
  %v1733 = vmul.f32 %v1637, %v1637
  %v1734 = vmul.f32 %v1638, %v1638
  %v1735 = vmul.f32 %v1639, %v1639
  %v1736 = vmul.f32 %v1640, %v1640
  %v1737 = vmul.f32 %v1641, %v1641
  %v1738 = vmul.f32 %v1642, %v1642
  %v1739 = vmul.f32 %v1643, %v1643
  %v1740 = vmul.f32 %v1644, %v1644
  %v1741 = vmul.f32 %v1645, %v1645
  %v1742 = vmul.f32 %v1646, %v1646
  %v1743 = vmul.f32 %v1647, %v1647
  %v1744 = vmul.f32 %v1648, %v1648
  %v1745 = vmul.f32 %v1649, %v1649
  %v1746 = vmul.f32 %v1650, %v1650
  %v1747 = vmul.f32 %v1651, %v1651
  %v1748 = vmul.f32 %v1652, %v1652
  %v1749 = vmul.f32 %v1653, %v1653
  %v1750 = vmul.f32 %v1654, %v1654
  %v1751 = vmul.f32 %v1655, %v1655
  %v1752 = vmul.f32 %v1656, %v1656
  %v1753 = vmul.f32 %v1657, %v1657
  %v1754 = vmul.f32 %v1658, %v1658
  %v1755 = vmul.f32 %v1659, %v1659
  %v1756 = vmul.f32 %v1660, %v1660
  %v1757 = vmul.f32 %v1661, %v1661
  %v1758 = vmul.f32 %v1662, %v1662
  %v1759 = vmul.f32 %v1663, %v1663
  %v1760 = vmul.f32 %v1664, %v1664
  %v1761 = vmul.f32 %v1665, %v1665
  %v1762 = vadd.f32 %v1730, %v1731
  %1763 = vadd.xlane.f32.xlu0 %v1762
  %v1764 = vpop.xlane.xlu0 %1763
  %v1765 = vadd.f32 %v1732, %v1733
  %1766 = vadd.xlane.f32.xlu0 %v1765
  %v1767 = vpop.xlane.xlu0 %1766
  %v1768 = vadd.f32 %v1734, %v1735
  %1769 = vadd.xlane.f32.xlu0 %v1768
  %v1770 = vpop.xlane.xlu0 %1769
  %v1771 = vadd.f32 %v1736, %v1737
  %1772 = vadd.xlane.f32.xlu0 %v1771
  %v1773 = vpop.xlane.xlu0 %1772
  %v1774 = vadd.f32 %v1738, %v1739
  %1775 = vadd.xlane.f32.xlu0 %v1774
  %v1776 = vpop.xlane.xlu0 %1775
  %v1777 = vadd.f32 %v1740, %v1741
  %1778 = vadd.xlane.f32.xlu0 %v1777
  %v1779 = vpop.xlane.xlu0 %1778
  %v1780 = vadd.f32 %v1742, %v1743
  %1781 = vadd.xlane.f32.xlu0 %v1780
  %v1782 = vpop.xlane.xlu0 %1781
  %v1783 = vadd.f32 %v1744, %v1745
  %1784 = vadd.xlane.f32.xlu0 %v1783
  %v1785 = vpop.xlane.xlu0 %1784
  %v1786 = vadd.f32 %v1746, %v1747
  %1787 = vadd.xlane.f32.xlu0 %v1786
  %v1788 = vpop.xlane.xlu0 %1787
  %v1789 = vadd.f32 %v1748, %v1749
  %1790 = vadd.xlane.f32.xlu0 %v1789
  %v1791 = vpop.xlane.xlu0 %1790
  %v1792 = vadd.f32 %v1750, %v1751
  %1793 = vadd.xlane.f32.xlu0 %v1792
  %v1794 = vpop.xlane.xlu0 %1793
  %v1795 = vadd.f32 %v1752, %v1753
  %1796 = vadd.xlane.f32.xlu0 %v1795
  %v1797 = vpop.xlane.xlu0 %1796
  %v1798 = vadd.f32 %v1754, %v1755
  %1799 = vadd.xlane.f32.xlu0 %v1798
  %v1800 = vpop.xlane.xlu0 %1799
  %v1801 = vadd.f32 %v1756, %v1757
  %1802 = vadd.xlane.f32.xlu0 %v1801
  %v1803 = vpop.xlane.xlu0 %1802
  %v1804 = vadd.f32 %v1758, %v1759
  %1805 = vadd.xlane.f32.xlu0 %v1804
  %v1806 = vpop.xlane.xlu0 %1805
  %v1807 = vadd.f32 %v1760, %v1761
  %1808 = vadd.xlane.f32.xlu0 %v1807
  %v1809 = vpop.xlane.xlu0 %1808
  %v1810 = vmul.f32 %v1764, 0.00390625
  %v1811 = vmul.f32 %v1767, 0.00390625
  %v1812 = vmul.f32 %v1770, 0.00390625
  %v1813 = vmul.f32 %v1773, 0.00390625
  %v1814 = vmul.f32 %v1776, 0.00390625
  %v1815 = vmul.f32 %v1779, 0.00390625
  %v1816 = vmul.f32 %v1782, 0.00390625
  %v1817 = vmul.f32 %v1785, 0.00390625
  %v1818 = vmul.f32 %v1788, 0.00390625
  %v1819 = vmul.f32 %v1791, 0.00390625
  %v1820 = vmul.f32 %v1794, 0.00390625
  %v1821 = vmul.f32 %v1797, 0.00390625
  %v1822 = vmul.f32 %v1800, 0.00390625
  %v1823 = vmul.f32 %v1803, 0.00390625
  %v1824 = vmul.f32 %v1806, 0.00390625
  %v1825 = vmul.f32 %v1809, 0.00390625
  %v1826 = vmul.f32 %v1714, %v1714
  %v1827 = vmul.f32 %v1715, %v1715
  %v1828 = vmul.f32 %v1716, %v1716
  %v1829 = vmul.f32 %v1717, %v1717
  %v1830 = vmul.f32 %v1718, %v1718
  %v1831 = vmul.f32 %v1719, %v1719
  %v1832 = vmul.f32 %v1720, %v1720
  %v1833 = vmul.f32 %v1721, %v1721
  %v1834 = vmul.f32 %v1722, %v1722
  %v1835 = vmul.f32 %v1723, %v1723
  %v1836 = vmul.f32 %v1724, %v1724
  %v1837 = vmul.f32 %v1725, %v1725
  %v1838 = vmul.f32 %v1726, %v1726
  %v1839 = vmul.f32 %v1727, %v1727
  %v1840 = vmul.f32 %v1728, %v1728
  %v1841 = vmul.f32 %v1729, %v1729
  %v1842 = vsub.f32 %v1810, %v1826
  %v1843 = vsub.f32 %v1811, %v1827
  %v1844 = vsub.f32 %v1812, %v1828
  %v1845 = vsub.f32 %v1813, %v1829
  %v1846 = vsub.f32 %v1814, %v1830
  %v1847 = vsub.f32 %v1815, %v1831
  %v1848 = vsub.f32 %v1816, %v1832
  %v1849 = vsub.f32 %v1817, %v1833
  %v1850 = vsub.f32 %v1818, %v1834
  %v1851 = vsub.f32 %v1819, %v1835
  %v1852 = vsub.f32 %v1820, %v1836
  %v1853 = vsub.f32 %v1821, %v1837
  %v1854 = vsub.f32 %v1822, %v1838
  %v1855 = vsub.f32 %v1823, %v1839
  %v1856 = vsub.f32 %v1824, %v1840
  %v1857 = vsub.f32 %v1825, %v1841
  %v1858 = vld [vmem:[%s5] sm:$0xff]
  %v1859 = vld [vmem:[%s5 + $0x8] sm:$0xff]
  %v1860 = vld [vmem:[%s5 + $0x10] sm:$0xff]
  %v1861 = vld [vmem:[%s5 + $0x18] sm:$0xff]
  %v1862 = vld [vmem:[%s5 + $0x20] sm:$0xff]
  %v1863 = vld [vmem:[%s5 + $0x28] sm:$0xff]
  %v1864 = vld [vmem:[%s5 + $0x30] sm:$0xff]
  %v1865 = vld [vmem:[%s5 + $0x38] sm:$0xff]
  %v1866 = vld [vmem:[%s5 + $0x40] sm:$0xff]
  %v1867 = vld [vmem:[%s5 + $0x48] sm:$0xff]
  %v1868 = vld [vmem:[%s5 + $0x50] sm:$0xff]
  %v1869 = vld [vmem:[%s5 + $0x58] sm:$0xff]
  %v1870 = vld [vmem:[%s5 + $0x60] sm:$0xff]
  %v1871 = vld [vmem:[%s5 + $0x68] sm:$0xff]
  %v1872 = vld [vmem:[%s5 + $0x70] sm:$0xff]
  %v1873 = vld [vmem:[%s5 + $0x78] sm:$0xff]
  %v1874 = vadd.f32 %v1842, 1e-05
  %v1875 = vadd.f32 %v1843, 1e-05
  %v1876 = vadd.f32 %v1844, 1e-05
  %v1877 = vadd.f32 %v1845, 1e-05
  %v1878 = vadd.f32 %v1846, 1e-05
  %v1879 = vadd.f32 %v1847, 1e-05
  %v1880 = vadd.f32 %v1848, 1e-05
  %v1881 = vadd.f32 %v1849, 1e-05
  %v1882 = vadd.f32 %v1850, 1e-05
  %v1883 = vadd.f32 %v1851, 1e-05
  %v1884 = vadd.f32 %v1852, 1e-05
  %v1885 = vadd.f32 %v1853, 1e-05
  %v1886 = vadd.f32 %v1854, 1e-05
  %v1887 = vadd.f32 %v1855, 1e-05
  %v1888 = vadd.f32 %v1856, 1e-05
  %v1889 = vadd.f32 %v1857, 1e-05
  %v1890 = vrsqrt.pop %v1874
  %v1891 = vmul.f32 %v1890, %v1874
  %v1892 = vmul.f32 %v1891, %v1890
  %v1893 = vmul.f32 0.5, %v1892
  %v1894 = vsub.f32 1.5, %v1893
  %v1895 = vmul.f32 %v1890, %v1894
  %vm1896 = vweird.f32 %v1874
  %vm1897 = vweird.f32 %v1890
  %vm1898 = vmor %vm1896, %vm1897
  %v1899 = vsel %vm1898, %v1890, %v1895
  %v1900 = vrsqrt.pop %v1875
  %v1901 = vmul.f32 %v1900, %v1875
  %v1902 = vmul.f32 %v1901, %v1900
  %v1903 = vmul.f32 0.5, %v1902
  %v1904 = vsub.f32 1.5, %v1903
  %v1905 = vmul.f32 %v1900, %v1904
  %vm1906 = vweird.f32 %v1875
  %vm1907 = vweird.f32 %v1900
  %vm1908 = vmor %vm1906, %vm1907
  %v1909 = vsel %vm1908, %v1900, %v1905
  %v1910 = vrsqrt.pop %v1876
  %v1911 = vmul.f32 %v1910, %v1876
  %v1912 = vmul.f32 %v1911, %v1910
  %v1913 = vmul.f32 0.5, %v1912
  %v1914 = vsub.f32 1.5, %v1913
  %v1915 = vmul.f32 %v1910, %v1914
  %vm1916 = vweird.f32 %v1876
  %vm1917 = vweird.f32 %v1910
  %vm1918 = vmor %vm1916, %vm1917
  %v1919 = vsel %vm1918, %v1910, %v1915
  %v1920 = vrsqrt.pop %v1877
  %v1921 = vmul.f32 %v1920, %v1877
  %v1922 = vmul.f32 %v1921, %v1920
  %v1923 = vmul.f32 0.5, %v1922
  %v1924 = vsub.f32 1.5, %v1923
  %v1925 = vmul.f32 %v1920, %v1924
  %vm1926 = vweird.f32 %v1877
  %vm1927 = vweird.f32 %v1920
  %vm1928 = vmor %vm1926, %vm1927
  %v1929 = vsel %vm1928, %v1920, %v1925
  %v1930 = vrsqrt.pop %v1878
  %v1931 = vmul.f32 %v1930, %v1878
  %v1932 = vmul.f32 %v1931, %v1930
  %v1933 = vmul.f32 0.5, %v1932
  %v1934 = vsub.f32 1.5, %v1933
  %v1935 = vmul.f32 %v1930, %v1934
  %vm1936 = vweird.f32 %v1878
  %vm1937 = vweird.f32 %v1930
  %vm1938 = vmor %vm1936, %vm1937
  %v1939 = vsel %vm1938, %v1930, %v1935
  %v1940 = vrsqrt.pop %v1879
  %v1941 = vmul.f32 %v1940, %v1879
  %v1942 = vmul.f32 %v1941, %v1940
  %v1943 = vmul.f32 0.5, %v1942
  %v1944 = vsub.f32 1.5, %v1943
  %v1945 = vmul.f32 %v1940, %v1944
  %vm1946 = vweird.f32 %v1879
  %vm1947 = vweird.f32 %v1940
  %vm1948 = vmor %vm1946, %vm1947
  %v1949 = vsel %vm1948, %v1940, %v1945
  %v1950 = vrsqrt.pop %v1880
  %v1951 = vmul.f32 %v1950, %v1880
  %v1952 = vmul.f32 %v1951, %v1950
  %v1953 = vmul.f32 0.5, %v1952
  %v1954 = vsub.f32 1.5, %v1953
  %v1955 = vmul.f32 %v1950, %v1954
  %vm1956 = vweird.f32 %v1880
  %vm1957 = vweird.f32 %v1950
  %vm1958 = vmor %vm1956, %vm1957
  %v1959 = vsel %vm1958, %v1950, %v1955
  %v1960 = vrsqrt.pop %v1881
  %v1961 = vmul.f32 %v1960, %v1881
  %v1962 = vmul.f32 %v1961, %v1960
  %v1963 = vmul.f32 0.5, %v1962
  %v1964 = vsub.f32 1.5, %v1963
  %v1965 = vmul.f32 %v1960, %v1964
  %vm1966 = vweird.f32 %v1881
  %vm1967 = vweird.f32 %v1960
  %vm1968 = vmor %vm1966, %vm1967
  %v1969 = vsel %vm1968, %v1960, %v1965
  %v1970 = vrsqrt.pop %v1882
  %v1971 = vmul.f32 %v1970, %v1882
  %v1972 = vmul.f32 %v1971, %v1970
  %v1973 = vmul.f32 0.5, %v1972
  %v1974 = vsub.f32 1.5, %v1973
  %v1975 = vmul.f32 %v1970, %v1974
  %vm1976 = vweird.f32 %v1882
  %vm1977 = vweird.f32 %v1970
  %vm1978 = vmor %vm1976, %vm1977
  %v1979 = vsel %vm1978, %v1970, %v1975
  %v1980 = vrsqrt.pop %v1883
  %v1981 = vmul.f32 %v1980, %v1883
  %v1982 = vmul.f32 %v1981, %v1980
  %v1983 = vmul.f32 0.5, %v1982
  %v1984 = vsub.f32 1.5, %v1983
  %v1985 = vmul.f32 %v1980, %v1984
  %vm1986 = vweird.f32 %v1883
  %vm1987 = vweird.f32 %v1980
  %vm1988 = vmor %vm1986, %vm1987
  %v1989 = vsel %vm1988, %v1980, %v1985
  %v1990 = vrsqrt.pop %v1884
  %v1991 = vmul.f32 %v1990, %v1884
  %v1992 = vmul.f32 %v1991, %v1990
  %v1993 = vmul.f32 0.5, %v1992
  %v1994 = vsub.f32 1.5, %v1993
  %v1995 = vmul.f32 %v1990, %v1994
  %vm1996 = vweird.f32 %v1884
  %vm1997 = vweird.f32 %v1990
  %vm1998 = vmor %vm1996, %vm1997
  %v1999 = vsel %vm1998, %v1990, %v1995
  %v2000 = vrsqrt.pop %v1885
  %v2001 = vmul.f32 %v2000, %v1885
  %v2002 = vmul.f32 %v2001, %v2000
  %v2003 = vmul.f32 0.5, %v2002
  %v2004 = vsub.f32 1.5, %v2003
  %v2005 = vmul.f32 %v2000, %v2004
  %vm2006 = vweird.f32 %v1885
  %vm2007 = vweird.f32 %v2000
  %vm2008 = vmor %vm2006, %vm2007
  %v2009 = vsel %vm2008, %v2000, %v2005
  %v2010 = vrsqrt.pop %v1886
  %v2011 = vmul.f32 %v2010, %v1886
  %v2012 = vmul.f32 %v2011, %v2010
  %v2013 = vmul.f32 0.5, %v2012
  %v2014 = vsub.f32 1.5, %v2013
  %v2015 = vmul.f32 %v2010, %v2014
  %vm2016 = vweird.f32 %v1886
  %vm2017 = vweird.f32 %v2010
  %vm2018 = vmor %vm2016, %vm2017
  %v2019 = vsel %vm2018, %v2010, %v2015
  %v2020 = vrsqrt.pop %v1887
  %v2021 = vmul.f32 %v2020, %v1887
  %v2022 = vmul.f32 %v2021, %v2020
  %v2023 = vmul.f32 0.5, %v2022
  %v2024 = vsub.f32 1.5, %v2023
  %v2025 = vmul.f32 %v2020, %v2024
  %vm2026 = vweird.f32 %v1887
  %vm2027 = vweird.f32 %v2020
  %vm2028 = vmor %vm2026, %vm2027
  %v2029 = vsel %vm2028, %v2020, %v2025
  %v2030 = vrsqrt.pop %v1888
  %v2031 = vmul.f32 %v2030, %v1888
  %v2032 = vmul.f32 %v2031, %v2030
  %v2033 = vmul.f32 0.5, %v2032
  %v2034 = vsub.f32 1.5, %v2033
  %v2035 = vmul.f32 %v2030, %v2034
  %vm2036 = vweird.f32 %v1888
  %vm2037 = vweird.f32 %v2030
  %vm2038 = vmor %vm2036, %vm2037
  %v2039 = vsel %vm2038, %v2030, %v2035
  %v2040 = vrsqrt.pop %v1889
  %v2041 = vmul.f32 %v2040, %v1889
  %v2042 = vmul.f32 %v2041, %v2040
  %v2043 = vmul.f32 0.5, %v2042
  %v2044 = vsub.f32 1.5, %v2043
  %v2045 = vmul.f32 %v2040, %v2044
  %vm2046 = vweird.f32 %v1889
  %vm2047 = vweird.f32 %v2040
  %vm2048 = vmor %vm2046, %vm2047
  %v2049 = vsel %vm2048, %v2040, %v2045
  %v2050 = vmul.f32 %v1858, %v1899
  %v2051 = vmul.f32 %v1859, %v1909
  %v2052 = vmul.f32 %v1860, %v1919
  %v2053 = vmul.f32 %v1861, %v1929
  %v2054 = vmul.f32 %v1862, %v1939
  %v2055 = vmul.f32 %v1863, %v1949
  %v2056 = vmul.f32 %v1864, %v1959
  %v2057 = vmul.f32 %v1865, %v1969
  %v2058 = vmul.f32 %v1866, %v1979
  %v2059 = vmul.f32 %v1867, %v1989
  %v2060 = vmul.f32 %v1868, %v1999
  %v2061 = vmul.f32 %v1869, %v2009
  %v2062 = vmul.f32 %v1870, %v2019
  %v2063 = vmul.f32 %v1871, %v2029
  %v2064 = vmul.f32 %v1872, %v2039
  %v2065 = vmul.f32 %v1873, %v2049
  %v2066 = vld [vmem:[%s6] sm:$0xff]
  %v2067 = vld [vmem:[%s6 + $0x8] sm:$0xff]
  %v2068 = vld [vmem:[%s6 + $0x10] sm:$0xff]
  %v2069 = vld [vmem:[%s6 + $0x18] sm:$0xff]
  %v2070 = vld [vmem:[%s6 + $0x20] sm:$0xff]
  %v2071 = vld [vmem:[%s6 + $0x28] sm:$0xff]
  %v2072 = vld [vmem:[%s6 + $0x30] sm:$0xff]
  %v2073 = vld [vmem:[%s6 + $0x38] sm:$0xff]
  %v2074 = vld [vmem:[%s6 + $0x40] sm:$0xff]
  %v2075 = vld [vmem:[%s6 + $0x48] sm:$0xff]
  %v2076 = vld [vmem:[%s6 + $0x50] sm:$0xff]
  %v2077 = vld [vmem:[%s6 + $0x58] sm:$0xff]
  %v2078 = vld [vmem:[%s6 + $0x60] sm:$0xff]
  %v2079 = vld [vmem:[%s6 + $0x68] sm:$0xff]
  %v2080 = vld [vmem:[%s6 + $0x70] sm:$0xff]
  %v2081 = vld [vmem:[%s6 + $0x78] sm:$0xff]
  %v2082 = vmul.f32 %v1714, %v2050
  %v2083 = vmul.f32 %v1715, %v2051
  %v2084 = vmul.f32 %v1716, %v2052
  %v2085 = vmul.f32 %v1717, %v2053
  %v2086 = vmul.f32 %v1718, %v2054
  %v2087 = vmul.f32 %v1719, %v2055
  %v2088 = vmul.f32 %v1720, %v2056
  %v2089 = vmul.f32 %v1721, %v2057
  %v2090 = vmul.f32 %v1722, %v2058
  %v2091 = vmul.f32 %v1723, %v2059
  %v2092 = vmul.f32 %v1724, %v2060
  %v2093 = vmul.f32 %v1725, %v2061
  %v2094 = vmul.f32 %v1726, %v2062
  %v2095 = vmul.f32 %v1727, %v2063
  %v2096 = vmul.f32 %v1728, %v2064
  %v2097 = vmul.f32 %v1729, %v2065
  %v2098 = vsub.f32 %v2066, %v2082
  %v2099 = vsub.f32 %v2067, %v2083
  %v2100 = vsub.f32 %v2068, %v2084
  %v2101 = vsub.f32 %v2069, %v2085
  %v2102 = vsub.f32 %v2070, %v2086
  %v2103 = vsub.f32 %v2071, %v2087
  %v2104 = vsub.f32 %v2072, %v2088
  %v2105 = vsub.f32 %v2073, %v2089
  %v2106 = vsub.f32 %v2074, %v2090
  %v2107 = vsub.f32 %v2075, %v2091
  %v2108 = vsub.f32 %v2076, %v2092
  %v2109 = vsub.f32 %v2077, %v2093
  %v2110 = vsub.f32 %v2078, %v2094
  %v2111 = vsub.f32 %v2079, %v2095
  %v2112 = vsub.f32 %v2080, %v2096
  %v2113 = vsub.f32 %v2081, %v2097
  %v2114 = vld [vmem:[#allocation3] sm:$0xff]
  %v2115 = vld [vmem:[#allocation3 + $0x10] sm:$0xff]
  %v2116 = vld [vmem:[#allocation3 + $0x20] sm:$0xff]
  %v2117 = vld [vmem:[#allocation3 + $0x30] sm:$0xff]
  %v2118 = vld [vmem:[#allocation3 + $0x40] sm:$0xff]
  %v2119 = vld [vmem:[#allocation3 + $0x50] sm:$0xff]
  %v2120 = vld [vmem:[#allocation3 + $0x60] sm:$0xff]
  %v2121 = vld [vmem:[#allocation3 + $0x70] sm:$0xff]
  %v2122 = vld [vmem:[#allocation3 + $0x80] sm:$0xff]
  %v2123 = vld [vmem:[#allocation3 + $0x90] sm:$0xff]
  %v2124 = vld [vmem:[#allocation3 + $0xa0] sm:$0xff]
  %v2125 = vld [vmem:[#allocation3 + $0xb0] sm:$0xff]
  %v2126 = vld [vmem:[#allocation3 + $0xc0] sm:$0xff]
  %v2127 = vld [vmem:[#allocation3 + $0xd0] sm:$0xff]
  %v2128 = vld [vmem:[#allocation3 + $0xe0] sm:$0xff]
  %v2129 = vld [vmem:[#allocation3 + $0xf0] sm:$0xff]
  %2131 = vset.pattern.permute.xlu0 0
  %2132 = vperm.xlu0 %2131, %v2050
  %v2133 = vpop.permute.xlu0 %2132
  %2136 = vset.pattern.permute.xlu0 0
  %2137 = vperm.xlu0 %2136, %v2051
  %v2138 = vpop.permute.xlu0 %2137
  %2141 = vset.pattern.permute.xlu0 0
  %2142 = vperm.xlu0 %2141, %v2052
  %v2143 = vpop.permute.xlu0 %2142
  %2146 = vset.pattern.permute.xlu0 0
  %2147 = vperm.xlu0 %2146, %v2053
  %v2148 = vpop.permute.xlu0 %2147
  %2151 = vset.pattern.permute.xlu0 0
  %2152 = vperm.xlu0 %2151, %v2054
  %v2153 = vpop.permute.xlu0 %2152
  %2156 = vset.pattern.permute.xlu0 0
  %2157 = vperm.xlu0 %2156, %v2055
  %v2158 = vpop.permute.xlu0 %2157
  %2161 = vset.pattern.permute.xlu0 0
  %2162 = vperm.xlu0 %2161, %v2056
  %v2163 = vpop.permute.xlu0 %2162
  %2166 = vset.pattern.permute.xlu0 0
  %2167 = vperm.xlu0 %2166, %v2057
  %v2168 = vpop.permute.xlu0 %2167
  %2171 = vset.pattern.permute.xlu0 0
  %2172 = vperm.xlu0 %2171, %v2058
  %v2173 = vpop.permute.xlu0 %2172
  %2176 = vset.pattern.permute.xlu0 0
  %2177 = vperm.xlu0 %2176, %v2059
  %v2178 = vpop.permute.xlu0 %2177
  %2181 = vset.pattern.permute.xlu0 0
  %2182 = vperm.xlu0 %2181, %v2060
  %v2183 = vpop.permute.xlu0 %2182
  %2186 = vset.pattern.permute.xlu0 0
  %2187 = vperm.xlu0 %2186, %v2061
  %v2188 = vpop.permute.xlu0 %2187
  %2191 = vset.pattern.permute.xlu0 0
  %2192 = vperm.xlu0 %2191, %v2062
  %v2193 = vpop.permute.xlu0 %2192
  %2196 = vset.pattern.permute.xlu0 0
  %2197 = vperm.xlu0 %2196, %v2063
  %v2198 = vpop.permute.xlu0 %2197
  %2201 = vset.pattern.permute.xlu0 0
  %2202 = vperm.xlu0 %2201, %v2064
  %v2203 = vpop.permute.xlu0 %2202
  %2206 = vset.pattern.permute.xlu0 0
  %2207 = vperm.xlu0 %2206, %v2065
  %v2208 = vpop.permute.xlu0 %2207
  %v2210 = vmul.f32 %v2114, %v2133
  %v2211 = vmul.f32 %v2115, %v2138
  %v2212 = vmul.f32 %v2116, %v2143
  %v2213 = vmul.f32 %v2117, %v2148
  %v2214 = vmul.f32 %v2118, %v2153
  %v2215 = vmul.f32 %v2119, %v2158
  %v2216 = vmul.f32 %v2120, %v2163
  %v2217 = vmul.f32 %v2121, %v2168
  %v2218 = vmul.f32 %v2122, %v2173
  %v2219 = vmul.f32 %v2123, %v2178
  %v2220 = vmul.f32 %v2124, %v2183
  %v2221 = vmul.f32 %v2125, %v2188
  %v2222 = vmul.f32 %v2126, %v2193
  %v2223 = vmul.f32 %v2127, %v2198
  %v2224 = vmul.f32 %v2128, %v2203
  %v2225 = vmul.f32 %v2129, %v2208
  %2227 = vset.pattern.permute.xlu0 0
  %2228 = vperm.xlu0 %2227, %v2098
  %v2229 = vpop.permute.xlu0 %2228
  %2232 = vset.pattern.permute.xlu0 0
  %2233 = vperm.xlu0 %2232, %v2099
  %v2234 = vpop.permute.xlu0 %2233
  %2237 = vset.pattern.permute.xlu0 0
  %2238 = vperm.xlu0 %2237, %v2100
  %v2239 = vpop.permute.xlu0 %2238
  %2242 = vset.pattern.permute.xlu0 0
  %2243 = vperm.xlu0 %2242, %v2101
  %v2244 = vpop.permute.xlu0 %2243
  %2247 = vset.pattern.permute.xlu0 0
  %2248 = vperm.xlu0 %2247, %v2102
  %v2249 = vpop.permute.xlu0 %2248
  %2252 = vset.pattern.permute.xlu0 0
  %2253 = vperm.xlu0 %2252, %v2103
  %v2254 = vpop.permute.xlu0 %2253
  %2257 = vset.pattern.permute.xlu0 0
  %2258 = vperm.xlu0 %2257, %v2104
  %v2259 = vpop.permute.xlu0 %2258
  %2262 = vset.pattern.permute.xlu0 0
  %2263 = vperm.xlu0 %2262, %v2105
  %v2264 = vpop.permute.xlu0 %2263
  %2267 = vset.pattern.permute.xlu0 0
  %2268 = vperm.xlu0 %2267, %v2106
  %v2269 = vpop.permute.xlu0 %2268
  %2272 = vset.pattern.permute.xlu0 0
  %2273 = vperm.xlu0 %2272, %v2107
  %v2274 = vpop.permute.xlu0 %2273
  %2277 = vset.pattern.permute.xlu0 0
  %2278 = vperm.xlu0 %2277, %v2108
  %v2279 = vpop.permute.xlu0 %2278
  %2282 = vset.pattern.permute.xlu0 0
  %2283 = vperm.xlu0 %2282, %v2109
  %v2284 = vpop.permute.xlu0 %2283
  %2287 = vset.pattern.permute.xlu0 0
  %2288 = vperm.xlu0 %2287, %v2110
  %v2289 = vpop.permute.xlu0 %2288
  %2292 = vset.pattern.permute.xlu0 0
  %2293 = vperm.xlu0 %2292, %v2111
  %v2294 = vpop.permute.xlu0 %2293
  %2297 = vset.pattern.permute.xlu0 0
  %2298 = vperm.xlu0 %2297, %v2112
  %v2299 = vpop.permute.xlu0 %2298
  %2302 = vset.pattern.permute.xlu0 0
  %2303 = vperm.xlu0 %2302, %v2113
  %v2304 = vpop.permute.xlu0 %2303
  %v2306 = vadd.f32 %v2210, %v2229
  %v2307 = vadd.f32 %v2211, %v2234
  %v2308 = vadd.f32 %v2212, %v2239
  %v2309 = vadd.f32 %v2213, %v2244
  %v2310 = vadd.f32 %v2214, %v2249
  %v2311 = vadd.f32 %v2215, %v2254
  %v2312 = vadd.f32 %v2216, %v2259
  %v2313 = vadd.f32 %v2217, %v2264
  %v2314 = vadd.f32 %v2218, %v2269
  %v2315 = vadd.f32 %v2219, %v2274
  %v2316 = vadd.f32 %v2220, %v2279
  %v2317 = vadd.f32 %v2221, %v2284
  %v2318 = vadd.f32 %v2222, %v2289
  %v2319 = vadd.f32 %v2223, %v2294
  %v2320 = vadd.f32 %v2224, %v2299
  %v2321 = vadd.f32 %v2225, %v2304
  %v2322 = vld [vmem:[%s0] sm:$0xff]
  %v2323 = vld [vmem:[%s0 + $0x8] sm:$0xff]
  %v2324 = vld [vmem:[%s0 + $0x10] sm:$0xff]
  %v2325 = vld [vmem:[%s0 + $0x18] sm:$0xff]
  %v2326 = vld [vmem:[%s0 + $0x20] sm:$0xff]
  %v2327 = vld [vmem:[%s0 + $0x28] sm:$0xff]
  %v2328 = vld [vmem:[%s0 + $0x30] sm:$0xff]
  %v2329 = vld [vmem:[%s0 + $0x38] sm:$0xff]
  %v2330 = vld [vmem:[%s0 + $0x40] sm:$0xff]
  %v2331 = vld [vmem:[%s0 + $0x48] sm:$0xff]
  %v2332 = vld [vmem:[%s0 + $0x50] sm:$0xff]
  %v2333 = vld [vmem:[%s0 + $0x58] sm:$0xff]
  %v2334 = vld [vmem:[%s0 + $0x60] sm:$0xff]
  %v2335 = vld [vmem:[%s0 + $0x68] sm:$0xff]
  %v2336 = vld [vmem:[%s0 + $0x70] sm:$0xff]
  %v2337 = vld [vmem:[%s0 + $0x78] sm:$0xff]
  %v2338 = vadd.f32 %v2306, %v2322
  %v2339 = vadd.f32 %v2307, %v2323
  %v2340 = vadd.f32 %v2308, %v2324
  %v2341 = vadd.f32 %v2309, %v2325
  %v2342 = vadd.f32 %v2310, %v2326
  %v2343 = vadd.f32 %v2311, %v2327
  %v2344 = vadd.f32 %v2312, %v2328
  %v2345 = vadd.f32 %v2313, %v2329
  %v2346 = vadd.f32 %v2314, %v2330
  %v2347 = vadd.f32 %v2315, %v2331
  %v2348 = vadd.f32 %v2316, %v2332
  %v2349 = vadd.f32 %v2317, %v2333
  %v2350 = vadd.f32 %v2318, %v2334
  %v2351 = vadd.f32 %v2319, %v2335
  %v2352 = vadd.f32 %v2320, %v2336
  %v2353 = vadd.f32 %v2321, %v2337
  %v2354 = vmul.f32 %v2338, 0.5
  %v2355 = vmul.f32 %v2339, 0.5
  %v2356 = vmul.f32 %v2340, 0.5
  %v2357 = vmul.f32 %v2341, 0.5
  %v2358 = vmul.f32 %v2342, 0.5
  %v2359 = vmul.f32 %v2343, 0.5
  %v2360 = vmul.f32 %v2344, 0.5
  %v2361 = vmul.f32 %v2345, 0.5
  %v2362 = vmul.f32 %v2346, 0.5
  %v2363 = vmul.f32 %v2347, 0.5
  %v2364 = vmul.f32 %v2348, 0.5
  %v2365 = vmul.f32 %v2349, 0.5
  %v2366 = vmul.f32 %v2350, 0.5
  %v2367 = vmul.f32 %v2351, 0.5
  %v2368 = vmul.f32 %v2352, 0.5
  %v2369 = vmul.f32 %v2353, 0.5
  %v2370 = vmul.f32 %v2338, 0.044715
  %v2371 = vmul.f32 %v2339, 0.044715
  %v2372 = vmul.f32 %v2340, 0.044715
  %v2373 = vmul.f32 %v2341, 0.044715
  %v2374 = vmul.f32 %v2342, 0.044715
  %v2375 = vmul.f32 %v2343, 0.044715
  %v2376 = vmul.f32 %v2344, 0.044715
  %v2377 = vmul.f32 %v2345, 0.044715
  %v2378 = vmul.f32 %v2346, 0.044715
  %v2379 = vmul.f32 %v2347, 0.044715
  %v2380 = vmul.f32 %v2348, 0.044715
  %v2381 = vmul.f32 %v2349, 0.044715
  %v2382 = vmul.f32 %v2350, 0.044715
  %v2383 = vmul.f32 %v2351, 0.044715
  %v2384 = vmul.f32 %v2352, 0.044715
  %v2385 = vmul.f32 %v2353, 0.044715
  %v2386 = vmul.f32 %v2370, %v2338
  %v2387 = vmul.f32 %v2371, %v2339
  %v2388 = vmul.f32 %v2372, %v2340
  %v2389 = vmul.f32 %v2373, %v2341
  %v2390 = vmul.f32 %v2374, %v2342
  %v2391 = vmul.f32 %v2375, %v2343
  %v2392 = vmul.f32 %v2376, %v2344
  %v2393 = vmul.f32 %v2377, %v2345
  %v2394 = vmul.f32 %v2378, %v2346
  %v2395 = vmul.f32 %v2379, %v2347
  %v2396 = vmul.f32 %v2380, %v2348
  %v2397 = vmul.f32 %v2381, %v2349
  %v2398 = vmul.f32 %v2382, %v2350
  %v2399 = vmul.f32 %v2383, %v2351
  %v2400 = vmul.f32 %v2384, %v2352
  %v2401 = vmul.f32 %v2385, %v2353
  %v2402 = vmul.f32 %v2386, %v2338
  %v2403 = vmul.f32 %v2387, %v2339
  %v2404 = vmul.f32 %v2388, %v2340
  %v2405 = vmul.f32 %v2389, %v2341
  %v2406 = vmul.f32 %v2390, %v2342
  %v2407 = vmul.f32 %v2391, %v2343
  %v2408 = vmul.f32 %v2392, %v2344
  %v2409 = vmul.f32 %v2393, %v2345
  %v2410 = vmul.f32 %v2394, %v2346
  %v2411 = vmul.f32 %v2395, %v2347
  %v2412 = vmul.f32 %v2396, %v2348
  %v2413 = vmul.f32 %v2397, %v2349
  %v2414 = vmul.f32 %v2398, %v2350
  %v2415 = vmul.f32 %v2399, %v2351
  %v2416 = vmul.f32 %v2400, %v2352
  %v2417 = vmul.f32 %v2401, %v2353
  %v2418 = vadd.f32 %v2338, %v2402
  %v2419 = vadd.f32 %v2339, %v2403
  %v2420 = vadd.f32 %v2340, %v2404
  %v2421 = vadd.f32 %v2341, %v2405
  %v2422 = vadd.f32 %v2342, %v2406
  %v2423 = vadd.f32 %v2343, %v2407
  %v2424 = vadd.f32 %v2344, %v2408
  %v2425 = vadd.f32 %v2345, %v2409
  %v2426 = vadd.f32 %v2346, %v2410
  %v2427 = vadd.f32 %v2347, %v2411
  %v2428 = vadd.f32 %v2348, %v2412
  %v2429 = vadd.f32 %v2349, %v2413
  %v2430 = vadd.f32 %v2350, %v2414
  %v2431 = vadd.f32 %v2351, %v2415
  %v2432 = vadd.f32 %v2352, %v2416
  %v2433 = vadd.f32 %v2353, %v2417
  %v2434 = vmul.f32 %v2418, 0.7978846
  %v2435 = vmul.f32 %v2419, 0.7978846
  %v2436 = vmul.f32 %v2420, 0.7978846
  %v2437 = vmul.f32 %v2421, 0.7978846
  %v2438 = vmul.f32 %v2422, 0.7978846
  %v2439 = vmul.f32 %v2423, 0.7978846
  %v2440 = vmul.f32 %v2424, 0.7978846
  %v2441 = vmul.f32 %v2425, 0.7978846
  %v2442 = vmul.f32 %v2426, 0.7978846
  %v2443 = vmul.f32 %v2427, 0.7978846
  %v2444 = vmul.f32 %v2428, 0.7978846
  %v2445 = vmul.f32 %v2429, 0.7978846
  %v2446 = vmul.f32 %v2430, 0.7978846
  %v2447 = vmul.f32 %v2431, 0.7978846
  %v2448 = vmul.f32 %v2432, 0.7978846
  %v2449 = vmul.f32 %v2433, 0.7978846
  %v2450 = vtanh.pop %v2434
  %v2451 = vtanh.pop %v2435
  %v2452 = vtanh.pop %v2436
  %v2453 = vtanh.pop %v2437
  %v2454 = vtanh.pop %v2438
  %v2455 = vtanh.pop %v2439
  %v2456 = vtanh.pop %v2440
  %v2457 = vtanh.pop %v2441
  %v2458 = vtanh.pop %v2442
  %v2459 = vtanh.pop %v2443
  %v2460 = vtanh.pop %v2444
  %v2461 = vtanh.pop %v2445
  %v2462 = vtanh.pop %v2446
  %v2463 = vtanh.pop %v2447
  %v2464 = vtanh.pop %v2448
  %v2465 = vtanh.pop %v2449
  %v2466 = vadd.f32 %v2450, 1.0
  %v2467 = vadd.f32 %v2451, 1.0
  %v2468 = vadd.f32 %v2452, 1.0
  %v2469 = vadd.f32 %v2453, 1.0
  %v2470 = vadd.f32 %v2454, 1.0
  %v2471 = vadd.f32 %v2455, 1.0
  %v2472 = vadd.f32 %v2456, 1.0
  %v2473 = vadd.f32 %v2457, 1.0
  %v2474 = vadd.f32 %v2458, 1.0
  %v2475 = vadd.f32 %v2459, 1.0
  %v2476 = vadd.f32 %v2460, 1.0
  %v2477 = vadd.f32 %v2461, 1.0
  %v2478 = vadd.f32 %v2462, 1.0
  %v2479 = vadd.f32 %v2463, 1.0
  %v2480 = vadd.f32 %v2464, 1.0
  %v2481 = vadd.f32 %v2465, 1.0
  %v2482 = vmul.f32 %v2354, %v2466
  %v2483 = vmul.f32 %v2355, %v2467
  %v2484 = vmul.f32 %v2356, %v2468
  %v2485 = vmul.f32 %v2357, %v2469
  %v2486 = vmul.f32 %v2358, %v2470
  %v2487 = vmul.f32 %v2359, %v2471
  %v2488 = vmul.f32 %v2360, %v2472
  %v2489 = vmul.f32 %v2361, %v2473
  %v2490 = vmul.f32 %v2362, %v2474
  %v2491 = vmul.f32 %v2363, %v2475
  %v2492 = vmul.f32 %v2364, %v2476
  %v2493 = vmul.f32 %v2365, %v2477
  %v2494 = vmul.f32 %v2366, %v2478
  %v2495 = vmul.f32 %v2367, %v2479
  %v2496 = vmul.f32 %v2368, %v2480
  %v2497 = vmul.f32 %v2369, %v2481
  %2498 = vst [vmem:[%s7] sm:$0xff] %v2482
  %2499 = vst [vmem:[%s7 + $0x8] sm:$0xff] %v2483
  %2500 = vst [vmem:[%s7 + $0x10] sm:$0xff] %v2484
  %2501 = vst [vmem:[%s7 + $0x18] sm:$0xff] %v2485
  %2502 = vst [vmem:[%s7 + $0x20] sm:$0xff] %v2486
  %2503 = vst [vmem:[%s7 + $0x28] sm:$0xff] %v2487
  %2504 = vst [vmem:[%s7 + $0x30] sm:$0xff] %v2488
  %2505 = vst [vmem:[%s7 + $0x38] sm:$0xff] %v2489
  %2506 = vst [vmem:[%s7 + $0x40] sm:$0xff] %v2490
  %2507 = vst [vmem:[%s7 + $0x48] sm:$0xff] %v2491
  %2508 = vst [vmem:[%s7 + $0x50] sm:$0xff] %v2492
  %2509 = vst [vmem:[%s7 + $0x58] sm:$0xff] %v2493
  %2510 = vst [vmem:[%s7 + $0x60] sm:$0xff] %v2494
  %2511 = vst [vmem:[%s7 + $0x68] sm:$0xff] %v2495
  %2512 = vst [vmem:[%s7 + $0x70] sm:$0xff] %v2496
  %2513 = vst [vmem:[%s7 + $0x78] sm:$0xff] %v2497
  %2514 = vadd.xlane.f32.xlu0 %v2482
  %v2515 = vpop.xlane.xlu0 %2514
  %2516 = vadd.xlane.f32.xlu0 %v2483
  %v2517 = vpop.xlane.xlu0 %2516
  %2518 = vadd.xlane.f32.xlu0 %v2484
  %v2519 = vpop.xlane.xlu0 %2518
  %2520 = vadd.xlane.f32.xlu0 %v2485
  %v2521 = vpop.xlane.xlu0 %2520
  %2522 = vadd.xlane.f32.xlu0 %v2486
  %v2523 = vpop.xlane.xlu0 %2522
  %2524 = vadd.xlane.f32.xlu0 %v2487
  %v2525 = vpop.xlane.xlu0 %2524
  %2526 = vadd.xlane.f32.xlu0 %v2488
  %v2527 = vpop.xlane.xlu0 %2526
  %2528 = vadd.xlane.f32.xlu0 %v2489
  %v2529 = vpop.xlane.xlu0 %2528
  %2530 = vadd.xlane.f32.xlu0 %v2490
  %v2531 = vpop.xlane.xlu0 %2530
  %2532 = vadd.xlane.f32.xlu0 %v2491
  %v2533 = vpop.xlane.xlu0 %2532
  %2534 = vadd.xlane.f32.xlu0 %v2492
  %v2535 = vpop.xlane.xlu0 %2534
  %2536 = vadd.xlane.f32.xlu0 %v2493
  %v2537 = vpop.xlane.xlu0 %2536
  %2538 = vadd.xlane.f32.xlu0 %v2494
  %v2539 = vpop.xlane.xlu0 %2538
  %2540 = vadd.xlane.f32.xlu0 %v2495
  %v2541 = vpop.xlane.xlu0 %2540
  %2542 = vadd.xlane.f32.xlu0 %v2496
  %v2543 = vpop.xlane.xlu0 %2542
  %2544 = vadd.xlane.f32.xlu0 %v2497
  %v2545 = vpop.xlane.xlu0 %2544
  %v2546 = vadd.f32 %v2515, 0.0
  %v2547 = vadd.f32 %v2517, 0.0
  %v2548 = vadd.f32 %v2519, 0.0
  %v2549 = vadd.f32 %v2521, 0.0
  %v2550 = vadd.f32 %v2523, 0.0
  %v2551 = vadd.f32 %v2525, 0.0
  %v2552 = vadd.f32 %v2527, 0.0
  %v2553 = vadd.f32 %v2529, 0.0
  %v2554 = vadd.f32 %v2531, 0.0
  %v2555 = vadd.f32 %v2533, 0.0
  %v2556 = vadd.f32 %v2535, 0.0
  %v2557 = vadd.f32 %v2537, 0.0
  %v2558 = vadd.f32 %v2539, 0.0
  %v2559 = vadd.f32 %v2541, 0.0
  %v2560 = vadd.f32 %v2543, 0.0
  %v2561 = vadd.f32 %v2545, 0.0
  %v2562 = vmul.f32 %v2482, %v2482
  %v2563 = vmul.f32 %v2483, %v2483
  %v2564 = vmul.f32 %v2484, %v2484
  %v2565 = vmul.f32 %v2485, %v2485
  %v2566 = vmul.f32 %v2486, %v2486
  %v2567 = vmul.f32 %v2487, %v2487
  %v2568 = vmul.f32 %v2488, %v2488
  %v2569 = vmul.f32 %v2489, %v2489
  %v2570 = vmul.f32 %v2490, %v2490
  %v2571 = vmul.f32 %v2491, %v2491
  %v2572 = vmul.f32 %v2492, %v2492
  %v2573 = vmul.f32 %v2493, %v2493
  %v2574 = vmul.f32 %v2494, %v2494
  %v2575 = vmul.f32 %v2495, %v2495
  %v2576 = vmul.f32 %v2496, %v2496
  %v2577 = vmul.f32 %v2497, %v2497
  %2578 = vadd.xlane.f32.xlu0 %v2562
  %v2579 = vpop.xlane.xlu0 %2578
  %2580 = vadd.xlane.f32.xlu0 %v2563
  %v2581 = vpop.xlane.xlu0 %2580
  %2582 = vadd.xlane.f32.xlu0 %v2564
  %v2583 = vpop.xlane.xlu0 %2582
  %2584 = vadd.xlane.f32.xlu0 %v2565
  %v2585 = vpop.xlane.xlu0 %2584
  %2586 = vadd.xlane.f32.xlu0 %v2566
  %v2587 = vpop.xlane.xlu0 %2586
  %2588 = vadd.xlane.f32.xlu0 %v2567
  %v2589 = vpop.xlane.xlu0 %2588
  %2590 = vadd.xlane.f32.xlu0 %v2568
  %v2591 = vpop.xlane.xlu0 %2590
  %2592 = vadd.xlane.f32.xlu0 %v2569
  %v2593 = vpop.xlane.xlu0 %2592
  %2594 = vadd.xlane.f32.xlu0 %v2570
  %v2595 = vpop.xlane.xlu0 %2594
  %2596 = vadd.xlane.f32.xlu0 %v2571
  %v2597 = vpop.xlane.xlu0 %2596
  %2598 = vadd.xlane.f32.xlu0 %v2572
  %v2599 = vpop.xlane.xlu0 %2598
  %2600 = vadd.xlane.f32.xlu0 %v2573
  %v2601 = vpop.xlane.xlu0 %2600
  %2602 = vadd.xlane.f32.xlu0 %v2574
  %v2603 = vpop.xlane.xlu0 %2602
  %2604 = vadd.xlane.f32.xlu0 %v2575
  %v2605 = vpop.xlane.xlu0 %2604
  %2606 = vadd.xlane.f32.xlu0 %v2576
  %v2607 = vpop.xlane.xlu0 %2606
  %2608 = vadd.xlane.f32.xlu0 %v2577
  %v2609 = vpop.xlane.xlu0 %2608
  %v2610 = vadd.f32 %v2579, 0.0
  %v2611 = vadd.f32 %v2581, 0.0
  %v2612 = vadd.f32 %v2583, 0.0
  %v2613 = vadd.f32 %v2585, 0.0
  %v2614 = vadd.f32 %v2587, 0.0
  %v2615 = vadd.f32 %v2589, 0.0
  %v2616 = vadd.f32 %v2591, 0.0
  %v2617 = vadd.f32 %v2593, 0.0
  %v2618 = vadd.f32 %v2595, 0.0
  %v2619 = vadd.f32 %v2597, 0.0
  %v2620 = vadd.f32 %v2599, 0.0
  %v2621 = vadd.f32 %v2601, 0.0
  %v2622 = vadd.f32 %v2603, 0.0
  %v2623 = vadd.f32 %v2605, 0.0
  %v2624 = vadd.f32 %v2607, 0.0
  %v2625 = vadd.f32 %v2609, 0.0
  %v2626 = vld [vmem:[#allocation3 + $0x8] sm:$0xff]
  %v2627 = vld [vmem:[#allocation3 + $0x18] sm:$0xff]
  %v2628 = vld [vmem:[#allocation3 + $0x28] sm:$0xff]
  %v2629 = vld [vmem:[#allocation3 + $0x38] sm:$0xff]
  %v2630 = vld [vmem:[#allocation3 + $0x48] sm:$0xff]
  %v2631 = vld [vmem:[#allocation3 + $0x58] sm:$0xff]
  %v2632 = vld [vmem:[#allocation3 + $0x68] sm:$0xff]
  %v2633 = vld [vmem:[#allocation3 + $0x78] sm:$0xff]
  %v2634 = vld [vmem:[#allocation3 + $0x88] sm:$0xff]
  %v2635 = vld [vmem:[#allocation3 + $0x98] sm:$0xff]
  %v2636 = vld [vmem:[#allocation3 + $0xa8] sm:$0xff]
  %v2637 = vld [vmem:[#allocation3 + $0xb8] sm:$0xff]
  %v2638 = vld [vmem:[#allocation3 + $0xc8] sm:$0xff]
  %v2639 = vld [vmem:[#allocation3 + $0xd8] sm:$0xff]
  %v2640 = vld [vmem:[#allocation3 + $0xe8] sm:$0xff]
  %v2641 = vld [vmem:[#allocation3 + $0xf8] sm:$0xff]
  %v2642 = vmul.f32 %v2626, %v2133
  %v2643 = vmul.f32 %v2627, %v2138
  %v2644 = vmul.f32 %v2628, %v2143
  %v2645 = vmul.f32 %v2629, %v2148
  %v2646 = vmul.f32 %v2630, %v2153
  %v2647 = vmul.f32 %v2631, %v2158
  %v2648 = vmul.f32 %v2632, %v2163
  %v2649 = vmul.f32 %v2633, %v2168
  %v2650 = vmul.f32 %v2634, %v2173
  %v2651 = vmul.f32 %v2635, %v2178
  %v2652 = vmul.f32 %v2636, %v2183
  %v2653 = vmul.f32 %v2637, %v2188
  %v2654 = vmul.f32 %v2638, %v2193
  %v2655 = vmul.f32 %v2639, %v2198
  %v2656 = vmul.f32 %v2640, %v2203
  %v2657 = vmul.f32 %v2641, %v2208
  %v2658 = vadd.f32 %v2642, %v2229
  %v2659 = vadd.f32 %v2643, %v2234
  %v2660 = vadd.f32 %v2644, %v2239
  %v2661 = vadd.f32 %v2645, %v2244
  %v2662 = vadd.f32 %v2646, %v2249
  %v2663 = vadd.f32 %v2647, %v2254
  %v2664 = vadd.f32 %v2648, %v2259
  %v2665 = vadd.f32 %v2649, %v2264
  %v2666 = vadd.f32 %v2650, %v2269
  %v2667 = vadd.f32 %v2651, %v2274
  %v2668 = vadd.f32 %v2652, %v2279
  %v2669 = vadd.f32 %v2653, %v2284
  %v2670 = vadd.f32 %v2654, %v2289
  %v2671 = vadd.f32 %v2655, %v2294
  %v2672 = vadd.f32 %v2656, %v2299
  %v2673 = vadd.f32 %v2657, %v2304
  %v2674 = vld [vmem:[%s198] sm:$0xff]
  %v2675 = vld [vmem:[%s198 + $0x8] sm:$0xff]
  %v2676 = vld [vmem:[%s198 + $0x10] sm:$0xff]
  %v2677 = vld [vmem:[%s198 + $0x18] sm:$0xff]
  %v2678 = vld [vmem:[%s198 + $0x20] sm:$0xff]
  %v2679 = vld [vmem:[%s198 + $0x28] sm:$0xff]
  %v2680 = vld [vmem:[%s198 + $0x30] sm:$0xff]
  %v2681 = vld [vmem:[%s198 + $0x38] sm:$0xff]
  %v2682 = vld [vmem:[%s198 + $0x40] sm:$0xff]
  %v2683 = vld [vmem:[%s198 + $0x48] sm:$0xff]
  %v2684 = vld [vmem:[%s198 + $0x50] sm:$0xff]
  %v2685 = vld [vmem:[%s198 + $0x58] sm:$0xff]
  %v2686 = vld [vmem:[%s198 + $0x60] sm:$0xff]
  %v2687 = vld [vmem:[%s198 + $0x68] sm:$0xff]
  %v2688 = vld [vmem:[%s198 + $0x70] sm:$0xff]
  %v2689 = vld [vmem:[%s198 + $0x78] sm:$0xff]
  %v2690 = vadd.f32 %v2658, %v2674
  %v2691 = vadd.f32 %v2659, %v2675
  %v2692 = vadd.f32 %v2660, %v2676
  %v2693 = vadd.f32 %v2661, %v2677
  %v2694 = vadd.f32 %v2662, %v2678
  %v2695 = vadd.f32 %v2663, %v2679
  %v2696 = vadd.f32 %v2664, %v2680
  %v2697 = vadd.f32 %v2665, %v2681
  %v2698 = vadd.f32 %v2666, %v2682
  %v2699 = vadd.f32 %v2667, %v2683
  %v2700 = vadd.f32 %v2668, %v2684
  %v2701 = vadd.f32 %v2669, %v2685
  %v2702 = vadd.f32 %v2670, %v2686
  %v2703 = vadd.f32 %v2671, %v2687
  %v2704 = vadd.f32 %v2672, %v2688
  %v2705 = vadd.f32 %v2673, %v2689
  %v2706 = vmul.f32 %v2690, 0.5
  %v2707 = vmul.f32 %v2691, 0.5
  %v2708 = vmul.f32 %v2692, 0.5
  %v2709 = vmul.f32 %v2693, 0.5
  %v2710 = vmul.f32 %v2694, 0.5
  %v2711 = vmul.f32 %v2695, 0.5
  %v2712 = vmul.f32 %v2696, 0.5
  %v2713 = vmul.f32 %v2697, 0.5
  %v2714 = vmul.f32 %v2698, 0.5
  %v2715 = vmul.f32 %v2699, 0.5
  %v2716 = vmul.f32 %v2700, 0.5
  %v2717 = vmul.f32 %v2701, 0.5
  %v2718 = vmul.f32 %v2702, 0.5
  %v2719 = vmul.f32 %v2703, 0.5
  %v2720 = vmul.f32 %v2704, 0.5
  %v2721 = vmul.f32 %v2705, 0.5
  %v2722 = vmul.f32 %v2690, 0.044715
  %v2723 = vmul.f32 %v2691, 0.044715
  %v2724 = vmul.f32 %v2692, 0.044715
  %v2725 = vmul.f32 %v2693, 0.044715
  %v2726 = vmul.f32 %v2694, 0.044715
  %v2727 = vmul.f32 %v2695, 0.044715
  %v2728 = vmul.f32 %v2696, 0.044715
  %v2729 = vmul.f32 %v2697, 0.044715
  %v2730 = vmul.f32 %v2698, 0.044715
  %v2731 = vmul.f32 %v2699, 0.044715
  %v2732 = vmul.f32 %v2700, 0.044715
  %v2733 = vmul.f32 %v2701, 0.044715
  %v2734 = vmul.f32 %v2702, 0.044715
  %v2735 = vmul.f32 %v2703, 0.044715
  %v2736 = vmul.f32 %v2704, 0.044715
  %v2737 = vmul.f32 %v2705, 0.044715
  %v2738 = vmul.f32 %v2722, %v2690
  %v2739 = vmul.f32 %v2723, %v2691
  %v2740 = vmul.f32 %v2724, %v2692
  %v2741 = vmul.f32 %v2725, %v2693
  %v2742 = vmul.f32 %v2726, %v2694
  %v2743 = vmul.f32 %v2727, %v2695
  %v2744 = vmul.f32 %v2728, %v2696
  %v2745 = vmul.f32 %v2729, %v2697
  %v2746 = vmul.f32 %v2730, %v2698
  %v2747 = vmul.f32 %v2731, %v2699
  %v2748 = vmul.f32 %v2732, %v2700
  %v2749 = vmul.f32 %v2733, %v2701
  %v2750 = vmul.f32 %v2734, %v2702
  %v2751 = vmul.f32 %v2735, %v2703
  %v2752 = vmul.f32 %v2736, %v2704
  %v2753 = vmul.f32 %v2737, %v2705
  %v2754 = vmul.f32 %v2738, %v2690
  %v2755 = vmul.f32 %v2739, %v2691
  %v2756 = vmul.f32 %v2740, %v2692
  %v2757 = vmul.f32 %v2741, %v2693
  %v2758 = vmul.f32 %v2742, %v2694
  %v2759 = vmul.f32 %v2743, %v2695
  %v2760 = vmul.f32 %v2744, %v2696
  %v2761 = vmul.f32 %v2745, %v2697
  %v2762 = vmul.f32 %v2746, %v2698
  %v2763 = vmul.f32 %v2747, %v2699
  %v2764 = vmul.f32 %v2748, %v2700
  %v2765 = vmul.f32 %v2749, %v2701
  %v2766 = vmul.f32 %v2750, %v2702
  %v2767 = vmul.f32 %v2751, %v2703
  %v2768 = vmul.f32 %v2752, %v2704
  %v2769 = vmul.f32 %v2753, %v2705
  %v2770 = vadd.f32 %v2690, %v2754
  %v2771 = vadd.f32 %v2691, %v2755
  %v2772 = vadd.f32 %v2692, %v2756
  %v2773 = vadd.f32 %v2693, %v2757
  %v2774 = vadd.f32 %v2694, %v2758
  %v2775 = vadd.f32 %v2695, %v2759
  %v2776 = vadd.f32 %v2696, %v2760
  %v2777 = vadd.f32 %v2697, %v2761
  %v2778 = vadd.f32 %v2698, %v2762
  %v2779 = vadd.f32 %v2699, %v2763
  %v2780 = vadd.f32 %v2700, %v2764
  %v2781 = vadd.f32 %v2701, %v2765
  %v2782 = vadd.f32 %v2702, %v2766
  %v2783 = vadd.f32 %v2703, %v2767
  %v2784 = vadd.f32 %v2704, %v2768
  %v2785 = vadd.f32 %v2705, %v2769
  %v2786 = vmul.f32 %v2770, 0.7978846
  %v2787 = vmul.f32 %v2771, 0.7978846
  %v2788 = vmul.f32 %v2772, 0.7978846
  %v2789 = vmul.f32 %v2773, 0.7978846
  %v2790 = vmul.f32 %v2774, 0.7978846
  %v2791 = vmul.f32 %v2775, 0.7978846
  %v2792 = vmul.f32 %v2776, 0.7978846
  %v2793 = vmul.f32 %v2777, 0.7978846
  %v2794 = vmul.f32 %v2778, 0.7978846
  %v2795 = vmul.f32 %v2779, 0.7978846
  %v2796 = vmul.f32 %v2780, 0.7978846
  %v2797 = vmul.f32 %v2781, 0.7978846
  %v2798 = vmul.f32 %v2782, 0.7978846
  %v2799 = vmul.f32 %v2783, 0.7978846
  %v2800 = vmul.f32 %v2784, 0.7978846
  %v2801 = vmul.f32 %v2785, 0.7978846
  %v2802 = vtanh.pop %v2786
  %v2803 = vtanh.pop %v2787
  %v2804 = vtanh.pop %v2788
  %v2805 = vtanh.pop %v2789
  %v2806 = vtanh.pop %v2790
  %v2807 = vtanh.pop %v2791
  %v2808 = vtanh.pop %v2792
  %v2809 = vtanh.pop %v2793
  %v2810 = vtanh.pop %v2794
  %v2811 = vtanh.pop %v2795
  %v2812 = vtanh.pop %v2796
  %v2813 = vtanh.pop %v2797
  %v2814 = vtanh.pop %v2798
  %v2815 = vtanh.pop %v2799
  %v2816 = vtanh.pop %v2800
  %v2817 = vtanh.pop %v2801
  %v2818 = vadd.f32 %v2802, 1.0
  %v2819 = vadd.f32 %v2803, 1.0
  %v2820 = vadd.f32 %v2804, 1.0
  %v2821 = vadd.f32 %v2805, 1.0
  %v2822 = vadd.f32 %v2806, 1.0
  %v2823 = vadd.f32 %v2807, 1.0
  %v2824 = vadd.f32 %v2808, 1.0
  %v2825 = vadd.f32 %v2809, 1.0
  %v2826 = vadd.f32 %v2810, 1.0
  %v2827 = vadd.f32 %v2811, 1.0
  %v2828 = vadd.f32 %v2812, 1.0
  %v2829 = vadd.f32 %v2813, 1.0
  %v2830 = vadd.f32 %v2814, 1.0
  %v2831 = vadd.f32 %v2815, 1.0
  %v2832 = vadd.f32 %v2816, 1.0
  %v2833 = vadd.f32 %v2817, 1.0
  %v2834 = vmul.f32 %v2706, %v2818
  %v2835 = vmul.f32 %v2707, %v2819
  %v2836 = vmul.f32 %v2708, %v2820
  %v2837 = vmul.f32 %v2709, %v2821
  %v2838 = vmul.f32 %v2710, %v2822
  %v2839 = vmul.f32 %v2711, %v2823
  %v2840 = vmul.f32 %v2712, %v2824
  %v2841 = vmul.f32 %v2713, %v2825
  %v2842 = vmul.f32 %v2714, %v2826
  %v2843 = vmul.f32 %v2715, %v2827
  %v2844 = vmul.f32 %v2716, %v2828
  %v2845 = vmul.f32 %v2717, %v2829
  %v2846 = vmul.f32 %v2718, %v2830
  %v2847 = vmul.f32 %v2719, %v2831
  %v2848 = vmul.f32 %v2720, %v2832
  %v2849 = vmul.f32 %v2721, %v2833
  %s2850 = scalar_lea.vmem %s7, 128
  %2851 = vst [vmem:[%s2850] sm:$0xff] %v2834
  %2852 = vst [vmem:[%s2850 + $0x8] sm:$0xff] %v2835
  %2853 = vst [vmem:[%s2850 + $0x10] sm:$0xff] %v2836
  %2854 = vst [vmem:[%s2850 + $0x18] sm:$0xff] %v2837
  %2855 = vst [vmem:[%s2850 + $0x20] sm:$0xff] %v2838
  %2856 = vst [vmem:[%s2850 + $0x28] sm:$0xff] %v2839
  %2857 = vst [vmem:[%s2850 + $0x30] sm:$0xff] %v2840
  %2858 = vst [vmem:[%s2850 + $0x38] sm:$0xff] %v2841
  %2859 = vst [vmem:[%s2850 + $0x40] sm:$0xff] %v2842
  %2860 = vst [vmem:[%s2850 + $0x48] sm:$0xff] %v2843
  %2861 = vst [vmem:[%s2850 + $0x50] sm:$0xff] %v2844
  %2862 = vst [vmem:[%s2850 + $0x58] sm:$0xff] %v2845
  %2863 = vst [vmem:[%s2850 + $0x60] sm:$0xff] %v2846
  %2864 = vst [vmem:[%s2850 + $0x68] sm:$0xff] %v2847
  %2865 = vst [vmem:[%s2850 + $0x70] sm:$0xff] %v2848
  %2866 = vst [vmem:[%s2850 + $0x78] sm:$0xff] %v2849
  %2867 = vadd.xlane.f32.xlu0 %v2834
  %v2868 = vpop.xlane.xlu0 %2867
  %2869 = vadd.xlane.f32.xlu0 %v2835
  %v2870 = vpop.xlane.xlu0 %2869
  %2871 = vadd.xlane.f32.xlu0 %v2836
  %v2872 = vpop.xlane.xlu0 %2871
  %2873 = vadd.xlane.f32.xlu0 %v2837
  %v2874 = vpop.xlane.xlu0 %2873
  %2875 = vadd.xlane.f32.xlu0 %v2838
  %v2876 = vpop.xlane.xlu0 %2875
  %2877 = vadd.xlane.f32.xlu0 %v2839
  %v2878 = vpop.xlane.xlu0 %2877
  %2879 = vadd.xlane.f32.xlu0 %v2840
  %v2880 = vpop.xlane.xlu0 %2879
  %2881 = vadd.xlane.f32.xlu0 %v2841
  %v2882 = vpop.xlane.xlu0 %2881
  %2883 = vadd.xlane.f32.xlu0 %v2842
  %v2884 = vpop.xlane.xlu0 %2883
  %2885 = vadd.xlane.f32.xlu0 %v2843
  %v2886 = vpop.xlane.xlu0 %2885
  %2887 = vadd.xlane.f32.xlu0 %v2844
  %v2888 = vpop.xlane.xlu0 %2887
  %2889 = vadd.xlane.f32.xlu0 %v2845
  %v2890 = vpop.xlane.xlu0 %2889
  %2891 = vadd.xlane.f32.xlu0 %v2846
  %v2892 = vpop.xlane.xlu0 %2891
  %2893 = vadd.xlane.f32.xlu0 %v2847
  %v2894 = vpop.xlane.xlu0 %2893
  %2895 = vadd.xlane.f32.xlu0 %v2848
  %v2896 = vpop.xlane.xlu0 %2895
  %2897 = vadd.xlane.f32.xlu0 %v2849
  %v2898 = vpop.xlane.xlu0 %2897
  %v2899 = vadd.f32 %v2546, %v2868
  %v2900 = vadd.f32 %v2547, %v2870
  %v2901 = vadd.f32 %v2548, %v2872
  %v2902 = vadd.f32 %v2549, %v2874
  %v2903 = vadd.f32 %v2550, %v2876
  %v2904 = vadd.f32 %v2551, %v2878
  %v2905 = vadd.f32 %v2552, %v2880
  %v2906 = vadd.f32 %v2553, %v2882
  %v2907 = vadd.f32 %v2554, %v2884
  %v2908 = vadd.f32 %v2555, %v2886
  %v2909 = vadd.f32 %v2556, %v2888
  %v2910 = vadd.f32 %v2557, %v2890
  %v2911 = vadd.f32 %v2558, %v2892
  %v2912 = vadd.f32 %v2559, %v2894
  %v2913 = vadd.f32 %v2560, %v2896
  %v2914 = vadd.f32 %v2561, %v2898
  %v2915 = vmul.f32 %v2834, %v2834
  %v2916 = vmul.f32 %v2835, %v2835
  %v2917 = vmul.f32 %v2836, %v2836
  %v2918 = vmul.f32 %v2837, %v2837
  %v2919 = vmul.f32 %v2838, %v2838
  %v2920 = vmul.f32 %v2839, %v2839
  %v2921 = vmul.f32 %v2840, %v2840
  %v2922 = vmul.f32 %v2841, %v2841
  %v2923 = vmul.f32 %v2842, %v2842
  %v2924 = vmul.f32 %v2843, %v2843
  %v2925 = vmul.f32 %v2844, %v2844
  %v2926 = vmul.f32 %v2845, %v2845
  %v2927 = vmul.f32 %v2846, %v2846
  %v2928 = vmul.f32 %v2847, %v2847
  %v2929 = vmul.f32 %v2848, %v2848
  %v2930 = vmul.f32 %v2849, %v2849
  %2931 = vadd.xlane.f32.xlu0 %v2915
  %v2932 = vpop.xlane.xlu0 %2931
  %2933 = vadd.xlane.f32.xlu0 %v2916
  %v2934 = vpop.xlane.xlu0 %2933
  %2935 = vadd.xlane.f32.xlu0 %v2917
  %v2936 = vpop.xlane.xlu0 %2935
  %2937 = vadd.xlane.f32.xlu0 %v2918
  %v2938 = vpop.xlane.xlu0 %2937
  %2939 = vadd.xlane.f32.xlu0 %v2919
  %v2940 = vpop.xlane.xlu0 %2939
  %2941 = vadd.xlane.f32.xlu0 %v2920
  %v2942 = vpop.xlane.xlu0 %2941
  %2943 = vadd.xlane.f32.xlu0 %v2921
  %v2944 = vpop.xlane.xlu0 %2943
  %2945 = vadd.xlane.f32.xlu0 %v2922
  %v2946 = vpop.xlane.xlu0 %2945
  %2947 = vadd.xlane.f32.xlu0 %v2923
  %v2948 = vpop.xlane.xlu0 %2947
  %2949 = vadd.xlane.f32.xlu0 %v2924
  %v2950 = vpop.xlane.xlu0 %2949
  %2951 = vadd.xlane.f32.xlu0 %v2925
  %v2952 = vpop.xlane.xlu0 %2951
  %2953 = vadd.xlane.f32.xlu0 %v2926
  %v2954 = vpop.xlane.xlu0 %2953
  %2955 = vadd.xlane.f32.xlu0 %v2927
  %v2956 = vpop.xlane.xlu0 %2955
  %2957 = vadd.xlane.f32.xlu0 %v2928
  %v2958 = vpop.xlane.xlu0 %2957
  %2959 = vadd.xlane.f32.xlu0 %v2929
  %v2960 = vpop.xlane.xlu0 %2959
  %2961 = vadd.xlane.f32.xlu0 %v2930
  %v2962 = vpop.xlane.xlu0 %2961
  %v2963 = vadd.f32 %v2610, %v2932
  %v2964 = vadd.f32 %v2611, %v2934
  %v2965 = vadd.f32 %v2612, %v2936
  %v2966 = vadd.f32 %v2613, %v2938
  %v2967 = vadd.f32 %v2614, %v2940
  %v2968 = vadd.f32 %v2615, %v2942
  %v2969 = vadd.f32 %v2616, %v2944
  %v2970 = vadd.f32 %v2617, %v2946
  %v2971 = vadd.f32 %v2618, %v2948
  %v2972 = vadd.f32 %v2619, %v2950
  %v2973 = vadd.f32 %v2620, %v2952
  %v2974 = vadd.f32 %v2621, %v2954
  %v2975 = vadd.f32 %v2622, %v2956
  %v2976 = vadd.f32 %v2623, %v2958
  %v2977 = vadd.f32 %v2624, %v2960
  %v2978 = vadd.f32 %v2625, %v2962
  %v2979 = vmul.f32 %v2899, 0.00390625
  %v2980 = vmul.f32 %v2900, 0.00390625
  %v2981 = vmul.f32 %v2901, 0.00390625
  %v2982 = vmul.f32 %v2902, 0.00390625
  %v2983 = vmul.f32 %v2903, 0.00390625
  %v2984 = vmul.f32 %v2904, 0.00390625
  %v2985 = vmul.f32 %v2905, 0.00390625
  %v2986 = vmul.f32 %v2906, 0.00390625
  %v2987 = vmul.f32 %v2907, 0.00390625
  %v2988 = vmul.f32 %v2908, 0.00390625
  %v2989 = vmul.f32 %v2909, 0.00390625
  %v2990 = vmul.f32 %v2910, 0.00390625
  %v2991 = vmul.f32 %v2911, 0.00390625
  %v2992 = vmul.f32 %v2912, 0.00390625
  %v2993 = vmul.f32 %v2913, 0.00390625
  %v2994 = vmul.f32 %v2914, 0.00390625
  %vm2995 = vcmask 7168
  %2996 = vst.msk [vmem:[%s8] sm:$0xff] %vm2995, %v2979
  %2997 = vst.msk [vmem:[%s8 + $0x8] sm:$0xff] %vm2995, %v2980
  %2998 = vst.msk [vmem:[%s8 + $0x10] sm:$0xff] %vm2995, %v2981
  %2999 = vst.msk [vmem:[%s8 + $0x18] sm:$0xff] %vm2995, %v2982
  %3000 = vst.msk [vmem:[%s8 + $0x20] sm:$0xff] %vm2995, %v2983
  %3001 = vst.msk [vmem:[%s8 + $0x28] sm:$0xff] %vm2995, %v2984
  %3002 = vst.msk [vmem:[%s8 + $0x30] sm:$0xff] %vm2995, %v2985
  %3003 = vst.msk [vmem:[%s8 + $0x38] sm:$0xff] %vm2995, %v2986
  %3004 = vst.msk [vmem:[%s8 + $0x40] sm:$0xff] %vm2995, %v2987
  %3005 = vst.msk [vmem:[%s8 + $0x48] sm:$0xff] %vm2995, %v2988
  %3006 = vst.msk [vmem:[%s8 + $0x50] sm:$0xff] %vm2995, %v2989
  %3007 = vst.msk [vmem:[%s8 + $0x58] sm:$0xff] %vm2995, %v2990
  %3008 = vst.msk [vmem:[%s8 + $0x60] sm:$0xff] %vm2995, %v2991
  %3009 = vst.msk [vmem:[%s8 + $0x68] sm:$0xff] %vm2995, %v2992
  %3010 = vst.msk [vmem:[%s8 + $0x70] sm:$0xff] %vm2995, %v2993
  %3011 = vst.msk [vmem:[%s8 + $0x78] sm:$0xff] %vm2995, %v2994
  %v3012 = vmul.f32 %v2963, 0.00390625
  %v3013 = vmul.f32 %v2964, 0.00390625
  %v3014 = vmul.f32 %v2965, 0.00390625
  %v3015 = vmul.f32 %v2966, 0.00390625
  %v3016 = vmul.f32 %v2967, 0.00390625
  %v3017 = vmul.f32 %v2968, 0.00390625
  %v3018 = vmul.f32 %v2969, 0.00390625
  %v3019 = vmul.f32 %v2970, 0.00390625
  %v3020 = vmul.f32 %v2971, 0.00390625
  %v3021 = vmul.f32 %v2972, 0.00390625
  %v3022 = vmul.f32 %v2973, 0.00390625
  %v3023 = vmul.f32 %v2974, 0.00390625
  %v3024 = vmul.f32 %v2975, 0.00390625
  %v3025 = vmul.f32 %v2976, 0.00390625
  %v3026 = vmul.f32 %v2977, 0.00390625
  %v3027 = vmul.f32 %v2978, 0.00390625
  %v3028 = vmul.f32 %v2979, %v2979
  %v3029 = vmul.f32 %v2980, %v2980
  %v3030 = vmul.f32 %v2981, %v2981
  %v3031 = vmul.f32 %v2982, %v2982
  %v3032 = vmul.f32 %v2983, %v2983
  %v3033 = vmul.f32 %v2984, %v2984
  %v3034 = vmul.f32 %v2985, %v2985
  %v3035 = vmul.f32 %v2986, %v2986
  %v3036 = vmul.f32 %v2987, %v2987
  %v3037 = vmul.f32 %v2988, %v2988
  %v3038 = vmul.f32 %v2989, %v2989
  %v3039 = vmul.f32 %v2990, %v2990
  %v3040 = vmul.f32 %v2991, %v2991
  %v3041 = vmul.f32 %v2992, %v2992
  %v3042 = vmul.f32 %v2993, %v2993
  %v3043 = vmul.f32 %v2994, %v2994
  %v3044 = vsub.f32 %v3012, %v3028
  %v3045 = vsub.f32 %v3013, %v3029
  %v3046 = vsub.f32 %v3014, %v3030
  %v3047 = vsub.f32 %v3015, %v3031
  %v3048 = vsub.f32 %v3016, %v3032
  %v3049 = vsub.f32 %v3017, %v3033
  %v3050 = vsub.f32 %v3018, %v3034
  %v3051 = vsub.f32 %v3019, %v3035
  %v3052 = vsub.f32 %v3020, %v3036
  %v3053 = vsub.f32 %v3021, %v3037
  %v3054 = vsub.f32 %v3022, %v3038
  %v3055 = vsub.f32 %v3023, %v3039
  %v3056 = vsub.f32 %v3024, %v3040
  %v3057 = vsub.f32 %v3025, %v3041
  %v3058 = vsub.f32 %v3026, %v3042
  %v3059 = vsub.f32 %v3027, %v3043
  %3060 = vst.msk [vmem:[%s9] sm:$0xff] %vm2995, %v3044
  %3061 = vst.msk [vmem:[%s9 + $0x8] sm:$0xff] %vm2995, %v3045
  %3062 = vst.msk [vmem:[%s9 + $0x10] sm:$0xff] %vm2995, %v3046
  %3063 = vst.msk [vmem:[%s9 + $0x18] sm:$0xff] %vm2995, %v3047
  %3064 = vst.msk [vmem:[%s9 + $0x20] sm:$0xff] %vm2995, %v3048
  %3065 = vst.msk [vmem:[%s9 + $0x28] sm:$0xff] %vm2995, %v3049
  %3066 = vst.msk [vmem:[%s9 + $0x30] sm:$0xff] %vm2995, %v3050
  %3067 = vst.msk [vmem:[%s9 + $0x38] sm:$0xff] %vm2995, %v3051
  %3068 = vst.msk [vmem:[%s9 + $0x40] sm:$0xff] %vm2995, %v3052
  %3069 = vst.msk [vmem:[%s9 + $0x48] sm:$0xff] %vm2995, %v3053
  %3070 = vst.msk [vmem:[%s9 + $0x50] sm:$0xff] %vm2995, %v3054
  %3071 = vst.msk [vmem:[%s9 + $0x58] sm:$0xff] %vm2995, %v3055
  %3072 = vst.msk [vmem:[%s9 + $0x60] sm:$0xff] %vm2995, %v3056
  %3073 = vst.msk [vmem:[%s9 + $0x68] sm:$0xff] %vm2995, %v3057
  %3074 = vst.msk [vmem:[%s9 + $0x70] sm:$0xff] %vm2995, %v3058
  %3075 = vst.msk [vmem:[%s9 + $0x78] sm:$0xff] %vm2995, %v3059
  // Predicated region
  $region30: #{pos_extraction_pallas.3} parent=0 // pred_check
    _
  $region31: #{pos_extraction_pallas.3} parent=0 // pred_check_branch
    %3077 = sbr.rel (0) target = $region33
  $region32: #{pos_extraction_pallas.3} parent=0 // pred_region
    _
  $region33: #{pos_extraction_pallas.3} parent=0 // pred_fallthru
    _
  // Predicated region
  $region34: #{pos_extraction_pallas.3} parent=0 // pred_check
    _
  $region35: #{pos_extraction_pallas.3} parent=0 // pred_check_branch
    %3079 = sbr.rel (0) target = $region37
  $region36: #{pos_extraction_pallas.3} parent=0 // pred_region
    _
  $region37: #{pos_extraction_pallas.3} parent=0 // pred_fallthru
    _
  // Predicated region
  $region38: #{pos_extraction_pallas.3} parent=0 // pred_check
    _
  $region39: #{pos_extraction_pallas.3} parent=0 // pred_check_branch
    %3081 = sbr.rel (0) target = $region41
  $region40: #{pos_extraction_pallas.3} parent=0 // pred_region
    _
  $region41: #{pos_extraction_pallas.3} parent=0 // pred_fallthru
    _
  // Predicated region
  $region42: #{pos_extraction_pallas.3} parent=0 // pred_check
    _
  $region43: #{pos_extraction_pallas.3} parent=0 // pred_check_branch
    %3083 = sbr.rel (0) target = $region45
  $region44: #{pos_extraction_pallas.3} parent=0 // pred_region
    _
  $region45: #{pos_extraction_pallas.3} parent=0 // pred_fallthru
    _
  // Predicated region
  $region46: #{pos_extraction_pallas.3} parent=0 // pred_check
    _
  $region47: #{pos_extraction_pallas.3} parent=0 // pred_check_branch
    %3085 = sbr.rel (0) target = $region49
  $region48: #{pos_extraction_pallas.3} parent=0 // pred_region
    _
  $region49: #{pos_extraction_pallas.3} parent=0 // pred_fallthru
    _
  // Predicated region
  $region50: #{pos_extraction_pallas.3} parent=0 // pred_check
    _
  $region51: #{pos_extraction_pallas.3} parent=0 // pred_check_branch
    %3087 = sbr.rel (0) target = $region53
  $region52: #{pos_extraction_pallas.3} parent=0 // pred_region
    _
  $region53: #{pos_extraction_pallas.3} parent=0 // pred_fallthru
    _

// kernel: pos_extraction_pallas.4
$region0: #{pos_extraction_pallas.4}
  #allocation0 [shape = 'u32[]', space=smem, size = 0x4, offset = 0x4, fixed_abs, tag = 'smem constant byte address 0x4 - core index']
  #allocation1 [shape = 'u32[72,128]{1,0:T(1,128)}', space=vmem, size = 0x9000, scoped, tag = 'internal scratch']
  #allocation2 [shape = 'bf16[768,128]{1,0:T(8,128)(2,1)}', space=vmem, size = 0x30000, scoped, tag = 'scratch operand']
  #allocation3 [shape = 'f32[128,128]{1,0:T(8,128)}', space=vmem, size = 0x10000, scoped, tag = 'scratch operand']
  %s0 = inlined_call_operand.vmem [shape: f32[2,128,128], index: 0, kind: input, shape index: {}]
  %s1 = inlined_call_operand.vmem [shape: bf16[768,128], index: 1, kind: input, shape index: {}]
  %s2 = inlined_call_operand.vmem [shape: f32[768,1], index: 2, kind: input, shape index: {}]
  %s3 = inlined_call_operand.vmem [shape: bf16[4,128,64], index: 3, kind: input, shape index: {}]
  %s4 = inlined_call_operand.vmem [shape: f32[128,1], index: 4, kind: input, shape index: {}]
  %s5 = inlined_call_operand.vmem [shape: f32[2,128,128], index: 5, kind: output, shape index: {0}]
  %s6 = inlined_call_operand.vmem [shape: f32[2,128,1], index: 6, kind: output, shape index: {1}]
  %s7 = inlined_call_operand.vmem [shape: f32[2,128,1], index: 7, kind: output, shape index: {2}]
  %8 = xla_tuple %s5, %s6, %s7
  %s9 = sld [smem:[#allocation0]]
  $region77: #{pos_extraction_pallas.4} parent=0
    _
  %s11 = ssub.s32 1, %s9
  %s12 = scalar_select 0, %s11, %s9
  loop: start=0, step=1, limit=4
  $region2: #{pos_extraction_pallas.4} parent=0 // loop_pre_header
    _
  $region3: #{pos_extraction_pallas.4} parent=0 // loop_header
    %s14 = sphi 0, %s18
    %p15 = scmp.ge.s32.totalorder %s14, 4
    %s21 = sphi 0, %s33
    %s22 = sphi 0, %s29
    %s23 = sphi 0, %s21
    %s24 = sphi 0, %s22
    %s25 = sphi 0, %s23
    %s26 = sphi 0, %s24
    %s36 = sphi 0, %s38
    %s39 = sphi 0, %s36
    %s40 = sphi 0, %s39
    %s56 = sphi 0, %s40
    %s60 = sphi 0, %s60
    %s62 = sphi 0, %s60
    %s63 = sphi 0, %s62
    %s77 = sphi 0, %s63
    %s81 = sphi 0, %s81
    %s83 = sphi 0, %s81
    %s84 = sphi 0, %s83
    %s98 = sphi 0, %s84
    %s102 = sphi 0, %s102
    %s104 = sphi 0, %s102
    %s105 = sphi 0, %s104
    %s119 = sphi 0, %s105
    %s123 = sphi 0, %s123
    %s125 = sphi 0, %s123
    %s126 = sphi 0, %s125
    %s140 = sphi 0, %s126
    %s148 = sphi 0, %s150
    %s151 = sphi 0, %s148
    %s152 = sphi 0, %s151
    %s168 = sphi 0, %s152
    %s174 = sphi 0, %s176
    %s177 = sphi 0, %s174
    %s178 = sphi 0, %s177
    %s194 = sphi 0, %s178
    %s200 = sphi 0, %s202
    %s203 = sphi 0, %s200
    %s204 = sphi 0, %s203
    %s220 = sphi 0, %s204
  $region4: #{pos_extraction_pallas.4} parent=0 // loop_header_branch
    %17 = sbr.rel (%p15) target = $region8
  $region5: #{pos_extraction_pallas.4} parent=0 // loop_body
    %s19 = ssub.s32 %s14, 1
    %s20 = ssub.s32 %s14, 2
    %s27 = sadd.s32 1, %s22
    %p28 = scmp.ge.s32.totalorder %s27, 1
    %s29 = scalar_select %p28, 0, %s27
    %s30 = sadd.s32 1, %s21
    %s31 = scalar_select %p28, %s30, %s21
    %p32 = scmp.ge.s32.totalorder %s31, 2
    %s33 = scalar_select %p32, 0, %s31
    %s34 = ssub.s32 %s21, %s33
    %p35 = scmp.eq.s32.totalorder %s34, 0
    %s37 = sadd.s32 %s36, 1
    %s38 = scalar_select %p35, %s36, %s37
    %p41 = pneg %p35
    %p42 = scmp.eq.s32.totalorder %s14, 1
    %p43 = por %p41, %p42
    %p44 = scmp.ne.s32.totalorder %s36, %s39
    %p45 = scmp.eq.s32.totalorder %s14, 0
    %p46 = por %p44, %p45
    %p47 = scmp.ne.s32.totalorder %s36, %s39
    %p48 = scmp.eq.s32.totalorder %s19, 1
    %p49 = por %p47, %p48
    %p50 = scmp.ne.s32.totalorder %s39, %s40
    %p51 = scmp.eq.s32.totalorder %s19, 0
    %p52 = por %p50, %p51
    %p53 = scmp.ne.s32.totalorder %s39, %s40
    %p54 = scmp.eq.s32.totalorder %s20, 1
    %p55 = por %p53, %p54
    %p57 = scmp.ne.s32.totalorder %s40, %s56
    %p58 = scmp.eq.s32.totalorder %s20, 0
    %p59 = por %p57, %p58
    %s61 = sadd.s32 %s60, 1
    %p64 = scmp.eq.s32.totalorder %s14, 1
    %p65 = scmp.ne.s32.totalorder %s60, %s62
    %p66 = scmp.eq.s32.totalorder %s14, 0
    %p67 = por %p65, %p66
    %p68 = scmp.ne.s32.totalorder %s60, %s62
    %p69 = scmp.eq.s32.totalorder %s19, 1
    %p70 = por %p68, %p69
    %p71 = scmp.ne.s32.totalorder %s62, %s63
    %p72 = scmp.eq.s32.totalorder %s19, 0
    %p73 = por %p71, %p72
    %p74 = scmp.ne.s32.totalorder %s62, %s63
    %p75 = scmp.eq.s32.totalorder %s20, 1
    %p76 = por %p74, %p75
    %p78 = scmp.ne.s32.totalorder %s63, %s77
    %p79 = scmp.eq.s32.totalorder %s20, 0
    %p80 = por %p78, %p79
    %s82 = sadd.s32 %s81, 1
    %p85 = scmp.eq.s32.totalorder %s14, 1
    %p86 = scmp.ne.s32.totalorder %s81, %s83
    %p87 = scmp.eq.s32.totalorder %s14, 0
    %p88 = por %p86, %p87
    %p89 = scmp.ne.s32.totalorder %s81, %s83
    %p90 = scmp.eq.s32.totalorder %s19, 1
    %p91 = por %p89, %p90
    %p92 = scmp.ne.s32.totalorder %s83, %s84
    %p93 = scmp.eq.s32.totalorder %s19, 0
    %p94 = por %p92, %p93
    %p95 = scmp.ne.s32.totalorder %s83, %s84
    %p96 = scmp.eq.s32.totalorder %s20, 1
    %p97 = por %p95, %p96
    %p99 = scmp.ne.s32.totalorder %s84, %s98
    %p100 = scmp.eq.s32.totalorder %s20, 0
    %p101 = por %p99, %p100
    %s103 = sadd.s32 %s102, 1
    %p106 = scmp.eq.s32.totalorder %s14, 1
    %p107 = scmp.ne.s32.totalorder %s102, %s104
    %p108 = scmp.eq.s32.totalorder %s14, 0
    %p109 = por %p107, %p108
    %p110 = scmp.ne.s32.totalorder %s102, %s104
    %p111 = scmp.eq.s32.totalorder %s19, 1
    %p112 = por %p110, %p111
    %p113 = scmp.ne.s32.totalorder %s104, %s105
    %p114 = scmp.eq.s32.totalorder %s19, 0
    %p115 = por %p113, %p114
    %p116 = scmp.ne.s32.totalorder %s104, %s105
    %p117 = scmp.eq.s32.totalorder %s20, 1
    %p118 = por %p116, %p117
    %p120 = scmp.ne.s32.totalorder %s105, %s119
    %p121 = scmp.eq.s32.totalorder %s20, 0
    %p122 = por %p120, %p121
    %s124 = sadd.s32 %s123, 1
    %p127 = scmp.eq.s32.totalorder %s14, 1
    %p128 = scmp.ne.s32.totalorder %s123, %s125
    %p129 = scmp.eq.s32.totalorder %s14, 0
    %p130 = por %p128, %p129
    %p131 = scmp.ne.s32.totalorder %s123, %s125
    %p132 = scmp.eq.s32.totalorder %s19, 1
    %p133 = por %p131, %p132
    %p134 = scmp.ne.s32.totalorder %s125, %s126
    %p135 = scmp.eq.s32.totalorder %s19, 0
    %p136 = por %p134, %p135
    %p137 = scmp.ne.s32.totalorder %s125, %s126
    %p138 = scmp.eq.s32.totalorder %s20, 1
    %p139 = por %p137, %p138
    %p141 = scmp.ne.s32.totalorder %s126, %s140
    %p142 = scmp.eq.s32.totalorder %s20, 0
    %p143 = por %p141, %p142
    %s144 = ssub.s32 %s21, %s33
    %s145 = ssub.s32 %s22, %s29
    %s146 = sor.u32 %s144, %s145
    %p147 = scmp.eq.s32.totalorder %s146, 0
    %s149 = sadd.s32 %s148, 1
    %s150 = scalar_select %p147, %s148, %s149
    %p153 = pneg %p147
    %p154 = scmp.eq.s32.totalorder %s14, 1
    %p155 = por %p153, %p154
    %p156 = scmp.ne.s32.totalorder %s148, %s151
    %p157 = scmp.eq.s32.totalorder %s14, 0
    %p158 = por %p156, %p157
    %p159 = scmp.ne.s32.totalorder %s148, %s151
    %p160 = scmp.eq.s32.totalorder %s19, 1
    %p161 = por %p159, %p160
    %p162 = scmp.ne.s32.totalorder %s151, %s152
    %p163 = scmp.eq.s32.totalorder %s19, 0
    %p164 = por %p162, %p163
    %p165 = scmp.ne.s32.totalorder %s151, %s152
    %p166 = scmp.eq.s32.totalorder %s20, 1
    %p167 = por %p165, %p166
    %p169 = scmp.ne.s32.totalorder %s152, %s168
    %p170 = scmp.eq.s32.totalorder %s20, 0
    %p171 = por %p169, %p170
    %s172 = ssub.s32 %s21, %s33
    %p173 = scmp.eq.s32.totalorder %s172, 0
    %s175 = sadd.s32 %s174, 1
    %s176 = scalar_select %p173, %s174, %s175
    %p179 = pneg %p173
    %p180 = scmp.eq.s32.totalorder %s14, 1
    %p181 = por %p179, %p180
    %p182 = scmp.ne.s32.totalorder %s174, %s177
    %p183 = scmp.eq.s32.totalorder %s14, 0
    %p184 = por %p182, %p183
    %p185 = scmp.ne.s32.totalorder %s174, %s177
    %p186 = scmp.eq.s32.totalorder %s19, 1
    %p187 = por %p185, %p186
    %p188 = scmp.ne.s32.totalorder %s177, %s178
    %p189 = scmp.eq.s32.totalorder %s19, 0
    %p190 = por %p188, %p189
    %p191 = scmp.ne.s32.totalorder %s177, %s178
    %p192 = scmp.eq.s32.totalorder %s20, 1
    %p193 = por %p191, %p192
    %p195 = scmp.ne.s32.totalorder %s178, %s194
    %p196 = scmp.eq.s32.totalorder %s20, 0
    %p197 = por %p195, %p196
    %s198 = ssub.s32 %s21, %s33
    %p199 = scmp.eq.s32.totalorder %s198, 0
    %s201 = sadd.s32 %s200, 1
    %s202 = scalar_select %p199, %s200, %s201
    %p205 = pneg %p199
    %p206 = scmp.eq.s32.totalorder %s14, 1
    %p207 = por %p205, %p206
    %p208 = scmp.ne.s32.totalorder %s200, %s203
    %p209 = scmp.eq.s32.totalorder %s14, 0
    %p210 = por %p208, %p209
    %p211 = scmp.ne.s32.totalorder %s200, %s203
    %p212 = scmp.eq.s32.totalorder %s19, 1
    %p213 = por %p211, %p212
    %p214 = scmp.ne.s32.totalorder %s203, %s204
    %p215 = scmp.eq.s32.totalorder %s19, 0
    %p216 = por %p214, %p215
    %p217 = scmp.ne.s32.totalorder %s203, %s204
    %p218 = scmp.eq.s32.totalorder %s20, 1
    %p219 = por %p217, %p218
    %p221 = scmp.ne.s32.totalorder %s204, %s220
    %p222 = scmp.eq.s32.totalorder %s20, 0
    %p223 = por %p221, %p222
    %p224 = scmp.le.s32.totalorder 1, %s14
    %p225 = scmp.lt.s32.totalorder %s14, 3
    %p226 = pnand %p224, %p225
    %p227 = pneg %p226
    // Predicated region
    $region9: #{pos_extraction_pallas.4} parent=5 // pred_check
      _
    $region10: #{pos_extraction_pallas.4} parent=5 // pred_check_branch
      %229 = sbr.rel (%p226) target = $region12
    $region11: #{pos_extraction_pallas.4} parent=5 // pred_region
      %s230 = ssub.s32 %s14, 1
      // Predicated region
      $region13: #{pos_extraction_pallas.4} parent=11 // pred_check
        %p231 = pneg %p73
      $region14: #{pos_extraction_pallas.4} parent=11 // pred_check_branch
        %233 = sbr.rel (%p231) target = $region16
      $region15: #{pos_extraction_pallas.4} parent=11 // pred_region
        _
      $region16: #{pos_extraction_pallas.4} parent=11 // pred_fallthru
        _
      // Predicated region
      $region17: #{pos_extraction_pallas.4} parent=11 // pred_check
        %p234 = pneg %p94
      $region18: #{pos_extraction_pallas.4} parent=11 // pred_check_branch
        %236 = sbr.rel (%p234) target = $region20
      $region19: #{pos_extraction_pallas.4} parent=11 // pred_region
        _
      $region20: #{pos_extraction_pallas.4} parent=11 // pred_fallthru
        _
      // Predicated region
      $region21: #{pos_extraction_pallas.4} parent=11 // pred_check
        %p237 = pneg %p115
      $region22: #{pos_extraction_pallas.4} parent=11 // pred_check_branch
        %239 = sbr.rel (%p237) target = $region24
      $region23: #{pos_extraction_pallas.4} parent=11 // pred_region
        _
      $region24: #{pos_extraction_pallas.4} parent=11 // pred_fallthru
        _
      // Predicated region
      $region25: #{pos_extraction_pallas.4} parent=11 // pred_check
        %p240 = pneg %p136
      $region26: #{pos_extraction_pallas.4} parent=11 // pred_check_branch
        %242 = sbr.rel (%p240) target = $region28
      $region27: #{pos_extraction_pallas.4} parent=11 // pred_region
        _
      $region28: #{pos_extraction_pallas.4} parent=11 // pred_fallthru
        _
    $region12: #{pos_extraction_pallas.4} parent=5 // pred_fallthru
      _
    %p243 = scmp.lt.s32.totalorder %s14, 2
    // Predicated region
    $region29: #{pos_extraction_pallas.4} parent=5 // pred_check
      %p244 = pneg %p243
    $region30: #{pos_extraction_pallas.4} parent=5 // pred_check_branch
      %246 = sbr.rel (%p244) target = $region32
    $region31: #{pos_extraction_pallas.4} parent=5 // pred_region
      // Predicated region
      $region33: #{pos_extraction_pallas.4} parent=31 // pred_check
        %p247 = pneg %p46
      $region34: #{pos_extraction_pallas.4} parent=31 // pred_check_branch
        %249 = sbr.rel (%p247) target = $region36
      $region35: #{pos_extraction_pallas.4} parent=31 // pred_region
        %p250 = scmp.lt.s32.totalorder %s21, 1
        %s251 = scalar_select %p250, %s21, 1
        %s252 = smul.addr %s251, 16
        %s253 = smul.addr %s252, 8
        %s254 = scalar_lea.vmem %s0, %s253
      $region36: #{pos_extraction_pallas.4} parent=31 // pred_fallthru
        _
    $region32: #{pos_extraction_pallas.4} parent=5 // pred_fallthru
      _
    %p255 = scmp.le.s32.totalorder 1, %s14
    %p256 = scmp.lt.s32.totalorder %s14, 3
    %p257 = pnand %p255, %p256
    %p258 = pneg %p257
    // Predicated region
    $region37: #{pos_extraction_pallas.4} parent=5 // pred_check
      _
    $region38: #{pos_extraction_pallas.4} parent=5 // pred_check_branch
      %260 = sbr.rel (%p257) target = $region40
    $region39: #{pos_extraction_pallas.4} parent=5 // pred_region
      %s261 = ssub.s32 %s14, 1
      %p262 = scmp.lt.s32.totalorder %s23, 1
      %s263 = scalar_select %p262, %s23, 1
      %s264 = smul.addr %s263, 16
      %s265 = smul.addr %s264, 8
      %s266 = scalar_lea.vmem %s0, %s265
      %p267 = pneg %p52
      %p268 = pneg %p49
      %p269 = pneg %p73
      %p270 = pneg %p70
      %p271 = pneg %p94
      %p272 = pneg %p91
      %p273 = pneg %p115
      %p274 = pneg %p112
      %p275 = pneg %p136
      %p276 = pneg %p133
      %p277 = pneg %p164
      %p278 = pneg %p161
      %p279 = scmp.lt.s32.totalorder %s23, 1
      %s280 = scalar_select %p279, %s23, 1
      %p281 = scmp.lt.s32.totalorder %s24, 0
      %s282 = scalar_select %p281, %s24, 0
      %s283 = smul.addr %s280, 16
      %s284 = sadd.s32 %s282, %s283
      %s285 = smul.addr %s284, 8
      %s286 = scalar_lea.vmem %s5, %s285
      %p287 = pneg %p190
      %p288 = pneg %p187
      %p289 = scmp.lt.s32.totalorder %s23, 1
      %s290 = scalar_select %p289, %s23, 1
      %s291 = smul.addr %s290, 16
      %s292 = smul.addr %s291, 8
      %s293 = scalar_lea.vmem %s6, %s292
      %p294 = pneg %p216
      %p295 = pneg %p213
      %p296 = scmp.lt.s32.totalorder %s23, 1
      %s297 = scalar_select %p296, %s23, 1
      %s298 = smul.addr %s297, 16
      %s299 = smul.addr %s298, 8
      %s300 = scalar_lea.vmem %s7, %s299
      %p301 = scmp.lt.s32.totalorder %s23, 1
      %s302 = scalar_select %p301, %s23, 1
      %s303 = smul.addr %s302, 16
      %s304 = smul.addr %s303, 8
      %s305 = scalar_lea.vmem %s0, %s304
      %p306 = scmp.lt.s32.totalorder %s23, 1
      %s307 = scalar_select %p306, %s23, 1
      %p308 = scmp.lt.s32.totalorder %s24, 0
      %s309 = scalar_select %p308, %s24, 0
      %s310 = smul.addr %s307, 16
      %s311 = sadd.s32 %s309, %s310
      %s312 = smul.addr %s311, 8
      %s313 = scalar_lea.vmem %s5, %s312
      %p314 = scmp.lt.s32.totalorder %s23, 1
      %s315 = scalar_select %p314, %s23, 1
      %s316 = smul.addr %s315, 16
      %s317 = smul.addr %s316, 8
      %s318 = scalar_lea.vmem %s6, %s317
      %p319 = scmp.lt.s32.totalorder %s23, 1
      %s320 = scalar_select %p319, %s23, 1
      %s321 = smul.addr %s320, 16
      %s322 = smul.addr %s321, 8
      %s323 = scalar_lea.vmem %s7, %s322
      %p325 = scmp.eq.s32.totalorder %s24, 0
      // Predicated region
      $region41: #{pos_extraction_pallas.4} parent=39 // pred_check
        %p326 = pneg %p325
      $region42: #{pos_extraction_pallas.4} parent=39 // pred_check_branch
        %328 = sbr.rel (%p326) target = $region44
      $region43: #{pos_extraction_pallas.4} parent=39 // pred_region
        %v329 = vld [vmem:[%s1] sm:$0xf]
        %v330 = vld [vmem:[%s1 + $0x4] sm:$0xf]
        %v331 = vld [vmem:[%s1 + $0x8] sm:$0xf]
        %v332 = vld [vmem:[%s1 + $0xc] sm:$0xf]
        %v333 = vld [vmem:[%s1 + $0x10] sm:$0xf]
        %v334 = vld [vmem:[%s1 + $0x14] sm:$0xf]
        %v335 = vld [vmem:[%s1 + $0x18] sm:$0xf]
        %v336 = vld [vmem:[%s1 + $0x1c] sm:$0xf]
        %v337 = vld [vmem:[%s1 + $0x20] sm:$0xf]
        %v338 = vld [vmem:[%s1 + $0x24] sm:$0xf]
        %v339 = vld [vmem:[%s1 + $0x28] sm:$0xf]
        %v340 = vld [vmem:[%s1 + $0x2c] sm:$0xf]
        %v341 = vld [vmem:[%s1 + $0x30] sm:$0xf]
        %v342 = vld [vmem:[%s1 + $0x34] sm:$0xf]
        %v343 = vld [vmem:[%s1 + $0x38] sm:$0xf]
        %v344 = vld [vmem:[%s1 + $0x3c] sm:$0xf]
        %v345 = vld [vmem:[%s1 + $0x40] sm:$0xf]
        %v346 = vld [vmem:[%s1 + $0x44] sm:$0xf]
        %v347 = vld [vmem:[%s1 + $0x48] sm:$0xf]
        %v348 = vld [vmem:[%s1 + $0x4c] sm:$0xf]
        %v349 = vld [vmem:[%s1 + $0x50] sm:$0xf]
        %v350 = vld [vmem:[%s1 + $0x54] sm:$0xf]
        %v351 = vld [vmem:[%s1 + $0x58] sm:$0xf]
        %v352 = vld [vmem:[%s1 + $0x5c] sm:$0xf]
        %v353 = vld [vmem:[%s1 + $0x60] sm:$0xf]
        %v354 = vld [vmem:[%s1 + $0x64] sm:$0xf]
        %v355 = vld [vmem:[%s1 + $0x68] sm:$0xf]
        %v356 = vld [vmem:[%s1 + $0x6c] sm:$0xf]
        %v357 = vld [vmem:[%s1 + $0x70] sm:$0xf]
        %v358 = vld [vmem:[%s1 + $0x74] sm:$0xf]
        %v359 = vld [vmem:[%s1 + $0x78] sm:$0xf]
        %v360 = vld [vmem:[%s1 + $0x7c] sm:$0xf]
        %v361 = vld [vmem:[%s1 + $0x80] sm:$0xf]
        %v362 = vld [vmem:[%s1 + $0x84] sm:$0xf]
        %v363 = vld [vmem:[%s1 + $0x88] sm:$0xf]
        %v364 = vld [vmem:[%s1 + $0x8c] sm:$0xf]
        %v365 = vld [vmem:[%s1 + $0x90] sm:$0xf]
        %v366 = vld [vmem:[%s1 + $0x94] sm:$0xf]
        %v367 = vld [vmem:[%s1 + $0x98] sm:$0xf]
        %v368 = vld [vmem:[%s1 + $0x9c] sm:$0xf]
        %v369 = vld [vmem:[%s1 + $0xa0] sm:$0xf]
        %v370 = vld [vmem:[%s1 + $0xa4] sm:$0xf]
        %v371 = vld [vmem:[%s1 + $0xa8] sm:$0xf]
        %v372 = vld [vmem:[%s1 + $0xac] sm:$0xf]
        %v373 = vld [vmem:[%s1 + $0xb0] sm:$0xf]
        %v374 = vld [vmem:[%s1 + $0xb4] sm:$0xf]
        %v375 = vld [vmem:[%s1 + $0xb8] sm:$0xf]
        %v376 = vld [vmem:[%s1 + $0xbc] sm:$0xf]
        %v377 = vld [vmem:[%s1 + $0xc0] sm:$0xf]
        %v378 = vld [vmem:[%s1 + $0xc4] sm:$0xf]
        %v379 = vld [vmem:[%s1 + $0xc8] sm:$0xf]
        %v380 = vld [vmem:[%s1 + $0xcc] sm:$0xf]
        %v381 = vld [vmem:[%s1 + $0xd0] sm:$0xf]
        %v382 = vld [vmem:[%s1 + $0xd4] sm:$0xf]
        %v383 = vld [vmem:[%s1 + $0xd8] sm:$0xf]
        %v384 = vld [vmem:[%s1 + $0xdc] sm:$0xf]
        %v385 = vld [vmem:[%s1 + $0xe0] sm:$0xf]
        %v386 = vld [vmem:[%s1 + $0xe4] sm:$0xf]
        %v387 = vld [vmem:[%s1 + $0xe8] sm:$0xf]
        %v388 = vld [vmem:[%s1 + $0xec] sm:$0xf]
        %v389 = vld [vmem:[%s1 + $0xf0] sm:$0xf]
        %v390 = vld [vmem:[%s1 + $0xf4] sm:$0xf]
        %v391 = vld [vmem:[%s1 + $0xf8] sm:$0xf]
        %v392 = vld [vmem:[%s1 + $0xfc] sm:$0xf]
        %v393 = vld [vmem:[%s1 + $0x100] sm:$0xf]
        %v394 = vld [vmem:[%s1 + $0x104] sm:$0xf]
        %v395 = vld [vmem:[%s1 + $0x108] sm:$0xf]
        %v396 = vld [vmem:[%s1 + $0x10c] sm:$0xf]
        %v397 = vld [vmem:[%s1 + $0x110] sm:$0xf]
        %v398 = vld [vmem:[%s1 + $0x114] sm:$0xf]
        %v399 = vld [vmem:[%s1 + $0x118] sm:$0xf]
        %v400 = vld [vmem:[%s1 + $0x11c] sm:$0xf]
        %v401 = vld [vmem:[%s1 + $0x120] sm:$0xf]
        %v402 = vld [vmem:[%s1 + $0x124] sm:$0xf]
        %v403 = vld [vmem:[%s1 + $0x128] sm:$0xf]
        %v404 = vld [vmem:[%s1 + $0x12c] sm:$0xf]
        %v405 = vld [vmem:[%s1 + $0x130] sm:$0xf]
        %v406 = vld [vmem:[%s1 + $0x134] sm:$0xf]
        %v407 = vld [vmem:[%s1 + $0x138] sm:$0xf]
        %v408 = vld [vmem:[%s1 + $0x13c] sm:$0xf]
        %v409 = vld [vmem:[%s1 + $0x140] sm:$0xf]
        %v410 = vld [vmem:[%s1 + $0x144] sm:$0xf]
        %v411 = vld [vmem:[%s1 + $0x148] sm:$0xf]
        %v412 = vld [vmem:[%s1 + $0x14c] sm:$0xf]
        %v413 = vld [vmem:[%s1 + $0x150] sm:$0xf]
        %v414 = vld [vmem:[%s1 + $0x154] sm:$0xf]
        %v415 = vld [vmem:[%s1 + $0x158] sm:$0xf]
        %v416 = vld [vmem:[%s1 + $0x15c] sm:$0xf]
        %v417 = vld [vmem:[%s1 + $0x160] sm:$0xf]
        %v418 = vld [vmem:[%s1 + $0x164] sm:$0xf]
        %v419 = vld [vmem:[%s1 + $0x168] sm:$0xf]
        %v420 = vld [vmem:[%s1 + $0x16c] sm:$0xf]
        %v421 = vld [vmem:[%s1 + $0x170] sm:$0xf]
        %v422 = vld [vmem:[%s1 + $0x174] sm:$0xf]
        %v423 = vld [vmem:[%s1 + $0x178] sm:$0xf]
        %v424 = vld [vmem:[%s1 + $0x17c] sm:$0xf]
        %v425 = vld [vmem:[%s305] sm:$0xff]
        %v426 = vld [vmem:[%s305 + $0x8] sm:$0xff]
        %v427 = vld [vmem:[%s305 + $0x10] sm:$0xff]
        %v428 = vld [vmem:[%s305 + $0x18] sm:$0xff]
        %v429 = vld [vmem:[%s305 + $0x20] sm:$0xff]
        %v430 = vld [vmem:[%s305 + $0x28] sm:$0xff]
        %v431 = vld [vmem:[%s305 + $0x30] sm:$0xff]
        %v432 = vld [vmem:[%s305 + $0x38] sm:$0xff]
        %v433 = vld [vmem:[%s305 + $0x40] sm:$0xff]
        %v434 = vld [vmem:[%s305 + $0x48] sm:$0xff]
        %v435 = vld [vmem:[%s305 + $0x50] sm:$0xff]
        %v436 = vld [vmem:[%s305 + $0x58] sm:$0xff]
        %v437 = vld [vmem:[%s305 + $0x60] sm:$0xff]
        %v438 = vld [vmem:[%s305 + $0x68] sm:$0xff]
        %v439 = vld [vmem:[%s305 + $0x70] sm:$0xff]
        %v440 = vld [vmem:[%s305 + $0x78] sm:$0xff]
        %v441 = vpack.c.bf16 %v426, %v425
        %v442 = vpack.c.bf16 %v428, %v427
        %v443 = vpack.c.bf16 %v430, %v429
        %v444 = vpack.c.bf16 %v432, %v431
        %v445 = vpack.c.bf16 %v434, %v433
        %v446 = vpack.c.bf16 %v436, %v435
        %v447 = vpack.c.bf16 %v438, %v437
        %v448 = vpack.c.bf16 %v440, %v439
        %v449 = vld [vmem:[%s2] sm:$0xff]
        %v450 = vld [vmem:[%s2 + $0x8] sm:$0xff]
        %v451 = vld [vmem:[%s2 + $0x10] sm:$0xff]
        %v452 = vld [vmem:[%s2 + $0x18] sm:$0xff]
        %v453 = vld [vmem:[%s2 + $0x20] sm:$0xff]
        %v454 = vld [vmem:[%s2 + $0x28] sm:$0xff]
        %v455 = vld [vmem:[%s2 + $0x30] sm:$0xff]
        %v456 = vld [vmem:[%s2 + $0x38] sm:$0xff]
        %v457 = vld [vmem:[%s2 + $0x40] sm:$0xff]
        %v458 = vld [vmem:[%s2 + $0x48] sm:$0xff]
        %v459 = vld [vmem:[%s2 + $0x50] sm:$0xff]
        %v460 = vld [vmem:[%s2 + $0x58] sm:$0xff]
        %v461 = vld [vmem:[%s2 + $0x60] sm:$0xff]
        %v462 = vld [vmem:[%s2 + $0x68] sm:$0xff]
        %v463 = vld [vmem:[%s2 + $0x70] sm:$0xff]
        %v464 = vld [vmem:[%s2 + $0x78] sm:$0xff]
        %v465 = vld [vmem:[%s2 + $0x80] sm:$0xff]
        %v466 = vld [vmem:[%s2 + $0x88] sm:$0xff]
        %v467 = vld [vmem:[%s2 + $0x90] sm:$0xff]
        %v468 = vld [vmem:[%s2 + $0x98] sm:$0xff]
        %v469 = vld [vmem:[%s2 + $0xa0] sm:$0xff]
        %v470 = vld [vmem:[%s2 + $0xa8] sm:$0xff]
        %v471 = vld [vmem:[%s2 + $0xb0] sm:$0xff]
        %v472 = vld [vmem:[%s2 + $0xb8] sm:$0xff]
        %v473 = vld [vmem:[%s2 + $0xc0] sm:$0xff]
        %v474 = vld [vmem:[%s2 + $0xc8] sm:$0xff]
        %v475 = vld [vmem:[%s2 + $0xd0] sm:$0xff]
        %v476 = vld [vmem:[%s2 + $0xd8] sm:$0xff]
        %v477 = vld [vmem:[%s2 + $0xe0] sm:$0xff]
        %v478 = vld [vmem:[%s2 + $0xe8] sm:$0xff]
        %v479 = vld [vmem:[%s2 + $0xf0] sm:$0xff]
        %v480 = vld [vmem:[%s2 + $0xf8] sm:$0xff]
        %v481 = vld [vmem:[%s2 + $0x100] sm:$0xff]
        %v482 = vld [vmem:[%s2 + $0x108] sm:$0xff]
        %v483 = vld [vmem:[%s2 + $0x110] sm:$0xff]
        %v484 = vld [vmem:[%s2 + $0x118] sm:$0xff]
        %v485 = vld [vmem:[%s2 + $0x120] sm:$0xff]
        %v486 = vld [vmem:[%s2 + $0x128] sm:$0xff]
        %v487 = vld [vmem:[%s2 + $0x130] sm:$0xff]
        %v488 = vld [vmem:[%s2 + $0x138] sm:$0xff]
        %v489 = vld [vmem:[%s2 + $0x140] sm:$0xff]
        %v490 = vld [vmem:[%s2 + $0x148] sm:$0xff]
        %v491 = vld [vmem:[%s2 + $0x150] sm:$0xff]
        %v492 = vld [vmem:[%s2 + $0x158] sm:$0xff]
        %v493 = vld [vmem:[%s2 + $0x160] sm:$0xff]
        %v494 = vld [vmem:[%s2 + $0x168] sm:$0xff]
        %v495 = vld [vmem:[%s2 + $0x170] sm:$0xff]
        %v496 = vld [vmem:[%s2 + $0x178] sm:$0xff]
        %v497 = vld [vmem:[%s2 + $0x180] sm:$0xff]
        %v498 = vld [vmem:[%s2 + $0x188] sm:$0xff]
        %v499 = vld [vmem:[%s2 + $0x190] sm:$0xff]
        %v500 = vld [vmem:[%s2 + $0x198] sm:$0xff]
        %v501 = vld [vmem:[%s2 + $0x1a0] sm:$0xff]
        %v502 = vld [vmem:[%s2 + $0x1a8] sm:$0xff]
        %v503 = vld [vmem:[%s2 + $0x1b0] sm:$0xff]
        %v504 = vld [vmem:[%s2 + $0x1b8] sm:$0xff]
        %v505 = vld [vmem:[%s2 + $0x1c0] sm:$0xff]
        %v506 = vld [vmem:[%s2 + $0x1c8] sm:$0xff]
        %v507 = vld [vmem:[%s2 + $0x1d0] sm:$0xff]
        %v508 = vld [vmem:[%s2 + $0x1d8] sm:$0xff]
        %v509 = vld [vmem:[%s2 + $0x1e0] sm:$0xff]
        %v510 = vld [vmem:[%s2 + $0x1e8] sm:$0xff]
        %v511 = vld [vmem:[%s2 + $0x1f0] sm:$0xff]
        %v512 = vld [vmem:[%s2 + $0x1f8] sm:$0xff]
        %v513 = vld [vmem:[%s2 + $0x200] sm:$0xff]
        %v514 = vld [vmem:[%s2 + $0x208] sm:$0xff]
        %v515 = vld [vmem:[%s2 + $0x210] sm:$0xff]
        %v516 = vld [vmem:[%s2 + $0x218] sm:$0xff]
        %v517 = vld [vmem:[%s2 + $0x220] sm:$0xff]
        %v518 = vld [vmem:[%s2 + $0x228] sm:$0xff]
        %v519 = vld [vmem:[%s2 + $0x230] sm:$0xff]
        %v520 = vld [vmem:[%s2 + $0x238] sm:$0xff]
        %v521 = vld [vmem:[%s2 + $0x240] sm:$0xff]
        %v522 = vld [vmem:[%s2 + $0x248] sm:$0xff]
        %v523 = vld [vmem:[%s2 + $0x250] sm:$0xff]
        %v524 = vld [vmem:[%s2 + $0x258] sm:$0xff]
        %v525 = vld [vmem:[%s2 + $0x260] sm:$0xff]
        %v526 = vld [vmem:[%s2 + $0x268] sm:$0xff]
        %v527 = vld [vmem:[%s2 + $0x270] sm:$0xff]
        %v528 = vld [vmem:[%s2 + $0x278] sm:$0xff]
        %v529 = vld [vmem:[%s2 + $0x280] sm:$0xff]
        %v530 = vld [vmem:[%s2 + $0x288] sm:$0xff]
        %v531 = vld [vmem:[%s2 + $0x290] sm:$0xff]
        %v532 = vld [vmem:[%s2 + $0x298] sm:$0xff]
        %v533 = vld [vmem:[%s2 + $0x2a0] sm:$0xff]
        %v534 = vld [vmem:[%s2 + $0x2a8] sm:$0xff]
        %v535 = vld [vmem:[%s2 + $0x2b0] sm:$0xff]
        %v536 = vld [vmem:[%s2 + $0x2b8] sm:$0xff]
        %v537 = vld [vmem:[%s2 + $0x2c0] sm:$0xff]
        %v538 = vld [vmem:[%s2 + $0x2c8] sm:$0xff]
        %v539 = vld [vmem:[%s2 + $0x2d0] sm:$0xff]
        %v540 = vld [vmem:[%s2 + $0x2d8] sm:$0xff]
        %v541 = vld [vmem:[%s2 + $0x2e0] sm:$0xff]
        %v542 = vld [vmem:[%s2 + $0x2e8] sm:$0xff]
        %v543 = vld [vmem:[%s2 + $0x2f0] sm:$0xff]
        %v544 = vld [vmem:[%s2 + $0x2f8] sm:$0xff]
        %546 = vset.pattern.permute.xlu0 0
        %547 = vperm.xlu0 %546, %v449
        %v548 = vpop.permute.xlu0 %547
        %551 = vset.pattern.permute.xlu0 0
        %552 = vperm.xlu0 %551, %v450
        %v553 = vpop.permute.xlu0 %552
        %556 = vset.pattern.permute.xlu0 0
        %557 = vperm.xlu0 %556, %v451
        %v558 = vpop.permute.xlu0 %557
        %561 = vset.pattern.permute.xlu0 0
        %562 = vperm.xlu0 %561, %v452
        %v563 = vpop.permute.xlu0 %562
        %566 = vset.pattern.permute.xlu0 0
        %567 = vperm.xlu0 %566, %v453
        %v568 = vpop.permute.xlu0 %567
        %571 = vset.pattern.permute.xlu0 0
        %572 = vperm.xlu0 %571, %v454
        %v573 = vpop.permute.xlu0 %572
        %576 = vset.pattern.permute.xlu0 0
        %577 = vperm.xlu0 %576, %v455
        %v578 = vpop.permute.xlu0 %577
        %581 = vset.pattern.permute.xlu0 0
        %582 = vperm.xlu0 %581, %v456
        %v583 = vpop.permute.xlu0 %582
        %586 = vset.pattern.permute.xlu0 0
        %587 = vperm.xlu0 %586, %v457
        %v588 = vpop.permute.xlu0 %587
        %591 = vset.pattern.permute.xlu0 0
        %592 = vperm.xlu0 %591, %v458
        %v593 = vpop.permute.xlu0 %592
        %596 = vset.pattern.permute.xlu0 0
        %597 = vperm.xlu0 %596, %v459
        %v598 = vpop.permute.xlu0 %597
        %601 = vset.pattern.permute.xlu0 0
        %602 = vperm.xlu0 %601, %v460
        %v603 = vpop.permute.xlu0 %602
        %606 = vset.pattern.permute.xlu0 0
        %607 = vperm.xlu0 %606, %v461
        %v608 = vpop.permute.xlu0 %607
        %611 = vset.pattern.permute.xlu0 0
        %612 = vperm.xlu0 %611, %v462
        %v613 = vpop.permute.xlu0 %612
        %616 = vset.pattern.permute.xlu0 0
        %617 = vperm.xlu0 %616, %v463
        %v618 = vpop.permute.xlu0 %617
        %621 = vset.pattern.permute.xlu0 0
        %622 = vperm.xlu0 %621, %v464
        %v623 = vpop.permute.xlu0 %622
        %626 = vset.pattern.permute.xlu0 0
        %627 = vperm.xlu0 %626, %v465
        %v628 = vpop.permute.xlu0 %627
        %631 = vset.pattern.permute.xlu0 0
        %632 = vperm.xlu0 %631, %v466
        %v633 = vpop.permute.xlu0 %632
        %636 = vset.pattern.permute.xlu0 0
        %637 = vperm.xlu0 %636, %v467
        %v638 = vpop.permute.xlu0 %637
        %641 = vset.pattern.permute.xlu0 0
        %642 = vperm.xlu0 %641, %v468
        %v643 = vpop.permute.xlu0 %642
        %646 = vset.pattern.permute.xlu0 0
        %647 = vperm.xlu0 %646, %v469
        %v648 = vpop.permute.xlu0 %647
        %651 = vset.pattern.permute.xlu0 0
        %652 = vperm.xlu0 %651, %v470
        %v653 = vpop.permute.xlu0 %652
        %656 = vset.pattern.permute.xlu0 0
        %657 = vperm.xlu0 %656, %v471
        %v658 = vpop.permute.xlu0 %657
        %661 = vset.pattern.permute.xlu0 0
        %662 = vperm.xlu0 %661, %v472
        %v663 = vpop.permute.xlu0 %662
        %666 = vset.pattern.permute.xlu0 0
        %667 = vperm.xlu0 %666, %v473
        %v668 = vpop.permute.xlu0 %667
        %671 = vset.pattern.permute.xlu0 0
        %672 = vperm.xlu0 %671, %v474
        %v673 = vpop.permute.xlu0 %672
        %676 = vset.pattern.permute.xlu0 0
        %677 = vperm.xlu0 %676, %v475
        %v678 = vpop.permute.xlu0 %677
        %681 = vset.pattern.permute.xlu0 0
        %682 = vperm.xlu0 %681, %v476
        %v683 = vpop.permute.xlu0 %682
        %686 = vset.pattern.permute.xlu0 0
        %687 = vperm.xlu0 %686, %v477
        %v688 = vpop.permute.xlu0 %687
        %691 = vset.pattern.permute.xlu0 0
        %692 = vperm.xlu0 %691, %v478
        %v693 = vpop.permute.xlu0 %692
        %696 = vset.pattern.permute.xlu0 0
        %697 = vperm.xlu0 %696, %v479
        %v698 = vpop.permute.xlu0 %697
        %701 = vset.pattern.permute.xlu0 0
        %702 = vperm.xlu0 %701, %v480
        %v703 = vpop.permute.xlu0 %702
        %706 = vset.pattern.permute.xlu0 0
        %707 = vperm.xlu0 %706, %v481
        %v708 = vpop.permute.xlu0 %707
        %711 = vset.pattern.permute.xlu0 0
        %712 = vperm.xlu0 %711, %v482
        %v713 = vpop.permute.xlu0 %712
        %716 = vset.pattern.permute.xlu0 0
        %717 = vperm.xlu0 %716, %v483
        %v718 = vpop.permute.xlu0 %717
        %721 = vset.pattern.permute.xlu0 0
        %722 = vperm.xlu0 %721, %v484
        %v723 = vpop.permute.xlu0 %722
        %726 = vset.pattern.permute.xlu0 0
        %727 = vperm.xlu0 %726, %v485
        %v728 = vpop.permute.xlu0 %727
        %731 = vset.pattern.permute.xlu0 0
        %732 = vperm.xlu0 %731, %v486
        %v733 = vpop.permute.xlu0 %732
        %736 = vset.pattern.permute.xlu0 0
        %737 = vperm.xlu0 %736, %v487
        %v738 = vpop.permute.xlu0 %737
        %741 = vset.pattern.permute.xlu0 0
        %742 = vperm.xlu0 %741, %v488
        %v743 = vpop.permute.xlu0 %742
        %746 = vset.pattern.permute.xlu0 0
        %747 = vperm.xlu0 %746, %v489
        %v748 = vpop.permute.xlu0 %747
        %751 = vset.pattern.permute.xlu0 0
        %752 = vperm.xlu0 %751, %v490
        %v753 = vpop.permute.xlu0 %752
        %756 = vset.pattern.permute.xlu0 0
        %757 = vperm.xlu0 %756, %v491
        %v758 = vpop.permute.xlu0 %757
        %761 = vset.pattern.permute.xlu0 0
        %762 = vperm.xlu0 %761, %v492
        %v763 = vpop.permute.xlu0 %762
        %766 = vset.pattern.permute.xlu0 0
        %767 = vperm.xlu0 %766, %v493
        %v768 = vpop.permute.xlu0 %767
        %771 = vset.pattern.permute.xlu0 0
        %772 = vperm.xlu0 %771, %v494
        %v773 = vpop.permute.xlu0 %772
        %776 = vset.pattern.permute.xlu0 0
        %777 = vperm.xlu0 %776, %v495
        %v778 = vpop.permute.xlu0 %777
        %781 = vset.pattern.permute.xlu0 0
        %782 = vperm.xlu0 %781, %v496
        %v783 = vpop.permute.xlu0 %782
        %786 = vset.pattern.permute.xlu0 0
        %787 = vperm.xlu0 %786, %v497
        %v788 = vpop.permute.xlu0 %787
        %791 = vset.pattern.permute.xlu0 0
        %792 = vperm.xlu0 %791, %v498
        %v793 = vpop.permute.xlu0 %792
        %796 = vset.pattern.permute.xlu0 0
        %797 = vperm.xlu0 %796, %v499
        %v798 = vpop.permute.xlu0 %797
        %801 = vset.pattern.permute.xlu0 0
        %802 = vperm.xlu0 %801, %v500
        %v803 = vpop.permute.xlu0 %802
        %806 = vset.pattern.permute.xlu0 0
        %807 = vperm.xlu0 %806, %v501
        %v808 = vpop.permute.xlu0 %807
        %811 = vset.pattern.permute.xlu0 0
        %812 = vperm.xlu0 %811, %v502
        %v813 = vpop.permute.xlu0 %812
        %816 = vset.pattern.permute.xlu0 0
        %817 = vperm.xlu0 %816, %v503
        %v818 = vpop.permute.xlu0 %817
        %821 = vset.pattern.permute.xlu0 0
        %822 = vperm.xlu0 %821, %v504
        %v823 = vpop.permute.xlu0 %822
        %826 = vset.pattern.permute.xlu0 0
        %827 = vperm.xlu0 %826, %v505
        %v828 = vpop.permute.xlu0 %827
        %831 = vset.pattern.permute.xlu0 0
        %832 = vperm.xlu0 %831, %v506
        %v833 = vpop.permute.xlu0 %832
        %836 = vset.pattern.permute.xlu0 0
        %837 = vperm.xlu0 %836, %v507
        %v838 = vpop.permute.xlu0 %837
        %841 = vset.pattern.permute.xlu0 0
        %842 = vperm.xlu0 %841, %v508
        %v843 = vpop.permute.xlu0 %842
        %846 = vset.pattern.permute.xlu0 0
        %847 = vperm.xlu0 %846, %v509
        %v848 = vpop.permute.xlu0 %847
        %851 = vset.pattern.permute.xlu0 0
        %852 = vperm.xlu0 %851, %v510
        %v853 = vpop.permute.xlu0 %852
        %856 = vset.pattern.permute.xlu0 0
        %857 = vperm.xlu0 %856, %v511
        %v858 = vpop.permute.xlu0 %857
        %861 = vset.pattern.permute.xlu0 0
        %862 = vperm.xlu0 %861, %v512
        %v863 = vpop.permute.xlu0 %862
        %866 = vset.pattern.permute.xlu0 0
        %867 = vperm.xlu0 %866, %v513
        %v868 = vpop.permute.xlu0 %867
        %871 = vset.pattern.permute.xlu0 0
        %872 = vperm.xlu0 %871, %v514
        %v873 = vpop.permute.xlu0 %872
        %876 = vset.pattern.permute.xlu0 0
        %877 = vperm.xlu0 %876, %v515
        %v878 = vpop.permute.xlu0 %877
        %881 = vset.pattern.permute.xlu0 0
        %882 = vperm.xlu0 %881, %v516
        %v883 = vpop.permute.xlu0 %882
        %886 = vset.pattern.permute.xlu0 0
        %887 = vperm.xlu0 %886, %v517
        %v888 = vpop.permute.xlu0 %887
        %891 = vset.pattern.permute.xlu0 0
        %892 = vperm.xlu0 %891, %v518
        %v893 = vpop.permute.xlu0 %892
        %896 = vset.pattern.permute.xlu0 0
        %897 = vperm.xlu0 %896, %v519
        %v898 = vpop.permute.xlu0 %897
        %901 = vset.pattern.permute.xlu0 0
        %902 = vperm.xlu0 %901, %v520
        %v903 = vpop.permute.xlu0 %902
        %906 = vset.pattern.permute.xlu0 0
        %907 = vperm.xlu0 %906, %v521
        %v908 = vpop.permute.xlu0 %907
        %911 = vset.pattern.permute.xlu0 0
        %912 = vperm.xlu0 %911, %v522
        %v913 = vpop.permute.xlu0 %912
        %916 = vset.pattern.permute.xlu0 0
        %917 = vperm.xlu0 %916, %v523
        %v918 = vpop.permute.xlu0 %917
        %921 = vset.pattern.permute.xlu0 0
        %922 = vperm.xlu0 %921, %v524
        %v923 = vpop.permute.xlu0 %922
        %926 = vset.pattern.permute.xlu0 0
        %927 = vperm.xlu0 %926, %v525
        %v928 = vpop.permute.xlu0 %927
        %931 = vset.pattern.permute.xlu0 0
        %932 = vperm.xlu0 %931, %v526
        %v933 = vpop.permute.xlu0 %932
        %936 = vset.pattern.permute.xlu0 0
        %937 = vperm.xlu0 %936, %v527
        %v938 = vpop.permute.xlu0 %937
        %941 = vset.pattern.permute.xlu0 0
        %942 = vperm.xlu0 %941, %v528
        %v943 = vpop.permute.xlu0 %942
        %946 = vset.pattern.permute.xlu0 0
        %947 = vperm.xlu0 %946, %v529
        %v948 = vpop.permute.xlu0 %947
        %951 = vset.pattern.permute.xlu0 0
        %952 = vperm.xlu0 %951, %v530
        %v953 = vpop.permute.xlu0 %952
        %956 = vset.pattern.permute.xlu0 0
        %957 = vperm.xlu0 %956, %v531
        %v958 = vpop.permute.xlu0 %957
        %961 = vset.pattern.permute.xlu0 0
        %962 = vperm.xlu0 %961, %v532
        %v963 = vpop.permute.xlu0 %962
        %966 = vset.pattern.permute.xlu0 0
        %967 = vperm.xlu0 %966, %v533
        %v968 = vpop.permute.xlu0 %967
        %971 = vset.pattern.permute.xlu0 0
        %972 = vperm.xlu0 %971, %v534
        %v973 = vpop.permute.xlu0 %972
        %976 = vset.pattern.permute.xlu0 0
        %977 = vperm.xlu0 %976, %v535
        %v978 = vpop.permute.xlu0 %977
        %981 = vset.pattern.permute.xlu0 0
        %982 = vperm.xlu0 %981, %v536
        %v983 = vpop.permute.xlu0 %982
        %986 = vset.pattern.permute.xlu0 0
        %987 = vperm.xlu0 %986, %v537
        %v988 = vpop.permute.xlu0 %987
        %991 = vset.pattern.permute.xlu0 0
        %992 = vperm.xlu0 %991, %v538
        %v993 = vpop.permute.xlu0 %992
        %996 = vset.pattern.permute.xlu0 0
        %997 = vperm.xlu0 %996, %v539
        %v998 = vpop.permute.xlu0 %997
        %1001 = vset.pattern.permute.xlu0 0
        %1002 = vperm.xlu0 %1001, %v540
        %v1003 = vpop.permute.xlu0 %1002
        %1006 = vset.pattern.permute.xlu0 0
        %1007 = vperm.xlu0 %1006, %v541
        %v1008 = vpop.permute.xlu0 %1007
        %1011 = vset.pattern.permute.xlu0 0
        %1012 = vperm.xlu0 %1011, %v542
        %v1013 = vpop.permute.xlu0 %1012
        %1016 = vset.pattern.permute.xlu0 0
        %1017 = vperm.xlu0 %1016, %v543
        %v1018 = vpop.permute.xlu0 %1017
        %1021 = vset.pattern.permute.xlu0 0
        %1022 = vperm.xlu0 %1021, %v544
        %v1023 = vpop.permute.xlu0 %1022
        %v1121 = vunpack.c.l.b16 %v329
        %v1122 = vunpack.c.l.b16 %v330
        %v1123 = vunpack.c.l.b16 %v331
        %v1124 = vunpack.c.l.b16 %v332
        %v1125 = vunpack.c.l.b16 %v333
        %v1126 = vunpack.c.l.b16 %v334
        %v1127 = vunpack.c.l.b16 %v335
        %v1128 = vunpack.c.l.b16 %v336
        %v1129 = vunpack.c.l.b16 %v337
        %v1130 = vunpack.c.l.b16 %v338
        %v1131 = vunpack.c.l.b16 %v339
        %v1132 = vunpack.c.l.b16 %v340
        %v1133 = vunpack.c.l.b16 %v341
        %v1134 = vunpack.c.l.b16 %v342
        %v1135 = vunpack.c.l.b16 %v343
        %v1136 = vunpack.c.l.b16 %v344
        %v1137 = vunpack.c.l.b16 %v345
        %v1138 = vunpack.c.l.b16 %v346
        %v1139 = vunpack.c.l.b16 %v347
        %v1140 = vunpack.c.l.b16 %v348
        %v1141 = vunpack.c.l.b16 %v349
        %v1142 = vunpack.c.l.b16 %v350
        %v1143 = vunpack.c.l.b16 %v351
        %v1144 = vunpack.c.l.b16 %v352
        %v1145 = vunpack.c.l.b16 %v353
        %v1146 = vunpack.c.l.b16 %v354
        %v1147 = vunpack.c.l.b16 %v355
        %v1148 = vunpack.c.l.b16 %v356
        %v1149 = vunpack.c.l.b16 %v357
        %v1150 = vunpack.c.l.b16 %v358
        %v1151 = vunpack.c.l.b16 %v359
        %v1152 = vunpack.c.l.b16 %v360
        %v1153 = vunpack.c.l.b16 %v361
        %v1154 = vunpack.c.l.b16 %v362
        %v1155 = vunpack.c.l.b16 %v363
        %v1156 = vunpack.c.l.b16 %v364
        %v1157 = vunpack.c.l.b16 %v365
        %v1158 = vunpack.c.l.b16 %v366
        %v1159 = vunpack.c.l.b16 %v367
        %v1160 = vunpack.c.l.b16 %v368
        %v1161 = vunpack.c.l.b16 %v369
        %v1162 = vunpack.c.l.b16 %v370
        %v1163 = vunpack.c.l.b16 %v371
        %v1164 = vunpack.c.l.b16 %v372
        %v1165 = vunpack.c.l.b16 %v373
        %v1166 = vunpack.c.l.b16 %v374
        %v1167 = vunpack.c.l.b16 %v375
        %v1168 = vunpack.c.l.b16 %v376
        %v1169 = vunpack.c.l.b16 %v377
        %v1170 = vunpack.c.l.b16 %v378
        %v1171 = vunpack.c.l.b16 %v379
        %v1172 = vunpack.c.l.b16 %v380
        %v1173 = vunpack.c.l.b16 %v381
        %v1174 = vunpack.c.l.b16 %v382
        %v1175 = vunpack.c.l.b16 %v383
        %v1176 = vunpack.c.l.b16 %v384
        %v1177 = vunpack.c.l.b16 %v385
        %v1178 = vunpack.c.l.b16 %v386
        %v1179 = vunpack.c.l.b16 %v387
        %v1180 = vunpack.c.l.b16 %v388
        %v1181 = vunpack.c.l.b16 %v389
        %v1182 = vunpack.c.l.b16 %v390
        %v1183 = vunpack.c.l.b16 %v391
        %v1184 = vunpack.c.l.b16 %v392
        %v1185 = vunpack.c.l.b16 %v393
        %v1186 = vunpack.c.l.b16 %v394
        %v1187 = vunpack.c.l.b16 %v395
        %v1188 = vunpack.c.l.b16 %v396
        %v1189 = vunpack.c.l.b16 %v397
        %v1190 = vunpack.c.l.b16 %v398
        %v1191 = vunpack.c.l.b16 %v399
        %v1192 = vunpack.c.l.b16 %v400
        %v1193 = vunpack.c.l.b16 %v401
        %v1194 = vunpack.c.l.b16 %v402
        %v1195 = vunpack.c.l.b16 %v403
        %v1196 = vunpack.c.l.b16 %v404
        %v1197 = vunpack.c.l.b16 %v405
        %v1198 = vunpack.c.l.b16 %v406
        %v1199 = vunpack.c.l.b16 %v407
        %v1200 = vunpack.c.l.b16 %v408
        %v1201 = vunpack.c.l.b16 %v409
        %v1202 = vunpack.c.l.b16 %v410
        %v1203 = vunpack.c.l.b16 %v411
        %v1204 = vunpack.c.l.b16 %v412
        %v1205 = vunpack.c.l.b16 %v413
        %v1206 = vunpack.c.l.b16 %v414
        %v1207 = vunpack.c.l.b16 %v415
        %v1208 = vunpack.c.l.b16 %v416
        %v1209 = vunpack.c.l.b16 %v417
        %v1210 = vunpack.c.l.b16 %v418
        %v1211 = vunpack.c.l.b16 %v419
        %v1212 = vunpack.c.l.b16 %v420
        %v1213 = vunpack.c.l.b16 %v421
        %v1214 = vunpack.c.l.b16 %v422
        %v1215 = vunpack.c.l.b16 %v423
        %v1216 = vunpack.c.l.b16 %v424
        %v1217 = vpack.c.b16 %v1122, %v1121
        %v1218 = vpack.c.b16 %v1124, %v1123
        %v1219 = vpack.c.b16 %v1126, %v1125
        %v1220 = vpack.c.b16 %v1128, %v1127
        %v1221 = vpack.c.b16 %v1130, %v1129
        %v1222 = vpack.c.b16 %v1132, %v1131
        %v1223 = vpack.c.b16 %v1134, %v1133
        %v1224 = vpack.c.b16 %v1136, %v1135
        %v1225 = vpack.c.b16 %v1138, %v1137
        %v1226 = vpack.c.b16 %v1140, %v1139
        %v1227 = vpack.c.b16 %v1142, %v1141
        %v1228 = vpack.c.b16 %v1144, %v1143
        %v1229 = vpack.c.b16 %v1146, %v1145
        %v1230 = vpack.c.b16 %v1148, %v1147
        %v1231 = vpack.c.b16 %v1150, %v1149
        %v1232 = vpack.c.b16 %v1152, %v1151
        %v1233 = vpack.c.b16 %v1154, %v1153
        %v1234 = vpack.c.b16 %v1156, %v1155
        %v1235 = vpack.c.b16 %v1158, %v1157
        %v1236 = vpack.c.b16 %v1160, %v1159
        %v1237 = vpack.c.b16 %v1162, %v1161
        %v1238 = vpack.c.b16 %v1164, %v1163
        %v1239 = vpack.c.b16 %v1166, %v1165
        %v1240 = vpack.c.b16 %v1168, %v1167
        %v1241 = vpack.c.b16 %v1170, %v1169
        %v1242 = vpack.c.b16 %v1172, %v1171
        %v1243 = vpack.c.b16 %v1174, %v1173
        %v1244 = vpack.c.b16 %v1176, %v1175
        %v1245 = vpack.c.b16 %v1178, %v1177
        %v1246 = vpack.c.b16 %v1180, %v1179
        %v1247 = vpack.c.b16 %v1182, %v1181
        %v1248 = vpack.c.b16 %v1184, %v1183
        %v1249 = vpack.c.b16 %v1186, %v1185
        %v1250 = vpack.c.b16 %v1188, %v1187
        %v1251 = vpack.c.b16 %v1190, %v1189
        %v1252 = vpack.c.b16 %v1192, %v1191
        %v1253 = vpack.c.b16 %v1194, %v1193
        %v1254 = vpack.c.b16 %v1196, %v1195
        %v1255 = vpack.c.b16 %v1198, %v1197
        %v1256 = vpack.c.b16 %v1200, %v1199
        %v1257 = vpack.c.b16 %v1202, %v1201
        %v1258 = vpack.c.b16 %v1204, %v1203
        %v1259 = vpack.c.b16 %v1206, %v1205
        %v1260 = vpack.c.b16 %v1208, %v1207
        %v1261 = vpack.c.b16 %v1210, %v1209
        %v1262 = vpack.c.b16 %v1212, %v1211
        %v1263 = vpack.c.b16 %v1214, %v1213
        %v1264 = vpack.c.b16 %v1216, %v1215
        %1313 = vmatpush.bf16.msra.mxu0 %v448
        %1314 = vmatpush.bf16.msra.mxu0 %v447
        %1315 = vmatpush.bf16.msra.mxu0 %v446
        %1316 = vmatpush.bf16.msra.mxu0 %v445
        %1317 = vmatpush.bf16.msra.mxu0 %v444
        %1318 = vmatpush.bf16.msra.mxu0 %v443
        %1319 = vmatpush.bf16.msra.mxu0 %v442
        %1320 = vmatpush.bf16.msra.mxu0 %v441
        %1321 = vmatmul.bf16.gmra.mxu0 %v1217
        %v1322 = vpop.f32.mrf.mxu0
        %v1323 = vadd.f32 %v548, %v1322
        %v1324 = vpop.f32.mrf.mxu0
        %v1325 = vadd.f32 %v553, %v1324
        %1326 = vmatmul.bf16.gmra.mxu0 %v1218
        %v1327 = vpop.f32.mrf.mxu0
        %v1328 = vadd.f32 %v558, %v1327
        %v1329 = vpop.f32.mrf.mxu0
        %v1330 = vadd.f32 %v563, %v1329
        %1331 = vmatmul.bf16.gmra.mxu0 %v1219
        %v1332 = vpop.f32.mrf.mxu0
        %v1333 = vadd.f32 %v568, %v1332
        %v1334 = vpop.f32.mrf.mxu0
        %v1335 = vadd.f32 %v573, %v1334
        %1336 = vmatmul.bf16.gmra.mxu0 %v1220
        %v1337 = vpop.f32.mrf.mxu0
        %v1338 = vadd.f32 %v578, %v1337
        %v1339 = vpop.f32.mrf.mxu0
        %v1340 = vadd.f32 %v583, %v1339
        %1341 = vmatmul.bf16.gmra.mxu0 %v1221
        %v1342 = vpop.f32.mrf.mxu0
        %v1343 = vadd.f32 %v588, %v1342
        %v1344 = vpop.f32.mrf.mxu0
        %v1345 = vadd.f32 %v593, %v1344
        %1346 = vmatmul.bf16.gmra.mxu0 %v1222
        %v1347 = vpop.f32.mrf.mxu0
        %v1348 = vadd.f32 %v598, %v1347
        %v1349 = vpop.f32.mrf.mxu0
        %v1350 = vadd.f32 %v603, %v1349
        %1351 = vmatmul.bf16.gmra.mxu0 %v1223
        %v1352 = vpop.f32.mrf.mxu0
        %v1353 = vadd.f32 %v608, %v1352
        %v1354 = vpop.f32.mrf.mxu0
        %v1355 = vadd.f32 %v613, %v1354
        %1356 = vmatmul.bf16.gmra.mxu0 %v1224
        %v1357 = vpop.f32.mrf.mxu0
        %v1358 = vadd.f32 %v618, %v1357
        %v1359 = vpop.f32.mrf.mxu0
        %v1360 = vadd.f32 %v623, %v1359
        %1361 = vmatmul.bf16.gmra.mxu0 %v1225
        %v1362 = vpop.f32.mrf.mxu0
        %v1363 = vadd.f32 %v628, %v1362
        %v1364 = vpop.f32.mrf.mxu0
        %v1365 = vadd.f32 %v633, %v1364
        %1366 = vmatmul.bf16.gmra.mxu0 %v1226
        %v1367 = vpop.f32.mrf.mxu0
        %v1368 = vadd.f32 %v638, %v1367
        %v1369 = vpop.f32.mrf.mxu0
        %v1370 = vadd.f32 %v643, %v1369
        %1371 = vmatmul.bf16.gmra.mxu0 %v1227
        %v1372 = vpop.f32.mrf.mxu0
        %v1373 = vadd.f32 %v648, %v1372
        %v1374 = vpop.f32.mrf.mxu0
        %v1375 = vadd.f32 %v653, %v1374
        %1376 = vmatmul.bf16.gmra.mxu0 %v1228
        %v1377 = vpop.f32.mrf.mxu0
        %v1378 = vadd.f32 %v658, %v1377
        %v1379 = vpop.f32.mrf.mxu0
        %v1380 = vadd.f32 %v663, %v1379
        %1381 = vmatmul.bf16.gmra.mxu0 %v1229
        %v1382 = vpop.f32.mrf.mxu0
        %v1383 = vadd.f32 %v668, %v1382
        %v1384 = vpop.f32.mrf.mxu0
        %v1385 = vadd.f32 %v673, %v1384
        %1386 = vmatmul.bf16.gmra.mxu0 %v1230
        %v1387 = vpop.f32.mrf.mxu0
        %v1388 = vadd.f32 %v678, %v1387
        %v1389 = vpop.f32.mrf.mxu0
        %v1390 = vadd.f32 %v683, %v1389
        %1391 = vmatmul.bf16.gmra.mxu0 %v1231
        %v1392 = vpop.f32.mrf.mxu0
        %v1393 = vadd.f32 %v688, %v1392
        %v1394 = vpop.f32.mrf.mxu0
        %v1395 = vadd.f32 %v693, %v1394
        %1396 = vmatmul.bf16.gmra.mxu0 %v1232
        %v1397 = vpop.f32.mrf.mxu0
        %v1398 = vadd.f32 %v698, %v1397
        %v1399 = vpop.f32.mrf.mxu0
        %v1400 = vadd.f32 %v703, %v1399
        %1401 = vmatmul.bf16.gmra.mxu0 %v1233
        %v1402 = vpop.f32.mrf.mxu0
        %v1403 = vadd.f32 %v708, %v1402
        %v1404 = vpop.f32.mrf.mxu0
        %v1405 = vadd.f32 %v713, %v1404
        %1406 = vmatmul.bf16.gmra.mxu0 %v1234
        %v1407 = vpop.f32.mrf.mxu0
        %v1408 = vadd.f32 %v718, %v1407
        %v1409 = vpop.f32.mrf.mxu0
        %v1410 = vadd.f32 %v723, %v1409
        %1411 = vmatmul.bf16.gmra.mxu0 %v1235
        %v1412 = vpop.f32.mrf.mxu0
        %v1413 = vadd.f32 %v728, %v1412
        %v1414 = vpop.f32.mrf.mxu0
        %v1415 = vadd.f32 %v733, %v1414
        %1416 = vmatmul.bf16.gmra.mxu0 %v1236
        %v1417 = vpop.f32.mrf.mxu0
        %v1418 = vadd.f32 %v738, %v1417
        %v1419 = vpop.f32.mrf.mxu0
        %v1420 = vadd.f32 %v743, %v1419
        %1421 = vmatmul.bf16.gmra.mxu0 %v1237
        %v1422 = vpop.f32.mrf.mxu0
        %v1423 = vadd.f32 %v748, %v1422
        %v1424 = vpop.f32.mrf.mxu0
        %v1425 = vadd.f32 %v753, %v1424
        %1426 = vmatmul.bf16.gmra.mxu0 %v1238
        %v1427 = vpop.f32.mrf.mxu0
        %v1428 = vadd.f32 %v758, %v1427
        %v1429 = vpop.f32.mrf.mxu0
        %v1430 = vadd.f32 %v763, %v1429
        %1431 = vmatmul.bf16.gmra.mxu0 %v1239
        %v1432 = vpop.f32.mrf.mxu0
        %v1433 = vadd.f32 %v768, %v1432
        %v1434 = vpop.f32.mrf.mxu0
        %v1435 = vadd.f32 %v773, %v1434
        %1436 = vmatmul.bf16.gmra.mxu0 %v1240
        %v1437 = vpop.f32.mrf.mxu0
        %v1438 = vadd.f32 %v778, %v1437
        %v1439 = vpop.f32.mrf.mxu0
        %v1440 = vadd.f32 %v783, %v1439
        %1441 = vmatmul.bf16.gmra.mxu0 %v1241
        %v1442 = vpop.f32.mrf.mxu0
        %v1443 = vadd.f32 %v788, %v1442
        %v1444 = vpop.f32.mrf.mxu0
        %v1445 = vadd.f32 %v793, %v1444
        %1446 = vmatmul.bf16.gmra.mxu0 %v1242
        %v1447 = vpop.f32.mrf.mxu0
        %v1448 = vadd.f32 %v798, %v1447
        %v1449 = vpop.f32.mrf.mxu0
        %v1450 = vadd.f32 %v803, %v1449
        %1451 = vmatmul.bf16.gmra.mxu0 %v1243
        %v1452 = vpop.f32.mrf.mxu0
        %v1453 = vadd.f32 %v808, %v1452
        %v1454 = vpop.f32.mrf.mxu0
        %v1455 = vadd.f32 %v813, %v1454
        %1456 = vmatmul.bf16.gmra.mxu0 %v1244
        %v1457 = vpop.f32.mrf.mxu0
        %v1458 = vadd.f32 %v818, %v1457
        %v1459 = vpop.f32.mrf.mxu0
        %v1460 = vadd.f32 %v823, %v1459
        %1461 = vmatmul.bf16.gmra.mxu0 %v1245
        %v1462 = vpop.f32.mrf.mxu0
        %v1463 = vadd.f32 %v828, %v1462
        %v1464 = vpop.f32.mrf.mxu0
        %v1465 = vadd.f32 %v833, %v1464
        %1466 = vmatmul.bf16.gmra.mxu0 %v1246
        %v1467 = vpop.f32.mrf.mxu0
        %v1468 = vadd.f32 %v838, %v1467
        %v1469 = vpop.f32.mrf.mxu0
        %v1470 = vadd.f32 %v843, %v1469
        %1471 = vmatmul.bf16.gmra.mxu0 %v1247
        %v1472 = vpop.f32.mrf.mxu0
        %v1473 = vadd.f32 %v848, %v1472
        %v1474 = vpop.f32.mrf.mxu0
        %v1475 = vadd.f32 %v853, %v1474
        %1476 = vmatmul.bf16.gmra.mxu0 %v1248
        %v1477 = vpop.f32.mrf.mxu0
        %v1478 = vadd.f32 %v858, %v1477
        %v1479 = vpop.f32.mrf.mxu0
        %v1480 = vadd.f32 %v863, %v1479
        %1481 = vmatmul.bf16.gmra.mxu0 %v1249
        %v1482 = vpop.f32.mrf.mxu0
        %v1483 = vadd.f32 %v868, %v1482
        %v1484 = vpop.f32.mrf.mxu0
        %v1485 = vadd.f32 %v873, %v1484
        %1486 = vmatmul.bf16.gmra.mxu0 %v1250
        %v1487 = vpop.f32.mrf.mxu0
        %v1488 = vadd.f32 %v878, %v1487
        %v1489 = vpop.f32.mrf.mxu0
        %v1490 = vadd.f32 %v883, %v1489
        %1491 = vmatmul.bf16.gmra.mxu0 %v1251
        %v1492 = vpop.f32.mrf.mxu0
        %v1493 = vadd.f32 %v888, %v1492
        %v1494 = vpop.f32.mrf.mxu0
        %v1495 = vadd.f32 %v893, %v1494
        %1496 = vmatmul.bf16.gmra.mxu0 %v1252
        %v1497 = vpop.f32.mrf.mxu0
        %v1498 = vadd.f32 %v898, %v1497
        %v1499 = vpop.f32.mrf.mxu0
        %v1500 = vadd.f32 %v903, %v1499
        %1501 = vmatmul.bf16.gmra.mxu0 %v1253
        %v1502 = vpop.f32.mrf.mxu0
        %v1503 = vadd.f32 %v908, %v1502
        %v1504 = vpop.f32.mrf.mxu0
        %v1505 = vadd.f32 %v913, %v1504
        %1506 = vmatmul.bf16.gmra.mxu0 %v1254
        %v1507 = vpop.f32.mrf.mxu0
        %v1508 = vadd.f32 %v918, %v1507
        %v1509 = vpop.f32.mrf.mxu0
        %v1510 = vadd.f32 %v923, %v1509
        %1511 = vmatmul.bf16.gmra.mxu0 %v1255
        %v1512 = vpop.f32.mrf.mxu0
        %v1513 = vadd.f32 %v928, %v1512
        %v1514 = vpop.f32.mrf.mxu0
        %v1515 = vadd.f32 %v933, %v1514
        %1516 = vmatmul.bf16.gmra.mxu0 %v1256
        %v1517 = vpop.f32.mrf.mxu0
        %v1518 = vadd.f32 %v938, %v1517
        %v1519 = vpop.f32.mrf.mxu0
        %v1520 = vadd.f32 %v943, %v1519
        %1521 = vmatmul.bf16.gmra.mxu0 %v1257
        %v1522 = vpop.f32.mrf.mxu0
        %v1523 = vadd.f32 %v948, %v1522
        %v1524 = vpop.f32.mrf.mxu0
        %v1525 = vadd.f32 %v953, %v1524
        %1526 = vmatmul.bf16.gmra.mxu0 %v1258
        %v1527 = vpop.f32.mrf.mxu0
        %v1528 = vadd.f32 %v958, %v1527
        %v1529 = vpop.f32.mrf.mxu0
        %v1530 = vadd.f32 %v963, %v1529
        %1531 = vmatmul.bf16.gmra.mxu0 %v1259
        %v1532 = vpop.f32.mrf.mxu0
        %v1533 = vadd.f32 %v968, %v1532
        %v1534 = vpop.f32.mrf.mxu0
        %v1535 = vadd.f32 %v973, %v1534
        %1536 = vmatmul.bf16.gmra.mxu0 %v1260
        %v1537 = vpop.f32.mrf.mxu0
        %v1538 = vadd.f32 %v978, %v1537
        %v1539 = vpop.f32.mrf.mxu0
        %v1540 = vadd.f32 %v983, %v1539
        %1541 = vmatmul.bf16.gmra.mxu0 %v1261
        %v1542 = vpop.f32.mrf.mxu0
        %v1543 = vadd.f32 %v988, %v1542
        %v1544 = vpop.f32.mrf.mxu0
        %v1545 = vadd.f32 %v993, %v1544
        %1546 = vmatmul.bf16.gmra.mxu0 %v1262
        %v1547 = vpop.f32.mrf.mxu0
        %v1548 = vadd.f32 %v998, %v1547
        %v1549 = vpop.f32.mrf.mxu0
        %v1550 = vadd.f32 %v1003, %v1549
        %1551 = vmatmul.bf16.gmra.mxu0 %v1263
        %v1552 = vpop.f32.mrf.mxu0
        %v1553 = vadd.f32 %v1008, %v1552
        %v1554 = vpop.f32.mrf.mxu0
        %v1555 = vadd.f32 %v1013, %v1554
        %1556 = vmatmul.bf16.gmra.mxu0 %v1264
        %v1557 = vpop.f32.mrf.mxu0
        %v1558 = vadd.f32 %v1018, %v1557
        %v1559 = vpop.f32.mrf.mxu0
        %v1560 = vadd.f32 %v1023, %v1559
        %1561 = vdwg.mxu0
        %v1562 = vpack.c.bf16 %v1323, %v1323
        %v1563 = vpack.c.bf16 %v1325, %v1325
        %v1564 = vpack.c.bf16 %v1328, %v1328
        %v1565 = vpack.c.bf16 %v1330, %v1330
        %v1566 = vpack.c.bf16 %v1333, %v1333
        %v1567 = vpack.c.bf16 %v1335, %v1335
        %v1568 = vpack.c.bf16 %v1338, %v1338
        %v1569 = vpack.c.bf16 %v1340, %v1340
        %v1570 = vpack.c.bf16 %v1343, %v1343
        %v1571 = vpack.c.bf16 %v1345, %v1345
        %v1572 = vpack.c.bf16 %v1348, %v1348
        %v1573 = vpack.c.bf16 %v1350, %v1350
        %v1574 = vpack.c.bf16 %v1353, %v1353
        %v1575 = vpack.c.bf16 %v1355, %v1355
        %v1576 = vpack.c.bf16 %v1358, %v1358
        %v1577 = vpack.c.bf16 %v1360, %v1360
        %v1578 = vpack.c.bf16 %v1363, %v1363
        %v1579 = vpack.c.bf16 %v1365, %v1365
        %v1580 = vpack.c.bf16 %v1368, %v1368
        %v1581 = vpack.c.bf16 %v1370, %v1370
        %v1582 = vpack.c.bf16 %v1373, %v1373
        %v1583 = vpack.c.bf16 %v1375, %v1375
        %v1584 = vpack.c.bf16 %v1378, %v1378
        %v1585 = vpack.c.bf16 %v1380, %v1380
        %v1586 = vpack.c.bf16 %v1383, %v1383
        %v1587 = vpack.c.bf16 %v1385, %v1385
        %v1588 = vpack.c.bf16 %v1388, %v1388
        %v1589 = vpack.c.bf16 %v1390, %v1390
        %v1590 = vpack.c.bf16 %v1393, %v1393
        %v1591 = vpack.c.bf16 %v1395, %v1395
        %v1592 = vpack.c.bf16 %v1398, %v1398
        %v1593 = vpack.c.bf16 %v1400, %v1400
        %v1594 = vpack.c.bf16 %v1403, %v1403
        %v1595 = vpack.c.bf16 %v1405, %v1405
        %v1596 = vpack.c.bf16 %v1408, %v1408
        %v1597 = vpack.c.bf16 %v1410, %v1410
        %v1598 = vpack.c.bf16 %v1413, %v1413
        %v1599 = vpack.c.bf16 %v1415, %v1415
        %v1600 = vpack.c.bf16 %v1418, %v1418
        %v1601 = vpack.c.bf16 %v1420, %v1420
        %v1602 = vpack.c.bf16 %v1423, %v1423
        %v1603 = vpack.c.bf16 %v1425, %v1425
        %v1604 = vpack.c.bf16 %v1428, %v1428
        %v1605 = vpack.c.bf16 %v1430, %v1430
        %v1606 = vpack.c.bf16 %v1433, %v1433
        %v1607 = vpack.c.bf16 %v1435, %v1435
        %v1608 = vpack.c.bf16 %v1438, %v1438
        %v1609 = vpack.c.bf16 %v1440, %v1440
        %v1610 = vpack.c.bf16 %v1443, %v1443
        %v1611 = vpack.c.bf16 %v1445, %v1445
        %v1612 = vpack.c.bf16 %v1448, %v1448
        %v1613 = vpack.c.bf16 %v1450, %v1450
        %v1614 = vpack.c.bf16 %v1453, %v1453
        %v1615 = vpack.c.bf16 %v1455, %v1455
        %v1616 = vpack.c.bf16 %v1458, %v1458
        %v1617 = vpack.c.bf16 %v1460, %v1460
        %v1618 = vpack.c.bf16 %v1463, %v1463
        %v1619 = vpack.c.bf16 %v1465, %v1465
        %v1620 = vpack.c.bf16 %v1468, %v1468
        %v1621 = vpack.c.bf16 %v1470, %v1470
        %v1622 = vpack.c.bf16 %v1473, %v1473
        %v1623 = vpack.c.bf16 %v1475, %v1475
        %v1624 = vpack.c.bf16 %v1478, %v1478
        %v1625 = vpack.c.bf16 %v1480, %v1480
        %v1626 = vpack.c.bf16 %v1483, %v1483
        %v1627 = vpack.c.bf16 %v1485, %v1485
        %v1628 = vpack.c.bf16 %v1488, %v1488
        %v1629 = vpack.c.bf16 %v1490, %v1490
        %v1630 = vpack.c.bf16 %v1493, %v1493
        %v1631 = vpack.c.bf16 %v1495, %v1495
        %v1632 = vpack.c.bf16 %v1498, %v1498
        %v1633 = vpack.c.bf16 %v1500, %v1500
        %v1634 = vpack.c.bf16 %v1503, %v1503
        %v1635 = vpack.c.bf16 %v1505, %v1505
        %v1636 = vpack.c.bf16 %v1508, %v1508
        %v1637 = vpack.c.bf16 %v1510, %v1510
        %v1638 = vpack.c.bf16 %v1513, %v1513
        %v1639 = vpack.c.bf16 %v1515, %v1515
        %v1640 = vpack.c.bf16 %v1518, %v1518
        %v1641 = vpack.c.bf16 %v1520, %v1520
        %v1642 = vpack.c.bf16 %v1523, %v1523
        %v1643 = vpack.c.bf16 %v1525, %v1525
        %v1644 = vpack.c.bf16 %v1528, %v1528
        %v1645 = vpack.c.bf16 %v1530, %v1530
        %v1646 = vpack.c.bf16 %v1533, %v1533
        %v1647 = vpack.c.bf16 %v1535, %v1535
        %v1648 = vpack.c.bf16 %v1538, %v1538
        %v1649 = vpack.c.bf16 %v1540, %v1540
        %v1650 = vpack.c.bf16 %v1543, %v1543
        %v1651 = vpack.c.bf16 %v1545, %v1545
        %v1652 = vpack.c.bf16 %v1548, %v1548
        %v1653 = vpack.c.bf16 %v1550, %v1550
        %v1654 = vpack.c.bf16 %v1553, %v1553
        %v1655 = vpack.c.bf16 %v1555, %v1555
        %v1656 = vpack.c.bf16 %v1558, %v1558
        %v1657 = vpack.c.bf16 %v1560, %v1560
        %1658 = vst [vmem:[#allocation2] sm:$0xf] %v1562
        %1659 = vst [vmem:[#allocation2 + $0x4] sm:$0xf] %v1563
        %1660 = vst [vmem:[#allocation2 + $0x8] sm:$0xf] %v1564
        %1661 = vst [vmem:[#allocation2 + $0xc] sm:$0xf] %v1565
        %1662 = vst [vmem:[#allocation2 + $0x10] sm:$0xf] %v1566
        %1663 = vst [vmem:[#allocation2 + $0x14] sm:$0xf] %v1567
        %1664 = vst [vmem:[#allocation2 + $0x18] sm:$0xf] %v1568
        %1665 = vst [vmem:[#allocation2 + $0x1c] sm:$0xf] %v1569
        %1666 = vst [vmem:[#allocation2 + $0x20] sm:$0xf] %v1570
        %1667 = vst [vmem:[#allocation2 + $0x24] sm:$0xf] %v1571
        %1668 = vst [vmem:[#allocation2 + $0x28] sm:$0xf] %v1572
        %1669 = vst [vmem:[#allocation2 + $0x2c] sm:$0xf] %v1573
        %1670 = vst [vmem:[#allocation2 + $0x30] sm:$0xf] %v1574
        %1671 = vst [vmem:[#allocation2 + $0x34] sm:$0xf] %v1575
        %1672 = vst [vmem:[#allocation2 + $0x38] sm:$0xf] %v1576
        %1673 = vst [vmem:[#allocation2 + $0x3c] sm:$0xf] %v1577
        %1674 = vst [vmem:[#allocation2 + $0x40] sm:$0xf] %v1578
        %1675 = vst [vmem:[#allocation2 + $0x44] sm:$0xf] %v1579
        %1676 = vst [vmem:[#allocation2 + $0x48] sm:$0xf] %v1580
        %1677 = vst [vmem:[#allocation2 + $0x4c] sm:$0xf] %v1581
        %1678 = vst [vmem:[#allocation2 + $0x50] sm:$0xf] %v1582
        %1679 = vst [vmem:[#allocation2 + $0x54] sm:$0xf] %v1583
        %1680 = vst [vmem:[#allocation2 + $0x58] sm:$0xf] %v1584
        %1681 = vst [vmem:[#allocation2 + $0x5c] sm:$0xf] %v1585
        %1682 = vst [vmem:[#allocation2 + $0x60] sm:$0xf] %v1586
        %1683 = vst [vmem:[#allocation2 + $0x64] sm:$0xf] %v1587
        %1684 = vst [vmem:[#allocation2 + $0x68] sm:$0xf] %v1588
        %1685 = vst [vmem:[#allocation2 + $0x6c] sm:$0xf] %v1589
        %1686 = vst [vmem:[#allocation2 + $0x70] sm:$0xf] %v1590
        %1687 = vst [vmem:[#allocation2 + $0x74] sm:$0xf] %v1591
        %1688 = vst [vmem:[#allocation2 + $0x78] sm:$0xf] %v1592
        %1689 = vst [vmem:[#allocation2 + $0x7c] sm:$0xf] %v1593
        %1690 = vst [vmem:[#allocation2 + $0x80] sm:$0xf] %v1594
        %1691 = vst [vmem:[#allocation2 + $0x84] sm:$0xf] %v1595
        %1692 = vst [vmem:[#allocation2 + $0x88] sm:$0xf] %v1596
        %1693 = vst [vmem:[#allocation2 + $0x8c] sm:$0xf] %v1597
        %1694 = vst [vmem:[#allocation2 + $0x90] sm:$0xf] %v1598
        %1695 = vst [vmem:[#allocation2 + $0x94] sm:$0xf] %v1599
        %1696 = vst [vmem:[#allocation2 + $0x98] sm:$0xf] %v1600
        %1697 = vst [vmem:[#allocation2 + $0x9c] sm:$0xf] %v1601
        %1698 = vst [vmem:[#allocation2 + $0xa0] sm:$0xf] %v1602
        %1699 = vst [vmem:[#allocation2 + $0xa4] sm:$0xf] %v1603
        %1700 = vst [vmem:[#allocation2 + $0xa8] sm:$0xf] %v1604
        %1701 = vst [vmem:[#allocation2 + $0xac] sm:$0xf] %v1605
        %1702 = vst [vmem:[#allocation2 + $0xb0] sm:$0xf] %v1606
        %1703 = vst [vmem:[#allocation2 + $0xb4] sm:$0xf] %v1607
        %1704 = vst [vmem:[#allocation2 + $0xb8] sm:$0xf] %v1608
        %1705 = vst [vmem:[#allocation2 + $0xbc] sm:$0xf] %v1609
        %1706 = vst [vmem:[#allocation2 + $0xc0] sm:$0xf] %v1610
        %1707 = vst [vmem:[#allocation2 + $0xc4] sm:$0xf] %v1611
        %1708 = vst [vmem:[#allocation2 + $0xc8] sm:$0xf] %v1612
        %1709 = vst [vmem:[#allocation2 + $0xcc] sm:$0xf] %v1613
        %1710 = vst [vmem:[#allocation2 + $0xd0] sm:$0xf] %v1614
        %1711 = vst [vmem:[#allocation2 + $0xd4] sm:$0xf] %v1615
        %1712 = vst [vmem:[#allocation2 + $0xd8] sm:$0xf] %v1616
        %1713 = vst [vmem:[#allocation2 + $0xdc] sm:$0xf] %v1617
        %1714 = vst [vmem:[#allocation2 + $0xe0] sm:$0xf] %v1618
        %1715 = vst [vmem:[#allocation2 + $0xe4] sm:$0xf] %v1619
        %1716 = vst [vmem:[#allocation2 + $0xe8] sm:$0xf] %v1620
        %1717 = vst [vmem:[#allocation2 + $0xec] sm:$0xf] %v1621
        %1718 = vst [vmem:[#allocation2 + $0xf0] sm:$0xf] %v1622
        %1719 = vst [vmem:[#allocation2 + $0xf4] sm:$0xf] %v1623
        %1720 = vst [vmem:[#allocation2 + $0xf8] sm:$0xf] %v1624
        %1721 = vst [vmem:[#allocation2 + $0xfc] sm:$0xf] %v1625
        %1722 = vst [vmem:[#allocation2 + $0x100] sm:$0xf] %v1626
        %1723 = vst [vmem:[#allocation2 + $0x104] sm:$0xf] %v1627
        %1724 = vst [vmem:[#allocation2 + $0x108] sm:$0xf] %v1628
        %1725 = vst [vmem:[#allocation2 + $0x10c] sm:$0xf] %v1629
        %1726 = vst [vmem:[#allocation2 + $0x110] sm:$0xf] %v1630
        %1727 = vst [vmem:[#allocation2 + $0x114] sm:$0xf] %v1631
        %1728 = vst [vmem:[#allocation2 + $0x118] sm:$0xf] %v1632
        %1729 = vst [vmem:[#allocation2 + $0x11c] sm:$0xf] %v1633
        %1730 = vst [vmem:[#allocation2 + $0x120] sm:$0xf] %v1634
        %1731 = vst [vmem:[#allocation2 + $0x124] sm:$0xf] %v1635
        %1732 = vst [vmem:[#allocation2 + $0x128] sm:$0xf] %v1636
        %1733 = vst [vmem:[#allocation2 + $0x12c] sm:$0xf] %v1637
        %1734 = vst [vmem:[#allocation2 + $0x130] sm:$0xf] %v1638
        %1735 = vst [vmem:[#allocation2 + $0x134] sm:$0xf] %v1639
        %1736 = vst [vmem:[#allocation2 + $0x138] sm:$0xf] %v1640
        %1737 = vst [vmem:[#allocation2 + $0x13c] sm:$0xf] %v1641
        %1738 = vst [vmem:[#allocation2 + $0x140] sm:$0xf] %v1642
        %1739 = vst [vmem:[#allocation2 + $0x144] sm:$0xf] %v1643
        %1740 = vst [vmem:[#allocation2 + $0x148] sm:$0xf] %v1644
        %1741 = vst [vmem:[#allocation2 + $0x14c] sm:$0xf] %v1645
        %1742 = vst [vmem:[#allocation2 + $0x150] sm:$0xf] %v1646
        %1743 = vst [vmem:[#allocation2 + $0x154] sm:$0xf] %v1647
        %1744 = vst [vmem:[#allocation2 + $0x158] sm:$0xf] %v1648
        %1745 = vst [vmem:[#allocation2 + $0x15c] sm:$0xf] %v1649
        %1746 = vst [vmem:[#allocation2 + $0x160] sm:$0xf] %v1650
        %1747 = vst [vmem:[#allocation2 + $0x164] sm:$0xf] %v1651
        %1748 = vst [vmem:[#allocation2 + $0x168] sm:$0xf] %v1652
        %1749 = vst [vmem:[#allocation2 + $0x16c] sm:$0xf] %v1653
        %1750 = vst [vmem:[#allocation2 + $0x170] sm:$0xf] %v1654
        %1751 = vst [vmem:[#allocation2 + $0x174] sm:$0xf] %v1655
        %1752 = vst [vmem:[#allocation2 + $0x178] sm:$0xf] %v1656
        %1753 = vst [vmem:[#allocation2 + $0x17c] sm:$0xf] %v1657
      $region44: #{pos_extraction_pallas.4} parent=39 // pred_fallthru
        _
      %s1754 = smul.u32 %s24, 128
      %s1755 = sshra.s32 %s1754, 7
      %s1756 = sand.u32 %s1754, 127
      %s1757 = smul.addr %s1755, 4
      %s1758 = scalar_lea.vmem [#allocation2], %s1757
      %v1759 = vld [vmem:[%s1758] sm:$0xf]
      %v1760 = vld [vmem:[%s1758 + $0x4] sm:$0xf]
      %v1761 = vld [vmem:[%s1758 + $0x8] sm:$0xf]
      %v1762 = vld [vmem:[%s1758 + $0xc] sm:$0xf]
      %v1763 = vld [vmem:[%s1758 + $0x10] sm:$0xf]
      %v1764 = vld [vmem:[%s1758 + $0x14] sm:$0xf]
      %v1765 = vld [vmem:[%s1758 + $0x18] sm:$0xf]
      %v1766 = vld [vmem:[%s1758 + $0x1c] sm:$0xf]
      %v1767 = vld [vmem:[#allocation2 + $0x80] sm:$0xf]
      %v1768 = vld [vmem:[#allocation2 + $0x84] sm:$0xf]
      %v1769 = vld [vmem:[#allocation2 + $0x88] sm:$0xf]
      %v1770 = vld [vmem:[#allocation2 + $0x8c] sm:$0xf]
      %v1771 = vld [vmem:[#allocation2 + $0x90] sm:$0xf]
      %v1772 = vld [vmem:[#allocation2 + $0x94] sm:$0xf]
      %v1773 = vld [vmem:[#allocation2 + $0x98] sm:$0xf]
      %v1774 = vld [vmem:[#allocation2 + $0x9c] sm:$0xf]
      %v1775 = vld [vmem:[#allocation2 + $0x100] sm:$0xf]
      %v1776 = vld [vmem:[#allocation2 + $0x104] sm:$0xf]
      %v1777 = vld [vmem:[#allocation2 + $0x108] sm:$0xf]
      %v1778 = vld [vmem:[#allocation2 + $0x10c] sm:$0xf]
      %v1779 = vld [vmem:[#allocation2 + $0x110] sm:$0xf]
      %v1780 = vld [vmem:[#allocation2 + $0x114] sm:$0xf]
      %v1781 = vld [vmem:[#allocation2 + $0x118] sm:$0xf]
      %v1782 = vld [vmem:[#allocation2 + $0x11c] sm:$0xf]
      %v1791 = vunpack.c.l.b16 %v1759
      %v1792 = vunpack.c.l.b16 %v1760
      %v1793 = vunpack.c.l.b16 %v1761
      %v1794 = vunpack.c.l.b16 %v1762
      %v1795 = vunpack.c.l.b16 %v1763
      %v1796 = vunpack.c.l.b16 %v1764
      %v1797 = vunpack.c.l.b16 %v1765
      %v1798 = vunpack.c.l.b16 %v1766
      %v1799 = vpack.c.b16 %v1792, %v1791
      %v1800 = vpack.c.b16 %v1794, %v1793
      %v1801 = vpack.c.b16 %v1796, %v1795
      %v1802 = vpack.c.b16 %v1798, %v1797
      %1807 = vxpose.xlu0.c.b16.start [1/8] %v1799, 128
      %1808 = vxpose.xlu0.c.b16.cont [2/8] %v1800, 128
      %1809 = vxpose.xlu0.c.b16.cont [3/8] %v1801, 128
      %1810 = vxpose.xlu0.c.b16.cont [4/8] %v1802, 128
      %1811 = vxpose.xlu0.c.b16.cont [5/8] 0, 128
      %1812 = vxpose.xlu0.c.b16.cont [6/8] 0, 128
      %1813 = vxpose.xlu0.c.b16.cont [7/8] 0, 128
      %1814 = vxpose.xlu0.c.b16.end [8/8] 0, 128
      %v1815 = vpop.trf.xlu0
      %v1816 = vpop.trf.xlu0
      %v1817 = vpop.trf.xlu0
      %v1818 = vpop.trf.xlu0
      %v1819 = vpop.trf.xlu0
      %v1820 = vpop.trf.xlu0
      %v1821 = vpop.trf.xlu0
      %v1822 = vpop.trf.xlu0
      %v1831 = vunpack.c.l.b16 %v1767
      %v1832 = vunpack.c.l.b16 %v1768
      %v1833 = vunpack.c.l.b16 %v1769
      %v1834 = vunpack.c.l.b16 %v1770
      %v1835 = vunpack.c.l.b16 %v1771
      %v1836 = vunpack.c.l.b16 %v1772
      %v1837 = vunpack.c.l.b16 %v1773
      %v1838 = vunpack.c.l.b16 %v1774
      %v1839 = vpack.c.b16 %v1832, %v1831
      %v1840 = vpack.c.b16 %v1834, %v1833
      %v1841 = vpack.c.b16 %v1836, %v1835
      %v1842 = vpack.c.b16 %v1838, %v1837
      %vm1847 = vcmask 523264
      %v1849 = vsel %vm1847, %v1815, 0
      %v1852 = vsel %vm1847, %v1816, 0
      %v1855 = vsel %vm1847, %v1817, 0
      %v1858 = vsel %vm1847, %v1818, 0
      %v1861 = vsel %vm1847, %v1819, 0
      %v1864 = vsel %vm1847, %v1820, 0
      %v1867 = vsel %vm1847, %v1821, 0
      %v1870 = vsel %vm1847, %v1822, 0
      %1872 = vmatpush.bf16.msra.mxu0 0
      %1873 = vmatpush.bf16.msra.mxu0 0
      %1874 = vmatpush.bf16.msra.mxu0 0
      %1875 = vmatpush.bf16.msra.mxu0 0
      %1876 = vmatpush.bf16.msra.mxu0 %v1842
      %1877 = vmatpush.bf16.msra.mxu0 %v1841
      %1878 = vmatpush.bf16.msra.mxu0 %v1840
      %1879 = vmatpush.bf16.msra.mxu0 %v1839
      %1880 = vmatmul.bf16.gmra.mxu0 %v1849
      %v1881 = vpop.f32.mrf.mxu0
      %v1882 = vadd.f32 0.0, %v1881
      %v1883 = vpop.f32.mrf.mxu0
      %v1884 = vadd.f32 0.0, %v1883
      %1885 = vmatmul.bf16.gmra.mxu0 %v1852
      %v1886 = vpop.f32.mrf.mxu0
      %v1887 = vadd.f32 0.0, %v1886
      %v1888 = vpop.f32.mrf.mxu0
      %v1889 = vadd.f32 0.0, %v1888
      %1890 = vmatmul.bf16.gmra.mxu0 %v1855
      %v1891 = vpop.f32.mrf.mxu0
      %v1892 = vadd.f32 0.0, %v1891
      %v1893 = vpop.f32.mrf.mxu0
      %v1894 = vadd.f32 0.0, %v1893
      %1895 = vmatmul.bf16.gmra.mxu0 %v1858
      %v1896 = vpop.f32.mrf.mxu0
      %v1897 = vadd.f32 0.0, %v1896
      %v1898 = vpop.f32.mrf.mxu0
      %v1899 = vadd.f32 0.0, %v1898
      %1900 = vmatmul.bf16.gmra.mxu0 %v1861
      %v1901 = vpop.f32.mrf.mxu0
      %v1902 = vadd.f32 0.0, %v1901
      %v1903 = vpop.f32.mrf.mxu0
      %v1904 = vadd.f32 0.0, %v1903
      %1905 = vmatmul.bf16.gmra.mxu0 %v1864
      %v1906 = vpop.f32.mrf.mxu0
      %v1907 = vadd.f32 0.0, %v1906
      %v1908 = vpop.f32.mrf.mxu0
      %v1909 = vadd.f32 0.0, %v1908
      %1910 = vmatmul.bf16.gmra.mxu0 %v1867
      %v1911 = vpop.f32.mrf.mxu0
      %v1912 = vadd.f32 0.0, %v1911
      %v1913 = vpop.f32.mrf.mxu0
      %v1914 = vadd.f32 0.0, %v1913
      %1915 = vmatmul.bf16.gmra.mxu0 %v1870
      %v1916 = vpop.f32.mrf.mxu0
      %v1917 = vadd.f32 0.0, %v1916
      %v1918 = vpop.f32.mrf.mxu0
      %v1919 = vadd.f32 0.0, %v1918
      %1920 = vdwg.mxu0
      %1921 = vmax.xlane.f32.xlu0 %v1882
      %v1922 = vpop.xlane.xlu0 %1921
      %1923 = vmax.xlane.f32.xlu0 %v1884
      %v1924 = vpop.xlane.xlu0 %1923
      %1925 = vmax.xlane.f32.xlu0 %v1887
      %v1926 = vpop.xlane.xlu0 %1925
      %1927 = vmax.xlane.f32.xlu0 %v1889
      %v1928 = vpop.xlane.xlu0 %1927
      %1929 = vmax.xlane.f32.xlu0 %v1892
      %v1930 = vpop.xlane.xlu0 %1929
      %1931 = vmax.xlane.f32.xlu0 %v1894
      %v1932 = vpop.xlane.xlu0 %1931
      %1933 = vmax.xlane.f32.xlu0 %v1897
      %v1934 = vpop.xlane.xlu0 %1933
      %1935 = vmax.xlane.f32.xlu0 %v1899
      %v1936 = vpop.xlane.xlu0 %1935
      %1937 = vmax.xlane.f32.xlu0 %v1902
      %v1938 = vpop.xlane.xlu0 %1937
      %1939 = vmax.xlane.f32.xlu0 %v1904
      %v1940 = vpop.xlane.xlu0 %1939
      %1941 = vmax.xlane.f32.xlu0 %v1907
      %v1942 = vpop.xlane.xlu0 %1941
      %1943 = vmax.xlane.f32.xlu0 %v1909
      %v1944 = vpop.xlane.xlu0 %1943
      %1945 = vmax.xlane.f32.xlu0 %v1912
      %v1946 = vpop.xlane.xlu0 %1945
      %1947 = vmax.xlane.f32.xlu0 %v1914
      %v1948 = vpop.xlane.xlu0 %1947
      %1949 = vmax.xlane.f32.xlu0 %v1917
      %v1950 = vpop.xlane.xlu0 %1949
      %1951 = vmax.xlane.f32.xlu0 %v1919
      %v1952 = vpop.xlane.xlu0 %1951
      %v1953 = vsub.f32 %v1882, %v1922
      %v1954 = vsub.f32 %v1884, %v1924
      %v1955 = vsub.f32 %v1887, %v1926
      %v1956 = vsub.f32 %v1889, %v1928
      %v1957 = vsub.f32 %v1892, %v1930
      %v1958 = vsub.f32 %v1894, %v1932
      %v1959 = vsub.f32 %v1897, %v1934
      %v1960 = vsub.f32 %v1899, %v1936
      %v1961 = vsub.f32 %v1902, %v1938
      %v1962 = vsub.f32 %v1904, %v1940
      %v1963 = vsub.f32 %v1907, %v1942
      %v1964 = vsub.f32 %v1909, %v1944
      %v1965 = vsub.f32 %v1912, %v1946
      %v1966 = vsub.f32 %v1914, %v1948
      %v1967 = vsub.f32 %v1917, %v1950
      %v1968 = vsub.f32 %v1919, %v1952
      %v1969 = vmul.f32 %v1953, 1.442695
      %v1970 = vpow.pop %v1969
      %v1971 = vmul.f32 %v1954, 1.442695
      %v1972 = vpow.pop %v1971
      %v1973 = vmul.f32 %v1955, 1.442695
      %v1974 = vpow.pop %v1973
      %v1975 = vmul.f32 %v1956, 1.442695
      %v1976 = vpow.pop %v1975
      %v1977 = vmul.f32 %v1957, 1.442695
      %v1978 = vpow.pop %v1977
      %v1979 = vmul.f32 %v1958, 1.442695
      %v1980 = vpow.pop %v1979
      %v1981 = vmul.f32 %v1959, 1.442695
      %v1982 = vpow.pop %v1981
      %v1983 = vmul.f32 %v1960, 1.442695
      %v1984 = vpow.pop %v1983
      %v1985 = vmul.f32 %v1961, 1.442695
      %v1986 = vpow.pop %v1985
      %v1987 = vmul.f32 %v1962, 1.442695
      %v1988 = vpow.pop %v1987
      %v1989 = vmul.f32 %v1963, 1.442695
      %v1990 = vpow.pop %v1989
      %v1991 = vmul.f32 %v1964, 1.442695
      %v1992 = vpow.pop %v1991
      %v1993 = vmul.f32 %v1965, 1.442695
      %v1994 = vpow.pop %v1993
      %v1995 = vmul.f32 %v1966, 1.442695
      %v1996 = vpow.pop %v1995
      %v1997 = vmul.f32 %v1967, 1.442695
      %v1998 = vpow.pop %v1997
      %v1999 = vmul.f32 %v1968, 1.442695
      %v2000 = vpow.pop %v1999
      %2001 = vadd.xlane.f32.xlu0 %v1970
      %v2002 = vpop.xlane.xlu0 %2001
      %2003 = vadd.xlane.f32.xlu0 %v1972
      %v2004 = vpop.xlane.xlu0 %2003
      %2005 = vadd.xlane.f32.xlu0 %v1974
      %v2006 = vpop.xlane.xlu0 %2005
      %2007 = vadd.xlane.f32.xlu0 %v1976
      %v2008 = vpop.xlane.xlu0 %2007
      %2009 = vadd.xlane.f32.xlu0 %v1978
      %v2010 = vpop.xlane.xlu0 %2009
      %2011 = vadd.xlane.f32.xlu0 %v1980
      %v2012 = vpop.xlane.xlu0 %2011
      %2013 = vadd.xlane.f32.xlu0 %v1982
      %v2014 = vpop.xlane.xlu0 %2013
      %2015 = vadd.xlane.f32.xlu0 %v1984
      %v2016 = vpop.xlane.xlu0 %2015
      %2017 = vadd.xlane.f32.xlu0 %v1986
      %v2018 = vpop.xlane.xlu0 %2017
      %2019 = vadd.xlane.f32.xlu0 %v1988
      %v2020 = vpop.xlane.xlu0 %2019
      %2021 = vadd.xlane.f32.xlu0 %v1990
      %v2022 = vpop.xlane.xlu0 %2021
      %2023 = vadd.xlane.f32.xlu0 %v1992
      %v2024 = vpop.xlane.xlu0 %2023
      %2025 = vadd.xlane.f32.xlu0 %v1994
      %v2026 = vpop.xlane.xlu0 %2025
      %2027 = vadd.xlane.f32.xlu0 %v1996
      %v2028 = vpop.xlane.xlu0 %2027
      %2029 = vadd.xlane.f32.xlu0 %v1998
      %v2030 = vpop.xlane.xlu0 %2029
      %2031 = vadd.xlane.f32.xlu0 %v2000
      %v2032 = vpop.xlane.xlu0 %2031
      %v2033 = vpack.c.bf16 %v1972, %v1970
      %v2034 = vpack.c.bf16 %v1976, %v1974
      %v2035 = vpack.c.bf16 %v1980, %v1978
      %v2036 = vpack.c.bf16 %v1984, %v1982
      %v2037 = vpack.c.bf16 %v1988, %v1986
      %v2038 = vpack.c.bf16 %v1992, %v1990
      %v2039 = vpack.c.bf16 %v1996, %v1994
      %v2040 = vpack.c.bf16 %v2000, %v1998
      %v2049 = vunpack.c.l.b16 %v1775
      %v2050 = vunpack.c.l.b16 %v1776
      %v2051 = vunpack.c.l.b16 %v1777
      %v2052 = vunpack.c.l.b16 %v1778
      %v2053 = vunpack.c.l.b16 %v1779
      %v2054 = vunpack.c.l.b16 %v1780
      %v2055 = vunpack.c.l.b16 %v1781
      %v2056 = vunpack.c.l.b16 %v1782
      %v2057 = vpack.c.b16 %v2050, %v2049
      %v2058 = vpack.c.b16 %v2052, %v2051
      %v2059 = vpack.c.b16 %v2054, %v2053
      %v2060 = vpack.c.b16 %v2056, %v2055
      %2065 = vmatpush.bf16.xpose.msra.mxu0 0
      %2066 = vmatpush.bf16.xpose.msra.mxu0 0
      %2067 = vmatpush.bf16.xpose.msra.mxu0 0
      %2068 = vmatpush.bf16.xpose.msra.mxu0 0
      %2069 = vmatpush.bf16.xpose.msra.mxu0 %v2060
      %2070 = vmatpush.bf16.xpose.msra.mxu0 %v2059
      %2071 = vmatpush.bf16.xpose.msra.mxu0 %v2058
      %2072 = vmatpush.bf16.xpose.msra.mxu0 %v2057
      %2073 = vmatmul.bf16.gmra.mxu0 %v2033
      %v2074 = vpop.f32.mrf.mxu0
      %v2075 = vadd.f32 0.0, %v2074
      %v2076 = vpop.f32.mrf.mxu0
      %v2077 = vadd.f32 0.0, %v2076
      %2078 = vmatmul.bf16.gmra.mxu0 %v2034
      %v2079 = vpop.f32.mrf.mxu0
      %v2080 = vadd.f32 0.0, %v2079
      %v2081 = vpop.f32.mrf.mxu0
      %v2082 = vadd.f32 0.0, %v2081
      %2083 = vmatmul.bf16.gmra.mxu0 %v2035
      %v2084 = vpop.f32.mrf.mxu0
      %v2085 = vadd.f32 0.0, %v2084
      %v2086 = vpop.f32.mrf.mxu0
      %v2087 = vadd.f32 0.0, %v2086
      %2088 = vmatmul.bf16.gmra.mxu0 %v2036
      %v2089 = vpop.f32.mrf.mxu0
      %v2090 = vadd.f32 0.0, %v2089
      %v2091 = vpop.f32.mrf.mxu0
      %v2092 = vadd.f32 0.0, %v2091
      %2093 = vmatmul.bf16.gmra.mxu0 %v2037
      %v2094 = vpop.f32.mrf.mxu0
      %v2095 = vadd.f32 0.0, %v2094
      %v2096 = vpop.f32.mrf.mxu0
      %v2097 = vadd.f32 0.0, %v2096
      %2098 = vmatmul.bf16.gmra.mxu0 %v2038
      %v2099 = vpop.f32.mrf.mxu0
      %v2100 = vadd.f32 0.0, %v2099
      %v2101 = vpop.f32.mrf.mxu0
      %v2102 = vadd.f32 0.0, %v2101
      %2103 = vmatmul.bf16.gmra.mxu0 %v2039
      %v2104 = vpop.f32.mrf.mxu0
      %v2105 = vadd.f32 0.0, %v2104
      %v2106 = vpop.f32.mrf.mxu0
      %v2107 = vadd.f32 0.0, %v2106
      %2108 = vmatmul.bf16.gmra.mxu0 %v2040
      %v2109 = vpop.f32.mrf.mxu0
      %v2110 = vadd.f32 0.0, %v2109
      %v2111 = vpop.f32.mrf.mxu0
      %v2112 = vadd.f32 0.0, %v2111
      %2113 = vdwg.mxu0
      %v2114 = vrcp.pop %v2002
      %v2115 = vrcp.pop %v2004
      %v2116 = vrcp.pop %v2006
      %v2117 = vrcp.pop %v2008
      %v2118 = vrcp.pop %v2010
      %v2119 = vrcp.pop %v2012
      %v2120 = vrcp.pop %v2014
      %v2121 = vrcp.pop %v2016
      %v2122 = vrcp.pop %v2018
      %v2123 = vrcp.pop %v2020
      %v2124 = vrcp.pop %v2022
      %v2125 = vrcp.pop %v2024
      %v2126 = vrcp.pop %v2026
      %v2127 = vrcp.pop %v2028
      %v2128 = vrcp.pop %v2030
      %v2129 = vrcp.pop %v2032
      %v2130 = vmul.f32 %v2075, %v2114
      %v2131 = vmul.f32 %v2077, %v2115
      %v2132 = vmul.f32 %v2080, %v2116
      %v2133 = vmul.f32 %v2082, %v2117
      %v2134 = vmul.f32 %v2085, %v2118
      %v2135 = vmul.f32 %v2087, %v2119
      %v2136 = vmul.f32 %v2090, %v2120
      %v2137 = vmul.f32 %v2092, %v2121
      %v2138 = vmul.f32 %v2095, %v2122
      %v2139 = vmul.f32 %v2097, %v2123
      %v2140 = vmul.f32 %v2100, %v2124
      %v2141 = vmul.f32 %v2102, %v2125
      %v2142 = vmul.f32 %v2105, %v2126
      %v2143 = vmul.f32 %v2107, %v2127
      %v2144 = vmul.f32 %v2110, %v2128
      %v2145 = vmul.f32 %v2112, %v2129
      %v2146 = vld [vmem:[%s3] sm:$0xf]
      %v2147 = vld [vmem:[%s3 + $0x4] sm:$0xf]
      %v2148 = vld [vmem:[%s3 + $0x8] sm:$0xf]
      %v2149 = vld [vmem:[%s3 + $0xc] sm:$0xf]
      %v2150 = vld [vmem:[%s3 + $0x10] sm:$0xf]
      %v2151 = vld [vmem:[%s3 + $0x14] sm:$0xf]
      %v2152 = vld [vmem:[%s3 + $0x18] sm:$0xf]
      %v2153 = vld [vmem:[%s3 + $0x1c] sm:$0xf]
      %v2154 = vld [vmem:[%s3 + $0x20] sm:$0xf]
      %v2155 = vld [vmem:[%s3 + $0x24] sm:$0xf]
      %v2156 = vld [vmem:[%s3 + $0x28] sm:$0xf]
      %v2157 = vld [vmem:[%s3 + $0x2c] sm:$0xf]
      %v2158 = vld [vmem:[%s3 + $0x30] sm:$0xf]
      %v2159 = vld [vmem:[%s3 + $0x34] sm:$0xf]
      %v2160 = vld [vmem:[%s3 + $0x38] sm:$0xf]
      %v2161 = vld [vmem:[%s3 + $0x3c] sm:$0xf]
      %v2162 = vpack.c.bf16 %v2131, %v2130
      %v2163 = vpack.c.bf16 %v2133, %v2132
      %v2164 = vpack.c.bf16 %v2135, %v2134
      %v2165 = vpack.c.bf16 %v2137, %v2136
      %v2166 = vpack.c.bf16 %v2139, %v2138
      %v2167 = vpack.c.bf16 %v2141, %v2140
      %v2168 = vpack.c.bf16 %v2143, %v2142
      %v2169 = vpack.c.bf16 %v2145, %v2144
      %v2186 = vunpack.c.l.b16 %v2146
      %v2187 = vunpack.c.l.b16 %v2147
      %v2188 = vunpack.c.l.b16 %v2148
      %v2189 = vunpack.c.l.b16 %v2149
      %v2190 = vunpack.c.l.b16 %v2150
      %v2191 = vunpack.c.l.b16 %v2151
      %v2192 = vunpack.c.l.b16 %v2152
      %v2193 = vunpack.c.l.b16 %v2153
      %v2194 = vunpack.c.l.b16 %v2154
      %v2195 = vunpack.c.l.b16 %v2155
      %v2196 = vunpack.c.l.b16 %v2156
      %v2197 = vunpack.c.l.b16 %v2157
      %v2198 = vunpack.c.l.b16 %v2158
      %v2199 = vunpack.c.l.b16 %v2159
      %v2200 = vunpack.c.l.b16 %v2160
      %v2201 = vunpack.c.l.b16 %v2161
      %v2202 = vpack.c.b16 %v2187, %v2186
      %v2203 = vpack.c.b16 %v2189, %v2188
      %v2204 = vpack.c.b16 %v2191, %v2190
      %v2205 = vpack.c.b16 %v2193, %v2192
      %v2206 = vpack.c.b16 %v2195, %v2194
      %v2207 = vpack.c.b16 %v2197, %v2196
      %v2208 = vpack.c.b16 %v2199, %v2198
      %v2209 = vpack.c.b16 %v2201, %v2200
      %v2211 = vsel %vm1847, %v2202, 0
      %v2214 = vsel %vm1847, %v2203, 0
      %v2217 = vsel %vm1847, %v2204, 0
      %v2220 = vsel %vm1847, %v2205, 0
      %v2223 = vsel %vm1847, %v2206, 0
      %v2226 = vsel %vm1847, %v2207, 0
      %v2229 = vsel %vm1847, %v2208, 0
      %v2232 = vsel %vm1847, %v2209, 0
      %v2235 = vsel %vm1847, %v2162, 0
      %v2238 = vsel %vm1847, %v2163, 0
      %v2241 = vsel %vm1847, %v2164, 0
      %v2244 = vsel %vm1847, %v2165, 0
      %v2247 = vsel %vm1847, %v2166, 0
      %v2250 = vsel %vm1847, %v2167, 0
      %v2253 = vsel %vm1847, %v2168, 0
      %v2256 = vsel %vm1847, %v2169, 0
      %2258 = vmatpush.bf16.xpose.msra.mxu0 %v2256
      %2259 = vmatpush.bf16.xpose.msra.mxu0 %v2253
      %2260 = vmatpush.bf16.xpose.msra.mxu0 %v2250
      %2261 = vmatpush.bf16.xpose.msra.mxu0 %v2247
      %2262 = vmatpush.bf16.xpose.msra.mxu0 %v2244
      %2263 = vmatpush.bf16.xpose.msra.mxu0 %v2241
      %2264 = vmatpush.bf16.xpose.msra.mxu0 %v2238
      %2265 = vmatpush.bf16.xpose.msra.mxu0 %v2235
      %2266 = vmatmul.bf16.gmra.mxu0 %v2211
      %v2267 = vpop.f32.mrf.mxu0
      %v2268 = vadd.f32 0.0, %v2267
      %v2269 = vpop.f32.mrf.mxu0
      %v2270 = vadd.f32 0.0, %v2269
      %2271 = vmatmul.bf16.gmra.mxu0 %v2214
      %v2272 = vpop.f32.mrf.mxu0
      %v2273 = vadd.f32 0.0, %v2272
      %v2274 = vpop.f32.mrf.mxu0
      %v2275 = vadd.f32 0.0, %v2274
      %2276 = vmatmul.bf16.gmra.mxu0 %v2217
      %v2277 = vpop.f32.mrf.mxu0
      %v2278 = vadd.f32 0.0, %v2277
      %v2279 = vpop.f32.mrf.mxu0
      %v2280 = vadd.f32 0.0, %v2279
      %2281 = vmatmul.bf16.gmra.mxu0 %v2220
      %v2282 = vpop.f32.mrf.mxu0
      %v2283 = vadd.f32 0.0, %v2282
      %v2284 = vpop.f32.mrf.mxu0
      %v2285 = vadd.f32 0.0, %v2284
      %2286 = vmatmul.bf16.gmra.mxu0 %v2223
      %v2287 = vpop.f32.mrf.mxu0
      %v2288 = vadd.f32 0.0, %v2287
      %v2289 = vpop.f32.mrf.mxu0
      %v2290 = vadd.f32 0.0, %v2289
      %2291 = vmatmul.bf16.gmra.mxu0 %v2226
      %v2292 = vpop.f32.mrf.mxu0
      %v2293 = vadd.f32 0.0, %v2292
      %v2294 = vpop.f32.mrf.mxu0
      %v2295 = vadd.f32 0.0, %v2294
      %2296 = vmatmul.bf16.gmra.mxu0 %v2229
      %v2297 = vpop.f32.mrf.mxu0
      %v2298 = vadd.f32 0.0, %v2297
      %v2299 = vpop.f32.mrf.mxu0
      %v2300 = vadd.f32 0.0, %v2299
      %2301 = vmatmul.bf16.gmra.mxu0 %v2232
      %v2302 = vpop.f32.mrf.mxu0
      %v2303 = vadd.f32 0.0, %v2302
      %v2304 = vpop.f32.mrf.mxu0
      %v2305 = vadd.f32 0.0, %v2304
      %2306 = vdwg.mxu0
      %2307 = vst [vmem:[#allocation3] sm:$0xff] %v2268
      %2308 = vst [vmem:[#allocation3 + $0x8] sm:$0xff] %v2270
      %2309 = vst [vmem:[#allocation3 + $0x10] sm:$0xff] %v2273
      %2310 = vst [vmem:[#allocation3 + $0x18] sm:$0xff] %v2275
      %2311 = vst [vmem:[#allocation3 + $0x20] sm:$0xff] %v2278
      %2312 = vst [vmem:[#allocation3 + $0x28] sm:$0xff] %v2280
      %2313 = vst [vmem:[#allocation3 + $0x30] sm:$0xff] %v2283
      %2314 = vst [vmem:[#allocation3 + $0x38] sm:$0xff] %v2285
      %2315 = vst [vmem:[#allocation3 + $0x40] sm:$0xff] %v2288
      %2316 = vst [vmem:[#allocation3 + $0x48] sm:$0xff] %v2290
      %2317 = vst [vmem:[#allocation3 + $0x50] sm:$0xff] %v2293
      %2318 = vst [vmem:[#allocation3 + $0x58] sm:$0xff] %v2295
      %2319 = vst [vmem:[#allocation3 + $0x60] sm:$0xff] %v2298
      %2320 = vst [vmem:[#allocation3 + $0x68] sm:$0xff] %v2300
      %2321 = vst [vmem:[#allocation3 + $0x70] sm:$0xff] %v2303
      %2322 = vst [vmem:[#allocation3 + $0x78] sm:$0xff] %v2305
      %v2323 = vld [vmem:[%s1758 + $0x20] sm:$0xf]
      %v2324 = vld [vmem:[%s1758 + $0x24] sm:$0xf]
      %v2325 = vld [vmem:[%s1758 + $0x28] sm:$0xf]
      %v2326 = vld [vmem:[%s1758 + $0x2c] sm:$0xf]
      %v2327 = vld [vmem:[%s1758 + $0x30] sm:$0xf]
      %v2328 = vld [vmem:[%s1758 + $0x34] sm:$0xf]
      %v2329 = vld [vmem:[%s1758 + $0x38] sm:$0xf]
      %v2330 = vld [vmem:[%s1758 + $0x3c] sm:$0xf]
      %v2331 = vld [vmem:[#allocation2 + $0xa0] sm:$0xf]
      %v2332 = vld [vmem:[#allocation2 + $0xa4] sm:$0xf]
      %v2333 = vld [vmem:[#allocation2 + $0xa8] sm:$0xf]
      %v2334 = vld [vmem:[#allocation2 + $0xac] sm:$0xf]
      %v2335 = vld [vmem:[#allocation2 + $0xb0] sm:$0xf]
      %v2336 = vld [vmem:[#allocation2 + $0xb4] sm:$0xf]
      %v2337 = vld [vmem:[#allocation2 + $0xb8] sm:$0xf]
      %v2338 = vld [vmem:[#allocation2 + $0xbc] sm:$0xf]
      %v2339 = vld [vmem:[#allocation2 + $0x120] sm:$0xf]
      %v2340 = vld [vmem:[#allocation2 + $0x124] sm:$0xf]
      %v2341 = vld [vmem:[#allocation2 + $0x128] sm:$0xf]
      %v2342 = vld [vmem:[#allocation2 + $0x12c] sm:$0xf]
      %v2343 = vld [vmem:[#allocation2 + $0x130] sm:$0xf]
      %v2344 = vld [vmem:[#allocation2 + $0x134] sm:$0xf]
      %v2345 = vld [vmem:[#allocation2 + $0x138] sm:$0xf]
      %v2346 = vld [vmem:[#allocation2 + $0x13c] sm:$0xf]
      %v2355 = vunpack.c.l.b16 %v2323
      %v2356 = vunpack.c.l.b16 %v2324
      %v2357 = vunpack.c.l.b16 %v2325
      %v2358 = vunpack.c.l.b16 %v2326
      %v2359 = vunpack.c.l.b16 %v2327
      %v2360 = vunpack.c.l.b16 %v2328
      %v2361 = vunpack.c.l.b16 %v2329
      %v2362 = vunpack.c.l.b16 %v2330
      %v2363 = vpack.c.b16 %v2356, %v2355
      %v2364 = vpack.c.b16 %v2358, %v2357
      %v2365 = vpack.c.b16 %v2360, %v2359
      %v2366 = vpack.c.b16 %v2362, %v2361
      %2371 = vxpose.xlu0.c.b16.start [1/8] %v2363, 128
      %2372 = vxpose.xlu0.c.b16.cont [2/8] %v2364, 128
      %2373 = vxpose.xlu0.c.b16.cont [3/8] %v2365, 128
      %2374 = vxpose.xlu0.c.b16.cont [4/8] %v2366, 128
      %2375 = vxpose.xlu0.c.b16.cont [5/8] 0, 128
      %2376 = vxpose.xlu0.c.b16.cont [6/8] 0, 128
      %2377 = vxpose.xlu0.c.b16.cont [7/8] 0, 128
      %2378 = vxpose.xlu0.c.b16.end [8/8] 0, 128
      %v2379 = vpop.trf.xlu0
      %v2380 = vpop.trf.xlu0
      %v2381 = vpop.trf.xlu0
      %v2382 = vpop.trf.xlu0
      %v2383 = vpop.trf.xlu0
      %v2384 = vpop.trf.xlu0
      %v2385 = vpop.trf.xlu0
      %v2386 = vpop.trf.xlu0
      %v2395 = vunpack.c.l.b16 %v2331
      %v2396 = vunpack.c.l.b16 %v2332
      %v2397 = vunpack.c.l.b16 %v2333
      %v2398 = vunpack.c.l.b16 %v2334
      %v2399 = vunpack.c.l.b16 %v2335
      %v2400 = vunpack.c.l.b16 %v2336
      %v2401 = vunpack.c.l.b16 %v2337
      %v2402 = vunpack.c.l.b16 %v2338
      %v2403 = vpack.c.b16 %v2396, %v2395
      %v2404 = vpack.c.b16 %v2398, %v2397
      %v2405 = vpack.c.b16 %v2400, %v2399
      %v2406 = vpack.c.b16 %v2402, %v2401
      %v2412 = vsel %vm1847, %v2379, 0
      %v2415 = vsel %vm1847, %v2380, 0
      %v2418 = vsel %vm1847, %v2381, 0
      %v2421 = vsel %vm1847, %v2382, 0
      %v2424 = vsel %vm1847, %v2383, 0
      %v2427 = vsel %vm1847, %v2384, 0
      %v2430 = vsel %vm1847, %v2385, 0
      %v2433 = vsel %vm1847, %v2386, 0
      %2435 = vmatpush.bf16.msra.mxu0 0
      %2436 = vmatpush.bf16.msra.mxu0 0
      %2437 = vmatpush.bf16.msra.mxu0 0
      %2438 = vmatpush.bf16.msra.mxu0 0
      %2439 = vmatpush.bf16.msra.mxu0 %v2406
      %2440 = vmatpush.bf16.msra.mxu0 %v2405
      %2441 = vmatpush.bf16.msra.mxu0 %v2404
      %2442 = vmatpush.bf16.msra.mxu0 %v2403
      %2443 = vmatmul.bf16.gmra.mxu0 %v2412
      %v2444 = vpop.f32.mrf.mxu0
      %v2445 = vadd.f32 0.0, %v2444
      %v2446 = vpop.f32.mrf.mxu0
      %v2447 = vadd.f32 0.0, %v2446
      %2448 = vmatmul.bf16.gmra.mxu0 %v2415
      %v2449 = vpop.f32.mrf.mxu0
      %v2450 = vadd.f32 0.0, %v2449
      %v2451 = vpop.f32.mrf.mxu0
      %v2452 = vadd.f32 0.0, %v2451
      %2453 = vmatmul.bf16.gmra.mxu0 %v2418
      %v2454 = vpop.f32.mrf.mxu0
      %v2455 = vadd.f32 0.0, %v2454
      %v2456 = vpop.f32.mrf.mxu0
      %v2457 = vadd.f32 0.0, %v2456
      %2458 = vmatmul.bf16.gmra.mxu0 %v2421
      %v2459 = vpop.f32.mrf.mxu0
      %v2460 = vadd.f32 0.0, %v2459
      %v2461 = vpop.f32.mrf.mxu0
      %v2462 = vadd.f32 0.0, %v2461
      %2463 = vmatmul.bf16.gmra.mxu0 %v2424
      %v2464 = vpop.f32.mrf.mxu0
      %v2465 = vadd.f32 0.0, %v2464
      %v2466 = vpop.f32.mrf.mxu0
      %v2467 = vadd.f32 0.0, %v2466
      %2468 = vmatmul.bf16.gmra.mxu0 %v2427
      %v2469 = vpop.f32.mrf.mxu0
      %v2470 = vadd.f32 0.0, %v2469
      %v2471 = vpop.f32.mrf.mxu0
      %v2472 = vadd.f32 0.0, %v2471
      %2473 = vmatmul.bf16.gmra.mxu0 %v2430
      %v2474 = vpop.f32.mrf.mxu0
      %v2475 = vadd.f32 0.0, %v2474
      %v2476 = vpop.f32.mrf.mxu0
      %v2477 = vadd.f32 0.0, %v2476
      %2478 = vmatmul.bf16.gmra.mxu0 %v2433
      %v2479 = vpop.f32.mrf.mxu0
      %v2480 = vadd.f32 0.0, %v2479
      %v2481 = vpop.f32.mrf.mxu0
      %v2482 = vadd.f32 0.0, %v2481
      %2483 = vdwg.mxu0
      %2484 = vmax.xlane.f32.xlu0 %v2445
      %v2485 = vpop.xlane.xlu0 %2484
      %2486 = vmax.xlane.f32.xlu0 %v2447
      %v2487 = vpop.xlane.xlu0 %2486
      %2488 = vmax.xlane.f32.xlu0 %v2450
      %v2489 = vpop.xlane.xlu0 %2488
      %2490 = vmax.xlane.f32.xlu0 %v2452
      %v2491 = vpop.xlane.xlu0 %2490
      %2492 = vmax.xlane.f32.xlu0 %v2455
      %v2493 = vpop.xlane.xlu0 %2492
      %2494 = vmax.xlane.f32.xlu0 %v2457
      %v2495 = vpop.xlane.xlu0 %2494
      %2496 = vmax.xlane.f32.xlu0 %v2460
      %v2497 = vpop.xlane.xlu0 %2496
      %2498 = vmax.xlane.f32.xlu0 %v2462
      %v2499 = vpop.xlane.xlu0 %2498
      %2500 = vmax.xlane.f32.xlu0 %v2465
      %v2501 = vpop.xlane.xlu0 %2500
      %2502 = vmax.xlane.f32.xlu0 %v2467
      %v2503 = vpop.xlane.xlu0 %2502
      %2504 = vmax.xlane.f32.xlu0 %v2470
      %v2505 = vpop.xlane.xlu0 %2504
      %2506 = vmax.xlane.f32.xlu0 %v2472
      %v2507 = vpop.xlane.xlu0 %2506
      %2508 = vmax.xlane.f32.xlu0 %v2475
      %v2509 = vpop.xlane.xlu0 %2508
      %2510 = vmax.xlane.f32.xlu0 %v2477
      %v2511 = vpop.xlane.xlu0 %2510
      %2512 = vmax.xlane.f32.xlu0 %v2480
      %v2513 = vpop.xlane.xlu0 %2512
      %2514 = vmax.xlane.f32.xlu0 %v2482
      %v2515 = vpop.xlane.xlu0 %2514
      %v2516 = vsub.f32 %v2445, %v2485
      %v2517 = vsub.f32 %v2447, %v2487
      %v2518 = vsub.f32 %v2450, %v2489
      %v2519 = vsub.f32 %v2452, %v2491
      %v2520 = vsub.f32 %v2455, %v2493
      %v2521 = vsub.f32 %v2457, %v2495
      %v2522 = vsub.f32 %v2460, %v2497
      %v2523 = vsub.f32 %v2462, %v2499
      %v2524 = vsub.f32 %v2465, %v2501
      %v2525 = vsub.f32 %v2467, %v2503
      %v2526 = vsub.f32 %v2470, %v2505
      %v2527 = vsub.f32 %v2472, %v2507
      %v2528 = vsub.f32 %v2475, %v2509
      %v2529 = vsub.f32 %v2477, %v2511
      %v2530 = vsub.f32 %v2480, %v2513
      %v2531 = vsub.f32 %v2482, %v2515
      %v2532 = vmul.f32 %v2516, 1.442695
      %v2533 = vpow.pop %v2532
      %v2534 = vmul.f32 %v2517, 1.442695
      %v2535 = vpow.pop %v2534
      %v2536 = vmul.f32 %v2518, 1.442695
      %v2537 = vpow.pop %v2536
      %v2538 = vmul.f32 %v2519, 1.442695
      %v2539 = vpow.pop %v2538
      %v2540 = vmul.f32 %v2520, 1.442695
      %v2541 = vpow.pop %v2540
      %v2542 = vmul.f32 %v2521, 1.442695
      %v2543 = vpow.pop %v2542
      %v2544 = vmul.f32 %v2522, 1.442695
      %v2545 = vpow.pop %v2544
      %v2546 = vmul.f32 %v2523, 1.442695
      %v2547 = vpow.pop %v2546
      %v2548 = vmul.f32 %v2524, 1.442695
      %v2549 = vpow.pop %v2548
      %v2550 = vmul.f32 %v2525, 1.442695
      %v2551 = vpow.pop %v2550
      %v2552 = vmul.f32 %v2526, 1.442695
      %v2553 = vpow.pop %v2552
      %v2554 = vmul.f32 %v2527, 1.442695
      %v2555 = vpow.pop %v2554
      %v2556 = vmul.f32 %v2528, 1.442695
      %v2557 = vpow.pop %v2556
      %v2558 = vmul.f32 %v2529, 1.442695
      %v2559 = vpow.pop %v2558
      %v2560 = vmul.f32 %v2530, 1.442695
      %v2561 = vpow.pop %v2560
      %v2562 = vmul.f32 %v2531, 1.442695
      %v2563 = vpow.pop %v2562
      %2564 = vadd.xlane.f32.xlu0 %v2533
      %v2565 = vpop.xlane.xlu0 %2564
      %2566 = vadd.xlane.f32.xlu0 %v2535
      %v2567 = vpop.xlane.xlu0 %2566
      %2568 = vadd.xlane.f32.xlu0 %v2537
      %v2569 = vpop.xlane.xlu0 %2568
      %2570 = vadd.xlane.f32.xlu0 %v2539
      %v2571 = vpop.xlane.xlu0 %2570
      %2572 = vadd.xlane.f32.xlu0 %v2541
      %v2573 = vpop.xlane.xlu0 %2572
      %2574 = vadd.xlane.f32.xlu0 %v2543
      %v2575 = vpop.xlane.xlu0 %2574
      %2576 = vadd.xlane.f32.xlu0 %v2545
      %v2577 = vpop.xlane.xlu0 %2576
      %2578 = vadd.xlane.f32.xlu0 %v2547
      %v2579 = vpop.xlane.xlu0 %2578
      %2580 = vadd.xlane.f32.xlu0 %v2549
      %v2581 = vpop.xlane.xlu0 %2580
      %2582 = vadd.xlane.f32.xlu0 %v2551
      %v2583 = vpop.xlane.xlu0 %2582
      %2584 = vadd.xlane.f32.xlu0 %v2553
      %v2585 = vpop.xlane.xlu0 %2584
      %2586 = vadd.xlane.f32.xlu0 %v2555
      %v2587 = vpop.xlane.xlu0 %2586
      %2588 = vadd.xlane.f32.xlu0 %v2557
      %v2589 = vpop.xlane.xlu0 %2588
      %2590 = vadd.xlane.f32.xlu0 %v2559
      %v2591 = vpop.xlane.xlu0 %2590
      %2592 = vadd.xlane.f32.xlu0 %v2561
      %v2593 = vpop.xlane.xlu0 %2592
      %2594 = vadd.xlane.f32.xlu0 %v2563
      %v2595 = vpop.xlane.xlu0 %2594
      %v2596 = vpack.c.bf16 %v2535, %v2533
      %v2597 = vpack.c.bf16 %v2539, %v2537
      %v2598 = vpack.c.bf16 %v2543, %v2541
      %v2599 = vpack.c.bf16 %v2547, %v2545
      %v2600 = vpack.c.bf16 %v2551, %v2549
      %v2601 = vpack.c.bf16 %v2555, %v2553
      %v2602 = vpack.c.bf16 %v2559, %v2557
      %v2603 = vpack.c.bf16 %v2563, %v2561
      %v2612 = vunpack.c.l.b16 %v2339
      %v2613 = vunpack.c.l.b16 %v2340
      %v2614 = vunpack.c.l.b16 %v2341
      %v2615 = vunpack.c.l.b16 %v2342
      %v2616 = vunpack.c.l.b16 %v2343
      %v2617 = vunpack.c.l.b16 %v2344
      %v2618 = vunpack.c.l.b16 %v2345
      %v2619 = vunpack.c.l.b16 %v2346
      %v2620 = vpack.c.b16 %v2613, %v2612
      %v2621 = vpack.c.b16 %v2615, %v2614
      %v2622 = vpack.c.b16 %v2617, %v2616
      %v2623 = vpack.c.b16 %v2619, %v2618
      %2628 = vmatpush.bf16.xpose.msra.mxu0 0
      %2629 = vmatpush.bf16.xpose.msra.mxu0 0
      %2630 = vmatpush.bf16.xpose.msra.mxu0 0
      %2631 = vmatpush.bf16.xpose.msra.mxu0 0
      %2632 = vmatpush.bf16.xpose.msra.mxu0 %v2623
      %2633 = vmatpush.bf16.xpose.msra.mxu0 %v2622
      %2634 = vmatpush.bf16.xpose.msra.mxu0 %v2621
      %2635 = vmatpush.bf16.xpose.msra.mxu0 %v2620
      %2636 = vmatmul.bf16.gmra.mxu0 %v2596
      %v2637 = vpop.f32.mrf.mxu0
      %v2638 = vadd.f32 0.0, %v2637
      %v2639 = vpop.f32.mrf.mxu0
      %v2640 = vadd.f32 0.0, %v2639
      %2641 = vmatmul.bf16.gmra.mxu0 %v2597
      %v2642 = vpop.f32.mrf.mxu0
      %v2643 = vadd.f32 0.0, %v2642
      %v2644 = vpop.f32.mrf.mxu0
      %v2645 = vadd.f32 0.0, %v2644
      %2646 = vmatmul.bf16.gmra.mxu0 %v2598
      %v2647 = vpop.f32.mrf.mxu0
      %v2648 = vadd.f32 0.0, %v2647
      %v2649 = vpop.f32.mrf.mxu0
      %v2650 = vadd.f32 0.0, %v2649
      %2651 = vmatmul.bf16.gmra.mxu0 %v2599
      %v2652 = vpop.f32.mrf.mxu0
      %v2653 = vadd.f32 0.0, %v2652
      %v2654 = vpop.f32.mrf.mxu0
      %v2655 = vadd.f32 0.0, %v2654
      %2656 = vmatmul.bf16.gmra.mxu0 %v2600
      %v2657 = vpop.f32.mrf.mxu0
      %v2658 = vadd.f32 0.0, %v2657
      %v2659 = vpop.f32.mrf.mxu0
      %v2660 = vadd.f32 0.0, %v2659
      %2661 = vmatmul.bf16.gmra.mxu0 %v2601
      %v2662 = vpop.f32.mrf.mxu0
      %v2663 = vadd.f32 0.0, %v2662
      %v2664 = vpop.f32.mrf.mxu0
      %v2665 = vadd.f32 0.0, %v2664
      %2666 = vmatmul.bf16.gmra.mxu0 %v2602
      %v2667 = vpop.f32.mrf.mxu0
      %v2668 = vadd.f32 0.0, %v2667
      %v2669 = vpop.f32.mrf.mxu0
      %v2670 = vadd.f32 0.0, %v2669
      %2671 = vmatmul.bf16.gmra.mxu0 %v2603
      %v2672 = vpop.f32.mrf.mxu0
      %v2673 = vadd.f32 0.0, %v2672
      %v2674 = vpop.f32.mrf.mxu0
      %v2675 = vadd.f32 0.0, %v2674
      %2676 = vdwg.mxu0
      %v2677 = vrcp.pop %v2565
      %v2678 = vrcp.pop %v2567
      %v2679 = vrcp.pop %v2569
      %v2680 = vrcp.pop %v2571
      %v2681 = vrcp.pop %v2573
      %v2682 = vrcp.pop %v2575
      %v2683 = vrcp.pop %v2577
      %v2684 = vrcp.pop %v2579
      %v2685 = vrcp.pop %v2581
      %v2686 = vrcp.pop %v2583
      %v2687 = vrcp.pop %v2585
      %v2688 = vrcp.pop %v2587
      %v2689 = vrcp.pop %v2589
      %v2690 = vrcp.pop %v2591
      %v2691 = vrcp.pop %v2593
      %v2692 = vrcp.pop %v2595
      %v2693 = vmul.f32 %v2638, %v2677
      %v2694 = vmul.f32 %v2640, %v2678
      %v2695 = vmul.f32 %v2643, %v2679
      %v2696 = vmul.f32 %v2645, %v2680
      %v2697 = vmul.f32 %v2648, %v2681
      %v2698 = vmul.f32 %v2650, %v2682
      %v2699 = vmul.f32 %v2653, %v2683
      %v2700 = vmul.f32 %v2655, %v2684
      %v2701 = vmul.f32 %v2658, %v2685
      %v2702 = vmul.f32 %v2660, %v2686
      %v2703 = vmul.f32 %v2663, %v2687
      %v2704 = vmul.f32 %v2665, %v2688
      %v2705 = vmul.f32 %v2668, %v2689
      %v2706 = vmul.f32 %v2670, %v2690
      %v2707 = vmul.f32 %v2673, %v2691
      %v2708 = vmul.f32 %v2675, %v2692
      %s2709 = scalar_lea.vmem %s3, 64
      %v2710 = vld [vmem:[%s2709] sm:$0xf]
      %v2711 = vld [vmem:[%s2709 + $0x4] sm:$0xf]
      %v2712 = vld [vmem:[%s2709 + $0x8] sm:$0xf]
      %v2713 = vld [vmem:[%s2709 + $0xc] sm:$0xf]
      %v2714 = vld [vmem:[%s2709 + $0x10] sm:$0xf]
      %v2715 = vld [vmem:[%s2709 + $0x14] sm:$0xf]
      %v2716 = vld [vmem:[%s2709 + $0x18] sm:$0xf]
      %v2717 = vld [vmem:[%s2709 + $0x1c] sm:$0xf]
      %v2718 = vld [vmem:[%s2709 + $0x20] sm:$0xf]
      %v2719 = vld [vmem:[%s2709 + $0x24] sm:$0xf]
      %v2720 = vld [vmem:[%s2709 + $0x28] sm:$0xf]
      %v2721 = vld [vmem:[%s2709 + $0x2c] sm:$0xf]
      %v2722 = vld [vmem:[%s2709 + $0x30] sm:$0xf]
      %v2723 = vld [vmem:[%s2709 + $0x34] sm:$0xf]
      %v2724 = vld [vmem:[%s2709 + $0x38] sm:$0xf]
      %v2725 = vld [vmem:[%s2709 + $0x3c] sm:$0xf]
      %v2726 = vpack.c.bf16 %v2694, %v2693
      %v2727 = vpack.c.bf16 %v2696, %v2695
      %v2728 = vpack.c.bf16 %v2698, %v2697
      %v2729 = vpack.c.bf16 %v2700, %v2699
      %v2730 = vpack.c.bf16 %v2702, %v2701
      %v2731 = vpack.c.bf16 %v2704, %v2703
      %v2732 = vpack.c.bf16 %v2706, %v2705
      %v2733 = vpack.c.bf16 %v2708, %v2707
      %v2750 = vunpack.c.l.b16 %v2710
      %v2751 = vunpack.c.l.b16 %v2711
      %v2752 = vunpack.c.l.b16 %v2712
      %v2753 = vunpack.c.l.b16 %v2713
      %v2754 = vunpack.c.l.b16 %v2714
      %v2755 = vunpack.c.l.b16 %v2715
      %v2756 = vunpack.c.l.b16 %v2716
      %v2757 = vunpack.c.l.b16 %v2717
      %v2758 = vunpack.c.l.b16 %v2718
      %v2759 = vunpack.c.l.b16 %v2719
      %v2760 = vunpack.c.l.b16 %v2720
      %v2761 = vunpack.c.l.b16 %v2721
      %v2762 = vunpack.c.l.b16 %v2722
      %v2763 = vunpack.c.l.b16 %v2723
      %v2764 = vunpack.c.l.b16 %v2724
      %v2765 = vunpack.c.l.b16 %v2725
      %v2766 = vpack.c.b16 %v2751, %v2750
      %v2767 = vpack.c.b16 %v2753, %v2752
      %v2768 = vpack.c.b16 %v2755, %v2754
      %v2769 = vpack.c.b16 %v2757, %v2756
      %v2770 = vpack.c.b16 %v2759, %v2758
      %v2771 = vpack.c.b16 %v2761, %v2760
      %v2772 = vpack.c.b16 %v2763, %v2762
      %v2773 = vpack.c.b16 %v2765, %v2764
      %v2775 = vsel %vm1847, %v2766, 0
      %v2778 = vsel %vm1847, %v2767, 0
      %v2781 = vsel %vm1847, %v2768, 0
      %v2784 = vsel %vm1847, %v2769, 0
      %v2787 = vsel %vm1847, %v2770, 0
      %v2790 = vsel %vm1847, %v2771, 0
      %v2793 = vsel %vm1847, %v2772, 0
      %v2796 = vsel %vm1847, %v2773, 0
      %v2799 = vsel %vm1847, %v2726, 0
      %v2802 = vsel %vm1847, %v2727, 0
      %v2805 = vsel %vm1847, %v2728, 0
      %v2808 = vsel %vm1847, %v2729, 0
      %v2811 = vsel %vm1847, %v2730, 0
      %v2814 = vsel %vm1847, %v2731, 0
      %v2817 = vsel %vm1847, %v2732, 0
      %v2820 = vsel %vm1847, %v2733, 0
      %2822 = vmatpush.bf16.xpose.msra.mxu0 %v2820
      %2823 = vmatpush.bf16.xpose.msra.mxu0 %v2817
      %2824 = vmatpush.bf16.xpose.msra.mxu0 %v2814
      %2825 = vmatpush.bf16.xpose.msra.mxu0 %v2811
      %2826 = vmatpush.bf16.xpose.msra.mxu0 %v2808
      %2827 = vmatpush.bf16.xpose.msra.mxu0 %v2805
      %2828 = vmatpush.bf16.xpose.msra.mxu0 %v2802
      %2829 = vmatpush.bf16.xpose.msra.mxu0 %v2799
      %2830 = vmatmul.bf16.gmra.mxu0 %v2775
      %v2831 = vpop.f32.mrf.mxu0
      %v2832 = vadd.f32 0.0, %v2831
      %v2833 = vpop.f32.mrf.mxu0
      %v2834 = vadd.f32 0.0, %v2833
      %2835 = vmatmul.bf16.gmra.mxu0 %v2778
      %v2836 = vpop.f32.mrf.mxu0
      %v2837 = vadd.f32 0.0, %v2836
      %v2838 = vpop.f32.mrf.mxu0
      %v2839 = vadd.f32 0.0, %v2838
      %2840 = vmatmul.bf16.gmra.mxu0 %v2781
      %v2841 = vpop.f32.mrf.mxu0
      %v2842 = vadd.f32 0.0, %v2841
      %v2843 = vpop.f32.mrf.mxu0
      %v2844 = vadd.f32 0.0, %v2843
      %2845 = vmatmul.bf16.gmra.mxu0 %v2784
      %v2846 = vpop.f32.mrf.mxu0
      %v2847 = vadd.f32 0.0, %v2846
      %v2848 = vpop.f32.mrf.mxu0
      %v2849 = vadd.f32 0.0, %v2848
      %2850 = vmatmul.bf16.gmra.mxu0 %v2787
      %v2851 = vpop.f32.mrf.mxu0
      %v2852 = vadd.f32 0.0, %v2851
      %v2853 = vpop.f32.mrf.mxu0
      %v2854 = vadd.f32 0.0, %v2853
      %2855 = vmatmul.bf16.gmra.mxu0 %v2790
      %v2856 = vpop.f32.mrf.mxu0
      %v2857 = vadd.f32 0.0, %v2856
      %v2858 = vpop.f32.mrf.mxu0
      %v2859 = vadd.f32 0.0, %v2858
      %2860 = vmatmul.bf16.gmra.mxu0 %v2793
      %v2861 = vpop.f32.mrf.mxu0
      %v2862 = vadd.f32 0.0, %v2861
      %v2863 = vpop.f32.mrf.mxu0
      %v2864 = vadd.f32 0.0, %v2863
      %2865 = vmatmul.bf16.gmra.mxu0 %v2796
      %v2866 = vpop.f32.mrf.mxu0
      %v2867 = vadd.f32 0.0, %v2866
      %v2868 = vpop.f32.mrf.mxu0
      %v2869 = vadd.f32 0.0, %v2868
      %2870 = vdwg.mxu0
      %v2871 = vld [vmem:[#allocation3] sm:$0xff]
      %v2872 = vld [vmem:[#allocation3 + $0x8] sm:$0xff]
      %v2873 = vld [vmem:[#allocation3 + $0x10] sm:$0xff]
      %v2874 = vld [vmem:[#allocation3 + $0x18] sm:$0xff]
      %v2875 = vld [vmem:[#allocation3 + $0x20] sm:$0xff]
      %v2876 = vld [vmem:[#allocation3 + $0x28] sm:$0xff]
      %v2877 = vld [vmem:[#allocation3 + $0x30] sm:$0xff]
      %v2878 = vld [vmem:[#allocation3 + $0x38] sm:$0xff]
      %v2879 = vld [vmem:[#allocation3 + $0x40] sm:$0xff]
      %v2880 = vld [vmem:[#allocation3 + $0x48] sm:$0xff]
      %v2881 = vld [vmem:[#allocation3 + $0x50] sm:$0xff]
      %v2882 = vld [vmem:[#allocation3 + $0x58] sm:$0xff]
      %v2883 = vld [vmem:[#allocation3 + $0x60] sm:$0xff]
      %v2884 = vld [vmem:[#allocation3 + $0x68] sm:$0xff]
      %v2885 = vld [vmem:[#allocation3 + $0x70] sm:$0xff]
      %v2886 = vld [vmem:[#allocation3 + $0x78] sm:$0xff]
      %v2887 = vadd.f32 %v2871, %v2832
      %v2888 = vadd.f32 %v2872, %v2834
      %v2889 = vadd.f32 %v2873, %v2837
      %v2890 = vadd.f32 %v2874, %v2839
      %v2891 = vadd.f32 %v2875, %v2842
      %v2892 = vadd.f32 %v2876, %v2844
      %v2893 = vadd.f32 %v2877, %v2847
      %v2894 = vadd.f32 %v2878, %v2849
      %v2895 = vadd.f32 %v2879, %v2852
      %v2896 = vadd.f32 %v2880, %v2854
      %v2897 = vadd.f32 %v2881, %v2857
      %v2898 = vadd.f32 %v2882, %v2859
      %v2899 = vadd.f32 %v2883, %v2862
      %v2900 = vadd.f32 %v2884, %v2864
      %v2901 = vadd.f32 %v2885, %v2867
      %v2902 = vadd.f32 %v2886, %v2869
      %2903 = vst [vmem:[#allocation3] sm:$0xff] %v2887
      %2904 = vst [vmem:[#allocation3 + $0x8] sm:$0xff] %v2888
      %2905 = vst [vmem:[#allocation3 + $0x10] sm:$0xff] %v2889
      %2906 = vst [vmem:[#allocation3 + $0x18] sm:$0xff] %v2890
      %2907 = vst [vmem:[#allocation3 + $0x20] sm:$0xff] %v2891
      %2908 = vst [vmem:[#allocation3 + $0x28] sm:$0xff] %v2892
      %2909 = vst [vmem:[#allocation3 + $0x30] sm:$0xff] %v2893
      %2910 = vst [vmem:[#allocation3 + $0x38] sm:$0xff] %v2894
      %2911 = vst [vmem:[#allocation3 + $0x40] sm:$0xff] %v2895
      %2912 = vst [vmem:[#allocation3 + $0x48] sm:$0xff] %v2896
      %2913 = vst [vmem:[#allocation3 + $0x50] sm:$0xff] %v2897
      %2914 = vst [vmem:[#allocation3 + $0x58] sm:$0xff] %v2898
      %2915 = vst [vmem:[#allocation3 + $0x60] sm:$0xff] %v2899
      %2916 = vst [vmem:[#allocation3 + $0x68] sm:$0xff] %v2900
      %2917 = vst [vmem:[#allocation3 + $0x70] sm:$0xff] %v2901
      %2918 = vst [vmem:[#allocation3 + $0x78] sm:$0xff] %v2902
      %v2919 = vld [vmem:[%s1758 + $0x40] sm:$0xf]
      %v2920 = vld [vmem:[%s1758 + $0x44] sm:$0xf]
      %v2921 = vld [vmem:[%s1758 + $0x48] sm:$0xf]
      %v2922 = vld [vmem:[%s1758 + $0x4c] sm:$0xf]
      %v2923 = vld [vmem:[%s1758 + $0x50] sm:$0xf]
      %v2924 = vld [vmem:[%s1758 + $0x54] sm:$0xf]
      %v2925 = vld [vmem:[%s1758 + $0x58] sm:$0xf]
      %v2926 = vld [vmem:[%s1758 + $0x5c] sm:$0xf]
      %v2927 = vld [vmem:[#allocation2 + $0xc0] sm:$0xf]
      %v2928 = vld [vmem:[#allocation2 + $0xc4] sm:$0xf]
      %v2929 = vld [vmem:[#allocation2 + $0xc8] sm:$0xf]
      %v2930 = vld [vmem:[#allocation2 + $0xcc] sm:$0xf]
      %v2931 = vld [vmem:[#allocation2 + $0xd0] sm:$0xf]
      %v2932 = vld [vmem:[#allocation2 + $0xd4] sm:$0xf]
      %v2933 = vld [vmem:[#allocation2 + $0xd8] sm:$0xf]
      %v2934 = vld [vmem:[#allocation2 + $0xdc] sm:$0xf]
      %v2935 = vld [vmem:[#allocation2 + $0x140] sm:$0xf]
      %v2936 = vld [vmem:[#allocation2 + $0x144] sm:$0xf]
      %v2937 = vld [vmem:[#allocation2 + $0x148] sm:$0xf]
      %v2938 = vld [vmem:[#allocation2 + $0x14c] sm:$0xf]
      %v2939 = vld [vmem:[#allocation2 + $0x150] sm:$0xf]
      %v2940 = vld [vmem:[#allocation2 + $0x154] sm:$0xf]
      %v2941 = vld [vmem:[#allocation2 + $0x158] sm:$0xf]
      %v2942 = vld [vmem:[#allocation2 + $0x15c] sm:$0xf]
      %v2951 = vunpack.c.l.b16 %v2919
      %v2952 = vunpack.c.l.b16 %v2920
      %v2953 = vunpack.c.l.b16 %v2921
      %v2954 = vunpack.c.l.b16 %v2922
      %v2955 = vunpack.c.l.b16 %v2923
      %v2956 = vunpack.c.l.b16 %v2924
      %v2957 = vunpack.c.l.b16 %v2925
      %v2958 = vunpack.c.l.b16 %v2926
      %v2959 = vpack.c.b16 %v2952, %v2951
      %v2960 = vpack.c.b16 %v2954, %v2953
      %v2961 = vpack.c.b16 %v2956, %v2955
      %v2962 = vpack.c.b16 %v2958, %v2957
      %2967 = vxpose.xlu0.c.b16.start [1/8] %v2959, 128
      %2968 = vxpose.xlu0.c.b16.cont [2/8] %v2960, 128
      %2969 = vxpose.xlu0.c.b16.cont [3/8] %v2961, 128
      %2970 = vxpose.xlu0.c.b16.cont [4/8] %v2962, 128
      %2971 = vxpose.xlu0.c.b16.cont [5/8] 0, 128
      %2972 = vxpose.xlu0.c.b16.cont [6/8] 0, 128
      %2973 = vxpose.xlu0.c.b16.cont [7/8] 0, 128
      %2974 = vxpose.xlu0.c.b16.end [8/8] 0, 128
      %v2975 = vpop.trf.xlu0
      %v2976 = vpop.trf.xlu0
      %v2977 = vpop.trf.xlu0
      %v2978 = vpop.trf.xlu0
      %v2979 = vpop.trf.xlu0
      %v2980 = vpop.trf.xlu0
      %v2981 = vpop.trf.xlu0
      %v2982 = vpop.trf.xlu0
      %v2991 = vunpack.c.l.b16 %v2927
      %v2992 = vunpack.c.l.b16 %v2928
      %v2993 = vunpack.c.l.b16 %v2929
      %v2994 = vunpack.c.l.b16 %v2930
      %v2995 = vunpack.c.l.b16 %v2931
      %v2996 = vunpack.c.l.b16 %v2932
      %v2997 = vunpack.c.l.b16 %v2933
      %v2998 = vunpack.c.l.b16 %v2934
      %v2999 = vpack.c.b16 %v2992, %v2991
      %v3000 = vpack.c.b16 %v2994, %v2993
      %v3001 = vpack.c.b16 %v2996, %v2995
      %v3002 = vpack.c.b16 %v2998, %v2997
      %v3008 = vsel %vm1847, %v2975, 0
      %v3011 = vsel %vm1847, %v2976, 0
      %v3014 = vsel %vm1847, %v2977, 0
      %v3017 = vsel %vm1847, %v2978, 0
      %v3020 = vsel %vm1847, %v2979, 0
      %v3023 = vsel %vm1847, %v2980, 0
      %v3026 = vsel %vm1847, %v2981, 0
      %v3029 = vsel %vm1847, %v2982, 0
      %3031 = vmatpush.bf16.msra.mxu0 0
      %3032 = vmatpush.bf16.msra.mxu0 0
      %3033 = vmatpush.bf16.msra.mxu0 0
      %3034 = vmatpush.bf16.msra.mxu0 0
      %3035 = vmatpush.bf16.msra.mxu0 %v3002
      %3036 = vmatpush.bf16.msra.mxu0 %v3001
      %3037 = vmatpush.bf16.msra.mxu0 %v3000
      %3038 = vmatpush.bf16.msra.mxu0 %v2999
      %3039 = vmatmul.bf16.gmra.mxu0 %v3008
      %v3040 = vpop.f32.mrf.mxu0
      %v3041 = vadd.f32 0.0, %v3040
      %v3042 = vpop.f32.mrf.mxu0
      %v3043 = vadd.f32 0.0, %v3042
      %3044 = vmatmul.bf16.gmra.mxu0 %v3011
      %v3045 = vpop.f32.mrf.mxu0
      %v3046 = vadd.f32 0.0, %v3045
      %v3047 = vpop.f32.mrf.mxu0
      %v3048 = vadd.f32 0.0, %v3047
      %3049 = vmatmul.bf16.gmra.mxu0 %v3014
      %v3050 = vpop.f32.mrf.mxu0
      %v3051 = vadd.f32 0.0, %v3050
      %v3052 = vpop.f32.mrf.mxu0
      %v3053 = vadd.f32 0.0, %v3052
      %3054 = vmatmul.bf16.gmra.mxu0 %v3017
      %v3055 = vpop.f32.mrf.mxu0
      %v3056 = vadd.f32 0.0, %v3055
      %v3057 = vpop.f32.mrf.mxu0
      %v3058 = vadd.f32 0.0, %v3057
      %3059 = vmatmul.bf16.gmra.mxu0 %v3020
      %v3060 = vpop.f32.mrf.mxu0
      %v3061 = vadd.f32 0.0, %v3060
      %v3062 = vpop.f32.mrf.mxu0
      %v3063 = vadd.f32 0.0, %v3062
      %3064 = vmatmul.bf16.gmra.mxu0 %v3023
      %v3065 = vpop.f32.mrf.mxu0
      %v3066 = vadd.f32 0.0, %v3065
      %v3067 = vpop.f32.mrf.mxu0
      %v3068 = vadd.f32 0.0, %v3067
      %3069 = vmatmul.bf16.gmra.mxu0 %v3026
      %v3070 = vpop.f32.mrf.mxu0
      %v3071 = vadd.f32 0.0, %v3070
      %v3072 = vpop.f32.mrf.mxu0
      %v3073 = vadd.f32 0.0, %v3072
      %3074 = vmatmul.bf16.gmra.mxu0 %v3029
      %v3075 = vpop.f32.mrf.mxu0
      %v3076 = vadd.f32 0.0, %v3075
      %v3077 = vpop.f32.mrf.mxu0
      %v3078 = vadd.f32 0.0, %v3077
      %3079 = vdwg.mxu0
      %3080 = vmax.xlane.f32.xlu0 %v3041
      %v3081 = vpop.xlane.xlu0 %3080
      %3082 = vmax.xlane.f32.xlu0 %v3043
      %v3083 = vpop.xlane.xlu0 %3082
      %3084 = vmax.xlane.f32.xlu0 %v3046
      %v3085 = vpop.xlane.xlu0 %3084
      %3086 = vmax.xlane.f32.xlu0 %v3048
      %v3087 = vpop.xlane.xlu0 %3086
      %3088 = vmax.xlane.f32.xlu0 %v3051
      %v3089 = vpop.xlane.xlu0 %3088
      %3090 = vmax.xlane.f32.xlu0 %v3053
      %v3091 = vpop.xlane.xlu0 %3090
      %3092 = vmax.xlane.f32.xlu0 %v3056
      %v3093 = vpop.xlane.xlu0 %3092
      %3094 = vmax.xlane.f32.xlu0 %v3058
      %v3095 = vpop.xlane.xlu0 %3094
      %3096 = vmax.xlane.f32.xlu0 %v3061
      %v3097 = vpop.xlane.xlu0 %3096
      %3098 = vmax.xlane.f32.xlu0 %v3063
      %v3099 = vpop.xlane.xlu0 %3098
      %3100 = vmax.xlane.f32.xlu0 %v3066
      %v3101 = vpop.xlane.xlu0 %3100
      %3102 = vmax.xlane.f32.xlu0 %v3068
      %v3103 = vpop.xlane.xlu0 %3102
      %3104 = vmax.xlane.f32.xlu0 %v3071
      %v3105 = vpop.xlane.xlu0 %3104
      %3106 = vmax.xlane.f32.xlu0 %v3073
      %v3107 = vpop.xlane.xlu0 %3106
      %3108 = vmax.xlane.f32.xlu0 %v3076
      %v3109 = vpop.xlane.xlu0 %3108
      %3110 = vmax.xlane.f32.xlu0 %v3078
      %v3111 = vpop.xlane.xlu0 %3110
      %v3112 = vsub.f32 %v3041, %v3081
      %v3113 = vsub.f32 %v3043, %v3083
      %v3114 = vsub.f32 %v3046, %v3085
      %v3115 = vsub.f32 %v3048, %v3087
      %v3116 = vsub.f32 %v3051, %v3089
      %v3117 = vsub.f32 %v3053, %v3091
      %v3118 = vsub.f32 %v3056, %v3093
      %v3119 = vsub.f32 %v3058, %v3095
      %v3120 = vsub.f32 %v3061, %v3097
      %v3121 = vsub.f32 %v3063, %v3099
      %v3122 = vsub.f32 %v3066, %v3101
      %v3123 = vsub.f32 %v3068, %v3103
      %v3124 = vsub.f32 %v3071, %v3105
      %v3125 = vsub.f32 %v3073, %v3107
      %v3126 = vsub.f32 %v3076, %v3109
      %v3127 = vsub.f32 %v3078, %v3111
      %v3128 = vmul.f32 %v3112, 1.442695
      %v3129 = vpow.pop %v3128
      %v3130 = vmul.f32 %v3113, 1.442695
      %v3131 = vpow.pop %v3130
      %v3132 = vmul.f32 %v3114, 1.442695
      %v3133 = vpow.pop %v3132
      %v3134 = vmul.f32 %v3115, 1.442695
      %v3135 = vpow.pop %v3134
      %v3136 = vmul.f32 %v3116, 1.442695
      %v3137 = vpow.pop %v3136
      %v3138 = vmul.f32 %v3117, 1.442695
      %v3139 = vpow.pop %v3138
      %v3140 = vmul.f32 %v3118, 1.442695
      %v3141 = vpow.pop %v3140
      %v3142 = vmul.f32 %v3119, 1.442695
      %v3143 = vpow.pop %v3142
      %v3144 = vmul.f32 %v3120, 1.442695
      %v3145 = vpow.pop %v3144
      %v3146 = vmul.f32 %v3121, 1.442695
      %v3147 = vpow.pop %v3146
      %v3148 = vmul.f32 %v3122, 1.442695
      %v3149 = vpow.pop %v3148
      %v3150 = vmul.f32 %v3123, 1.442695
      %v3151 = vpow.pop %v3150
      %v3152 = vmul.f32 %v3124, 1.442695
      %v3153 = vpow.pop %v3152
      %v3154 = vmul.f32 %v3125, 1.442695
      %v3155 = vpow.pop %v3154
      %v3156 = vmul.f32 %v3126, 1.442695
      %v3157 = vpow.pop %v3156
      %v3158 = vmul.f32 %v3127, 1.442695
      %v3159 = vpow.pop %v3158
      %3160 = vadd.xlane.f32.xlu0 %v3129
      %v3161 = vpop.xlane.xlu0 %3160
      %3162 = vadd.xlane.f32.xlu0 %v3131
      %v3163 = vpop.xlane.xlu0 %3162
      %3164 = vadd.xlane.f32.xlu0 %v3133
      %v3165 = vpop.xlane.xlu0 %3164
      %3166 = vadd.xlane.f32.xlu0 %v3135
      %v3167 = vpop.xlane.xlu0 %3166
      %3168 = vadd.xlane.f32.xlu0 %v3137
      %v3169 = vpop.xlane.xlu0 %3168
      %3170 = vadd.xlane.f32.xlu0 %v3139
      %v3171 = vpop.xlane.xlu0 %3170
      %3172 = vadd.xlane.f32.xlu0 %v3141
      %v3173 = vpop.xlane.xlu0 %3172
      %3174 = vadd.xlane.f32.xlu0 %v3143
      %v3175 = vpop.xlane.xlu0 %3174
      %3176 = vadd.xlane.f32.xlu0 %v3145
      %v3177 = vpop.xlane.xlu0 %3176
      %3178 = vadd.xlane.f32.xlu0 %v3147
      %v3179 = vpop.xlane.xlu0 %3178
      %3180 = vadd.xlane.f32.xlu0 %v3149
      %v3181 = vpop.xlane.xlu0 %3180
      %3182 = vadd.xlane.f32.xlu0 %v3151
      %v3183 = vpop.xlane.xlu0 %3182
      %3184 = vadd.xlane.f32.xlu0 %v3153
      %v3185 = vpop.xlane.xlu0 %3184
      %3186 = vadd.xlane.f32.xlu0 %v3155
      %v3187 = vpop.xlane.xlu0 %3186
      %3188 = vadd.xlane.f32.xlu0 %v3157
      %v3189 = vpop.xlane.xlu0 %3188
      %3190 = vadd.xlane.f32.xlu0 %v3159
      %v3191 = vpop.xlane.xlu0 %3190
      %v3192 = vpack.c.bf16 %v3131, %v3129
      %v3193 = vpack.c.bf16 %v3135, %v3133
      %v3194 = vpack.c.bf16 %v3139, %v3137
      %v3195 = vpack.c.bf16 %v3143, %v3141
      %v3196 = vpack.c.bf16 %v3147, %v3145
      %v3197 = vpack.c.bf16 %v3151, %v3149
      %v3198 = vpack.c.bf16 %v3155, %v3153
      %v3199 = vpack.c.bf16 %v3159, %v3157
      %v3208 = vunpack.c.l.b16 %v2935
      %v3209 = vunpack.c.l.b16 %v2936
      %v3210 = vunpack.c.l.b16 %v2937
      %v3211 = vunpack.c.l.b16 %v2938
      %v3212 = vunpack.c.l.b16 %v2939
      %v3213 = vunpack.c.l.b16 %v2940
      %v3214 = vunpack.c.l.b16 %v2941
      %v3215 = vunpack.c.l.b16 %v2942
      %v3216 = vpack.c.b16 %v3209, %v3208
      %v3217 = vpack.c.b16 %v3211, %v3210
      %v3218 = vpack.c.b16 %v3213, %v3212
      %v3219 = vpack.c.b16 %v3215, %v3214
      %3224 = vmatpush.bf16.xpose.msra.mxu0 0
      %3225 = vmatpush.bf16.xpose.msra.mxu0 0
      %3226 = vmatpush.bf16.xpose.msra.mxu0 0
      %3227 = vmatpush.bf16.xpose.msra.mxu0 0
      %3228 = vmatpush.bf16.xpose.msra.mxu0 %v3219
      %3229 = vmatpush.bf16.xpose.msra.mxu0 %v3218
      %3230 = vmatpush.bf16.xpose.msra.mxu0 %v3217
      %3231 = vmatpush.bf16.xpose.msra.mxu0 %v3216
      %3232 = vmatmul.bf16.gmra.mxu0 %v3192
      %v3233 = vpop.f32.mrf.mxu0
      %v3234 = vadd.f32 0.0, %v3233
      %v3235 = vpop.f32.mrf.mxu0
      %v3236 = vadd.f32 0.0, %v3235
      %3237 = vmatmul.bf16.gmra.mxu0 %v3193
      %v3238 = vpop.f32.mrf.mxu0
      %v3239 = vadd.f32 0.0, %v3238
      %v3240 = vpop.f32.mrf.mxu0
      %v3241 = vadd.f32 0.0, %v3240
      %3242 = vmatmul.bf16.gmra.mxu0 %v3194
      %v3243 = vpop.f32.mrf.mxu0
      %v3244 = vadd.f32 0.0, %v3243
      %v3245 = vpop.f32.mrf.mxu0
      %v3246 = vadd.f32 0.0, %v3245
      %3247 = vmatmul.bf16.gmra.mxu0 %v3195
      %v3248 = vpop.f32.mrf.mxu0
      %v3249 = vadd.f32 0.0, %v3248
      %v3250 = vpop.f32.mrf.mxu0
      %v3251 = vadd.f32 0.0, %v3250
      %3252 = vmatmul.bf16.gmra.mxu0 %v3196
      %v3253 = vpop.f32.mrf.mxu0
      %v3254 = vadd.f32 0.0, %v3253
      %v3255 = vpop.f32.mrf.mxu0
      %v3256 = vadd.f32 0.0, %v3255
      %3257 = vmatmul.bf16.gmra.mxu0 %v3197
      %v3258 = vpop.f32.mrf.mxu0
      %v3259 = vadd.f32 0.0, %v3258
      %v3260 = vpop.f32.mrf.mxu0
      %v3261 = vadd.f32 0.0, %v3260
      %3262 = vmatmul.bf16.gmra.mxu0 %v3198
      %v3263 = vpop.f32.mrf.mxu0
      %v3264 = vadd.f32 0.0, %v3263
      %v3265 = vpop.f32.mrf.mxu0
      %v3266 = vadd.f32 0.0, %v3265
      %3267 = vmatmul.bf16.gmra.mxu0 %v3199
      %v3268 = vpop.f32.mrf.mxu0
      %v3269 = vadd.f32 0.0, %v3268
      %v3270 = vpop.f32.mrf.mxu0
      %v3271 = vadd.f32 0.0, %v3270
      %3272 = vdwg.mxu0
      %v3273 = vrcp.pop %v3161
      %v3274 = vrcp.pop %v3163
      %v3275 = vrcp.pop %v3165
      %v3276 = vrcp.pop %v3167
      %v3277 = vrcp.pop %v3169
      %v3278 = vrcp.pop %v3171
      %v3279 = vrcp.pop %v3173
      %v3280 = vrcp.pop %v3175
      %v3281 = vrcp.pop %v3177
      %v3282 = vrcp.pop %v3179
      %v3283 = vrcp.pop %v3181
      %v3284 = vrcp.pop %v3183
      %v3285 = vrcp.pop %v3185
      %v3286 = vrcp.pop %v3187
      %v3287 = vrcp.pop %v3189
      %v3288 = vrcp.pop %v3191
      %v3289 = vmul.f32 %v3234, %v3273
      %v3290 = vmul.f32 %v3236, %v3274
      %v3291 = vmul.f32 %v3239, %v3275
      %v3292 = vmul.f32 %v3241, %v3276
      %v3293 = vmul.f32 %v3244, %v3277
      %v3294 = vmul.f32 %v3246, %v3278
      %v3295 = vmul.f32 %v3249, %v3279
      %v3296 = vmul.f32 %v3251, %v3280
      %v3297 = vmul.f32 %v3254, %v3281
      %v3298 = vmul.f32 %v3256, %v3282
      %v3299 = vmul.f32 %v3259, %v3283
      %v3300 = vmul.f32 %v3261, %v3284
      %v3301 = vmul.f32 %v3264, %v3285
      %v3302 = vmul.f32 %v3266, %v3286
      %v3303 = vmul.f32 %v3269, %v3287
      %v3304 = vmul.f32 %v3271, %v3288
      %s3305 = scalar_lea.vmem %s3, 128
      %v3306 = vld [vmem:[%s3305] sm:$0xf]
      %v3307 = vld [vmem:[%s3305 + $0x4] sm:$0xf]
      %v3308 = vld [vmem:[%s3305 + $0x8] sm:$0xf]
      %v3309 = vld [vmem:[%s3305 + $0xc] sm:$0xf]
      %v3310 = vld [vmem:[%s3305 + $0x10] sm:$0xf]
      %v3311 = vld [vmem:[%s3305 + $0x14] sm:$0xf]
      %v3312 = vld [vmem:[%s3305 + $0x18] sm:$0xf]
      %v3313 = vld [vmem:[%s3305 + $0x1c] sm:$0xf]
      %v3314 = vld [vmem:[%s3305 + $0x20] sm:$0xf]
      %v3315 = vld [vmem:[%s3305 + $0x24] sm:$0xf]
      %v3316 = vld [vmem:[%s3305 + $0x28] sm:$0xf]
      %v3317 = vld [vmem:[%s3305 + $0x2c] sm:$0xf]
      %v3318 = vld [vmem:[%s3305 + $0x30] sm:$0xf]
      %v3319 = vld [vmem:[%s3305 + $0x34] sm:$0xf]
      %v3320 = vld [vmem:[%s3305 + $0x38] sm:$0xf]
      %v3321 = vld [vmem:[%s3305 + $0x3c] sm:$0xf]
      %v3322 = vpack.c.bf16 %v3290, %v3289
      %v3323 = vpack.c.bf16 %v3292, %v3291
      %v3324 = vpack.c.bf16 %v3294, %v3293
      %v3325 = vpack.c.bf16 %v3296, %v3295
      %v3326 = vpack.c.bf16 %v3298, %v3297
      %v3327 = vpack.c.bf16 %v3300, %v3299
      %v3328 = vpack.c.bf16 %v3302, %v3301
      %v3329 = vpack.c.bf16 %v3304, %v3303
      %v3346 = vunpack.c.l.b16 %v3306
      %v3347 = vunpack.c.l.b16 %v3307
      %v3348 = vunpack.c.l.b16 %v3308
      %v3349 = vunpack.c.l.b16 %v3309
      %v3350 = vunpack.c.l.b16 %v3310
      %v3351 = vunpack.c.l.b16 %v3311
      %v3352 = vunpack.c.l.b16 %v3312
      %v3353 = vunpack.c.l.b16 %v3313
      %v3354 = vunpack.c.l.b16 %v3314
      %v3355 = vunpack.c.l.b16 %v3315
      %v3356 = vunpack.c.l.b16 %v3316
      %v3357 = vunpack.c.l.b16 %v3317
      %v3358 = vunpack.c.l.b16 %v3318
      %v3359 = vunpack.c.l.b16 %v3319
      %v3360 = vunpack.c.l.b16 %v3320
      %v3361 = vunpack.c.l.b16 %v3321
      %v3362 = vpack.c.b16 %v3347, %v3346
      %v3363 = vpack.c.b16 %v3349, %v3348
      %v3364 = vpack.c.b16 %v3351, %v3350
      %v3365 = vpack.c.b16 %v3353, %v3352
      %v3366 = vpack.c.b16 %v3355, %v3354
      %v3367 = vpack.c.b16 %v3357, %v3356
      %v3368 = vpack.c.b16 %v3359, %v3358
      %v3369 = vpack.c.b16 %v3361, %v3360
      %v3371 = vsel %vm1847, %v3362, 0
      %v3374 = vsel %vm1847, %v3363, 0
      %v3377 = vsel %vm1847, %v3364, 0
      %v3380 = vsel %vm1847, %v3365, 0
      %v3383 = vsel %vm1847, %v3366, 0
      %v3386 = vsel %vm1847, %v3367, 0
      %v3389 = vsel %vm1847, %v3368, 0
      %v3392 = vsel %vm1847, %v3369, 0
      %v3395 = vsel %vm1847, %v3322, 0
      %v3398 = vsel %vm1847, %v3323, 0
      %v3401 = vsel %vm1847, %v3324, 0
      %v3404 = vsel %vm1847, %v3325, 0
      %v3407 = vsel %vm1847, %v3326, 0
      %v3410 = vsel %vm1847, %v3327, 0
      %v3413 = vsel %vm1847, %v3328, 0
      %v3416 = vsel %vm1847, %v3329, 0
      %3418 = vmatpush.bf16.xpose.msra.mxu0 %v3416
      %3419 = vmatpush.bf16.xpose.msra.mxu0 %v3413
      %3420 = vmatpush.bf16.xpose.msra.mxu0 %v3410
      %3421 = vmatpush.bf16.xpose.msra.mxu0 %v3407
      %3422 = vmatpush.bf16.xpose.msra.mxu0 %v3404
      %3423 = vmatpush.bf16.xpose.msra.mxu0 %v3401
      %3424 = vmatpush.bf16.xpose.msra.mxu0 %v3398
      %3425 = vmatpush.bf16.xpose.msra.mxu0 %v3395
      %3426 = vmatmul.bf16.gmra.mxu0 %v3371
      %v3427 = vpop.f32.mrf.mxu0
      %v3428 = vadd.f32 0.0, %v3427
      %v3429 = vpop.f32.mrf.mxu0
      %v3430 = vadd.f32 0.0, %v3429
      %3431 = vmatmul.bf16.gmra.mxu0 %v3374
      %v3432 = vpop.f32.mrf.mxu0
      %v3433 = vadd.f32 0.0, %v3432
      %v3434 = vpop.f32.mrf.mxu0
      %v3435 = vadd.f32 0.0, %v3434
      %3436 = vmatmul.bf16.gmra.mxu0 %v3377
      %v3437 = vpop.f32.mrf.mxu0
      %v3438 = vadd.f32 0.0, %v3437
      %v3439 = vpop.f32.mrf.mxu0
      %v3440 = vadd.f32 0.0, %v3439
      %3441 = vmatmul.bf16.gmra.mxu0 %v3380
      %v3442 = vpop.f32.mrf.mxu0
      %v3443 = vadd.f32 0.0, %v3442
      %v3444 = vpop.f32.mrf.mxu0
      %v3445 = vadd.f32 0.0, %v3444
      %3446 = vmatmul.bf16.gmra.mxu0 %v3383
      %v3447 = vpop.f32.mrf.mxu0
      %v3448 = vadd.f32 0.0, %v3447
      %v3449 = vpop.f32.mrf.mxu0
      %v3450 = vadd.f32 0.0, %v3449
      %3451 = vmatmul.bf16.gmra.mxu0 %v3386
      %v3452 = vpop.f32.mrf.mxu0
      %v3453 = vadd.f32 0.0, %v3452
      %v3454 = vpop.f32.mrf.mxu0
      %v3455 = vadd.f32 0.0, %v3454
      %3456 = vmatmul.bf16.gmra.mxu0 %v3389
      %v3457 = vpop.f32.mrf.mxu0
      %v3458 = vadd.f32 0.0, %v3457
      %v3459 = vpop.f32.mrf.mxu0
      %v3460 = vadd.f32 0.0, %v3459
      %3461 = vmatmul.bf16.gmra.mxu0 %v3392
      %v3462 = vpop.f32.mrf.mxu0
      %v3463 = vadd.f32 0.0, %v3462
      %v3464 = vpop.f32.mrf.mxu0
      %v3465 = vadd.f32 0.0, %v3464
      %3466 = vdwg.mxu0
      %v3467 = vld [vmem:[#allocation3] sm:$0xff]
      %v3468 = vld [vmem:[#allocation3 + $0x8] sm:$0xff]
      %v3469 = vld [vmem:[#allocation3 + $0x10] sm:$0xff]
      %v3470 = vld [vmem:[#allocation3 + $0x18] sm:$0xff]
      %v3471 = vld [vmem:[#allocation3 + $0x20] sm:$0xff]
      %v3472 = vld [vmem:[#allocation3 + $0x28] sm:$0xff]
      %v3473 = vld [vmem:[#allocation3 + $0x30] sm:$0xff]
      %v3474 = vld [vmem:[#allocation3 + $0x38] sm:$0xff]
      %v3475 = vld [vmem:[#allocation3 + $0x40] sm:$0xff]
      %v3476 = vld [vmem:[#allocation3 + $0x48] sm:$0xff]
      %v3477 = vld [vmem:[#allocation3 + $0x50] sm:$0xff]
      %v3478 = vld [vmem:[#allocation3 + $0x58] sm:$0xff]
      %v3479 = vld [vmem:[#allocation3 + $0x60] sm:$0xff]
      %v3480 = vld [vmem:[#allocation3 + $0x68] sm:$0xff]
      %v3481 = vld [vmem:[#allocation3 + $0x70] sm:$0xff]
      %v3482 = vld [vmem:[#allocation3 + $0x78] sm:$0xff]
      %v3483 = vadd.f32 %v3467, %v3428
      %v3484 = vadd.f32 %v3468, %v3430
      %v3485 = vadd.f32 %v3469, %v3433
      %v3486 = vadd.f32 %v3470, %v3435
      %v3487 = vadd.f32 %v3471, %v3438
      %v3488 = vadd.f32 %v3472, %v3440
      %v3489 = vadd.f32 %v3473, %v3443
      %v3490 = vadd.f32 %v3474, %v3445
      %v3491 = vadd.f32 %v3475, %v3448
      %v3492 = vadd.f32 %v3476, %v3450
      %v3493 = vadd.f32 %v3477, %v3453
      %v3494 = vadd.f32 %v3478, %v3455
      %v3495 = vadd.f32 %v3479, %v3458
      %v3496 = vadd.f32 %v3480, %v3460
      %v3497 = vadd.f32 %v3481, %v3463
      %v3498 = vadd.f32 %v3482, %v3465
      %3499 = vst [vmem:[#allocation3] sm:$0xff] %v3483
      %3500 = vst [vmem:[#allocation3 + $0x8] sm:$0xff] %v3484
      %3501 = vst [vmem:[#allocation3 + $0x10] sm:$0xff] %v3485
      %3502 = vst [vmem:[#allocation3 + $0x18] sm:$0xff] %v3486
      %3503 = vst [vmem:[#allocation3 + $0x20] sm:$0xff] %v3487
      %3504 = vst [vmem:[#allocation3 + $0x28] sm:$0xff] %v3488
      %3505 = vst [vmem:[#allocation3 + $0x30] sm:$0xff] %v3489
      %3506 = vst [vmem:[#allocation3 + $0x38] sm:$0xff] %v3490
      %3507 = vst [vmem:[#allocation3 + $0x40] sm:$0xff] %v3491
      %3508 = vst [vmem:[#allocation3 + $0x48] sm:$0xff] %v3492
      %3509 = vst [vmem:[#allocation3 + $0x50] sm:$0xff] %v3493
      %3510 = vst [vmem:[#allocation3 + $0x58] sm:$0xff] %v3494
      %3511 = vst [vmem:[#allocation3 + $0x60] sm:$0xff] %v3495
      %3512 = vst [vmem:[#allocation3 + $0x68] sm:$0xff] %v3496
      %3513 = vst [vmem:[#allocation3 + $0x70] sm:$0xff] %v3497
      %3514 = vst [vmem:[#allocation3 + $0x78] sm:$0xff] %v3498
      %v3515 = vld [vmem:[%s1758 + $0x60] sm:$0xf]
      %v3516 = vld [vmem:[%s1758 + $0x64] sm:$0xf]
      %v3517 = vld [vmem:[%s1758 + $0x68] sm:$0xf]
      %v3518 = vld [vmem:[%s1758 + $0x6c] sm:$0xf]
      %v3519 = vld [vmem:[%s1758 + $0x70] sm:$0xf]
      %v3520 = vld [vmem:[%s1758 + $0x74] sm:$0xf]
      %v3521 = vld [vmem:[%s1758 + $0x78] sm:$0xf]
      %v3522 = vld [vmem:[%s1758 + $0x7c] sm:$0xf]
      %v3523 = vld [vmem:[#allocation2 + $0xe0] sm:$0xf]
      %v3524 = vld [vmem:[#allocation2 + $0xe4] sm:$0xf]
      %v3525 = vld [vmem:[#allocation2 + $0xe8] sm:$0xf]
      %v3526 = vld [vmem:[#allocation2 + $0xec] sm:$0xf]
      %v3527 = vld [vmem:[#allocation2 + $0xf0] sm:$0xf]
      %v3528 = vld [vmem:[#allocation2 + $0xf4] sm:$0xf]
      %v3529 = vld [vmem:[#allocation2 + $0xf8] sm:$0xf]
      %v3530 = vld [vmem:[#allocation2 + $0xfc] sm:$0xf]
      %v3531 = vld [vmem:[#allocation2 + $0x160] sm:$0xf]
      %v3532 = vld [vmem:[#allocation2 + $0x164] sm:$0xf]
      %v3533 = vld [vmem:[#allocation2 + $0x168] sm:$0xf]
      %v3534 = vld [vmem:[#allocation2 + $0x16c] sm:$0xf]
      %v3535 = vld [vmem:[#allocation2 + $0x170] sm:$0xf]
      %v3536 = vld [vmem:[#allocation2 + $0x174] sm:$0xf]
      %v3537 = vld [vmem:[#allocation2 + $0x178] sm:$0xf]
      %v3538 = vld [vmem:[#allocation2 + $0x17c] sm:$0xf]
      %v3547 = vunpack.c.l.b16 %v3515
      %v3548 = vunpack.c.l.b16 %v3516
      %v3549 = vunpack.c.l.b16 %v3517
      %v3550 = vunpack.c.l.b16 %v3518
      %v3551 = vunpack.c.l.b16 %v3519
      %v3552 = vunpack.c.l.b16 %v3520
      %v3553 = vunpack.c.l.b16 %v3521
      %v3554 = vunpack.c.l.b16 %v3522
      %v3555 = vpack.c.b16 %v3548, %v3547
      %v3556 = vpack.c.b16 %v3550, %v3549
      %v3557 = vpack.c.b16 %v3552, %v3551
      %v3558 = vpack.c.b16 %v3554, %v3553
      %3563 = vxpose.xlu0.c.b16.start [1/8] %v3555, 128
      %3564 = vxpose.xlu0.c.b16.cont [2/8] %v3556, 128
      %3565 = vxpose.xlu0.c.b16.cont [3/8] %v3557, 128
      %3566 = vxpose.xlu0.c.b16.cont [4/8] %v3558, 128
      %3567 = vxpose.xlu0.c.b16.cont [5/8] 0, 128
      %3568 = vxpose.xlu0.c.b16.cont [6/8] 0, 128
      %3569 = vxpose.xlu0.c.b16.cont [7/8] 0, 128
      %3570 = vxpose.xlu0.c.b16.end [8/8] 0, 128
      %v3571 = vpop.trf.xlu0
      %v3572 = vpop.trf.xlu0
      %v3573 = vpop.trf.xlu0
      %v3574 = vpop.trf.xlu0
      %v3575 = vpop.trf.xlu0
      %v3576 = vpop.trf.xlu0
      %v3577 = vpop.trf.xlu0
      %v3578 = vpop.trf.xlu0
      %v3587 = vunpack.c.l.b16 %v3523
      %v3588 = vunpack.c.l.b16 %v3524
      %v3589 = vunpack.c.l.b16 %v3525
      %v3590 = vunpack.c.l.b16 %v3526
      %v3591 = vunpack.c.l.b16 %v3527
      %v3592 = vunpack.c.l.b16 %v3528
      %v3593 = vunpack.c.l.b16 %v3529
      %v3594 = vunpack.c.l.b16 %v3530
      %v3595 = vpack.c.b16 %v3588, %v3587
      %v3596 = vpack.c.b16 %v3590, %v3589
      %v3597 = vpack.c.b16 %v3592, %v3591
      %v3598 = vpack.c.b16 %v3594, %v3593
      %v3604 = vsel %vm1847, %v3571, 0
      %v3607 = vsel %vm1847, %v3572, 0
      %v3610 = vsel %vm1847, %v3573, 0
      %v3613 = vsel %vm1847, %v3574, 0
      %v3616 = vsel %vm1847, %v3575, 0
      %v3619 = vsel %vm1847, %v3576, 0
      %v3622 = vsel %vm1847, %v3577, 0
      %v3625 = vsel %vm1847, %v3578, 0
      %3627 = vmatpush.bf16.msra.mxu0 0
      %3628 = vmatpush.bf16.msra.mxu0 0
      %3629 = vmatpush.bf16.msra.mxu0 0
      %3630 = vmatpush.bf16.msra.mxu0 0
      %3631 = vmatpush.bf16.msra.mxu0 %v3598
      %3632 = vmatpush.bf16.msra.mxu0 %v3597
      %3633 = vmatpush.bf16.msra.mxu0 %v3596
      %3634 = vmatpush.bf16.msra.mxu0 %v3595
      %3635 = vmatmul.bf16.gmra.mxu0 %v3604
      %v3636 = vpop.f32.mrf.mxu0
      %v3637 = vadd.f32 0.0, %v3636
      %v3638 = vpop.f32.mrf.mxu0
      %v3639 = vadd.f32 0.0, %v3638
      %3640 = vmatmul.bf16.gmra.mxu0 %v3607
      %v3641 = vpop.f32.mrf.mxu0
      %v3642 = vadd.f32 0.0, %v3641
      %v3643 = vpop.f32.mrf.mxu0
      %v3644 = vadd.f32 0.0, %v3643
      %3645 = vmatmul.bf16.gmra.mxu0 %v3610
      %v3646 = vpop.f32.mrf.mxu0
      %v3647 = vadd.f32 0.0, %v3646
      %v3648 = vpop.f32.mrf.mxu0
      %v3649 = vadd.f32 0.0, %v3648
      %3650 = vmatmul.bf16.gmra.mxu0 %v3613
      %v3651 = vpop.f32.mrf.mxu0
      %v3652 = vadd.f32 0.0, %v3651
      %v3653 = vpop.f32.mrf.mxu0
      %v3654 = vadd.f32 0.0, %v3653
      %3655 = vmatmul.bf16.gmra.mxu0 %v3616
      %v3656 = vpop.f32.mrf.mxu0
      %v3657 = vadd.f32 0.0, %v3656
      %v3658 = vpop.f32.mrf.mxu0
      %v3659 = vadd.f32 0.0, %v3658
      %3660 = vmatmul.bf16.gmra.mxu0 %v3619
      %v3661 = vpop.f32.mrf.mxu0
      %v3662 = vadd.f32 0.0, %v3661
      %v3663 = vpop.f32.mrf.mxu0
      %v3664 = vadd.f32 0.0, %v3663
      %3665 = vmatmul.bf16.gmra.mxu0 %v3622
      %v3666 = vpop.f32.mrf.mxu0
      %v3667 = vadd.f32 0.0, %v3666
      %v3668 = vpop.f32.mrf.mxu0
      %v3669 = vadd.f32 0.0, %v3668
      %3670 = vmatmul.bf16.gmra.mxu0 %v3625
      %v3671 = vpop.f32.mrf.mxu0
      %v3672 = vadd.f32 0.0, %v3671
      %v3673 = vpop.f32.mrf.mxu0
      %v3674 = vadd.f32 0.0, %v3673
      %3675 = vdwg.mxu0
      %3676 = vmax.xlane.f32.xlu0 %v3637
      %v3677 = vpop.xlane.xlu0 %3676
      %3678 = vmax.xlane.f32.xlu0 %v3639
      %v3679 = vpop.xlane.xlu0 %3678
      %3680 = vmax.xlane.f32.xlu0 %v3642
      %v3681 = vpop.xlane.xlu0 %3680
      %3682 = vmax.xlane.f32.xlu0 %v3644
      %v3683 = vpop.xlane.xlu0 %3682
      %3684 = vmax.xlane.f32.xlu0 %v3647
      %v3685 = vpop.xlane.xlu0 %3684
      %3686 = vmax.xlane.f32.xlu0 %v3649
      %v3687 = vpop.xlane.xlu0 %3686
      %3688 = vmax.xlane.f32.xlu0 %v3652
      %v3689 = vpop.xlane.xlu0 %3688
      %3690 = vmax.xlane.f32.xlu0 %v3654
      %v3691 = vpop.xlane.xlu0 %3690
      %3692 = vmax.xlane.f32.xlu0 %v3657
      %v3693 = vpop.xlane.xlu0 %3692
      %3694 = vmax.xlane.f32.xlu0 %v3659
      %v3695 = vpop.xlane.xlu0 %3694
      %3696 = vmax.xlane.f32.xlu0 %v3662
      %v3697 = vpop.xlane.xlu0 %3696
      %3698 = vmax.xlane.f32.xlu0 %v3664
      %v3699 = vpop.xlane.xlu0 %3698
      %3700 = vmax.xlane.f32.xlu0 %v3667
      %v3701 = vpop.xlane.xlu0 %3700
      %3702 = vmax.xlane.f32.xlu0 %v3669
      %v3703 = vpop.xlane.xlu0 %3702
      %3704 = vmax.xlane.f32.xlu0 %v3672
      %v3705 = vpop.xlane.xlu0 %3704
      %3706 = vmax.xlane.f32.xlu0 %v3674
      %v3707 = vpop.xlane.xlu0 %3706
      %v3708 = vsub.f32 %v3637, %v3677
      %v3709 = vsub.f32 %v3639, %v3679
      %v3710 = vsub.f32 %v3642, %v3681
      %v3711 = vsub.f32 %v3644, %v3683
      %v3712 = vsub.f32 %v3647, %v3685
      %v3713 = vsub.f32 %v3649, %v3687
      %v3714 = vsub.f32 %v3652, %v3689
      %v3715 = vsub.f32 %v3654, %v3691
      %v3716 = vsub.f32 %v3657, %v3693
      %v3717 = vsub.f32 %v3659, %v3695
      %v3718 = vsub.f32 %v3662, %v3697
      %v3719 = vsub.f32 %v3664, %v3699
      %v3720 = vsub.f32 %v3667, %v3701
      %v3721 = vsub.f32 %v3669, %v3703
      %v3722 = vsub.f32 %v3672, %v3705
      %v3723 = vsub.f32 %v3674, %v3707
      %v3724 = vmul.f32 %v3708, 1.442695
      %v3725 = vpow.pop %v3724
      %v3726 = vmul.f32 %v3709, 1.442695
      %v3727 = vpow.pop %v3726
      %v3728 = vmul.f32 %v3710, 1.442695
      %v3729 = vpow.pop %v3728
      %v3730 = vmul.f32 %v3711, 1.442695
      %v3731 = vpow.pop %v3730
      %v3732 = vmul.f32 %v3712, 1.442695
      %v3733 = vpow.pop %v3732
      %v3734 = vmul.f32 %v3713, 1.442695
      %v3735 = vpow.pop %v3734
      %v3736 = vmul.f32 %v3714, 1.442695
      %v3737 = vpow.pop %v3736
      %v3738 = vmul.f32 %v3715, 1.442695
      %v3739 = vpow.pop %v3738
      %v3740 = vmul.f32 %v3716, 1.442695
      %v3741 = vpow.pop %v3740
      %v3742 = vmul.f32 %v3717, 1.442695
      %v3743 = vpow.pop %v3742
      %v3744 = vmul.f32 %v3718, 1.442695
      %v3745 = vpow.pop %v3744
      %v3746 = vmul.f32 %v3719, 1.442695
      %v3747 = vpow.pop %v3746
      %v3748 = vmul.f32 %v3720, 1.442695
      %v3749 = vpow.pop %v3748
      %v3750 = vmul.f32 %v3721, 1.442695
      %v3751 = vpow.pop %v3750
      %v3752 = vmul.f32 %v3722, 1.442695
      %v3753 = vpow.pop %v3752
      %v3754 = vmul.f32 %v3723, 1.442695
      %v3755 = vpow.pop %v3754
      %3756 = vadd.xlane.f32.xlu0 %v3725
      %v3757 = vpop.xlane.xlu0 %3756
      %3758 = vadd.xlane.f32.xlu0 %v3727
      %v3759 = vpop.xlane.xlu0 %3758
      %3760 = vadd.xlane.f32.xlu0 %v3729
      %v3761 = vpop.xlane.xlu0 %3760
      %3762 = vadd.xlane.f32.xlu0 %v3731
      %v3763 = vpop.xlane.xlu0 %3762
      %3764 = vadd.xlane.f32.xlu0 %v3733
      %v3765 = vpop.xlane.xlu0 %3764
      %3766 = vadd.xlane.f32.xlu0 %v3735
      %v3767 = vpop.xlane.xlu0 %3766
      %3768 = vadd.xlane.f32.xlu0 %v3737
      %v3769 = vpop.xlane.xlu0 %3768
      %3770 = vadd.xlane.f32.xlu0 %v3739
      %v3771 = vpop.xlane.xlu0 %3770
      %3772 = vadd.xlane.f32.xlu0 %v3741
      %v3773 = vpop.xlane.xlu0 %3772
      %3774 = vadd.xlane.f32.xlu0 %v3743
      %v3775 = vpop.xlane.xlu0 %3774
      %3776 = vadd.xlane.f32.xlu0 %v3745
      %v3777 = vpop.xlane.xlu0 %3776
      %3778 = vadd.xlane.f32.xlu0 %v3747
      %v3779 = vpop.xlane.xlu0 %3778
      %3780 = vadd.xlane.f32.xlu0 %v3749
      %v3781 = vpop.xlane.xlu0 %3780
      %3782 = vadd.xlane.f32.xlu0 %v3751
      %v3783 = vpop.xlane.xlu0 %3782
      %3784 = vadd.xlane.f32.xlu0 %v3753
      %v3785 = vpop.xlane.xlu0 %3784
      %3786 = vadd.xlane.f32.xlu0 %v3755
      %v3787 = vpop.xlane.xlu0 %3786
      %v3788 = vpack.c.bf16 %v3727, %v3725
      %v3789 = vpack.c.bf16 %v3731, %v3729
      %v3790 = vpack.c.bf16 %v3735, %v3733
      %v3791 = vpack.c.bf16 %v3739, %v3737
      %v3792 = vpack.c.bf16 %v3743, %v3741
      %v3793 = vpack.c.bf16 %v3747, %v3745
      %v3794 = vpack.c.bf16 %v3751, %v3749
      %v3795 = vpack.c.bf16 %v3755, %v3753
      %v3804 = vunpack.c.l.b16 %v3531
      %v3805 = vunpack.c.l.b16 %v3532
      %v3806 = vunpack.c.l.b16 %v3533
      %v3807 = vunpack.c.l.b16 %v3534
      %v3808 = vunpack.c.l.b16 %v3535
      %v3809 = vunpack.c.l.b16 %v3536
      %v3810 = vunpack.c.l.b16 %v3537
      %v3811 = vunpack.c.l.b16 %v3538
      %v3812 = vpack.c.b16 %v3805, %v3804
      %v3813 = vpack.c.b16 %v3807, %v3806
      %v3814 = vpack.c.b16 %v3809, %v3808
      %v3815 = vpack.c.b16 %v3811, %v3810
      %3820 = vmatpush.bf16.xpose.msra.mxu0 0
      %3821 = vmatpush.bf16.xpose.msra.mxu0 0
      %3822 = vmatpush.bf16.xpose.msra.mxu0 0
      %3823 = vmatpush.bf16.xpose.msra.mxu0 0
      %3824 = vmatpush.bf16.xpose.msra.mxu0 %v3815
      %3825 = vmatpush.bf16.xpose.msra.mxu0 %v3814
      %3826 = vmatpush.bf16.xpose.msra.mxu0 %v3813
      %3827 = vmatpush.bf16.xpose.msra.mxu0 %v3812
      %3828 = vmatmul.bf16.gmra.mxu0 %v3788
      %v3829 = vpop.f32.mrf.mxu0
      %v3830 = vadd.f32 0.0, %v3829
      %v3831 = vpop.f32.mrf.mxu0
      %v3832 = vadd.f32 0.0, %v3831
      %3833 = vmatmul.bf16.gmra.mxu0 %v3789
      %v3834 = vpop.f32.mrf.mxu0
      %v3835 = vadd.f32 0.0, %v3834
      %v3836 = vpop.f32.mrf.mxu0
      %v3837 = vadd.f32 0.0, %v3836
      %3838 = vmatmul.bf16.gmra.mxu0 %v3790
      %v3839 = vpop.f32.mrf.mxu0
      %v3840 = vadd.f32 0.0, %v3839
      %v3841 = vpop.f32.mrf.mxu0
      %v3842 = vadd.f32 0.0, %v3841
      %3843 = vmatmul.bf16.gmra.mxu0 %v3791
      %v3844 = vpop.f32.mrf.mxu0
      %v3845 = vadd.f32 0.0, %v3844
      %v3846 = vpop.f32.mrf.mxu0
      %v3847 = vadd.f32 0.0, %v3846
      %3848 = vmatmul.bf16.gmra.mxu0 %v3792
      %v3849 = vpop.f32.mrf.mxu0
      %v3850 = vadd.f32 0.0, %v3849
      %v3851 = vpop.f32.mrf.mxu0
      %v3852 = vadd.f32 0.0, %v3851
      %3853 = vmatmul.bf16.gmra.mxu0 %v3793
      %v3854 = vpop.f32.mrf.mxu0
      %v3855 = vadd.f32 0.0, %v3854
      %v3856 = vpop.f32.mrf.mxu0
      %v3857 = vadd.f32 0.0, %v3856
      %3858 = vmatmul.bf16.gmra.mxu0 %v3794
      %v3859 = vpop.f32.mrf.mxu0
      %v3860 = vadd.f32 0.0, %v3859
      %v3861 = vpop.f32.mrf.mxu0
      %v3862 = vadd.f32 0.0, %v3861
      %3863 = vmatmul.bf16.gmra.mxu0 %v3795
      %v3864 = vpop.f32.mrf.mxu0
      %v3865 = vadd.f32 0.0, %v3864
      %v3866 = vpop.f32.mrf.mxu0
      %v3867 = vadd.f32 0.0, %v3866
      %3868 = vdwg.mxu0
      %v3869 = vrcp.pop %v3757
      %v3870 = vrcp.pop %v3759
      %v3871 = vrcp.pop %v3761
      %v3872 = vrcp.pop %v3763
      %v3873 = vrcp.pop %v3765
      %v3874 = vrcp.pop %v3767
      %v3875 = vrcp.pop %v3769
      %v3876 = vrcp.pop %v3771
      %v3877 = vrcp.pop %v3773
      %v3878 = vrcp.pop %v3775
      %v3879 = vrcp.pop %v3777
      %v3880 = vrcp.pop %v3779
      %v3881 = vrcp.pop %v3781
      %v3882 = vrcp.pop %v3783
      %v3883 = vrcp.pop %v3785
      %v3884 = vrcp.pop %v3787
      %v3885 = vmul.f32 %v3830, %v3869
      %v3886 = vmul.f32 %v3832, %v3870
      %v3887 = vmul.f32 %v3835, %v3871
      %v3888 = vmul.f32 %v3837, %v3872
      %v3889 = vmul.f32 %v3840, %v3873
      %v3890 = vmul.f32 %v3842, %v3874
      %v3891 = vmul.f32 %v3845, %v3875
      %v3892 = vmul.f32 %v3847, %v3876
      %v3893 = vmul.f32 %v3850, %v3877
      %v3894 = vmul.f32 %v3852, %v3878
      %v3895 = vmul.f32 %v3855, %v3879
      %v3896 = vmul.f32 %v3857, %v3880
      %v3897 = vmul.f32 %v3860, %v3881
      %v3898 = vmul.f32 %v3862, %v3882
      %v3899 = vmul.f32 %v3865, %v3883
      %v3900 = vmul.f32 %v3867, %v3884
      %s3901 = scalar_lea.vmem %s3, 192
      %v3902 = vld [vmem:[%s3901] sm:$0xf]
      %v3903 = vld [vmem:[%s3901 + $0x4] sm:$0xf]
      %v3904 = vld [vmem:[%s3901 + $0x8] sm:$0xf]
      %v3905 = vld [vmem:[%s3901 + $0xc] sm:$0xf]
      %v3906 = vld [vmem:[%s3901 + $0x10] sm:$0xf]
      %v3907 = vld [vmem:[%s3901 + $0x14] sm:$0xf]
      %v3908 = vld [vmem:[%s3901 + $0x18] sm:$0xf]
      %v3909 = vld [vmem:[%s3901 + $0x1c] sm:$0xf]
      %v3910 = vld [vmem:[%s3901 + $0x20] sm:$0xf]
      %v3911 = vld [vmem:[%s3901 + $0x24] sm:$0xf]
      %v3912 = vld [vmem:[%s3901 + $0x28] sm:$0xf]
      %v3913 = vld [vmem:[%s3901 + $0x2c] sm:$0xf]
      %v3914 = vld [vmem:[%s3901 + $0x30] sm:$0xf]
      %v3915 = vld [vmem:[%s3901 + $0x34] sm:$0xf]
      %v3916 = vld [vmem:[%s3901 + $0x38] sm:$0xf]
      %v3917 = vld [vmem:[%s3901 + $0x3c] sm:$0xf]
      %v3918 = vpack.c.bf16 %v3886, %v3885
      %v3919 = vpack.c.bf16 %v3888, %v3887
      %v3920 = vpack.c.bf16 %v3890, %v3889
      %v3921 = vpack.c.bf16 %v3892, %v3891
      %v3922 = vpack.c.bf16 %v3894, %v3893
      %v3923 = vpack.c.bf16 %v3896, %v3895
      %v3924 = vpack.c.bf16 %v3898, %v3897
      %v3925 = vpack.c.bf16 %v3900, %v3899
      %v3942 = vunpack.c.l.b16 %v3902
      %v3943 = vunpack.c.l.b16 %v3903
      %v3944 = vunpack.c.l.b16 %v3904
      %v3945 = vunpack.c.l.b16 %v3905
      %v3946 = vunpack.c.l.b16 %v3906
      %v3947 = vunpack.c.l.b16 %v3907
      %v3948 = vunpack.c.l.b16 %v3908
      %v3949 = vunpack.c.l.b16 %v3909
      %v3950 = vunpack.c.l.b16 %v3910
      %v3951 = vunpack.c.l.b16 %v3911
      %v3952 = vunpack.c.l.b16 %v3912
      %v3953 = vunpack.c.l.b16 %v3913
      %v3954 = vunpack.c.l.b16 %v3914
      %v3955 = vunpack.c.l.b16 %v3915
      %v3956 = vunpack.c.l.b16 %v3916
      %v3957 = vunpack.c.l.b16 %v3917
      %v3958 = vpack.c.b16 %v3943, %v3942
      %v3959 = vpack.c.b16 %v3945, %v3944
      %v3960 = vpack.c.b16 %v3947, %v3946
      %v3961 = vpack.c.b16 %v3949, %v3948
      %v3962 = vpack.c.b16 %v3951, %v3950
      %v3963 = vpack.c.b16 %v3953, %v3952
      %v3964 = vpack.c.b16 %v3955, %v3954
      %v3965 = vpack.c.b16 %v3957, %v3956
      %v3967 = vsel %vm1847, %v3958, 0
      %v3970 = vsel %vm1847, %v3959, 0
      %v3973 = vsel %vm1847, %v3960, 0
      %v3976 = vsel %vm1847, %v3961, 0
      %v3979 = vsel %vm1847, %v3962, 0
      %v3982 = vsel %vm1847, %v3963, 0
      %v3985 = vsel %vm1847, %v3964, 0
      %v3988 = vsel %vm1847, %v3965, 0
      %v3991 = vsel %vm1847, %v3918, 0
      %v3994 = vsel %vm1847, %v3919, 0
      %v3997 = vsel %vm1847, %v3920, 0
      %v4000 = vsel %vm1847, %v3921, 0
      %v4003 = vsel %vm1847, %v3922, 0
      %v4006 = vsel %vm1847, %v3923, 0
      %v4009 = vsel %vm1847, %v3924, 0
      %v4012 = vsel %vm1847, %v3925, 0
      %4014 = vmatpush.bf16.xpose.msra.mxu0 %v4012
      %4015 = vmatpush.bf16.xpose.msra.mxu0 %v4009
      %4016 = vmatpush.bf16.xpose.msra.mxu0 %v4006
      %4017 = vmatpush.bf16.xpose.msra.mxu0 %v4003
      %4018 = vmatpush.bf16.xpose.msra.mxu0 %v4000
      %4019 = vmatpush.bf16.xpose.msra.mxu0 %v3997
      %4020 = vmatpush.bf16.xpose.msra.mxu0 %v3994
      %4021 = vmatpush.bf16.xpose.msra.mxu0 %v3991
      %4022 = vmatmul.bf16.gmra.mxu0 %v3967
      %v4023 = vpop.f32.mrf.mxu0
      %v4024 = vadd.f32 0.0, %v4023
      %v4025 = vpop.f32.mrf.mxu0
      %v4026 = vadd.f32 0.0, %v4025
      %4027 = vmatmul.bf16.gmra.mxu0 %v3970
      %v4028 = vpop.f32.mrf.mxu0
      %v4029 = vadd.f32 0.0, %v4028
      %v4030 = vpop.f32.mrf.mxu0
      %v4031 = vadd.f32 0.0, %v4030
      %4032 = vmatmul.bf16.gmra.mxu0 %v3973
      %v4033 = vpop.f32.mrf.mxu0
      %v4034 = vadd.f32 0.0, %v4033
      %v4035 = vpop.f32.mrf.mxu0
      %v4036 = vadd.f32 0.0, %v4035
      %4037 = vmatmul.bf16.gmra.mxu0 %v3976
      %v4038 = vpop.f32.mrf.mxu0
      %v4039 = vadd.f32 0.0, %v4038
      %v4040 = vpop.f32.mrf.mxu0
      %v4041 = vadd.f32 0.0, %v4040
      %4042 = vmatmul.bf16.gmra.mxu0 %v3979
      %v4043 = vpop.f32.mrf.mxu0
      %v4044 = vadd.f32 0.0, %v4043
      %v4045 = vpop.f32.mrf.mxu0
      %v4046 = vadd.f32 0.0, %v4045
      %4047 = vmatmul.bf16.gmra.mxu0 %v3982
      %v4048 = vpop.f32.mrf.mxu0
      %v4049 = vadd.f32 0.0, %v4048
      %v4050 = vpop.f32.mrf.mxu0
      %v4051 = vadd.f32 0.0, %v4050
      %4052 = vmatmul.bf16.gmra.mxu0 %v3985
      %v4053 = vpop.f32.mrf.mxu0
      %v4054 = vadd.f32 0.0, %v4053
      %v4055 = vpop.f32.mrf.mxu0
      %v4056 = vadd.f32 0.0, %v4055
      %4057 = vmatmul.bf16.gmra.mxu0 %v3988
      %v4058 = vpop.f32.mrf.mxu0
      %v4059 = vadd.f32 0.0, %v4058
      %v4060 = vpop.f32.mrf.mxu0
      %v4061 = vadd.f32 0.0, %v4060
      %4062 = vdwg.mxu0
      %v4063 = vld [vmem:[#allocation3] sm:$0xff]
      %v4064 = vld [vmem:[#allocation3 + $0x8] sm:$0xff]
      %v4065 = vld [vmem:[#allocation3 + $0x10] sm:$0xff]
      %v4066 = vld [vmem:[#allocation3 + $0x18] sm:$0xff]
      %v4067 = vld [vmem:[#allocation3 + $0x20] sm:$0xff]
      %v4068 = vld [vmem:[#allocation3 + $0x28] sm:$0xff]
      %v4069 = vld [vmem:[#allocation3 + $0x30] sm:$0xff]
      %v4070 = vld [vmem:[#allocation3 + $0x38] sm:$0xff]
      %v4071 = vld [vmem:[#allocation3 + $0x40] sm:$0xff]
      %v4072 = vld [vmem:[#allocation3 + $0x48] sm:$0xff]
      %v4073 = vld [vmem:[#allocation3 + $0x50] sm:$0xff]
      %v4074 = vld [vmem:[#allocation3 + $0x58] sm:$0xff]
      %v4075 = vld [vmem:[#allocation3 + $0x60] sm:$0xff]
      %v4076 = vld [vmem:[#allocation3 + $0x68] sm:$0xff]
      %v4077 = vld [vmem:[#allocation3 + $0x70] sm:$0xff]
      %v4078 = vld [vmem:[#allocation3 + $0x78] sm:$0xff]
      %v4079 = vadd.f32 %v4063, %v4024
      %v4080 = vadd.f32 %v4064, %v4026
      %v4081 = vadd.f32 %v4065, %v4029
      %v4082 = vadd.f32 %v4066, %v4031
      %v4083 = vadd.f32 %v4067, %v4034
      %v4084 = vadd.f32 %v4068, %v4036
      %v4085 = vadd.f32 %v4069, %v4039
      %v4086 = vadd.f32 %v4070, %v4041
      %v4087 = vadd.f32 %v4071, %v4044
      %v4088 = vadd.f32 %v4072, %v4046
      %v4089 = vadd.f32 %v4073, %v4049
      %v4090 = vadd.f32 %v4074, %v4051
      %v4091 = vadd.f32 %v4075, %v4054
      %v4092 = vadd.f32 %v4076, %v4056
      %v4093 = vadd.f32 %v4077, %v4059
      %v4094 = vadd.f32 %v4078, %v4061
      %4095 = vst [vmem:[#allocation3] sm:$0xff] %v4079
      %4096 = vst [vmem:[#allocation3 + $0x8] sm:$0xff] %v4080
      %4097 = vst [vmem:[#allocation3 + $0x10] sm:$0xff] %v4081
      %4098 = vst [vmem:[#allocation3 + $0x18] sm:$0xff] %v4082
      %4099 = vst [vmem:[#allocation3 + $0x20] sm:$0xff] %v4083
      %4100 = vst [vmem:[#allocation3 + $0x28] sm:$0xff] %v4084
      %4101 = vst [vmem:[#allocation3 + $0x30] sm:$0xff] %v4085
      %4102 = vst [vmem:[#allocation3 + $0x38] sm:$0xff] %v4086
      %4103 = vst [vmem:[#allocation3 + $0x40] sm:$0xff] %v4087
      %4104 = vst [vmem:[#allocation3 + $0x48] sm:$0xff] %v4088
      %4105 = vst [vmem:[#allocation3 + $0x50] sm:$0xff] %v4089
      %4106 = vst [vmem:[#allocation3 + $0x58] sm:$0xff] %v4090
      %4107 = vst [vmem:[#allocation3 + $0x60] sm:$0xff] %v4091
      %4108 = vst [vmem:[#allocation3 + $0x68] sm:$0xff] %v4092
      %4109 = vst [vmem:[#allocation3 + $0x70] sm:$0xff] %v4093
      %4110 = vst [vmem:[#allocation3 + $0x78] sm:$0xff] %v4094
      %v4111 = vld [vmem:[#allocation3] sm:$0xff]
      %v4112 = vld [vmem:[#allocation3 + $0x8] sm:$0xff]
      %v4113 = vld [vmem:[#allocation3 + $0x10] sm:$0xff]
      %v4114 = vld [vmem:[#allocation3 + $0x18] sm:$0xff]
      %v4115 = vld [vmem:[#allocation3 + $0x20] sm:$0xff]
      %v4116 = vld [vmem:[#allocation3 + $0x28] sm:$0xff]
      %v4117 = vld [vmem:[#allocation3 + $0x30] sm:$0xff]
      %v4118 = vld [vmem:[#allocation3 + $0x38] sm:$0xff]
      %v4119 = vld [vmem:[#allocation3 + $0x40] sm:$0xff]
      %v4120 = vld [vmem:[#allocation3 + $0x48] sm:$0xff]
      %v4121 = vld [vmem:[#allocation3 + $0x50] sm:$0xff]
      %v4122 = vld [vmem:[#allocation3 + $0x58] sm:$0xff]
      %v4123 = vld [vmem:[#allocation3 + $0x60] sm:$0xff]
      %v4124 = vld [vmem:[#allocation3 + $0x68] sm:$0xff]
      %v4125 = vld [vmem:[#allocation3 + $0x70] sm:$0xff]
      %v4126 = vld [vmem:[#allocation3 + $0x78] sm:$0xff]
      %v4127 = vld [vmem:[%s4] sm:$0xff]
      %v4128 = vld [vmem:[%s4 + $0x8] sm:$0xff]
      %v4129 = vld [vmem:[%s4 + $0x10] sm:$0xff]
      %v4130 = vld [vmem:[%s4 + $0x18] sm:$0xff]
      %v4131 = vld [vmem:[%s4 + $0x20] sm:$0xff]
      %v4132 = vld [vmem:[%s4 + $0x28] sm:$0xff]
      %v4133 = vld [vmem:[%s4 + $0x30] sm:$0xff]
      %v4134 = vld [vmem:[%s4 + $0x38] sm:$0xff]
      %v4135 = vld [vmem:[%s4 + $0x40] sm:$0xff]
      %v4136 = vld [vmem:[%s4 + $0x48] sm:$0xff]
      %v4137 = vld [vmem:[%s4 + $0x50] sm:$0xff]
      %v4138 = vld [vmem:[%s4 + $0x58] sm:$0xff]
      %v4139 = vld [vmem:[%s4 + $0x60] sm:$0xff]
      %v4140 = vld [vmem:[%s4 + $0x68] sm:$0xff]
      %v4141 = vld [vmem:[%s4 + $0x70] sm:$0xff]
      %v4142 = vld [vmem:[%s4 + $0x78] sm:$0xff]
      %4144 = vset.pattern.permute.xlu0 0
      %4145 = vperm.xlu0 %4144, %v4127
      %v4146 = vpop.permute.xlu0 %4145
      %4149 = vset.pattern.permute.xlu0 0
      %4150 = vperm.xlu0 %4149, %v4128
      %v4151 = vpop.permute.xlu0 %4150
      %4154 = vset.pattern.permute.xlu0 0
      %4155 = vperm.xlu0 %4154, %v4129
      %v4156 = vpop.permute.xlu0 %4155
      %4159 = vset.pattern.permute.xlu0 0
      %4160 = vperm.xlu0 %4159, %v4130
      %v4161 = vpop.permute.xlu0 %4160
      %4164 = vset.pattern.permute.xlu0 0
      %4165 = vperm.xlu0 %4164, %v4131
      %v4166 = vpop.permute.xlu0 %4165
      %4169 = vset.pattern.permute.xlu0 0
      %4170 = vperm.xlu0 %4169, %v4132
      %v4171 = vpop.permute.xlu0 %4170
      %4174 = vset.pattern.permute.xlu0 0
      %4175 = vperm.xlu0 %4174, %v4133
      %v4176 = vpop.permute.xlu0 %4175
      %4179 = vset.pattern.permute.xlu0 0
      %4180 = vperm.xlu0 %4179, %v4134
      %v4181 = vpop.permute.xlu0 %4180
      %4184 = vset.pattern.permute.xlu0 0
      %4185 = vperm.xlu0 %4184, %v4135
      %v4186 = vpop.permute.xlu0 %4185
      %4189 = vset.pattern.permute.xlu0 0
      %4190 = vperm.xlu0 %4189, %v4136
      %v4191 = vpop.permute.xlu0 %4190
      %4194 = vset.pattern.permute.xlu0 0
      %4195 = vperm.xlu0 %4194, %v4137
      %v4196 = vpop.permute.xlu0 %4195
      %4199 = vset.pattern.permute.xlu0 0
      %4200 = vperm.xlu0 %4199, %v4138
      %v4201 = vpop.permute.xlu0 %4200
      %4204 = vset.pattern.permute.xlu0 0
      %4205 = vperm.xlu0 %4204, %v4139
      %v4206 = vpop.permute.xlu0 %4205
      %4209 = vset.pattern.permute.xlu0 0
      %4210 = vperm.xlu0 %4209, %v4140
      %v4211 = vpop.permute.xlu0 %4210
      %4214 = vset.pattern.permute.xlu0 0
      %4215 = vperm.xlu0 %4214, %v4141
      %v4216 = vpop.permute.xlu0 %4215
      %4219 = vset.pattern.permute.xlu0 0
      %4220 = vperm.xlu0 %4219, %v4142
      %v4221 = vpop.permute.xlu0 %4220
      %v4223 = vadd.f32 %v4111, %v4146
      %v4224 = vadd.f32 %v4112, %v4151
      %v4225 = vadd.f32 %v4113, %v4156
      %v4226 = vadd.f32 %v4114, %v4161
      %v4227 = vadd.f32 %v4115, %v4166
      %v4228 = vadd.f32 %v4116, %v4171
      %v4229 = vadd.f32 %v4117, %v4176
      %v4230 = vadd.f32 %v4118, %v4181
      %v4231 = vadd.f32 %v4119, %v4186
      %v4232 = vadd.f32 %v4120, %v4191
      %v4233 = vadd.f32 %v4121, %v4196
      %v4234 = vadd.f32 %v4122, %v4201
      %v4235 = vadd.f32 %v4123, %v4206
      %v4236 = vadd.f32 %v4124, %v4211
      %v4237 = vadd.f32 %v4125, %v4216
      %v4238 = vadd.f32 %v4126, %v4221
      %s4239 = scalar_lea.vmem %s305, %s1755
      %v4240 = vld [vmem:[%s4239] sm:$0xff]
      %v4241 = vld [vmem:[%s4239 + $0x8] sm:$0xff]
      %v4242 = vld [vmem:[%s4239 + $0x10] sm:$0xff]
      %v4243 = vld [vmem:[%s4239 + $0x18] sm:$0xff]
      %v4244 = vld [vmem:[%s4239 + $0x20] sm:$0xff]
      %v4245 = vld [vmem:[%s4239 + $0x28] sm:$0xff]
      %v4246 = vld [vmem:[%s4239 + $0x30] sm:$0xff]
      %v4247 = vld [vmem:[%s4239 + $0x38] sm:$0xff]
      %v4248 = vld [vmem:[%s4239 + $0x40] sm:$0xff]
      %v4249 = vld [vmem:[%s4239 + $0x48] sm:$0xff]
      %v4250 = vld [vmem:[%s4239 + $0x50] sm:$0xff]
      %v4251 = vld [vmem:[%s4239 + $0x58] sm:$0xff]
      %v4252 = vld [vmem:[%s4239 + $0x60] sm:$0xff]
      %v4253 = vld [vmem:[%s4239 + $0x68] sm:$0xff]
      %v4254 = vld [vmem:[%s4239 + $0x70] sm:$0xff]
      %v4255 = vld [vmem:[%s4239 + $0x78] sm:$0xff]
      %v4256 = vadd.f32 %v4223, %v4240
      %v4257 = vadd.f32 %v4224, %v4241
      %v4258 = vadd.f32 %v4225, %v4242
      %v4259 = vadd.f32 %v4226, %v4243
      %v4260 = vadd.f32 %v4227, %v4244
      %v4261 = vadd.f32 %v4228, %v4245
      %v4262 = vadd.f32 %v4229, %v4246
      %v4263 = vadd.f32 %v4230, %v4247
      %v4264 = vadd.f32 %v4231, %v4248
      %v4265 = vadd.f32 %v4232, %v4249
      %v4266 = vadd.f32 %v4233, %v4250
      %v4267 = vadd.f32 %v4234, %v4251
      %v4268 = vadd.f32 %v4235, %v4252
      %v4269 = vadd.f32 %v4236, %v4253
      %v4270 = vadd.f32 %v4237, %v4254
      %v4271 = vadd.f32 %v4238, %v4255
      %4272 = vst [vmem:[%s313] sm:$0xff] %v4256
      %4273 = vst [vmem:[%s313 + $0x8] sm:$0xff] %v4257
      %4274 = vst [vmem:[%s313 + $0x10] sm:$0xff] %v4258
      %4275 = vst [vmem:[%s313 + $0x18] sm:$0xff] %v4259
      %4276 = vst [vmem:[%s313 + $0x20] sm:$0xff] %v4260
      %4277 = vst [vmem:[%s313 + $0x28] sm:$0xff] %v4261
      %4278 = vst [vmem:[%s313 + $0x30] sm:$0xff] %v4262
      %4279 = vst [vmem:[%s313 + $0x38] sm:$0xff] %v4263
      %4280 = vst [vmem:[%s313 + $0x40] sm:$0xff] %v4264
      %4281 = vst [vmem:[%s313 + $0x48] sm:$0xff] %v4265
      %4282 = vst [vmem:[%s313 + $0x50] sm:$0xff] %v4266
      %4283 = vst [vmem:[%s313 + $0x58] sm:$0xff] %v4267
      %4284 = vst [vmem:[%s313 + $0x60] sm:$0xff] %v4268
      %4285 = vst [vmem:[%s313 + $0x68] sm:$0xff] %v4269
      %4286 = vst [vmem:[%s313 + $0x70] sm:$0xff] %v4270
      %4287 = vst [vmem:[%s313 + $0x78] sm:$0xff] %v4271
      // Predicated region
      $region45: #{pos_extraction_pallas.4} parent=39 // pred_check
        %p4288 = pneg %p325
      $region46: #{pos_extraction_pallas.4} parent=39 // pred_check_branch
        %4290 = sbr.rel (%p4288) target = $region48
      $region47: #{pos_extraction_pallas.4} parent=39 // pred_region
        %vm4291 = vcmask 7168
        %4292 = vst.msk [vmem:[%s318] sm:$0xff] %vm4291, 0.0
        %4293 = vst.msk [vmem:[%s318 + $0x8] sm:$0xff] %vm4291, 0.0
        %4294 = vst.msk [vmem:[%s318 + $0x10] sm:$0xff] %vm4291, 0.0
        %4295 = vst.msk [vmem:[%s318 + $0x18] sm:$0xff] %vm4291, 0.0
        %4296 = vst.msk [vmem:[%s318 + $0x20] sm:$0xff] %vm4291, 0.0
        %4297 = vst.msk [vmem:[%s318 + $0x28] sm:$0xff] %vm4291, 0.0
        %4298 = vst.msk [vmem:[%s318 + $0x30] sm:$0xff] %vm4291, 0.0
        %4299 = vst.msk [vmem:[%s318 + $0x38] sm:$0xff] %vm4291, 0.0
        %4300 = vst.msk [vmem:[%s318 + $0x40] sm:$0xff] %vm4291, 0.0
        %4301 = vst.msk [vmem:[%s318 + $0x48] sm:$0xff] %vm4291, 0.0
        %4302 = vst.msk [vmem:[%s318 + $0x50] sm:$0xff] %vm4291, 0.0
        %4303 = vst.msk [vmem:[%s318 + $0x58] sm:$0xff] %vm4291, 0.0
        %4304 = vst.msk [vmem:[%s318 + $0x60] sm:$0xff] %vm4291, 0.0
        %4305 = vst.msk [vmem:[%s318 + $0x68] sm:$0xff] %vm4291, 0.0
        %4306 = vst.msk [vmem:[%s318 + $0x70] sm:$0xff] %vm4291, 0.0
        %4307 = vst.msk [vmem:[%s318 + $0x78] sm:$0xff] %vm4291, 0.0
        %4308 = vst.msk [vmem:[%s323] sm:$0xff] %vm4291, 0.0
        %4309 = vst.msk [vmem:[%s323 + $0x8] sm:$0xff] %vm4291, 0.0
        %4310 = vst.msk [vmem:[%s323 + $0x10] sm:$0xff] %vm4291, 0.0
        %4311 = vst.msk [vmem:[%s323 + $0x18] sm:$0xff] %vm4291, 0.0
        %4312 = vst.msk [vmem:[%s323 + $0x20] sm:$0xff] %vm4291, 0.0
        %4313 = vst.msk [vmem:[%s323 + $0x28] sm:$0xff] %vm4291, 0.0
        %4314 = vst.msk [vmem:[%s323 + $0x30] sm:$0xff] %vm4291, 0.0
        %4315 = vst.msk [vmem:[%s323 + $0x38] sm:$0xff] %vm4291, 0.0
        %4316 = vst.msk [vmem:[%s323 + $0x40] sm:$0xff] %vm4291, 0.0
        %4317 = vst.msk [vmem:[%s323 + $0x48] sm:$0xff] %vm4291, 0.0
        %4318 = vst.msk [vmem:[%s323 + $0x50] sm:$0xff] %vm4291, 0.0
        %4319 = vst.msk [vmem:[%s323 + $0x58] sm:$0xff] %vm4291, 0.0
        %4320 = vst.msk [vmem:[%s323 + $0x60] sm:$0xff] %vm4291, 0.0
        %4321 = vst.msk [vmem:[%s323 + $0x68] sm:$0xff] %vm4291, 0.0
        %4322 = vst.msk [vmem:[%s323 + $0x70] sm:$0xff] %vm4291, 0.0
        %4323 = vst.msk [vmem:[%s323 + $0x78] sm:$0xff] %vm4291, 0.0
      $region48: #{pos_extraction_pallas.4} parent=39 // pred_fallthru
        _
      %v4324 = vld [vmem:[%s318] sm:$0xff]
      %v4325 = vld [vmem:[%s318 + $0x8] sm:$0xff]
      %v4326 = vld [vmem:[%s318 + $0x10] sm:$0xff]
      %v4327 = vld [vmem:[%s318 + $0x18] sm:$0xff]
      %v4328 = vld [vmem:[%s318 + $0x20] sm:$0xff]
      %v4329 = vld [vmem:[%s318 + $0x28] sm:$0xff]
      %v4330 = vld [vmem:[%s318 + $0x30] sm:$0xff]
      %v4331 = vld [vmem:[%s318 + $0x38] sm:$0xff]
      %v4332 = vld [vmem:[%s318 + $0x40] sm:$0xff]
      %v4333 = vld [vmem:[%s318 + $0x48] sm:$0xff]
      %v4334 = vld [vmem:[%s318 + $0x50] sm:$0xff]
      %v4335 = vld [vmem:[%s318 + $0x58] sm:$0xff]
      %v4336 = vld [vmem:[%s318 + $0x60] sm:$0xff]
      %v4337 = vld [vmem:[%s318 + $0x68] sm:$0xff]
      %v4338 = vld [vmem:[%s318 + $0x70] sm:$0xff]
      %v4339 = vld [vmem:[%s318 + $0x78] sm:$0xff]
      %4340 = vadd.xlane.f32.xlu0 %v4256
      %v4341 = vpop.xlane.xlu0 %4340
      %4342 = vadd.xlane.f32.xlu0 %v4257
      %v4343 = vpop.xlane.xlu0 %4342
      %4344 = vadd.xlane.f32.xlu0 %v4258
      %v4345 = vpop.xlane.xlu0 %4344
      %4346 = vadd.xlane.f32.xlu0 %v4259
      %v4347 = vpop.xlane.xlu0 %4346
      %4348 = vadd.xlane.f32.xlu0 %v4260
      %v4349 = vpop.xlane.xlu0 %4348
      %4350 = vadd.xlane.f32.xlu0 %v4261
      %v4351 = vpop.xlane.xlu0 %4350
      %4352 = vadd.xlane.f32.xlu0 %v4262
      %v4353 = vpop.xlane.xlu0 %4352
      %4354 = vadd.xlane.f32.xlu0 %v4263
      %v4355 = vpop.xlane.xlu0 %4354
      %4356 = vadd.xlane.f32.xlu0 %v4264
      %v4357 = vpop.xlane.xlu0 %4356
      %4358 = vadd.xlane.f32.xlu0 %v4265
      %v4359 = vpop.xlane.xlu0 %4358
      %4360 = vadd.xlane.f32.xlu0 %v4266
      %v4361 = vpop.xlane.xlu0 %4360
      %4362 = vadd.xlane.f32.xlu0 %v4267
      %v4363 = vpop.xlane.xlu0 %4362
      %4364 = vadd.xlane.f32.xlu0 %v4268
      %v4365 = vpop.xlane.xlu0 %4364
      %4366 = vadd.xlane.f32.xlu0 %v4269
      %v4367 = vpop.xlane.xlu0 %4366
      %4368 = vadd.xlane.f32.xlu0 %v4270
      %v4369 = vpop.xlane.xlu0 %4368
      %4370 = vadd.xlane.f32.xlu0 %v4271
      %v4371 = vpop.xlane.xlu0 %4370
      %v4372 = vadd.f32 %v4324, %v4341
      %v4373 = vadd.f32 %v4325, %v4343
      %v4374 = vadd.f32 %v4326, %v4345
      %v4375 = vadd.f32 %v4327, %v4347
      %v4376 = vadd.f32 %v4328, %v4349
      %v4377 = vadd.f32 %v4329, %v4351
      %v4378 = vadd.f32 %v4330, %v4353
      %v4379 = vadd.f32 %v4331, %v4355
      %v4380 = vadd.f32 %v4332, %v4357
      %v4381 = vadd.f32 %v4333, %v4359
      %v4382 = vadd.f32 %v4334, %v4361
      %v4383 = vadd.f32 %v4335, %v4363
      %v4384 = vadd.f32 %v4336, %v4365
      %v4385 = vadd.f32 %v4337, %v4367
      %v4386 = vadd.f32 %v4338, %v4369
      %v4387 = vadd.f32 %v4339, %v4371
      %vm4388 = vcmask 7168
      %4389 = vst.msk [vmem:[%s318] sm:$0xff] %vm4388, %v4372
      %4390 = vst.msk [vmem:[%s318 + $0x8] sm:$0xff] %vm4388, %v4373
      %4391 = vst.msk [vmem:[%s318 + $0x10] sm:$0xff] %vm4388, %v4374
      %4392 = vst.msk [vmem:[%s318 + $0x18] sm:$0xff] %vm4388, %v4375
      %4393 = vst.msk [vmem:[%s318 + $0x20] sm:$0xff] %vm4388, %v4376
      %4394 = vst.msk [vmem:[%s318 + $0x28] sm:$0xff] %vm4388, %v4377
      %4395 = vst.msk [vmem:[%s318 + $0x30] sm:$0xff] %vm4388, %v4378
      %4396 = vst.msk [vmem:[%s318 + $0x38] sm:$0xff] %vm4388, %v4379
      %4397 = vst.msk [vmem:[%s318 + $0x40] sm:$0xff] %vm4388, %v4380
      %4398 = vst.msk [vmem:[%s318 + $0x48] sm:$0xff] %vm4388, %v4381
      %4399 = vst.msk [vmem:[%s318 + $0x50] sm:$0xff] %vm4388, %v4382
      %4400 = vst.msk [vmem:[%s318 + $0x58] sm:$0xff] %vm4388, %v4383
      %4401 = vst.msk [vmem:[%s318 + $0x60] sm:$0xff] %vm4388, %v4384
      %4402 = vst.msk [vmem:[%s318 + $0x68] sm:$0xff] %vm4388, %v4385
      %4403 = vst.msk [vmem:[%s318 + $0x70] sm:$0xff] %vm4388, %v4386
      %4404 = vst.msk [vmem:[%s318 + $0x78] sm:$0xff] %vm4388, %v4387
      %v4405 = vld [vmem:[%s323] sm:$0xff]
      %v4406 = vld [vmem:[%s323 + $0x8] sm:$0xff]
      %v4407 = vld [vmem:[%s323 + $0x10] sm:$0xff]
      %v4408 = vld [vmem:[%s323 + $0x18] sm:$0xff]
      %v4409 = vld [vmem:[%s323 + $0x20] sm:$0xff]
      %v4410 = vld [vmem:[%s323 + $0x28] sm:$0xff]
      %v4411 = vld [vmem:[%s323 + $0x30] sm:$0xff]
      %v4412 = vld [vmem:[%s323 + $0x38] sm:$0xff]
      %v4413 = vld [vmem:[%s323 + $0x40] sm:$0xff]
      %v4414 = vld [vmem:[%s323 + $0x48] sm:$0xff]
      %v4415 = vld [vmem:[%s323 + $0x50] sm:$0xff]
      %v4416 = vld [vmem:[%s323 + $0x58] sm:$0xff]
      %v4417 = vld [vmem:[%s323 + $0x60] sm:$0xff]
      %v4418 = vld [vmem:[%s323 + $0x68] sm:$0xff]
      %v4419 = vld [vmem:[%s323 + $0x70] sm:$0xff]
      %v4420 = vld [vmem:[%s323 + $0x78] sm:$0xff]
      %v4421 = vmul.f32 %v4256, %v4256
      %v4422 = vmul.f32 %v4257, %v4257
      %v4423 = vmul.f32 %v4258, %v4258
      %v4424 = vmul.f32 %v4259, %v4259
      %v4425 = vmul.f32 %v4260, %v4260
      %v4426 = vmul.f32 %v4261, %v4261
      %v4427 = vmul.f32 %v4262, %v4262
      %v4428 = vmul.f32 %v4263, %v4263
      %v4429 = vmul.f32 %v4264, %v4264
      %v4430 = vmul.f32 %v4265, %v4265
      %v4431 = vmul.f32 %v4266, %v4266
      %v4432 = vmul.f32 %v4267, %v4267
      %v4433 = vmul.f32 %v4268, %v4268
      %v4434 = vmul.f32 %v4269, %v4269
      %v4435 = vmul.f32 %v4270, %v4270
      %v4436 = vmul.f32 %v4271, %v4271
      %4437 = vadd.xlane.f32.xlu0 %v4421
      %v4438 = vpop.xlane.xlu0 %4437
      %4439 = vadd.xlane.f32.xlu0 %v4422
      %v4440 = vpop.xlane.xlu0 %4439
      %4441 = vadd.xlane.f32.xlu0 %v4423
      %v4442 = vpop.xlane.xlu0 %4441
      %4443 = vadd.xlane.f32.xlu0 %v4424
      %v4444 = vpop.xlane.xlu0 %4443
      %4445 = vadd.xlane.f32.xlu0 %v4425
      %v4446 = vpop.xlane.xlu0 %4445
      %4447 = vadd.xlane.f32.xlu0 %v4426
      %v4448 = vpop.xlane.xlu0 %4447
      %4449 = vadd.xlane.f32.xlu0 %v4427
      %v4450 = vpop.xlane.xlu0 %4449
      %4451 = vadd.xlane.f32.xlu0 %v4428
      %v4452 = vpop.xlane.xlu0 %4451
      %4453 = vadd.xlane.f32.xlu0 %v4429
      %v4454 = vpop.xlane.xlu0 %4453
      %4455 = vadd.xlane.f32.xlu0 %v4430
      %v4456 = vpop.xlane.xlu0 %4455
      %4457 = vadd.xlane.f32.xlu0 %v4431
      %v4458 = vpop.xlane.xlu0 %4457
      %4459 = vadd.xlane.f32.xlu0 %v4432
      %v4460 = vpop.xlane.xlu0 %4459
      %4461 = vadd.xlane.f32.xlu0 %v4433
      %v4462 = vpop.xlane.xlu0 %4461
      %4463 = vadd.xlane.f32.xlu0 %v4434
      %v4464 = vpop.xlane.xlu0 %4463
      %4465 = vadd.xlane.f32.xlu0 %v4435
      %v4466 = vpop.xlane.xlu0 %4465
      %4467 = vadd.xlane.f32.xlu0 %v4436
      %v4468 = vpop.xlane.xlu0 %4467
      %v4469 = vadd.f32 %v4405, %v4438
      %v4470 = vadd.f32 %v4406, %v4440
      %v4471 = vadd.f32 %v4407, %v4442
      %v4472 = vadd.f32 %v4408, %v4444
      %v4473 = vadd.f32 %v4409, %v4446
      %v4474 = vadd.f32 %v4410, %v4448
      %v4475 = vadd.f32 %v4411, %v4450
      %v4476 = vadd.f32 %v4412, %v4452
      %v4477 = vadd.f32 %v4413, %v4454
      %v4478 = vadd.f32 %v4414, %v4456
      %v4479 = vadd.f32 %v4415, %v4458
      %v4480 = vadd.f32 %v4416, %v4460
      %v4481 = vadd.f32 %v4417, %v4462
      %v4482 = vadd.f32 %v4418, %v4464
      %v4483 = vadd.f32 %v4419, %v4466
      %v4484 = vadd.f32 %v4420, %v4468
      %4485 = vst.msk [vmem:[%s323] sm:$0xff] %vm4388, %v4469
      %4486 = vst.msk [vmem:[%s323 + $0x8] sm:$0xff] %vm4388, %v4470
      %4487 = vst.msk [vmem:[%s323 + $0x10] sm:$0xff] %vm4388, %v4471
      %4488 = vst.msk [vmem:[%s323 + $0x18] sm:$0xff] %vm4388, %v4472
      %4489 = vst.msk [vmem:[%s323 + $0x20] sm:$0xff] %vm4388, %v4473
      %4490 = vst.msk [vmem:[%s323 + $0x28] sm:$0xff] %vm4388, %v4474
      %4491 = vst.msk [vmem:[%s323 + $0x30] sm:$0xff] %vm4388, %v4475
      %4492 = vst.msk [vmem:[%s323 + $0x38] sm:$0xff] %vm4388, %v4476
      %4493 = vst.msk [vmem:[%s323 + $0x40] sm:$0xff] %vm4388, %v4477
      %4494 = vst.msk [vmem:[%s323 + $0x48] sm:$0xff] %vm4388, %v4478
      %4495 = vst.msk [vmem:[%s323 + $0x50] sm:$0xff] %vm4388, %v4479
      %4496 = vst.msk [vmem:[%s323 + $0x58] sm:$0xff] %vm4388, %v4480
      %4497 = vst.msk [vmem:[%s323 + $0x60] sm:$0xff] %vm4388, %v4481
      %4498 = vst.msk [vmem:[%s323 + $0x68] sm:$0xff] %vm4388, %v4482
      %4499 = vst.msk [vmem:[%s323 + $0x70] sm:$0xff] %vm4388, %v4483
      %4500 = vst.msk [vmem:[%s323 + $0x78] sm:$0xff] %vm4388, %v4484
      %p4501 = scmp.lt.s32.totalorder %s23, 1
      %s4502 = scalar_select %p4501, %s23, 1
      %p4503 = scmp.lt.s32.totalorder %s24, 0
      %s4504 = scalar_select %p4503, %s24, 0
      %s4505 = smul.addr %s4502, 16
      %s4506 = sadd.s32 %s4504, %s4505
      %s4507 = smul.addr %s4506, 8
      %s4508 = scalar_lea.vmem %s5, %s4507
      %p4509 = scmp.lt.s32.totalorder %s23, 1
      %s4510 = scalar_select %p4509, %s23, 1
      %s4511 = smul.addr %s4510, 16
      %s4512 = smul.addr %s4511, 8
      %s4513 = scalar_lea.vmem %s6, %s4512
      %p4514 = scmp.lt.s32.totalorder %s23, 1
      %s4515 = scalar_select %p4514, %s23, 1
      %s4516 = smul.addr %s4515, 16
      %s4517 = smul.addr %s4516, 8
      %s4518 = scalar_lea.vmem %s7, %s4517
      // Predicated region
      $region49: #{pos_extraction_pallas.4} parent=39 // pred_check
        %p4519 = pneg %p161
      $region50: #{pos_extraction_pallas.4} parent=39 // pred_check_branch
        %4521 = sbr.rel (%p4519) target = $region52
      $region51: #{pos_extraction_pallas.4} parent=39 // pred_region
        _
      $region52: #{pos_extraction_pallas.4} parent=39 // pred_fallthru
        _
      // Predicated region
      $region53: #{pos_extraction_pallas.4} parent=39 // pred_check
        %p4522 = pneg %p187
      $region54: #{pos_extraction_pallas.4} parent=39 // pred_check_branch
        %4524 = sbr.rel (%p4522) target = $region56
      $region55: #{pos_extraction_pallas.4} parent=39 // pred_region
        _
      $region56: #{pos_extraction_pallas.4} parent=39 // pred_fallthru
        _
      // Predicated region
      $region57: #{pos_extraction_pallas.4} parent=39 // pred_check
        %p4525 = pneg %p213
      $region58: #{pos_extraction_pallas.4} parent=39 // pred_check_branch
        %4527 = sbr.rel (%p4525) target = $region60
      $region59: #{pos_extraction_pallas.4} parent=39 // pred_region
        _
      $region60: #{pos_extraction_pallas.4} parent=39 // pred_fallthru
        _
    $region40: #{pos_extraction_pallas.4} parent=5 // pred_fallthru
      _
    %p4528 = scmp.le.s32.totalorder 2, %s14
    // Predicated region
    $region61: #{pos_extraction_pallas.4} parent=5 // pred_check
      %p4529 = pneg %p4528
    $region62: #{pos_extraction_pallas.4} parent=5 // pred_check_branch
      %4531 = sbr.rel (%p4529) target = $region64
    $region63: #{pos_extraction_pallas.4} parent=5 // pred_region
      %s4532 = ssub.s32 %s14, 2
      // Predicated region
      $region65: #{pos_extraction_pallas.4} parent=63 // pred_check
        %p4533 = pneg %p167
      $region66: #{pos_extraction_pallas.4} parent=63 // pred_check_branch
        %4535 = sbr.rel (%p4533) target = $region68
      $region67: #{pos_extraction_pallas.4} parent=63 // pred_region
        %p4536 = scmp.lt.s32.totalorder %s25, 1
        %s4537 = scalar_select %p4536, %s25, 1
        %p4538 = scmp.lt.s32.totalorder %s26, 0
        %s4539 = scalar_select %p4538, %s26, 0
        %s4540 = smul.addr %s4537, 16
        %s4541 = sadd.s32 %s4539, %s4540
        %s4542 = smul.addr %s4541, 8
        %s4543 = scalar_lea.vmem %s5, %s4542
      $region68: #{pos_extraction_pallas.4} parent=63 // pred_fallthru
        _
      // Predicated region
      $region69: #{pos_extraction_pallas.4} parent=63 // pred_check
        %p4544 = pneg %p193
      $region70: #{pos_extraction_pallas.4} parent=63 // pred_check_branch
        %4546 = sbr.rel (%p4544) target = $region72
      $region71: #{pos_extraction_pallas.4} parent=63 // pred_region
        %p4547 = scmp.lt.s32.totalorder %s25, 1
        %s4548 = scalar_select %p4547, %s25, 1
        %s4549 = smul.addr %s4548, 16
        %s4550 = smul.addr %s4549, 8
        %s4551 = scalar_lea.vmem %s6, %s4550
      $region72: #{pos_extraction_pallas.4} parent=63 // pred_fallthru
        _
      // Predicated region
      $region73: #{pos_extraction_pallas.4} parent=63 // pred_check
        %p4552 = pneg %p219
      $region74: #{pos_extraction_pallas.4} parent=63 // pred_check_branch
        %4554 = sbr.rel (%p4552) target = $region76
      $region75: #{pos_extraction_pallas.4} parent=63 // pred_region
        %p4555 = scmp.lt.s32.totalorder %s25, 1
        %s4556 = scalar_select %p4555, %s25, 1
        %s4557 = smul.addr %s4556, 16
        %s4558 = smul.addr %s4557, 8
        %s4559 = scalar_lea.vmem %s7, %s4558
      $region76: #{pos_extraction_pallas.4} parent=63 // pred_fallthru
        _
    $region64: #{pos_extraction_pallas.4} parent=5 // pred_fallthru
      _
  $region6: #{pos_extraction_pallas.4} parent=0 // loop_footer
    %s18 = sadd.s32 1, %s14
  $region7: #{pos_extraction_pallas.4} parent=0 // loop_footer_branch
    %13 = sbr.rel target = $region3
  $region8: #{pos_extraction_pallas.4} parent=0 // loop_exit
    _

</llo_original>
